<compile_context>
chip_gen: v5e
topology: v5e:2x2
jax: 0.10.0
libtpu: 0.0.40
codegen_flags: <defaults>
</compile_context>

<pallas_src>
import functools

import jax
import jax.numpy as jnp
from jax.experimental import pallas as pl
from jax.experimental.pallas import tpu as pltpu

EPS = 1e-5


# --------------------------------------------------------------------------
# In-kernel helpers
# --------------------------------------------------------------------------
def _zero_pad_border(pad_ref):
    """Zero only the 1-pixel border of the (bt, H+2, W+2, C) pad scratch."""
    bt, hp, wp, c = pad_ref.shape
    dt = pad_ref.dtype
    pad_ref[:, 0:1, :, :] = jnp.zeros((bt, 1, wp, c), dt)
    pad_ref[:, hp - 1:hp, :, :] = jnp.zeros((bt, 1, wp, c), dt)
    pad_ref[:, :, 0:1, :] = jnp.zeros((bt, hp, 1, c), dt)
    pad_ref[:, :, wp - 1:wp, :] = jnp.zeros((bt, hp, 1, c), dt)


def _conv3x3_acc(pad_ref, w_ref, bt, H, W):
    """3x3 conv as 9 accumulated MXU matmuls (K=Cin each) over shifted windows
    of the padded scratch.  f32 accumulation, operands in pad_ref/w_ref dtype."""
    m = bt * H * W
    cin = pad_ref.shape[-1]

    def win(tap):
        ky, kx = divmod(tap, 3)
        return pad_ref[:, ky:ky + H, kx:kx + W, :].reshape(m, cin)

    acc = jnp.dot(win(0), w_ref[0], preferred_element_type=jnp.float32)
    for tap in range(1, 9):
        acc = acc + jnp.dot(win(tap), w_ref[tap],
                            preferred_element_type=jnp.float32)
    return acc


def _write_stats(stats_ref, acc, m):
    """Per-block BN stats: [sum, centered sum-of-squares] (numerically stable;
    blocks are pooled in the wrapper)."""
    s = jnp.sum(acc, axis=0, keepdims=True)
    d = acc - s * (1.0 / m)
    stats_ref[0, 0:1, :] = s
    stats_ref[0, 1:2, :] = jnp.sum(d * d, axis=0, keepdims=True)


# --------------------------------------------------------------------------
# Kernels
# --------------------------------------------------------------------------
def _conv1_stats_kernel(x_ref, w_ref, y_ref, stats_ref, xpad_ref):
    """conv3x3(x) (SAME, stride 1) + per-block BN1 statistics."""
    bt, H, W, _ = x_ref.shape
    cout = y_ref.shape[-1]

    _zero_pad_border(xpad_ref)
    xpad_ref[:, 1:H + 1, 1:W + 1, :] = x_ref[...].astype(xpad_ref.dtype)

    acc = _conv3x3_acc(xpad_ref, w_ref, bt, H, W)
    _write_stats(stats_ref, acc, bt * H * W)
    y_ref[...] = acc.reshape(bt, H, W, cout).astype(y_ref.dtype)


def _bn_relu_conv2_stats_kernel(y1_ref, w_ref, scale_ref, shift_ref,
                                y_ref, stats_ref, hpad_ref):
    """relu(bn1(y1)) via folded scale/shift -> conv3x3 -> BN2 statistics."""
    bt, H, W, cin = y1_ref.shape
    cout = y_ref.shape[-1]

    scale = scale_ref[...].reshape(1, 1, 1, cin)
    shift = shift_ref[...].reshape(1, 1, 1, cin)
    act = jnp.maximum(y1_ref[...].astype(jnp.float32) * scale + shift, 0.0)

    _zero_pad_border(hpad_ref)
    hpad_ref[:, 1:H + 1, 1:W + 1, :] = act.astype(hpad_ref.dtype)

    acc = _conv3x3_acc(hpad_ref, w_ref, bt, H, W)
    _write_stats(stats_ref, acc, bt * H * W)
    y_ref[...] = acc.reshape(bt, H, W, cout).astype(y_ref.dtype)


def _bn_add_relu_kernel(y2_ref, res_ref, scale_ref, shift_ref, out_ref):
    """Lane-dense epilogue on (1, H, W*C): bn2-affine + residual + ReLU (f32)."""
    scale = scale_ref[...][None]          # (1, 1, W*C)
    shift = shift_ref[...][None]
    out_ref[...] = jnp.maximum(
        y2_ref[...] * scale + shift + res_ref[...], 0.0)


# --------------------------------------------------------------------------
# Wrapper-side helpers
# --------------------------------------------------------------------------
def _vmem_limit_bytes():
    """~3/4 of physical VMEM, capped at 100 MiB (v5e/v6e: ~96-100 MiB,
    v7x: 48 MiB).  Falls back to 96 MiB if the query is unavailable."""
    cap = 128 * 1024 * 1024
    try:
        cap = int(pltpu.get_tpu_info().vmem_capacity_bytes)
    except Exception:
        pass
    return int(min(cap * 3 // 4, 100 * 1024 * 1024))


def _pick_image_tile(n, hw):
    """Images per grid step: fill the MXU M dim (>=256) on small feature maps
    while keeping >=2 grid steps so both v7x TensorCores get work."""
    bt = 1
    while bt * hw < 256 and n % (bt * 2) == 0 and n // (bt * 2) >= 2:
        bt *= 2
    return bt


def _fold_bn(stats, gamma, beta, block_count, total_count):
    """Pool per-block [sum, centered-SSQ] stats into per-channel scale/shift."""
    s = stats[:, 0, :]                                   # (nb, C) block sums
    m2 = stats[:, 1, :]                                  # (nb, C) centered SSQ
    mean_b = s / block_count
    mean = jnp.sum(s, axis=0) / total_count
    var = (jnp.sum(m2, axis=0)
           + block_count * jnp.sum((mean_b - mean) ** 2, axis=0)) / total_count
    var = jnp.maximum(var, 0.0)                          # biased variance
    scale = gamma * jax.lax.rsqrt(var + EPS)
    shift = beta - mean * scale
    return scale, shift


# --------------------------------------------------------------------------
# Forward pass
# --------------------------------------------------------------------------
def basic_block_forward(x, w1, g1, b1, w2, g2, b2, *,
                        compute_dtype=jnp.bfloat16):
    """x: (N, H, W, C) f32; w1/w2: (9, Cin, Cout) tap-major; g*/b*: (C,) f32.

    compute_dtype: dtype of the MXU operands (padded activations, weights,
    and the y1 intermediate).  Accumulation, BN stats and the epilogue are f32.
    """
    N, H, W, C = x.shape
    C1 = w1.shape[-1]
    C2 = w2.shape[-1]
    assert w1.shape == (9, C, C1) and w2.shape == (9, C1, C2)
    assert C2 == C, "stride=1 / downsample=None BasicBlock needs planes == inplanes"
    Hp, Wp = H + 2, W + 2

    bt = _pick_image_tile(N, H * W)       # images per grid step
    nb = N // bt
    total_count = float(N * H * W)
    block_count = float(bt * H * W)

    params = pltpu.CompilerParams(
        dimension_semantics=("parallel",),        # batch axis -> TC sharding
        vmem_limit_bytes=_vmem_limit_bytes())

    w1c = w1.astype(compute_dtype)
    w2c = w2.astype(compute_dtype)

    # ---- conv1 + per-block BN1 statistics ---------------------------------
    y1, st1 = pl.pallas_call(
        _conv1_stats_kernel,
        grid=(nb,),
        in_specs=[
            pl.BlockSpec((bt, H, W, C), lambda i: (i, 0, 0, 0)),
            pl.BlockSpec((9, C, C1), lambda i: (0, 0, 0),
                         pipeline_mode=pl.Buffered(1)),     # grid-invariant
        ],
        out_specs=(
            pl.BlockSpec((bt, H, W, C1), lambda i: (i, 0, 0, 0)),
            pl.BlockSpec((1, 2, C1), lambda i: (i, 0, 0)),
        ),
        out_shape=(
            jax.ShapeDtypeStruct((N, H, W, C1), compute_dtype),
            jax.ShapeDtypeStruct((nb, 2, C1), jnp.float32),
        ),
        scratch_shapes=[pltpu.VMEM((bt, Hp, Wp, C), compute_dtype)],
        compiler_params=params,
    )(x, w1c)

    scale1, shift1 = _fold_bn(st1, g1, b1, block_count, total_count)

    # ---- bn1-affine + relu + conv2 + per-block BN2 statistics -------------
    y2, st2 = pl.pallas_call(
        _bn_relu_conv2_stats_kernel,
        grid=(nb,),
        in_specs=[
            pl.BlockSpec((bt, H, W, C1), lambda i: (i, 0, 0, 0)),
            pl.BlockSpec((9, C1, C2), lambda i: (0, 0, 0),
                         pipeline_mode=pl.Buffered(1)),
            pl.BlockSpec((1, C1), lambda i: (0, 0),
                         pipeline_mode=pl.Buffered(1)),
            pl.BlockSpec((1, C1), lambda i: (0, 0),
                         pipeline_mode=pl.Buffered(1)),
        ],
        out_specs=(
            pl.BlockSpec((bt, H, W, C2), lambda i: (i, 0, 0, 0)),
            pl.BlockSpec((1, 2, C2), lambda i: (i, 0, 0)),
        ),
        out_shape=(
            jax.ShapeDtypeStruct((N, H, W, C2), jnp.float32),
            jax.ShapeDtypeStruct((nb, 2, C2), jnp.float32),
        ),
        scratch_shapes=[pltpu.VMEM((bt, Hp, Wp, C1), compute_dtype)],
        compiler_params=params,
    )(y1, w2c, scale1.reshape(1, C1), shift1.reshape(1, C1))

    scale2, shift2 = _fold_bn(st2, g2, b2, block_count, total_count)

    # ---- bn2-affine + residual + relu, lane-dense (H, W*C) layout ---------
    # The result is written in place over the y2 buffer (input_output_aliases).
    wc = W * C2
    out_d = pl.pallas_call(
        _bn_add_relu_kernel,
        grid=(N,),
        in_specs=[
            pl.BlockSpec((1, H, wc), lambda i: (i, 0, 0)),
            pl.BlockSpec((1, H, wc), lambda i: (i, 0, 0)),
            pl.BlockSpec((1, wc), lambda i: (0, 0),
                         pipeline_mode=pl.Buffered(1)),
            pl.BlockSpec((1, wc), lambda i: (0, 0),
                         pipeline_mode=pl.Buffered(1)),
        ],
        out_specs=pl.BlockSpec((1, H, wc), lambda i: (i, 0, 0)),
        out_shape=jax.ShapeDtypeStruct((N, H, wc), jnp.float32),
        input_output_aliases={0: 0},
        compiler_params=params,
    )(y2.reshape(N, H, wc), x.reshape(N, H, wc),
      jnp.tile(scale2, W).reshape(1, wc), jnp.tile(shift2, W).reshape(1, wc))

    return out_d.reshape(N, H, W, C2)


# --------------------------------------------------------------------------
# Pure-JAX reference and self-test
# --------------------------------------------------------------------------
def _reference_forward(x, w1, g1, b1, w2, g2, b2):
    """Pure-JAX reference mirroring the PyTorch BasicBlock forward (f32)."""
    def conv(a, w9):
        w = w9.reshape(3, 3, w9.shape[1], w9.shape[2])  # HWIO
        return jax.lax.conv_general_dilated(
            a, w, window_strides=(1, 1), padding="SAME",
            dimension_numbers=("NHWC", "HWIO", "NHWC"))

    def bn(a, g, b):
        m = a.mean(axis=(0, 1, 2))
        v = ((a - m) ** 2).mean(axis=(0, 1, 2))
        return (a - m) * jax.lax.rsqrt(v + EPS) * g + b

    h = jax.nn.relu(bn(conv(x, w1), g1, b1))
    o = bn(conv(h, w2), g2, b2) + x
    return jax.nn.relu(o)


if __name__ == "__main__":
    # Small deterministic example: inplanes = planes = 8, stride = 1.
    N, H, W, C = 2, 16, 16, 8
    key = jax.random.PRNGKey(0)
    kx, kw1, kw2, kg1, kb1, kg2, kb2 = jax.random.split(key, 7)

    x = jax.random.normal(kx, (N, H, W, C), dtype=jnp.float32)

    # conv3x3 weights (bias=False), stored tap-major: (9, Cin, Cout).
    fan_in = C * 9
    w1 = jax.random.normal(kw1, (9, C, C), dtype=jnp.float32) * (2.0 / fan_in) ** 0.5
    w2 = jax.random.normal(kw2, (9, C, C), dtype=jnp.float32) * (2.0 / fan_in) ** 0.5

    # BatchNorm affine params (deterministic, non-trivial).
    g1 = 1.0 + 0.1 * jax.random.normal(kg1, (C,), dtype=jnp.float32)
    b1 = 0.1 * jax.random.normal(kb1, (C,), dtype=jnp.float32)
    g2 = 1.0 + 0.1 * jax.random.normal(kg2, (C,), dtype=jnp.float32)
    b2 = 0.1 * jax.random.normal(kb2, (C,), dtype=jnp.float32)

    ref = _reference_forward(x, w1, g1, b1, w2, g2, b2)

    # Exact-precision path (f32 MXU operands): tight check vs the f32 reference.
    run_f32 = jax.jit(functools.partial(basic_block_forward,
                                        compute_dtype=jnp.float32))
    out_f32 = jax.block_until_ready(run_f32(x, w1, g1, b1, w2, g2, b2))
    assert out_f32.shape == (N, H, W, C)
    assert jnp.allclose(out_f32, ref, atol=1e-4, rtol=1e-4), (
        float(jnp.max(jnp.abs(out_f32 - ref))))

    # Fast path (bf16 MXU operands, f32 accumulation / BN stats / epilogue).
    run_bf16 = jax.jit(functools.partial(basic_block_forward,
                                         compute_dtype=jnp.bfloat16))
    out_bf16 = jax.block_until_ready(run_bf16(x, w1, g1, b1, w2, g2, b2))
    assert out_bf16.shape == (N, H, W, C)
    assert jnp.allclose(out_bf16, ref, atol=1e-1, rtol=1e-1), (
        float(jnp.max(jnp.abs(out_bf16 - ref))))

    print("KERNEL_OK")
</pallas_src>

<mosaic_0001>
module attributes {stable_mosaic.version = 11 : i64} {
  func.func @_conv1_stats_kernel(%arg0: i32, %arg1: memref<1x16x16x8xf32, #tpu.memory_space<vmem>>, %arg2: memref<9x8x8xf32, #tpu.memory_space<vmem>>, %arg3: memref<1x16x16x8xf32, #tpu.memory_space<vmem>>, %arg4: memref<1x2x8xf32, #tpu.memory_space<vmem>>, %arg5: memref<1x18x18x8xf32, #tpu.memory_space<vmem>>) attributes {dimension_semantics = [#tpu.dimension_semantics<parallel>], iteration_bounds = array<i64: 2>, scalar_prefetch = 0 : i64, scratch_operands = 1 : i64, tpu.core_type = #tpu.core_type<tc>, window_params = [{transform_indices = @transform_0, window_bounds = array<i64: 1, 16, 16, 8>}, {pipeline_mode = #tpu.pipeline_mode<synchronous>, transform_indices = @transform_1, window_bounds = array<i64: 9, 8, 8>}, {transform_indices = @transform_2, window_bounds = array<i64: 1, 16, 16, 8>}, {transform_indices = @transform_3, window_bounds = array<i64: 1, 2, 8>}]} {
    %cst = arith.constant 0.000000e+00 : f32
    %0 = vector.broadcast %cst : f32 to vector<1x1x18x8xf32>
    %c0 = arith.constant 0 : index
    %c0_0 = arith.constant 0 : index
    %c0_1 = arith.constant 0 : index
    %c0_2 = arith.constant 0 : index
    %1 = vector.load %arg5[%c0, %c0_0, %c0_1, %c0_2] : memref<1x18x18x8xf32, #tpu.memory_space<vmem>>, vector<1x1x18x8xf32>
    tpu.vector_store %arg5[%c0, %c0_0, %c0_1, %c0_2], %0 {strides = array<i32>} : memref<1x18x18x8xf32, #tpu.memory_space<vmem>>, vector<1x1x18x8xf32>,
    %cst_3 = arith.constant 0.000000e+00 : f32
    %2 = vector.broadcast %cst_3 : f32 to vector<1x1x18x8xf32>
    %c0_4 = arith.constant 0 : index
    %c17 = arith.constant 17 : index
    %c0_5 = arith.constant 0 : index
    %c0_6 = arith.constant 0 : index
    %3 = vector.load %arg5[%c0_4, %c17, %c0_5, %c0_6] : memref<1x18x18x8xf32, #tpu.memory_space<vmem>>, vector<1x1x18x8xf32>
    tpu.vector_store %arg5[%c0_4, %c17, %c0_5, %c0_6], %2 {strides = array<i32>} : memref<1x18x18x8xf32, #tpu.memory_space<vmem>>, vector<1x1x18x8xf32>,
    %cst_7 = arith.constant 0.000000e+00 : f32
    %4 = vector.broadcast %cst_7 : f32 to vector<1x18x1x8xf32>
    %c0_8 = arith.constant 0 : index
    %c0_9 = arith.constant 0 : index
    %c0_10 = arith.constant 0 : index
    %c0_11 = arith.constant 0 : index
    %5 = vector.load %arg5[%c0_8, %c0_9, %c0_10, %c0_11] : memref<1x18x18x8xf32, #tpu.memory_space<vmem>>, vector<1x18x1x8xf32>
    tpu.vector_store %arg5[%c0_8, %c0_9, %c0_10, %c0_11], %4 {strides = array<i32>} : memref<1x18x18x8xf32, #tpu.memory_space<vmem>>, vector<1x18x1x8xf32>,
    %cst_12 = arith.constant 0.000000e+00 : f32
    %6 = vector.broadcast %cst_12 : f32 to vector<1x18x1x8xf32>
    %c0_13 = arith.constant 0 : index
    %c0_14 = arith.constant 0 : index
    %c17_15 = arith.constant 17 : index
    %c0_16 = arith.constant 0 : index
    %7 = vector.load %arg5[%c0_13, %c0_14, %c17_15, %c0_16] : memref<1x18x18x8xf32, #tpu.memory_space<vmem>>, vector<1x18x1x8xf32>
    tpu.vector_store %arg5[%c0_13, %c0_14, %c17_15, %c0_16], %6 {strides = array<i32>} : memref<1x18x18x8xf32, #tpu.memory_space<vmem>>, vector<1x18x1x8xf32>,
    %c0_17 = arith.constant 0 : index
    %c0_18 = arith.constant 0 : index
    %c0_19 = arith.constant 0 : index
    %c0_20 = arith.constant 0 : index
    %8 = vector.load %arg1[%c0_17, %c0_18, %c0_19, %c0_20] : memref<1x16x16x8xf32, #tpu.memory_space<vmem>>, vector<1x16x16x8xf32>
    %c0_21 = arith.constant 0 : index
    %c1 = arith.constant 1 : index
    %c1_22 = arith.constant 1 : index
    %c0_23 = arith.constant 0 : index
    %9 = vector.load %arg5[%c0_21, %c1, %c1_22, %c0_23] : memref<1x18x18x8xf32, #tpu.memory_space<vmem>>, vector<1x16x16x8xf32>
    tpu.vector_store %arg5[%c0_21, %c1, %c1_22, %c0_23], %8 {strides = array<i32>} : memref<1x18x18x8xf32, #tpu.memory_space<vmem>>, vector<1x16x16x8xf32>,
    %c0_24 = arith.constant 0 : index
    %c0_25 = arith.constant 0 : index
    %c0_26 = arith.constant 0 : index
    %c0_27 = arith.constant 0 : index
    %10 = vector.load %arg5[%c0_24, %c0_25, %c0_26, %c0_27] : memref<1x18x18x8xf32, #tpu.memory_space<vmem>>, vector<1x16x16x8xf32>
    %11 = vector.shape_cast %10 : vector<1x16x16x8xf32> to vector<256x8xf32>
    %c0_28 = arith.constant 0 : index
    %c0_29 = arith.constant 0 : index
    %c0_30 = arith.constant 0 : index
    %12 = vector.load %arg2[%c0_28, %c0_29, %c0_30] : memref<9x8x8xf32, #tpu.memory_space<vmem>>, vector<1x8x8xf32>
    %13 = vector.shape_cast %12 : vector<1x8x8xf32> to vector<8x8xf32>
    %cst_31 = arith.constant dense<0.000000e+00> : vector<256x8xf32>
    %14 = tpu.matmul %11, %13, %cst_31 {dimension_numbers = #tpu.dot_dimension_numbers<[1], [0], [0], [1], [0, 0, 1, 1], [], []>} : vector<256x8xf32>, vector<8x8xf32>, vector<256x8xf32> -> vector<256x8xf32>
    %c0_32 = arith.constant 0 : index
    %c0_33 = arith.constant 0 : index
    %c1_34 = arith.constant 1 : index
    %c0_35 = arith.constant 0 : index
    %15 = vector.load %arg5[%c0_32, %c0_33, %c1_34, %c0_35] : memref<1x18x18x8xf32, #tpu.memory_space<vmem>>, vector<1x16x16x8xf32>
    %16 = vector.shape_cast %15 : vector<1x16x16x8xf32> to vector<256x8xf32>
    %c1_36 = arith.constant 1 : index
    %c0_37 = arith.constant 0 : index
    %c0_38 = arith.constant 0 : index
    %17 = vector.load %arg2[%c1_36, %c0_37, %c0_38] : memref<9x8x8xf32, #tpu.memory_space<vmem>>, vector<1x8x8xf32>
    %18 = vector.shape_cast %17 : vector<1x8x8xf32> to vector<8x8xf32>
    %cst_39 = arith.constant dense<0.000000e+00> : vector<256x8xf32>
    %19 = tpu.matmul %16, %18, %cst_39 {dimension_numbers = #tpu.dot_dimension_numbers<[1], [0], [0], [1], [0, 0, 1, 1], [], []>} : vector<256x8xf32>, vector<8x8xf32>, vector<256x8xf32> -> vector<256x8xf32>
    %20 = arith.addf %14, %19 : vector<256x8xf32>
    %c0_40 = arith.constant 0 : index
    %c0_41 = arith.constant 0 : index
    %c2 = arith.constant 2 : index
    %c0_42 = arith.constant 0 : index
    %21 = vector.load %arg5[%c0_40, %c0_41, %c2, %c0_42] : memref<1x18x18x8xf32, #tpu.memory_space<vmem>>, vector<1x16x16x8xf32>
    %22 = vector.shape_cast %21 : vector<1x16x16x8xf32> to vector<256x8xf32>
    %c2_43 = arith.constant 2 : index
    %c0_44 = arith.constant 0 : index
    %c0_45 = arith.constant 0 : index
    %23 = vector.load %arg2[%c2_43, %c0_44, %c0_45] : memref<9x8x8xf32, #tpu.memory_space<vmem>>, vector<1x8x8xf32>
    %24 = vector.shape_cast %23 : vector<1x8x8xf32> to vector<8x8xf32>
    %cst_46 = arith.constant dense<0.000000e+00> : vector<256x8xf32>
    %25 = tpu.matmul %22, %24, %cst_46 {dimension_numbers = #tpu.dot_dimension_numbers<[1], [0], [0], [1], [0, 0, 1, 1], [], []>} : vector<256x8xf32>, vector<8x8xf32>, vector<256x8xf32> -> vector<256x8xf32>
    %26 = arith.addf %20, %25 : vector<256x8xf32>
    %c0_47 = arith.constant 0 : index
    %c1_48 = arith.constant 1 : index
    %c0_49 = arith.constant 0 : index
    %c0_50 = arith.constant 0 : index
    %27 = vector.load %arg5[%c0_47, %c1_48, %c0_49, %c0_50] : memref<1x18x18x8xf32, #tpu.memory_space<vmem>>, vector<1x16x16x8xf32>
    %28 = vector.shape_cast %27 : vector<1x16x16x8xf32> to vector<256x8xf32>
    %c3 = arith.constant 3 : index
    %c0_51 = arith.constant 0 : index
    %c0_52 = arith.constant 0 : index
    %29 = vector.load %arg2[%c3, %c0_51, %c0_52] : memref<9x8x8xf32, #tpu.memory_space<vmem>>, vector<1x8x8xf32>
    %30 = vector.shape_cast %29 : vector<1x8x8xf32> to vector<8x8xf32>
    %cst_53 = arith.constant dense<0.000000e+00> : vector<256x8xf32>
    %31 = tpu.matmul %28, %30, %cst_53 {dimension_numbers = #tpu.dot_dimension_numbers<[1], [0], [0], [1], [0, 0, 1, 1], [], []>} : vector<256x8xf32>, vector<8x8xf32>, vector<256x8xf32> -> vector<256x8xf32>
    %32 = arith.addf %26, %31 : vector<256x8xf32>
    %c0_54 = arith.constant 0 : index
    %c1_55 = arith.constant 1 : index
    %c1_56 = arith.constant 1 : index
    %c0_57 = arith.constant 0 : index
    %33 = vector.load %arg5[%c0_54, %c1_55, %c1_56, %c0_57] : memref<1x18x18x8xf32, #tpu.memory_space<vmem>>, vector<1x16x16x8xf32>
    %34 = vector.shape_cast %33 : vector<1x16x16x8xf32> to vector<256x8xf32>
    %c4 = arith.constant 4 : index
    %c0_58 = arith.constant 0 : index
    %c0_59 = arith.constant 0 : index
    %35 = vector.load %arg2[%c4, %c0_58, %c0_59] : memref<9x8x8xf32, #tpu.memory_space<vmem>>, vector<1x8x8xf32>
    %36 = vector.shape_cast %35 : vector<1x8x8xf32> to vector<8x8xf32>
    %cst_60 = arith.constant dense<0.000000e+00> : vector<256x8xf32>
    %37 = tpu.matmul %34, %36, %cst_60 {dimension_numbers = #tpu.dot_dimension_numbers<[1], [0], [0], [1], [0, 0, 1, 1], [], []>} : vector<256x8xf32>, vector<8x8xf32>, vector<256x8xf32> -> vector<256x8xf32>
    %38 = arith.addf %32, %37 : vector<256x8xf32>
    %c0_61 = arith.constant 0 : index
    %c1_62 = arith.constant 1 : index
    %c2_63 = arith.constant 2 : index
    %c0_64 = arith.constant 0 : index
    %39 = vector.load %arg5[%c0_61, %c1_62, %c2_63, %c0_64] : memref<1x18x18x8xf32, #tpu.memory_space<vmem>>, vector<1x16x16x8xf32>
    %40 = vector.shape_cast %39 : vector<1x16x16x8xf32> to vector<256x8xf32>
    %c5 = arith.constant 5 : index
    %c0_65 = arith.constant 0 : index
    %c0_66 = arith.constant 0 : index
    %41 = vector.load %arg2[%c5, %c0_65, %c0_66] : memref<9x8x8xf32, #tpu.memory_space<vmem>>, vector<1x8x8xf32>
    %42 = vector.shape_cast %41 : vector<1x8x8xf32> to vector<8x8xf32>
    %cst_67 = arith.constant dense<0.000000e+00> : vector<256x8xf32>
    %43 = tpu.matmul %40, %42, %cst_67 {dimension_numbers = #tpu.dot_dimension_numbers<[1], [0], [0], [1], [0, 0, 1, 1], [], []>} : vector<256x8xf32>, vector<8x8xf32>, vector<256x8xf32> -> vector<256x8xf32>
    %44 = arith.addf %38, %43 : vector<256x8xf32>
    %c0_68 = arith.constant 0 : index
    %c2_69 = arith.constant 2 : index
    %c0_70 = arith.constant 0 : index
    %c0_71 = arith.constant 0 : index
    %45 = vector.load %arg5[%c0_68, %c2_69, %c0_70, %c0_71] : memref<1x18x18x8xf32, #tpu.memory_space<vmem>>, vector<1x16x16x8xf32>
    %46 = vector.shape_cast %45 : vector<1x16x16x8xf32> to vector<256x8xf32>
    %c6 = arith.constant 6 : index
    %c0_72 = arith.constant 0 : index
    %c0_73 = arith.constant 0 : index
    %47 = vector.load %arg2[%c6, %c0_72, %c0_73] : memref<9x8x8xf32, #tpu.memory_space<vmem>>, vector<1x8x8xf32>
    %48 = vector.shape_cast %47 : vector<1x8x8xf32> to vector<8x8xf32>
    %cst_74 = arith.constant dense<0.000000e+00> : vector<256x8xf32>
    %49 = tpu.matmul %46, %48, %cst_74 {dimension_numbers = #tpu.dot_dimension_numbers<[1], [0], [0], [1], [0, 0, 1, 1], [], []>} : vector<256x8xf32>, vector<8x8xf32>, vector<256x8xf32> -> vector<256x8xf32>
    %50 = arith.addf %44, %49 : vector<256x8xf32>
    %c0_75 = arith.constant 0 : index
    %c2_76 = arith.constant 2 : index
    %c1_77 = arith.constant 1 : index
    %c0_78 = arith.constant 0 : index
    %51 = vector.load %arg5[%c0_75, %c2_76, %c1_77, %c0_78] : memref<1x18x18x8xf32, #tpu.memory_space<vmem>>, vector<1x16x16x8xf32>
    %52 = vector.shape_cast %51 : vector<1x16x16x8xf32> to vector<256x8xf32>
    %c7 = arith.constant 7 : index
    %c0_79 = arith.constant 0 : index
    %c0_80 = arith.constant 0 : index
    %53 = vector.load %arg2[%c7, %c0_79, %c0_80] : memref<9x8x8xf32, #tpu.memory_space<vmem>>, vector<1x8x8xf32>
    %54 = vector.shape_cast %53 : vector<1x8x8xf32> to vector<8x8xf32>
    %cst_81 = arith.constant dense<0.000000e+00> : vector<256x8xf32>
    %55 = tpu.matmul %52, %54, %cst_81 {dimension_numbers = #tpu.dot_dimension_numbers<[1], [0], [0], [1], [0, 0, 1, 1], [], []>} : vector<256x8xf32>, vector<8x8xf32>, vector<256x8xf32> -> vector<256x8xf32>
    %56 = arith.addf %50, %55 : vector<256x8xf32>
    %c0_82 = arith.constant 0 : index
    %c2_83 = arith.constant 2 : index
    %c2_84 = arith.constant 2 : index
    %c0_85 = arith.constant 0 : index
    %57 = vector.load %arg5[%c0_82, %c2_83, %c2_84, %c0_85] : memref<1x18x18x8xf32, #tpu.memory_space<vmem>>, vector<1x16x16x8xf32>
    %58 = vector.shape_cast %57 : vector<1x16x16x8xf32> to vector<256x8xf32>
    %c8 = arith.constant 8 : index
    %c0_86 = arith.constant 0 : index
    %c0_87 = arith.constant 0 : index
    %59 = vector.load %arg2[%c8, %c0_86, %c0_87] : memref<9x8x8xf32, #tpu.memory_space<vmem>>, vector<1x8x8xf32>
    %60 = vector.shape_cast %59 : vector<1x8x8xf32> to vector<8x8xf32>
    %cst_88 = arith.constant dense<0.000000e+00> : vector<256x8xf32>
    %61 = tpu.matmul %58, %60, %cst_88 {dimension_numbers = #tpu.dot_dimension_numbers<[1], [0], [0], [1], [0, 0, 1, 1], [], []>} : vector<256x8xf32>, vector<8x8xf32>, vector<256x8xf32> -> vector<256x8xf32>
    %62 = arith.addf %56, %61 : vector<256x8xf32>
    %cst_89 = arith.constant dense<0.000000e+00> : vector<8xf32>
    %63 = vector.multi_reduction <add>, %62, %cst_89 [0] : vector<256x8xf32> to vector<8xf32>
    %64 = vector.shape_cast %63 : vector<8xf32> to vector<1x8xf32>
    %cst_90 = arith.constant 3.906250e-03 : f32
    %65 = vector.broadcast %cst_90 : f32 to vector<1x8xf32>
    %66 = arith.mulf %64, %65 : vector<1x8xf32>
    %67 = vector.broadcast %66 : vector<1x8xf32> to vector<256x8xf32>
    %68 = arith.subf %62, %67 : vector<256x8xf32>
    %c0_91 = arith.constant 0 : index
    %c0_92 = arith.constant 0 : index
    %c0_93 = arith.constant 0 : index
    %69 = vector.load %arg4[%c0_91, %c0_92, %c0_93] : memref<1x2x8xf32, #tpu.memory_space<vmem>>, vector<1x1x8xf32>
    %70 = vector.shape_cast %69 : vector<1x1x8xf32> to vector<1x8xf32>
    %71 = vector.shape_cast %64 : vector<1x8xf32> to vector<1x1x8xf32>
    tpu.vector_store %arg4[%c0_91, %c0_92, %c0_93], %71 {strides = array<i32>} : memref<1x2x8xf32, #tpu.memory_space<vmem>>, vector<1x1x8xf32>,
    %72 = arith.mulf %68, %68 : vector<256x8xf32>
    %cst_94 = arith.constant dense<0.000000e+00> : vector<8xf32>
    %73 = vector.multi_reduction <add>, %72, %cst_94 [0] : vector<256x8xf32> to vector<8xf32>
    %74 = vector.shape_cast %73 : vector<8xf32> to vector<1x8xf32>
    %c0_95 = arith.constant 0 : index
    %c1_96 = arith.constant 1 : index
    %c0_97 = arith.constant 0 : index
    %75 = vector.load %arg4[%c0_95, %c1_96, %c0_97] : memref<1x2x8xf32, #tpu.memory_space<vmem>>, vector<1x1x8xf32>
    %76 = vector.shape_cast %75 : vector<1x1x8xf32> to vector<1x8xf32>
    %77 = vector.shape_cast %74 : vector<1x8xf32> to vector<1x1x8xf32>
    tpu.vector_store %arg4[%c0_95, %c1_96, %c0_97], %77 {strides = array<i32>} : memref<1x2x8xf32, #tpu.memory_space<vmem>>, vector<1x1x8xf32>,
    %78 = vector.shape_cast %62 : vector<256x8xf32> to vector<1x16x16x8xf32>
    %c0_98 = arith.constant 0 : index
    %c0_99 = arith.constant 0 : index
    %c0_100 = arith.constant 0 : index
    %c0_101 = arith.constant 0 : index
    %79 = vector.load %arg3[%c0_98, %c0_99, %c0_100, %c0_101] : memref<1x16x16x8xf32, #tpu.memory_space<vmem>>, vector<1x16x16x8xf32>
    tpu.vector_store %arg3[%c0_98, %c0_99, %c0_100, %c0_101], %78 {strides = array<i32>} : memref<1x16x16x8xf32, #tpu.memory_space<vmem>>, vector<1x16x16x8xf32>,
    return
  }
  func.func @transform_0(%arg0: i32) -> (i32, i32, i32, i32) {
    %c0_i32 = arith.constant 0 : i32
    %c0_i32_0 = arith.constant 0 : i32
    %c0_i32_1 = arith.constant 0 : i32
    %c0_i32_2 = arith.constant 0 : i32
    return %arg0, %c0_i32, %c0_i32_0, %c0_i32_1 : i32, i32, i32, i32
  }
  func.func @transform_1(%arg0: i32) -> (i32, i32, i32) {
    %c0_i32 = arith.constant 0 : i32
    %c0_i32_0 = arith.constant 0 : i32
    %c0_i32_1 = arith.constant 0 : i32
    %c0_i32_2 = arith.constant 0 : i32
    return %c0_i32, %c0_i32_0, %c0_i32_1 : i32, i32, i32
  }
  func.func @transform_2(%arg0: i32) -> (i32, i32, i32, i32) {
    %c0_i32 = arith.constant 0 : i32
    %c0_i32_0 = arith.constant 0 : i32
    %c0_i32_1 = arith.constant 0 : i32
    %c0_i32_2 = arith.constant 0 : i32
    return %arg0, %c0_i32, %c0_i32_0, %c0_i32_1 : i32, i32, i32, i32
  }
  func.func @transform_3(%arg0: i32) -> (i32, i32, i32) {
    %c0_i32 = arith.constant 0 : i32
    %c0_i32_0 = arith.constant 0 : i32
    %c0_i32_1 = arith.constant 0 : i32
    return %arg0, %c0_i32, %c0_i32_0 : i32, i32, i32
  }
}

module attributes {stable_mosaic.version = 11 : i64} {
  func.func @_bn_relu_conv2_stats_kernel(%arg0: i32, %arg1: memref<1x16x16x8xf32, #tpu.memory_space<vmem>>, %arg2: memref<9x8x8xf32, #tpu.memory_space<vmem>>, %arg3: memref<1x8xf32, #tpu.memory_space<vmem>>, %arg4: memref<1x8xf32, #tpu.memory_space<vmem>>, %arg5: memref<1x16x16x8xf32, #tpu.memory_space<vmem>>, %arg6: memref<1x2x8xf32, #tpu.memory_space<vmem>>, %arg7: memref<1x18x18x8xf32, #tpu.memory_space<vmem>>) attributes {dimension_semantics = [#tpu.dimension_semantics<parallel>], iteration_bounds = array<i64: 2>, scalar_prefetch = 0 : i64, scratch_operands = 1 : i64, tpu.core_type = #tpu.core_type<tc>, window_params = [{transform_indices = @transform_0, window_bounds = array<i64: 1, 16, 16, 8>}, {pipeline_mode = #tpu.pipeline_mode<synchronous>, transform_indices = @transform_1, window_bounds = array<i64: 9, 8, 8>}, {pipeline_mode = #tpu.pipeline_mode<synchronous>, transform_indices = @transform_2, window_bounds = array<i64: 1, 8>}, {pipeline_mode = #tpu.pipeline_mode<synchronous>, transform_indices = @transform_3, window_bounds = array<i64: 1, 8>}, {transform_indices = @transform_4, window_bounds = array<i64: 1, 16, 16, 8>}, {transform_indices = @transform_5, window_bounds = array<i64: 1, 2, 8>}]} {
    %c0 = arith.constant 0 : index
    %c0_0 = arith.constant 0 : index
    %0 = vector.load %arg3[%c0, %c0_0] : memref<1x8xf32, #tpu.memory_space<vmem>>, vector<1x8xf32>
    %1 = vector.shape_cast %0 : vector<1x8xf32> to vector<1x1x1x8xf32>
    %c0_1 = arith.constant 0 : index
    %c0_2 = arith.constant 0 : index
    %2 = vector.load %arg4[%c0_1, %c0_2] : memref<1x8xf32, #tpu.memory_space<vmem>>, vector<1x8xf32>
    %3 = vector.shape_cast %2 : vector<1x8xf32> to vector<1x1x1x8xf32>
    %c0_3 = arith.constant 0 : index
    %c0_4 = arith.constant 0 : index
    %c0_5 = arith.constant 0 : index
    %c0_6 = arith.constant 0 : index
    %4 = vector.load %arg1[%c0_3, %c0_4, %c0_5, %c0_6] : memref<1x16x16x8xf32, #tpu.memory_space<vmem>>, vector<1x16x16x8xf32>
    %5 = vector.broadcast %1 : vector<1x1x1x8xf32> to vector<1x16x16x8xf32>
    %6 = arith.mulf %4, %5 : vector<1x16x16x8xf32>
    %7 = vector.broadcast %3 : vector<1x1x1x8xf32> to vector<1x16x16x8xf32>
    %8 = arith.addf %6, %7 : vector<1x16x16x8xf32>
    %cst = arith.constant 0.000000e+00 : f32
    %9 = vector.broadcast %cst : f32 to vector<1x16x16x8xf32>
    %10 = arith.maximumf %8, %9 : vector<1x16x16x8xf32>
    %cst_7 = arith.constant 0.000000e+00 : f32
    %11 = vector.broadcast %cst_7 : f32 to vector<1x1x18x8xf32>
    %c0_8 = arith.constant 0 : index
    %c0_9 = arith.constant 0 : index
    %c0_10 = arith.constant 0 : index
    %c0_11 = arith.constant 0 : index
    %12 = vector.load %arg7[%c0_8, %c0_9, %c0_10, %c0_11] : memref<1x18x18x8xf32, #tpu.memory_space<vmem>>, vector<1x1x18x8xf32>
    tpu.vector_store %arg7[%c0_8, %c0_9, %c0_10, %c0_11], %11 {strides = array<i32>} : memref<1x18x18x8xf32, #tpu.memory_space<vmem>>, vector<1x1x18x8xf32>,
    %cst_12 = arith.constant 0.000000e+00 : f32
    %13 = vector.broadcast %cst_12 : f32 to vector<1x1x18x8xf32>
    %c0_13 = arith.constant 0 : index
    %c17 = arith.constant 17 : index
    %c0_14 = arith.constant 0 : index
    %c0_15 = arith.constant 0 : index
    %14 = vector.load %arg7[%c0_13, %c17, %c0_14, %c0_15] : memref<1x18x18x8xf32, #tpu.memory_space<vmem>>, vector<1x1x18x8xf32>
    tpu.vector_store %arg7[%c0_13, %c17, %c0_14, %c0_15], %13 {strides = array<i32>} : memref<1x18x18x8xf32, #tpu.memory_space<vmem>>, vector<1x1x18x8xf32>,
    %cst_16 = arith.constant 0.000000e+00 : f32
    %15 = vector.broadcast %cst_16 : f32 to vector<1x18x1x8xf32>
    %c0_17 = arith.constant 0 : index
    %c0_18 = arith.constant 0 : index
    %c0_19 = arith.constant 0 : index
    %c0_20 = arith.constant 0 : index
    %16 = vector.load %arg7[%c0_17, %c0_18, %c0_19, %c0_20] : memref<1x18x18x8xf32, #tpu.memory_space<vmem>>, vector<1x18x1x8xf32>
    tpu.vector_store %arg7[%c0_17, %c0_18, %c0_19, %c0_20], %15 {strides = array<i32>} : memref<1x18x18x8xf32, #tpu.memory_space<vmem>>, vector<1x18x1x8xf32>,
    %cst_21 = arith.constant 0.000000e+00 : f32
    %17 = vector.broadcast %cst_21 : f32 to vector<1x18x1x8xf32>
    %c0_22 = arith.constant 0 : index
    %c0_23 = arith.constant 0 : index
    %c17_24 = arith.constant 17 : index
    %c0_25 = arith.constant 0 : index
    %18 = vector.load %arg7[%c0_22, %c0_23, %c17_24, %c0_25] : memref<1x18x18x8xf32, #tpu.memory_space<vmem>>, vector<1x18x1x8xf32>
    tpu.vector_store %arg7[%c0_22, %c0_23, %c17_24, %c0_25], %17 {strides = array<i32>} : memref<1x18x18x8xf32, #tpu.memory_space<vmem>>, vector<1x18x1x8xf32>,
    %c0_26 = arith.constant 0 : index
    %c1 = arith.constant 1 : index
    %c1_27 = arith.constant 1 : index
    %c0_28 = arith.constant 0 : index
    %19 = vector.load %arg7[%c0_26, %c1, %c1_27, %c0_28] : memref<1x18x18x8xf32, #tpu.memory_space<vmem>>, vector<1x16x16x8xf32>
    tpu.vector_store %arg7[%c0_26, %c1, %c1_27, %c0_28], %10 {strides = array<i32>} : memref<1x18x18x8xf32, #tpu.memory_space<vmem>>, vector<1x16x16x8xf32>,
    %c0_29 = arith.constant 0 : index
    %c0_30 = arith.constant 0 : index
    %c0_31 = arith.constant 0 : index
    %c0_32 = arith.constant 0 : index
    %20 = vector.load %arg7[%c0_29, %c0_30, %c0_31, %c0_32] : memref<1x18x18x8xf32, #tpu.memory_space<vmem>>, vector<1x16x16x8xf32>
    %21 = vector.shape_cast %20 : vector<1x16x16x8xf32> to vector<256x8xf32>
    %c0_33 = arith.constant 0 : index
    %c0_34 = arith.constant 0 : index
    %c0_35 = arith.constant 0 : index
    %22 = vector.load %arg2[%c0_33, %c0_34, %c0_35] : memref<9x8x8xf32, #tpu.memory_space<vmem>>, vector<1x8x8xf32>
    %23 = vector.shape_cast %22 : vector<1x8x8xf32> to vector<8x8xf32>
    %cst_36 = arith.constant dense<0.000000e+00> : vector<256x8xf32>
    %24 = tpu.matmul %21, %23, %cst_36 {dimension_numbers = #tpu.dot_dimension_numbers<[1], [0], [0], [1], [0, 0, 1, 1], [], []>} : vector<256x8xf32>, vector<8x8xf32>, vector<256x8xf32> -> vector<256x8xf32>
    %c0_37 = arith.constant 0 : index
    %c0_38 = arith.constant 0 : index
    %c1_39 = arith.constant 1 : index
    %c0_40 = arith.constant 0 : index
    %25 = vector.load %arg7[%c0_37, %c0_38, %c1_39, %c0_40] : memref<1x18x18x8xf32, #tpu.memory_space<vmem>>, vector<1x16x16x8xf32>
    %26 = vector.shape_cast %25 : vector<1x16x16x8xf32> to vector<256x8xf32>
    %c1_41 = arith.constant 1 : index
    %c0_42 = arith.constant 0 : index
    %c0_43 = arith.constant 0 : index
    %27 = vector.load %arg2[%c1_41, %c0_42, %c0_43] : memref<9x8x8xf32, #tpu.memory_space<vmem>>, vector<1x8x8xf32>
    %28 = vector.shape_cast %27 : vector<1x8x8xf32> to vector<8x8xf32>
    %cst_44 = arith.constant dense<0.000000e+00> : vector<256x8xf32>
    %29 = tpu.matmul %26, %28, %cst_44 {dimension_numbers = #tpu.dot_dimension_numbers<[1], [0], [0], [1], [0, 0, 1, 1], [], []>} : vector<256x8xf32>, vector<8x8xf32>, vector<256x8xf32> -> vector<256x8xf32>
    %30 = arith.addf %24, %29 : vector<256x8xf32>
    %c0_45 = arith.constant 0 : index
    %c0_46 = arith.constant 0 : index
    %c2 = arith.constant 2 : index
    %c0_47 = arith.constant 0 : index
    %31 = vector.load %arg7[%c0_45, %c0_46, %c2, %c0_47] : memref<1x18x18x8xf32, #tpu.memory_space<vmem>>, vector<1x16x16x8xf32>
    %32 = vector.shape_cast %31 : vector<1x16x16x8xf32> to vector<256x8xf32>
    %c2_48 = arith.constant 2 : index
    %c0_49 = arith.constant 0 : index
    %c0_50 = arith.constant 0 : index
    %33 = vector.load %arg2[%c2_48, %c0_49, %c0_50] : memref<9x8x8xf32, #tpu.memory_space<vmem>>, vector<1x8x8xf32>
    %34 = vector.shape_cast %33 : vector<1x8x8xf32> to vector<8x8xf32>
    %cst_51 = arith.constant dense<0.000000e+00> : vector<256x8xf32>
    %35 = tpu.matmul %32, %34, %cst_51 {dimension_numbers = #tpu.dot_dimension_numbers<[1], [0], [0], [1], [0, 0, 1, 1], [], []>} : vector<256x8xf32>, vector<8x8xf32>, vector<256x8xf32> -> vector<256x8xf32>
    %36 = arith.addf %30, %35 : vector<256x8xf32>
    %c0_52 = arith.constant 0 : index
    %c1_53 = arith.constant 1 : index
    %c0_54 = arith.constant 0 : index
    %c0_55 = arith.constant 0 : index
    %37 = vector.load %arg7[%c0_52, %c1_53, %c0_54, %c0_55] : memref<1x18x18x8xf32, #tpu.memory_space<vmem>>, vector<1x16x16x8xf32>
    %38 = vector.shape_cast %37 : vector<1x16x16x8xf32> to vector<256x8xf32>
    %c3 = arith.constant 3 : index
    %c0_56 = arith.constant 0 : index
    %c0_57 = arith.constant 0 : index
    %39 = vector.load %arg2[%c3, %c0_56, %c0_57] : memref<9x8x8xf32, #tpu.memory_space<vmem>>, vector<1x8x8xf32>
    %40 = vector.shape_cast %39 : vector<1x8x8xf32> to vector<8x8xf32>
    %cst_58 = arith.constant dense<0.000000e+00> : vector<256x8xf32>
    %41 = tpu.matmul %38, %40, %cst_58 {dimension_numbers = #tpu.dot_dimension_numbers<[1], [0], [0], [1], [0, 0, 1, 1], [], []>} : vector<256x8xf32>, vector<8x8xf32>, vector<256x8xf32> -> vector<256x8xf32>
    %42 = arith.addf %36, %41 : vector<256x8xf32>
    %c0_59 = arith.constant 0 : index
    %c1_60 = arith.constant 1 : index
    %c1_61 = arith.constant 1 : index
    %c0_62 = arith.constant 0 : index
    %43 = vector.load %arg7[%c0_59, %c1_60, %c1_61, %c0_62] : memref<1x18x18x8xf32, #tpu.memory_space<vmem>>, vector<1x16x16x8xf32>
    %44 = vector.shape_cast %43 : vector<1x16x16x8xf32> to vector<256x8xf32>
    %c4 = arith.constant 4 : index
    %c0_63 = arith.constant 0 : index
    %c0_64 = arith.constant 0 : index
    %45 = vector.load %arg2[%c4, %c0_63, %c0_64] : memref<9x8x8xf32, #tpu.memory_space<vmem>>, vector<1x8x8xf32>
    %46 = vector.shape_cast %45 : vector<1x8x8xf32> to vector<8x8xf32>
    %cst_65 = arith.constant dense<0.000000e+00> : vector<256x8xf32>
    %47 = tpu.matmul %44, %46, %cst_65 {dimension_numbers = #tpu.dot_dimension_numbers<[1], [0], [0], [1], [0, 0, 1, 1], [], []>} : vector<256x8xf32>, vector<8x8xf32>, vector<256x8xf32> -> vector<256x8xf32>
    %48 = arith.addf %42, %47 : vector<256x8xf32>
    %c0_66 = arith.constant 0 : index
    %c1_67 = arith.constant 1 : index
    %c2_68 = arith.constant 2 : index
    %c0_69 = arith.constant 0 : index
    %49 = vector.load %arg7[%c0_66, %c1_67, %c2_68, %c0_69] : memref<1x18x18x8xf32, #tpu.memory_space<vmem>>, vector<1x16x16x8xf32>
    %50 = vector.shape_cast %49 : vector<1x16x16x8xf32> to vector<256x8xf32>
    %c5 = arith.constant 5 : index
    %c0_70 = arith.constant 0 : index
    %c0_71 = arith.constant 0 : index
    %51 = vector.load %arg2[%c5, %c0_70, %c0_71] : memref<9x8x8xf32, #tpu.memory_space<vmem>>, vector<1x8x8xf32>
    %52 = vector.shape_cast %51 : vector<1x8x8xf32> to vector<8x8xf32>
    %cst_72 = arith.constant dense<0.000000e+00> : vector<256x8xf32>
    %53 = tpu.matmul %50, %52, %cst_72 {dimension_numbers = #tpu.dot_dimension_numbers<[1], [0], [0], [1], [0, 0, 1, 1], [], []>} : vector<256x8xf32>, vector<8x8xf32>, vector<256x8xf32> -> vector<256x8xf32>
    %54 = arith.addf %48, %53 : vector<256x8xf32>
    %c0_73 = arith.constant 0 : index
    %c2_74 = arith.constant 2 : index
    %c0_75 = arith.constant 0 : index
    %c0_76 = arith.constant 0 : index
    %55 = vector.load %arg7[%c0_73, %c2_74, %c0_75, %c0_76] : memref<1x18x18x8xf32, #tpu.memory_space<vmem>>, vector<1x16x16x8xf32>
    %56 = vector.shape_cast %55 : vector<1x16x16x8xf32> to vector<256x8xf32>
    %c6 = arith.constant 6 : index
    %c0_77 = arith.constant 0 : index
    %c0_78 = arith.constant 0 : index
    %57 = vector.load %arg2[%c6, %c0_77, %c0_78] : memref<9x8x8xf32, #tpu.memory_space<vmem>>, vector<1x8x8xf32>
    %58 = vector.shape_cast %57 : vector<1x8x8xf32> to vector<8x8xf32>
    %cst_79 = arith.constant dense<0.000000e+00> : vector<256x8xf32>
    %59 = tpu.matmul %56, %58, %cst_79 {dimension_numbers = #tpu.dot_dimension_numbers<[1], [0], [0], [1], [0, 0, 1, 1], [], []>} : vector<256x8xf32>, vector<8x8xf32>, vector<256x8xf32> -> vector<256x8xf32>
    %60 = arith.addf %54, %59 : vector<256x8xf32>
    %c0_80 = arith.constant 0 : index
    %c2_81 = arith.constant 2 : index
    %c1_82 = arith.constant 1 : index
    %c0_83 = arith.constant 0 : index
    %61 = vector.load %arg7[%c0_80, %c2_81, %c1_82, %c0_83] : memref<1x18x18x8xf32, #tpu.memory_space<vmem>>, vector<1x16x16x8xf32>
    %62 = vector.shape_cast %61 : vector<1x16x16x8xf32> to vector<256x8xf32>
    %c7 = arith.constant 7 : index
    %c0_84 = arith.constant 0 : index
    %c0_85 = arith.constant 0 : index
    %63 = vector.load %arg2[%c7, %c0_84, %c0_85] : memref<9x8x8xf32, #tpu.memory_space<vmem>>, vector<1x8x8xf32>
    %64 = vector.shape_cast %63 : vector<1x8x8xf32> to vector<8x8xf32>
    %cst_86 = arith.constant dense<0.000000e+00> : vector<256x8xf32>
    %65 = tpu.matmul %62, %64, %cst_86 {dimension_numbers = #tpu.dot_dimension_numbers<[1], [0], [0], [1], [0, 0, 1, 1], [], []>} : vector<256x8xf32>, vector<8x8xf32>, vector<256x8xf32> -> vector<256x8xf32>
    %66 = arith.addf %60, %65 : vector<256x8xf32>
    %c0_87 = arith.constant 0 : index
    %c2_88 = arith.constant 2 : index
    %c2_89 = arith.constant 2 : index
    %c0_90 = arith.constant 0 : index
    %67 = vector.load %arg7[%c0_87, %c2_88, %c2_89, %c0_90] : memref<1x18x18x8xf32, #tpu.memory_space<vmem>>, vector<1x16x16x8xf32>
    %68 = vector.shape_cast %67 : vector<1x16x16x8xf32> to vector<256x8xf32>
    %c8 = arith.constant 8 : index
    %c0_91 = arith.constant 0 : index
    %c0_92 = arith.constant 0 : index
    %69 = vector.load %arg2[%c8, %c0_91, %c0_92] : memref<9x8x8xf32, #tpu.memory_space<vmem>>, vector<1x8x8xf32>
    %70 = vector.shape_cast %69 : vector<1x8x8xf32> to vector<8x8xf32>
    %cst_93 = arith.constant dense<0.000000e+00> : vector<256x8xf32>
    %71 = tpu.matmul %68, %70, %cst_93 {dimension_numbers = #tpu.dot_dimension_numbers<[1], [0], [0], [1], [0, 0, 1, 1], [], []>} : vector<256x8xf32>, vector<8x8xf32>, vector<256x8xf32> -> vector<256x8xf32>
    %72 = arith.addf %66, %71 : vector<256x8xf32>
    %cst_94 = arith.constant dense<0.000000e+00> : vector<8xf32>
    %73 = vector.multi_reduction <add>, %72, %cst_94 [0] : vector<256x8xf32> to vector<8xf32>
    %74 = vector.shape_cast %73 : vector<8xf32> to vector<1x8xf32>
    %cst_95 = arith.constant 3.906250e-03 : f32
    %75 = vector.broadcast %cst_95 : f32 to vector<1x8xf32>
    %76 = arith.mulf %74, %75 : vector<1x8xf32>
    %77 = vector.broadcast %76 : vector<1x8xf32> to vector<256x8xf32>
    %78 = arith.subf %72, %77 : vector<256x8xf32>
    %c0_96 = arith.constant 0 : index
    %c0_97 = arith.constant 0 : index
    %c0_98 = arith.constant 0 : index
    %79 = vector.load %arg6[%c0_96, %c0_97, %c0_98] : memref<1x2x8xf32, #tpu.memory_space<vmem>>, vector<1x1x8xf32>
    %80 = vector.shape_cast %79 : vector<1x1x8xf32> to vector<1x8xf32>
    %81 = vector.shape_cast %74 : vector<1x8xf32> to vector<1x1x8xf32>
    tpu.vector_store %arg6[%c0_96, %c0_97, %c0_98], %81 {strides = array<i32>} : memref<1x2x8xf32, #tpu.memory_space<vmem>>, vector<1x1x8xf32>,
    %82 = arith.mulf %78, %78 : vector<256x8xf32>
    %cst_99 = arith.constant dense<0.000000e+00> : vector<8xf32>
    %83 = vector.multi_reduction <add>, %82, %cst_99 [0] : vector<256x8xf32> to vector<8xf32>
    %84 = vector.shape_cast %83 : vector<8xf32> to vector<1x8xf32>
    %c0_100 = arith.constant 0 : index
    %c1_101 = arith.constant 1 : index
    %c0_102 = arith.constant 0 : index
    %85 = vector.load %arg6[%c0_100, %c1_101, %c0_102] : memref<1x2x8xf32, #tpu.memory_space<vmem>>, vector<1x1x8xf32>
    %86 = vector.shape_cast %85 : vector<1x1x8xf32> to vector<1x8xf32>
    %87 = vector.shape_cast %84 : vector<1x8xf32> to vector<1x1x8xf32>
    tpu.vector_store %arg6[%c0_100, %c1_101, %c0_102], %87 {strides = array<i32>} : memref<1x2x8xf32, #tpu.memory_space<vmem>>, vector<1x1x8xf32>,
    %88 = vector.shape_cast %72 : vector<256x8xf32> to vector<1x16x16x8xf32>
    %c0_103 = arith.constant 0 : index
    %c0_104 = arith.constant 0 : index
    %c0_105 = arith.constant 0 : index
    %c0_106 = arith.constant 0 : index
    %89 = vector.load %arg5[%c0_103, %c0_104, %c0_105, %c0_106] : memref<1x16x16x8xf32, #tpu.memory_space<vmem>>, vector<1x16x16x8xf32>
    tpu.vector_store %arg5[%c0_103, %c0_104, %c0_105, %c0_106], %88 {strides = array<i32>} : memref<1x16x16x8xf32, #tpu.memory_space<vmem>>, vector<1x16x16x8xf32>,
    return
  }
  func.func @transform_0(%arg0: i32) -> (i32, i32, i32, i32) {
    %c0_i32 = arith.constant 0 : i32
    %c0_i32_0 = arith.constant 0 : i32
    %c0_i32_1 = arith.constant 0 : i32
    %c0_i32_2 = arith.constant 0 : i32
    return %arg0, %c0_i32, %c0_i32_0, %c0_i32_1 : i32, i32, i32, i32
  }
  func.func @transform_1(%arg0: i32) -> (i32, i32, i32) {
    %c0_i32 = arith.constant 0 : i32
    %c0_i32_0 = arith.constant 0 : i32
    %c0_i32_1 = arith.constant 0 : i32
    %c0_i32_2 = arith.constant 0 : i32
    return %c0_i32, %c0_i32_0, %c0_i32_1 : i32, i32, i32
  }
  func.func @transform_2(%arg0: i32) -> (i32, i32) {
    %c0_i32 = arith.constant 0 : i32
    %c0_i32_0 = arith.constant 0 : i32
    %c0_i32_1 = arith.constant 0 : i32
    return %c0_i32, %c0_i32_0 : i32, i32
  }
  func.func @transform_3(%arg0: i32) -> (i32, i32) {
    %c0_i32 = arith.constant 0 : i32
    %c0_i32_0 = arith.constant 0 : i32
    %c0_i32_1 = arith.constant 0 : i32
    return %c0_i32, %c0_i32_0 : i32, i32
  }
  func.func @transform_4(%arg0: i32) -> (i32, i32, i32, i32) {
    %c0_i32 = arith.constant 0 : i32
    %c0_i32_0 = arith.constant 0 : i32
    %c0_i32_1 = arith.constant 0 : i32
    %c0_i32_2 = arith.constant 0 : i32
    return %arg0, %c0_i32, %c0_i32_0, %c0_i32_1 : i32, i32, i32, i32
  }
  func.func @transform_5(%arg0: i32) -> (i32, i32, i32) {
    %c0_i32 = arith.constant 0 : i32
    %c0_i32_0 = arith.constant 0 : i32
    %c0_i32_1 = arith.constant 0 : i32
    return %arg0, %c0_i32, %c0_i32_0 : i32, i32, i32
  }
}

module attributes {stable_mosaic.version = 11 : i64} {
  func.func @_bn_add_relu_kernel(%arg0: i32, %arg1: memref<1x16x128xf32, #tpu.memory_space<vmem>>, %arg2: memref<1x16x128xf32, #tpu.memory_space<vmem>>, %arg3: memref<1x128xf32, #tpu.memory_space<vmem>>, %arg4: memref<1x128xf32, #tpu.memory_space<vmem>>, %arg5: memref<1x16x128xf32, #tpu.memory_space<vmem>>) attributes {dimension_semantics = [#tpu.dimension_semantics<parallel>], iteration_bounds = array<i64: 2>, scalar_prefetch = 0 : i64, scratch_operands = 0 : i64, tpu.core_type = #tpu.core_type<tc>, window_params = [{transform_indices = @transform_0, window_bounds = array<i64: 1, 16, 128>}, {transform_indices = @transform_1, window_bounds = array<i64: 1, 16, 128>}, {pipeline_mode = #tpu.pipeline_mode<synchronous>, transform_indices = @transform_2, window_bounds = array<i64: 1, 128>}, {pipeline_mode = #tpu.pipeline_mode<synchronous>, transform_indices = @transform_3, window_bounds = array<i64: 1, 128>}, {transform_indices = @transform_4, window_bounds = array<i64: 1, 16, 128>}]} {
    %c0 = arith.constant 0 : index
    %c0_0 = arith.constant 0 : index
    %0 = vector.load %arg3[%c0, %c0_0] : memref<1x128xf32, #tpu.memory_space<vmem>>, vector<1x128xf32>
    %1 = vector.shape_cast %0 : vector<1x128xf32> to vector<1x1x128xf32>
    %c0_1 = arith.constant 0 : index
    %c0_2 = arith.constant 0 : index
    %2 = vector.load %arg4[%c0_1, %c0_2] : memref<1x128xf32, #tpu.memory_space<vmem>>, vector<1x128xf32>
    %3 = vector.shape_cast %2 : vector<1x128xf32> to vector<1x1x128xf32>
    %c0_3 = arith.constant 0 : index
    %c0_4 = arith.constant 0 : index
    %c0_5 = arith.constant 0 : index
    %4 = vector.load %arg1[%c0_3, %c0_4, %c0_5] : memref<1x16x128xf32, #tpu.memory_space<vmem>>, vector<1x16x128xf32>
    %5 = vector.broadcast %1 : vector<1x1x128xf32> to vector<1x16x128xf32>
    %6 = arith.mulf %4, %5 : vector<1x16x128xf32>
    %7 = vector.broadcast %3 : vector<1x1x128xf32> to vector<1x16x128xf32>
    %8 = arith.addf %6, %7 : vector<1x16x128xf32>
    %c0_6 = arith.constant 0 : index
    %c0_7 = arith.constant 0 : index
    %c0_8 = arith.constant 0 : index
    %9 = vector.load %arg2[%c0_6, %c0_7, %c0_8] : memref<1x16x128xf32, #tpu.memory_space<vmem>>, vector<1x16x128xf32>
    %10 = arith.addf %8, %9 : vector<1x16x128xf32>
    %cst = arith.constant 0.000000e+00 : f32
    %11 = vector.broadcast %cst : f32 to vector<1x16x128xf32>
    %12 = arith.maximumf %10, %11 : vector<1x16x128xf32>
    %c0_9 = arith.constant 0 : index
    %c0_10 = arith.constant 0 : index
    %c0_11 = arith.constant 0 : index
    %13 = vector.load %arg5[%c0_9, %c0_10, %c0_11] : memref<1x16x128xf32, #tpu.memory_space<vmem>>, vector<1x16x128xf32>
    tpu.vector_store %arg5[%c0_9, %c0_10, %c0_11], %12 {strides = array<i32>} : memref<1x16x128xf32, #tpu.memory_space<vmem>>, vector<1x16x128xf32>,
    return
  }
  func.func @transform_0(%arg0: i32) -> (i32, i32, i32) {
    %c0_i32 = arith.constant 0 : i32
    %c0_i32_0 = arith.constant 0 : i32
    %c0_i32_1 = arith.constant 0 : i32
    return %arg0, %c0_i32, %c0_i32_0 : i32, i32, i32
  }
  func.func @transform_1(%arg0: i32) -> (i32, i32, i32) {
    %c0_i32 = arith.constant 0 : i32
    %c0_i32_0 = arith.constant 0 : i32
    %c0_i32_1 = arith.constant 0 : i32
    return %arg0, %c0_i32, %c0_i32_0 : i32, i32, i32
  }
  func.func @transform_2(%arg0: i32) -> (i32, i32) {
    %c0_i32 = arith.constant 0 : i32
    %c0_i32_0 = arith.constant 0 : i32
    %c0_i32_1 = arith.constant 0 : i32
    return %c0_i32, %c0_i32_0 : i32, i32
  }
  func.func @transform_3(%arg0: i32) -> (i32, i32) {
    %c0_i32 = arith.constant 0 : i32
    %c0_i32_0 = arith.constant 0 : i32
    %c0_i32_1 = arith.constant 0 : i32
    return %c0_i32, %c0_i32_0 : i32, i32
  }
  func.func @transform_4(%arg0: i32) -> (i32, i32, i32) {
    %c0_i32 = arith.constant 0 : i32
    %c0_i32_0 = arith.constant 0 : i32
    %c0_i32_1 = arith.constant 0 : i32
    return %arg0, %c0_i32, %c0_i32_0 : i32, i32, i32
  }
}

</mosaic_0001>

<llo_original>
// kernel: tile.13
$region0: #{tile.13}
  #allocation0 [shape = 's32[1]{0}', space=sflag, size = 0x4, scoped, tag = 'scoped memory for tile.13']
  %s0 = inlined_call_operand.vmem [shape: f32[8], index: 0, kind: input, shape index: {}]
  %s1 = inlined_call_operand.vmem [shape: f32[16,8], index: 1, kind: output, shape index: {}]
  // Predicated region
  $region2: #{tile.13} parent=0 // pred_check
    _
  $region3: #{tile.13} parent=0 // pred_check_branch
    %3 = sbr.rel (0) target = $region5
  $region4: #{tile.13} parent=0 // pred_region
    _
  $region5: #{tile.13} parent=0 // pred_fallthru
    _
  %v4 = vld [vmem:[%s0] ss:$0 sm:$0xff]
  %5 = vst [vmem:[%s1] sm:$0xff] %v4
  %s6 = scalar_lea.vmem %s1, 8
  %7 = vst [vmem:[%s6] sm:$0xff] %v4

// kernel: tile.14
$region0: #{tile.14}
  %s0 = inlined_call_operand.vmem [shape: f32[16,8], index: 0, kind: input, shape index: {}]
  %s1 = inlined_call_operand.vmem [shape: f32[1,128], index: 1, kind: output, shape index: {}]
  $region1: #{tile.14} parent=0
    #allocation0 [shape = 'u8[4096]{0}', space=vmem, size = 0x1000, scoped, tag = 'scoped mem for output reshape']
    %v2 = vld [vmem:[%s0] sm:$0x1]
    %vm3 = vcmask 64512
    %4 = vst.msk [vmem:[#allocation0] sm:$0x1] %vm3, %v2
    %s5 = scalar_lea.vmem %s0, 15
    %v6 = vld [vmem:[%s5] sm:$0x1]
    %7 = vrot.lane.b32.xlu0 %v6, 120
    %v8 = vpop.permute.xlu0 %7
    %vm9 = vcmask 1048512
    %10 = vst.msk [vmem:[#allocation0] sm:$0x1] %vm9, %v8
    %s11 = scalar_lea.vmem %s0, 14
    %v12 = vld [vmem:[%s11] sm:$0x1]
    %13 = vrot.lane.b32.xlu0 %v12, 112
    %v14 = vpop.permute.xlu0 %13
    %vm15 = vcmask 982912
    %16 = vst.msk [vmem:[#allocation0] sm:$0x1] %vm15, %v14
    %s17 = scalar_lea.vmem %s0, 13
    %v18 = vld [vmem:[%s17] sm:$0x1]
    %19 = vrot.lane.b32.xlu0 %v18, 104
    %v20 = vpop.permute.xlu0 %19
    %vm21 = vcmask 917312
    %22 = vst.msk [vmem:[#allocation0] sm:$0x1] %vm21, %v20
    %s23 = scalar_lea.vmem %s0, 12
    %v24 = vld [vmem:[%s23] sm:$0x1]
    %25 = vrot.lane.b32.xlu0 %v24, 96
    %v26 = vpop.permute.xlu0 %25
    %vm27 = vcmask 851712
    %28 = vst.msk [vmem:[#allocation0] sm:$0x1] %vm27, %v26
    %s29 = scalar_lea.vmem %s0, 11
    %v30 = vld [vmem:[%s29] sm:$0x1]
    %31 = vrot.lane.b32.xlu0 %v30, 88
    %v32 = vpop.permute.xlu0 %31
    %vm33 = vcmask 786112
    %34 = vst.msk [vmem:[#allocation0] sm:$0x1] %vm33, %v32
    %s35 = scalar_lea.vmem %s0, 10
    %v36 = vld [vmem:[%s35] sm:$0x1]
    %37 = vrot.lane.b32.xlu0 %v36, 80
    %v38 = vpop.permute.xlu0 %37
    %vm39 = vcmask 720512
    %40 = vst.msk [vmem:[#allocation0] sm:$0x1] %vm39, %v38
    %s41 = scalar_lea.vmem %s0, 9
    %v42 = vld [vmem:[%s41] sm:$0x1]
    %43 = vrot.lane.b32.xlu0 %v42, 72
    %v44 = vpop.permute.xlu0 %43
    %vm45 = vcmask 654912
    %46 = vst.msk [vmem:[#allocation0] sm:$0x1] %vm45, %v44
    %s47 = scalar_lea.vmem %s0, 8
    %v48 = vld [vmem:[%s47] sm:$0x1]
    %49 = vrot.lane.b32.xlu0 %v48, 64
    %v50 = vpop.permute.xlu0 %49
    %vm51 = vcmask 589312
    %52 = vst.msk [vmem:[#allocation0] sm:$0x1] %vm51, %v50
    %s53 = scalar_lea.vmem %s0, 7
    %v54 = vld [vmem:[%s53] sm:$0x1]
    %55 = vrot.lane.b32.xlu0 %v54, 56
    %v56 = vpop.permute.xlu0 %55
    %vm57 = vcmask 523712
    %58 = vst.msk [vmem:[#allocation0] sm:$0x1] %vm57, %v56
    %s59 = scalar_lea.vmem %s0, 6
    %v60 = vld [vmem:[%s59] sm:$0x1]
    %61 = vrot.lane.b32.xlu0 %v60, 48
    %v62 = vpop.permute.xlu0 %61
    %vm63 = vcmask 458112
    %64 = vst.msk [vmem:[#allocation0] sm:$0x1] %vm63, %v62
    %s65 = scalar_lea.vmem %s0, 5
    %v66 = vld [vmem:[%s65] sm:$0x1]
    %67 = vrot.lane.b32.xlu0 %v66, 40
    %v68 = vpop.permute.xlu0 %67
    %vm69 = vcmask 392512
    %70 = vst.msk [vmem:[#allocation0] sm:$0x1] %vm69, %v68
    %s71 = scalar_lea.vmem %s0, 4
    %v72 = vld [vmem:[%s71] sm:$0x1]
    %73 = vrot.lane.b32.xlu0 %v72, 32
    %v74 = vpop.permute.xlu0 %73
    %vm75 = vcmask 326912
    %76 = vst.msk [vmem:[#allocation0] sm:$0x1] %vm75, %v74
    %s77 = scalar_lea.vmem %s0, 3
    %v78 = vld [vmem:[%s77] sm:$0x1]
    %79 = vrot.lane.b32.xlu0 %v78, 24
    %v80 = vpop.permute.xlu0 %79
    %vm81 = vcmask 261312
    %82 = vst.msk [vmem:[#allocation0] sm:$0x1] %vm81, %v80
    %s83 = scalar_lea.vmem %s0, 2
    %v84 = vld [vmem:[%s83] sm:$0x1]
    %85 = vrot.lane.b32.xlu0 %v84, 16
    %v86 = vpop.permute.xlu0 %85
    %vm87 = vcmask 195712
    %88 = vst.msk [vmem:[#allocation0] sm:$0x1] %vm87, %v86
    %s89 = scalar_lea.vmem %s0, 1
    %v90 = vld [vmem:[%s89] sm:$0x1]
    %91 = vrot.lane.b32.xlu0 %v90, 8
    %v92 = vpop.permute.xlu0 %91
    %vm93 = vcmask 130112
    %94 = vst.msk [vmem:[#allocation0] sm:$0x1] %vm93, %v92
    %s96 = ssub.s32 2, 1
    %v97 = vld [vmem:[#allocation0] sm:%s96]
    %s99 = ssub.s32 2, 1
    %100 = vst [vmem:[%s1] sm:%s99] %v97

// kernel: basic_block_forward.5
$region0: #{basic_block_forward.5}
  #allocation0 [shape = 'u32[]', space=smem, size = 0x4, offset = 0x4, fixed_abs, tag = 'smem constant byte address 0x4 - core index']
  #allocation1 [shape = 'u32[72,128]{1,0:T(1,128)}', space=vmem, size = 0x9000, scoped, tag = 'internal scratch']
  %s0 = inlined_call_operand.vmem [shape: f32[2,16,128], index: 0, kind: input, shape index: {}, may-alias: {0,4}]
  %s1 = inlined_call_operand.vmem [shape: f32[2,16,128], index: 1, kind: input, shape index: {}]
  %s2 = inlined_call_operand.vmem [shape: f32[1,128], index: 2, kind: input, shape index: {}]
  %s3 = inlined_call_operand.vmem [shape: f32[1,128], index: 3, kind: input, shape index: {}]
  %s4 = inlined_call_operand.vmem [shape: f32[2,16,128], index: 4, kind: output, shape index: {}, may-alias: {0,4}]
  %s5 = sld [smem:[#allocation0]]
  $region49: #{basic_block_forward.5} parent=0
    _
  %s7 = ssub.s32 1, %s5
  %s8 = scalar_select 0, %s7, %s5
  loop: start=0, step=1, limit=4
  $region2: #{basic_block_forward.5} parent=0 // loop_pre_header
    _
  $region3: #{basic_block_forward.5} parent=0 // loop_header
    %s10 = sphi 0, %s14
    %p11 = scmp.ge.s32.totalorder %s10, 4
    %s20 = sphi 0, %s22
    %s23 = sphi 0, %s20
    %s24 = sphi 0, %s23
    %s40 = sphi 0, %s24
    %s46 = sphi 0, %s48
    %s49 = sphi 0, %s46
    %s50 = sphi 0, %s49
    %s66 = sphi 0, %s50
    %s70 = sphi 0, %s70
    %s72 = sphi 0, %s70
    %s73 = sphi 0, %s72
    %s87 = sphi 0, %s73
    %s91 = sphi 0, %s91
    %s93 = sphi 0, %s91
    %s94 = sphi 0, %s93
    %s108 = sphi 0, %s94
    %s114 = sphi 0, %s116
    %s117 = sphi 0, %s114
    %s118 = sphi 0, %s117
    %s134 = sphi 0, %s118
  $region4: #{basic_block_forward.5} parent=0 // loop_header_branch
    %13 = sbr.rel (%p11) target = $region8
  $region5: #{basic_block_forward.5} parent=0 // loop_body
    %s15 = ssub.s32 %s10, 1
    %s16 = ssub.s32 %s10, 2
    %s17 = sadd.s32 %s10, 1
    %s18 = ssub.s32 %s10, %s17
    %p19 = scmp.eq.s32.totalorder %s18, 0
    %s21 = sadd.s32 %s20, 1
    %s22 = scalar_select %p19, %s20, %s21
    %p25 = pneg %p19
    %p26 = scmp.eq.s32.totalorder %s10, 1
    %p27 = por %p25, %p26
    %p28 = scmp.ne.s32.totalorder %s20, %s23
    %p29 = scmp.eq.s32.totalorder %s10, 0
    %p30 = por %p28, %p29
    %p31 = scmp.ne.s32.totalorder %s20, %s23
    %p32 = scmp.eq.s32.totalorder %s15, 1
    %p33 = por %p31, %p32
    %p34 = scmp.ne.s32.totalorder %s23, %s24
    %p35 = scmp.eq.s32.totalorder %s15, 0
    %p36 = por %p34, %p35
    %p37 = scmp.ne.s32.totalorder %s23, %s24
    %p38 = scmp.eq.s32.totalorder %s16, 1
    %p39 = por %p37, %p38
    %p41 = scmp.ne.s32.totalorder %s24, %s40
    %p42 = scmp.eq.s32.totalorder %s16, 0
    %p43 = por %p41, %p42
    %s44 = ssub.s32 %s10, %s17
    %p45 = scmp.eq.s32.totalorder %s44, 0
    %s47 = sadd.s32 %s46, 1
    %s48 = scalar_select %p45, %s46, %s47
    %p51 = pneg %p45
    %p52 = scmp.eq.s32.totalorder %s10, 1
    %p53 = por %p51, %p52
    %p54 = scmp.ne.s32.totalorder %s46, %s49
    %p55 = scmp.eq.s32.totalorder %s10, 0
    %p56 = por %p54, %p55
    %p57 = scmp.ne.s32.totalorder %s46, %s49
    %p58 = scmp.eq.s32.totalorder %s15, 1
    %p59 = por %p57, %p58
    %p60 = scmp.ne.s32.totalorder %s49, %s50
    %p61 = scmp.eq.s32.totalorder %s15, 0
    %p62 = por %p60, %p61
    %p63 = scmp.ne.s32.totalorder %s49, %s50
    %p64 = scmp.eq.s32.totalorder %s16, 1
    %p65 = por %p63, %p64
    %p67 = scmp.ne.s32.totalorder %s50, %s66
    %p68 = scmp.eq.s32.totalorder %s16, 0
    %p69 = por %p67, %p68
    %s71 = sadd.s32 %s70, 1
    %p74 = scmp.eq.s32.totalorder %s10, 1
    %p75 = scmp.ne.s32.totalorder %s70, %s72
    %p76 = scmp.eq.s32.totalorder %s10, 0
    %p77 = por %p75, %p76
    %p78 = scmp.ne.s32.totalorder %s70, %s72
    %p79 = scmp.eq.s32.totalorder %s15, 1
    %p80 = por %p78, %p79
    %p81 = scmp.ne.s32.totalorder %s72, %s73
    %p82 = scmp.eq.s32.totalorder %s15, 0
    %p83 = por %p81, %p82
    %p84 = scmp.ne.s32.totalorder %s72, %s73
    %p85 = scmp.eq.s32.totalorder %s16, 1
    %p86 = por %p84, %p85
    %p88 = scmp.ne.s32.totalorder %s73, %s87
    %p89 = scmp.eq.s32.totalorder %s16, 0
    %p90 = por %p88, %p89
    %s92 = sadd.s32 %s91, 1
    %p95 = scmp.eq.s32.totalorder %s10, 1
    %p96 = scmp.ne.s32.totalorder %s91, %s93
    %p97 = scmp.eq.s32.totalorder %s10, 0
    %p98 = por %p96, %p97
    %p99 = scmp.ne.s32.totalorder %s91, %s93
    %p100 = scmp.eq.s32.totalorder %s15, 1
    %p101 = por %p99, %p100
    %p102 = scmp.ne.s32.totalorder %s93, %s94
    %p103 = scmp.eq.s32.totalorder %s15, 0
    %p104 = por %p102, %p103
    %p105 = scmp.ne.s32.totalorder %s93, %s94
    %p106 = scmp.eq.s32.totalorder %s16, 1
    %p107 = por %p105, %p106
    %p109 = scmp.ne.s32.totalorder %s94, %s108
    %p110 = scmp.eq.s32.totalorder %s16, 0
    %p111 = por %p109, %p110
    %s112 = ssub.s32 %s10, %s17
    %p113 = scmp.eq.s32.totalorder %s112, 0
    %s115 = sadd.s32 %s114, 1
    %s116 = scalar_select %p113, %s114, %s115
    %p119 = pneg %p113
    %p120 = scmp.eq.s32.totalorder %s10, 1
    %p121 = por %p119, %p120
    %p122 = scmp.ne.s32.totalorder %s114, %s117
    %p123 = scmp.eq.s32.totalorder %s10, 0
    %p124 = por %p122, %p123
    %p125 = scmp.ne.s32.totalorder %s114, %s117
    %p126 = scmp.eq.s32.totalorder %s15, 1
    %p127 = por %p125, %p126
    %p128 = scmp.ne.s32.totalorder %s117, %s118
    %p129 = scmp.eq.s32.totalorder %s15, 0
    %p130 = por %p128, %p129
    %p131 = scmp.ne.s32.totalorder %s117, %s118
    %p132 = scmp.eq.s32.totalorder %s16, 1
    %p133 = por %p131, %p132
    %p135 = scmp.ne.s32.totalorder %s118, %s134
    %p136 = scmp.eq.s32.totalorder %s16, 0
    %p137 = por %p135, %p136
    %p138 = scmp.le.s32.totalorder 1, %s10
    %p139 = scmp.lt.s32.totalorder %s10, 3
    %p140 = pnand %p138, %p139
    %p141 = pneg %p140
    // Predicated region
    $region9: #{basic_block_forward.5} parent=5 // pred_check
      _
    $region10: #{basic_block_forward.5} parent=5 // pred_check_branch
      %143 = sbr.rel (%p140) target = $region12
    $region11: #{basic_block_forward.5} parent=5 // pred_region
      %s144 = ssub.s32 %s10, 1
      // Predicated region
      $region13: #{basic_block_forward.5} parent=11 // pred_check
        %p145 = pneg %p83
      $region14: #{basic_block_forward.5} parent=11 // pred_check_branch
        %147 = sbr.rel (%p145) target = $region16
      $region15: #{basic_block_forward.5} parent=11 // pred_region
        _
      $region16: #{basic_block_forward.5} parent=11 // pred_fallthru
        _
      // Predicated region
      $region17: #{basic_block_forward.5} parent=11 // pred_check
        %p148 = pneg %p104
      $region18: #{basic_block_forward.5} parent=11 // pred_check_branch
        %150 = sbr.rel (%p148) target = $region20
      $region19: #{basic_block_forward.5} parent=11 // pred_region
        _
      $region20: #{basic_block_forward.5} parent=11 // pred_fallthru
        _
    $region12: #{basic_block_forward.5} parent=5 // pred_fallthru
      _
    %p151 = scmp.lt.s32.totalorder %s10, 2
    // Predicated region
    $region21: #{basic_block_forward.5} parent=5 // pred_check
      %p152 = pneg %p151
    $region22: #{basic_block_forward.5} parent=5 // pred_check_branch
      %154 = sbr.rel (%p152) target = $region24
    $region23: #{basic_block_forward.5} parent=5 // pred_region
      // Predicated region
      $region25: #{basic_block_forward.5} parent=23 // pred_check
        %p155 = pneg %p30
      $region26: #{basic_block_forward.5} parent=23 // pred_check_branch
        %157 = sbr.rel (%p155) target = $region28
      $region27: #{basic_block_forward.5} parent=23 // pred_region
        %p158 = scmp.lt.s32.totalorder %s10, 1
        %s159 = scalar_select %p158, %s10, 1
        %s160 = smul.addr %s159, 2
        %s161 = smul.addr %s160, 8
        %s162 = scalar_lea.vmem %s0, %s161
      $region28: #{basic_block_forward.5} parent=23 // pred_fallthru
        _
      // Predicated region
      $region29: #{basic_block_forward.5} parent=23 // pred_check
        %p163 = pneg %p56
      $region30: #{basic_block_forward.5} parent=23 // pred_check_branch
        %165 = sbr.rel (%p163) target = $region32
      $region31: #{basic_block_forward.5} parent=23 // pred_region
        %p166 = scmp.lt.s32.totalorder %s10, 1
        %s167 = scalar_select %p166, %s10, 1
        %s168 = smul.addr %s167, 2
        %s169 = smul.addr %s168, 8
        %s170 = scalar_lea.vmem %s1, %s169
      $region32: #{basic_block_forward.5} parent=23 // pred_fallthru
        _
    $region24: #{basic_block_forward.5} parent=5 // pred_fallthru
      _
    %p171 = scmp.le.s32.totalorder 1, %s10
    %p172 = scmp.lt.s32.totalorder %s10, 3
    %p173 = pnand %p171, %p172
    %p174 = pneg %p173
    // Predicated region
    $region33: #{basic_block_forward.5} parent=5 // pred_check
      _
    $region34: #{basic_block_forward.5} parent=5 // pred_check_branch
      %176 = sbr.rel (%p173) target = $region36
    $region35: #{basic_block_forward.5} parent=5 // pred_region
      %s177 = ssub.s32 %s10, 1
      %p178 = scmp.lt.s32.totalorder %s15, 1
      %s179 = scalar_select %p178, %s15, 1
      %s180 = smul.addr %s179, 2
      %s181 = smul.addr %s180, 8
      %s182 = scalar_lea.vmem %s0, %s181
      %p183 = pneg %p36
      %p184 = pneg %p33
      %p185 = scmp.lt.s32.totalorder %s15, 1
      %s186 = scalar_select %p185, %s15, 1
      %s187 = smul.addr %s186, 2
      %s188 = smul.addr %s187, 8
      %s189 = scalar_lea.vmem %s1, %s188
      %p190 = pneg %p62
      %p191 = pneg %p59
      %p192 = pneg %p83
      %p193 = pneg %p80
      %p194 = pneg %p104
      %p195 = pneg %p101
      %p196 = pneg %p130
      %p197 = pneg %p127
      %p198 = scmp.lt.s32.totalorder %s15, 1
      %s199 = scalar_select %p198, %s15, 1
      %s200 = smul.addr %s199, 2
      %s201 = smul.addr %s200, 8
      %s202 = scalar_lea.vmem %s4, %s201
      %p203 = scmp.lt.s32.totalorder %s15, 1
      %s204 = scalar_select %p203, %s15, 1
      %s205 = smul.addr %s204, 2
      %s206 = smul.addr %s205, 8
      %s207 = scalar_lea.vmem %s0, %s206
      %p208 = scmp.lt.s32.totalorder %s15, 1
      %s209 = scalar_select %p208, %s15, 1
      %s210 = smul.addr %s209, 2
      %s211 = smul.addr %s210, 8
      %s212 = scalar_lea.vmem %s1, %s211
      %p213 = scmp.lt.s32.totalorder %s15, 1
      %s214 = scalar_select %p213, %s15, 1
      %s215 = smul.addr %s214, 2
      %s216 = smul.addr %s215, 8
      %s217 = scalar_lea.vmem %s4, %s216
      %v218 = vld [vmem:[%s2] sm:$0x1]
      %v219 = vld [vmem:[%s3] sm:$0x1]
      %v220 = vld [vmem:[%s207] sm:$0xff]
      %v221 = vld [vmem:[%s207 + $0x8] sm:$0xff]
      %v223 = vperm.slane %v218, 0
      %v225 = vmul.f32 %v220, %v223
      %v226 = vmul.f32 %v221, %v223
      %v228 = vperm.slane %v219, 0
      %v230 = vadd.f32 %v225, %v228
      %v231 = vadd.f32 %v226, %v228
      %v232 = vld [vmem:[%s212] sm:$0xff]
      %v233 = vld [vmem:[%s212 + $0x8] sm:$0xff]
      %v234 = vadd.f32 %v230, %v232
      %v235 = vadd.f32 %v231, %v233
      %v236 = vmax.f32 %v234, 0.0
      %v237 = vmax.f32 %v235, 0.0
      %238 = vst [vmem:[%s217] sm:$0xff] %v236
      %239 = vst [vmem:[%s217 + $0x8] sm:$0xff] %v237
      %p240 = scmp.lt.s32.totalorder %s15, 1
      %s241 = scalar_select %p240, %s15, 1
      %s242 = smul.addr %s241, 2
      %s243 = smul.addr %s242, 8
      %s244 = scalar_lea.vmem %s4, %s243
      // Predicated region
      $region37: #{basic_block_forward.5} parent=35 // pred_check
        %p245 = pneg %p127
      $region38: #{basic_block_forward.5} parent=35 // pred_check_branch
        %247 = sbr.rel (%p245) target = $region40
      $region39: #{basic_block_forward.5} parent=35 // pred_region
        _
      $region40: #{basic_block_forward.5} parent=35 // pred_fallthru
        _
    $region36: #{basic_block_forward.5} parent=5 // pred_fallthru
      _
    %p248 = scmp.le.s32.totalorder 2, %s10
    // Predicated region
    $region41: #{basic_block_forward.5} parent=5 // pred_check
      %p249 = pneg %p248
    $region42: #{basic_block_forward.5} parent=5 // pred_check_branch
      %251 = sbr.rel (%p249) target = $region44
    $region43: #{basic_block_forward.5} parent=5 // pred_region
      %s252 = ssub.s32 %s10, 2
      // Predicated region
      $region45: #{basic_block_forward.5} parent=43 // pred_check
        %p253 = pneg %p133
      $region46: #{basic_block_forward.5} parent=43 // pred_check_branch
        %255 = sbr.rel (%p253) target = $region48
      $region47: #{basic_block_forward.5} parent=43 // pred_region
        %p256 = scmp.lt.s32.totalorder %s16, 1
        %s257 = scalar_select %p256, %s16, 1
        %s258 = smul.addr %s257, 2
        %s259 = smul.addr %s258, 8
        %s260 = scalar_lea.vmem %s4, %s259
      $region48: #{basic_block_forward.5} parent=43 // pred_fallthru
        _
    $region44: #{basic_block_forward.5} parent=5 // pred_fallthru
      _
  $region6: #{basic_block_forward.5} parent=0 // loop_footer
    %s14 = sadd.s32 1, %s10
  $region7: #{basic_block_forward.5} parent=0 // loop_footer_branch
    %9 = sbr.rel target = $region3
  $region8: #{basic_block_forward.5} parent=0 // loop_exit
    _

// kernel: basic_block_forward.4
$region0: #{basic_block_forward.4}
  #allocation0 [shape = 'u32[]', space=smem, size = 0x4, offset = 0x4, fixed_abs, tag = 'smem constant byte address 0x4 - core index']
  #allocation1 [shape = 'u32[72,128]{1,0:T(1,128)}', space=vmem, size = 0x9000, scoped, tag = 'internal scratch']
  #allocation2 [shape = 'f32[1,18,18,8]{3,2,1,0:T(8,128)}', space=vmem, size = 0x36000, scoped, tag = 'scratch operand']
  %s0 = inlined_call_operand.vmem [shape: f32[2,16,16,8], index: 0, kind: input, shape index: {}]
  %s1 = inlined_call_operand.vmem [shape: f32[9,8,8], index: 1, kind: input, shape index: {}]
  %s2 = inlined_call_operand.vmem [shape: f32[1,8], index: 2, kind: input, shape index: {}]
  %s3 = inlined_call_operand.vmem [shape: f32[1,8], index: 3, kind: input, shape index: {}]
  %s4 = inlined_call_operand.vmem [shape: f32[2,16,16,8], index: 4, kind: output, shape index: {0}]
  %s5 = inlined_call_operand.vmem [shape: f32[2,2,8], index: 5, kind: output, shape index: {1}]
  %6 = xla_tuple %s4, %s5
  %s7 = sld [smem:[#allocation0]]
  $region57: #{basic_block_forward.4} parent=0
    _
  %s9 = ssub.s32 1, %s7
  %s10 = scalar_select 0, %s9, %s7
  loop: start=0, step=1, limit=4
  $region2: #{basic_block_forward.4} parent=0 // loop_pre_header
    _
  $region3: #{basic_block_forward.4} parent=0 // loop_header
    %s12 = sphi 0, %s16
    %p13 = scmp.ge.s32.totalorder %s12, 4
    %s22 = sphi 0, %s24
    %s25 = sphi 0, %s22
    %s26 = sphi 0, %s25
    %s42 = sphi 0, %s26
    %s46 = sphi 0, %s46
    %s48 = sphi 0, %s46
    %s49 = sphi 0, %s48
    %s63 = sphi 0, %s49
    %s67 = sphi 0, %s67
    %s69 = sphi 0, %s67
    %s70 = sphi 0, %s69
    %s84 = sphi 0, %s70
    %s88 = sphi 0, %s88
    %s90 = sphi 0, %s88
    %s91 = sphi 0, %s90
    %s105 = sphi 0, %s91
    %s111 = sphi 0, %s113
    %s114 = sphi 0, %s111
    %s115 = sphi 0, %s114
    %s131 = sphi 0, %s115
    %s137 = sphi 0, %s139
    %s140 = sphi 0, %s137
    %s141 = sphi 0, %s140
    %s157 = sphi 0, %s141
  $region4: #{basic_block_forward.4} parent=0 // loop_header_branch
    %15 = sbr.rel (%p13) target = $region8
  $region5: #{basic_block_forward.4} parent=0 // loop_body
    %s17 = ssub.s32 %s12, 1
    %s18 = ssub.s32 %s12, 2
    %s19 = sadd.s32 %s12, 1
    %s20 = ssub.s32 %s12, %s19
    %p21 = scmp.eq.s32.totalorder %s20, 0
    %s23 = sadd.s32 %s22, 1
    %s24 = scalar_select %p21, %s22, %s23
    %p27 = pneg %p21
    %p28 = scmp.eq.s32.totalorder %s12, 1
    %p29 = por %p27, %p28
    %p30 = scmp.ne.s32.totalorder %s22, %s25
    %p31 = scmp.eq.s32.totalorder %s12, 0
    %p32 = por %p30, %p31
    %p33 = scmp.ne.s32.totalorder %s22, %s25
    %p34 = scmp.eq.s32.totalorder %s17, 1
    %p35 = por %p33, %p34
    %p36 = scmp.ne.s32.totalorder %s25, %s26
    %p37 = scmp.eq.s32.totalorder %s17, 0
    %p38 = por %p36, %p37
    %p39 = scmp.ne.s32.totalorder %s25, %s26
    %p40 = scmp.eq.s32.totalorder %s18, 1
    %p41 = por %p39, %p40
    %p43 = scmp.ne.s32.totalorder %s26, %s42
    %p44 = scmp.eq.s32.totalorder %s18, 0
    %p45 = por %p43, %p44
    %s47 = sadd.s32 %s46, 1
    %p50 = scmp.eq.s32.totalorder %s12, 1
    %p51 = scmp.ne.s32.totalorder %s46, %s48
    %p52 = scmp.eq.s32.totalorder %s12, 0
    %p53 = por %p51, %p52
    %p54 = scmp.ne.s32.totalorder %s46, %s48
    %p55 = scmp.eq.s32.totalorder %s17, 1
    %p56 = por %p54, %p55
    %p57 = scmp.ne.s32.totalorder %s48, %s49
    %p58 = scmp.eq.s32.totalorder %s17, 0
    %p59 = por %p57, %p58
    %p60 = scmp.ne.s32.totalorder %s48, %s49
    %p61 = scmp.eq.s32.totalorder %s18, 1
    %p62 = por %p60, %p61
    %p64 = scmp.ne.s32.totalorder %s49, %s63
    %p65 = scmp.eq.s32.totalorder %s18, 0
    %p66 = por %p64, %p65
    %s68 = sadd.s32 %s67, 1
    %p71 = scmp.eq.s32.totalorder %s12, 1
    %p72 = scmp.ne.s32.totalorder %s67, %s69
    %p73 = scmp.eq.s32.totalorder %s12, 0
    %p74 = por %p72, %p73
    %p75 = scmp.ne.s32.totalorder %s67, %s69
    %p76 = scmp.eq.s32.totalorder %s17, 1
    %p77 = por %p75, %p76
    %p78 = scmp.ne.s32.totalorder %s69, %s70
    %p79 = scmp.eq.s32.totalorder %s17, 0
    %p80 = por %p78, %p79
    %p81 = scmp.ne.s32.totalorder %s69, %s70
    %p82 = scmp.eq.s32.totalorder %s18, 1
    %p83 = por %p81, %p82
    %p85 = scmp.ne.s32.totalorder %s70, %s84
    %p86 = scmp.eq.s32.totalorder %s18, 0
    %p87 = por %p85, %p86
    %s89 = sadd.s32 %s88, 1
    %p92 = scmp.eq.s32.totalorder %s12, 1
    %p93 = scmp.ne.s32.totalorder %s88, %s90
    %p94 = scmp.eq.s32.totalorder %s12, 0
    %p95 = por %p93, %p94
    %p96 = scmp.ne.s32.totalorder %s88, %s90
    %p97 = scmp.eq.s32.totalorder %s17, 1
    %p98 = por %p96, %p97
    %p99 = scmp.ne.s32.totalorder %s90, %s91
    %p100 = scmp.eq.s32.totalorder %s17, 0
    %p101 = por %p99, %p100
    %p102 = scmp.ne.s32.totalorder %s90, %s91
    %p103 = scmp.eq.s32.totalorder %s18, 1
    %p104 = por %p102, %p103
    %p106 = scmp.ne.s32.totalorder %s91, %s105
    %p107 = scmp.eq.s32.totalorder %s18, 0
    %p108 = por %p106, %p107
    %s109 = ssub.s32 %s12, %s19
    %p110 = scmp.eq.s32.totalorder %s109, 0
    %s112 = sadd.s32 %s111, 1
    %s113 = scalar_select %p110, %s111, %s112
    %p116 = pneg %p110
    %p117 = scmp.eq.s32.totalorder %s12, 1
    %p118 = por %p116, %p117
    %p119 = scmp.ne.s32.totalorder %s111, %s114
    %p120 = scmp.eq.s32.totalorder %s12, 0
    %p121 = por %p119, %p120
    %p122 = scmp.ne.s32.totalorder %s111, %s114
    %p123 = scmp.eq.s32.totalorder %s17, 1
    %p124 = por %p122, %p123
    %p125 = scmp.ne.s32.totalorder %s114, %s115
    %p126 = scmp.eq.s32.totalorder %s17, 0
    %p127 = por %p125, %p126
    %p128 = scmp.ne.s32.totalorder %s114, %s115
    %p129 = scmp.eq.s32.totalorder %s18, 1
    %p130 = por %p128, %p129
    %p132 = scmp.ne.s32.totalorder %s115, %s131
    %p133 = scmp.eq.s32.totalorder %s18, 0
    %p134 = por %p132, %p133
    %s135 = ssub.s32 %s12, %s19
    %p136 = scmp.eq.s32.totalorder %s135, 0
    %s138 = sadd.s32 %s137, 1
    %s139 = scalar_select %p136, %s137, %s138
    %p142 = pneg %p136
    %p143 = scmp.eq.s32.totalorder %s12, 1
    %p144 = por %p142, %p143
    %p145 = scmp.ne.s32.totalorder %s137, %s140
    %p146 = scmp.eq.s32.totalorder %s12, 0
    %p147 = por %p145, %p146
    %p148 = scmp.ne.s32.totalorder %s137, %s140
    %p149 = scmp.eq.s32.totalorder %s17, 1
    %p150 = por %p148, %p149
    %p151 = scmp.ne.s32.totalorder %s140, %s141
    %p152 = scmp.eq.s32.totalorder %s17, 0
    %p153 = por %p151, %p152
    %p154 = scmp.ne.s32.totalorder %s140, %s141
    %p155 = scmp.eq.s32.totalorder %s18, 1
    %p156 = por %p154, %p155
    %p158 = scmp.ne.s32.totalorder %s141, %s157
    %p159 = scmp.eq.s32.totalorder %s18, 0
    %p160 = por %p158, %p159
    %p161 = scmp.le.s32.totalorder 1, %s12
    %p162 = scmp.lt.s32.totalorder %s12, 3
    %p163 = pnand %p161, %p162
    %p164 = pneg %p163
    // Predicated region
    $region9: #{basic_block_forward.4} parent=5 // pred_check
      _
    $region10: #{basic_block_forward.4} parent=5 // pred_check_branch
      %166 = sbr.rel (%p163) target = $region12
    $region11: #{basic_block_forward.4} parent=5 // pred_region
      %s167 = ssub.s32 %s12, 1
      // Predicated region
      $region13: #{basic_block_forward.4} parent=11 // pred_check
        %p168 = pneg %p59
      $region14: #{basic_block_forward.4} parent=11 // pred_check_branch
        %170 = sbr.rel (%p168) target = $region16
      $region15: #{basic_block_forward.4} parent=11 // pred_region
        _
      $region16: #{basic_block_forward.4} parent=11 // pred_fallthru
        _
      // Predicated region
      $region17: #{basic_block_forward.4} parent=11 // pred_check
        %p171 = pneg %p80
      $region18: #{basic_block_forward.4} parent=11 // pred_check_branch
        %173 = sbr.rel (%p171) target = $region20
      $region19: #{basic_block_forward.4} parent=11 // pred_region
        _
      $region20: #{basic_block_forward.4} parent=11 // pred_fallthru
        _
      // Predicated region
      $region21: #{basic_block_forward.4} parent=11 // pred_check
        %p174 = pneg %p101
      $region22: #{basic_block_forward.4} parent=11 // pred_check_branch
        %176 = sbr.rel (%p174) target = $region24
      $region23: #{basic_block_forward.4} parent=11 // pred_region
        _
      $region24: #{basic_block_forward.4} parent=11 // pred_fallthru
        _
    $region12: #{basic_block_forward.4} parent=5 // pred_fallthru
      _
    %p177 = scmp.lt.s32.totalorder %s12, 2
    // Predicated region
    $region25: #{basic_block_forward.4} parent=5 // pred_check
      %p178 = pneg %p177
    $region26: #{basic_block_forward.4} parent=5 // pred_check_branch
      %180 = sbr.rel (%p178) target = $region28
    $region27: #{basic_block_forward.4} parent=5 // pred_region
      // Predicated region
      $region29: #{basic_block_forward.4} parent=27 // pred_check
        %p181 = pneg %p32
      $region30: #{basic_block_forward.4} parent=27 // pred_check_branch
        %183 = sbr.rel (%p181) target = $region32
      $region31: #{basic_block_forward.4} parent=27 // pred_region
        %p184 = scmp.lt.s32.totalorder %s12, 1
        %s185 = scalar_select %p184, %s12, 1
        %s186 = smul.addr %s185, 32
        %s187 = smul.addr %s186, 8
        %s188 = scalar_lea.vmem %s0, %s187
      $region32: #{basic_block_forward.4} parent=27 // pred_fallthru
        _
    $region28: #{basic_block_forward.4} parent=5 // pred_fallthru
      _
    %p189 = scmp.le.s32.totalorder 1, %s12
    %p190 = scmp.lt.s32.totalorder %s12, 3
    %p191 = pnand %p189, %p190
    %p192 = pneg %p191
    // Predicated region
    $region33: #{basic_block_forward.4} parent=5 // pred_check
      _
    $region34: #{basic_block_forward.4} parent=5 // pred_check_branch
      %194 = sbr.rel (%p191) target = $region36
    $region35: #{basic_block_forward.4} parent=5 // pred_region
      %s195 = ssub.s32 %s12, 1
      %p196 = scmp.lt.s32.totalorder %s17, 1
      %s197 = scalar_select %p196, %s17, 1
      %s198 = smul.addr %s197, 32
      %s199 = smul.addr %s198, 8
      %s200 = scalar_lea.vmem %s0, %s199
      %p201 = pneg %p38
      %p202 = pneg %p35
      %p203 = pneg %p59
      %p204 = pneg %p56
      %p205 = pneg %p80
      %p206 = pneg %p77
      %p207 = pneg %p101
      %p208 = pneg %p98
      %p209 = pneg %p127
      %p210 = pneg %p124
      %p211 = scmp.lt.s32.totalorder %s17, 1
      %s212 = scalar_select %p211, %s17, 1
      %s213 = smul.addr %s212, 32
      %s214 = smul.addr %s213, 8
      %s215 = scalar_lea.vmem %s4, %s214
      %p216 = pneg %p153
      %p217 = pneg %p150
      %p218 = scmp.lt.s32.totalorder %s17, 1
      %s219 = scalar_select %p218, %s17, 1
      %s220 = smul.addr %s219, 2
      %s221 = scalar_lea.vmem %s5, %s220
      %p222 = scmp.lt.s32.totalorder %s17, 1
      %s223 = scalar_select %p222, %s17, 1
      %s224 = smul.addr %s223, 32
      %s225 = smul.addr %s224, 8
      %s226 = scalar_lea.vmem %s0, %s225
      %p227 = scmp.lt.s32.totalorder %s17, 1
      %s228 = scalar_select %p227, %s17, 1
      %s229 = smul.addr %s228, 32
      %s230 = smul.addr %s229, 8
      %s231 = scalar_lea.vmem %s4, %s230
      %p232 = scmp.lt.s32.totalorder %s17, 1
      %s233 = scalar_select %p232, %s17, 1
      %s234 = smul.addr %s233, 2
      %s235 = scalar_lea.vmem %s5, %s234
      %v236 = vld [vmem:[%s2] sm:$0x1]
      %v237 = vld [vmem:[%s3] sm:$0x1]
      %v238 = vld [vmem:[%s226] sm:$0xff]
      %v239 = vld [vmem:[%s226 + $0x8] sm:$0xff]
      %v240 = vld [vmem:[%s226 + $0x10] sm:$0xff]
      %v241 = vld [vmem:[%s226 + $0x18] sm:$0xff]
      %v242 = vld [vmem:[%s226 + $0x20] sm:$0xff]
      %v243 = vld [vmem:[%s226 + $0x28] sm:$0xff]
      %v244 = vld [vmem:[%s226 + $0x30] sm:$0xff]
      %v245 = vld [vmem:[%s226 + $0x38] sm:$0xff]
      %v246 = vld [vmem:[%s226 + $0x40] sm:$0xff]
      %v247 = vld [vmem:[%s226 + $0x48] sm:$0xff]
      %v248 = vld [vmem:[%s226 + $0x50] sm:$0xff]
      %v249 = vld [vmem:[%s226 + $0x58] sm:$0xff]
      %v250 = vld [vmem:[%s226 + $0x60] sm:$0xff]
      %v251 = vld [vmem:[%s226 + $0x68] sm:$0xff]
      %v252 = vld [vmem:[%s226 + $0x70] sm:$0xff]
      %v253 = vld [vmem:[%s226 + $0x78] sm:$0xff]
      %v254 = vld [vmem:[%s226 + $0x80] sm:$0xff]
      %v255 = vld [vmem:[%s226 + $0x88] sm:$0xff]
      %v256 = vld [vmem:[%s226 + $0x90] sm:$0xff]
      %v257 = vld [vmem:[%s226 + $0x98] sm:$0xff]
      %v258 = vld [vmem:[%s226 + $0xa0] sm:$0xff]
      %v259 = vld [vmem:[%s226 + $0xa8] sm:$0xff]
      %v260 = vld [vmem:[%s226 + $0xb0] sm:$0xff]
      %v261 = vld [vmem:[%s226 + $0xb8] sm:$0xff]
      %v262 = vld [vmem:[%s226 + $0xc0] sm:$0xff]
      %v263 = vld [vmem:[%s226 + $0xc8] sm:$0xff]
      %v264 = vld [vmem:[%s226 + $0xd0] sm:$0xff]
      %v265 = vld [vmem:[%s226 + $0xd8] sm:$0xff]
      %v266 = vld [vmem:[%s226 + $0xe0] sm:$0xff]
      %v267 = vld [vmem:[%s226 + $0xe8] sm:$0xff]
      %v268 = vld [vmem:[%s226 + $0xf0] sm:$0xff]
      %v269 = vld [vmem:[%s226 + $0xf8] sm:$0xff]
      %v271 = vperm.slane %v236, 0
      %v273 = vmul.f32 %v238, %v271
      %v274 = vmul.f32 %v239, %v271
      %v275 = vmul.f32 %v240, %v271
      %v276 = vmul.f32 %v241, %v271
      %v277 = vmul.f32 %v242, %v271
      %v278 = vmul.f32 %v243, %v271
      %v279 = vmul.f32 %v244, %v271
      %v280 = vmul.f32 %v245, %v271
      %v281 = vmul.f32 %v246, %v271
      %v282 = vmul.f32 %v247, %v271
      %v283 = vmul.f32 %v248, %v271
      %v284 = vmul.f32 %v249, %v271
      %v285 = vmul.f32 %v250, %v271
      %v286 = vmul.f32 %v251, %v271
      %v287 = vmul.f32 %v252, %v271
      %v288 = vmul.f32 %v253, %v271
      %v289 = vmul.f32 %v254, %v271
      %v290 = vmul.f32 %v255, %v271
      %v291 = vmul.f32 %v256, %v271
      %v292 = vmul.f32 %v257, %v271
      %v293 = vmul.f32 %v258, %v271
      %v294 = vmul.f32 %v259, %v271
      %v295 = vmul.f32 %v260, %v271
      %v296 = vmul.f32 %v261, %v271
      %v297 = vmul.f32 %v262, %v271
      %v298 = vmul.f32 %v263, %v271
      %v299 = vmul.f32 %v264, %v271
      %v300 = vmul.f32 %v265, %v271
      %v301 = vmul.f32 %v266, %v271
      %v302 = vmul.f32 %v267, %v271
      %v303 = vmul.f32 %v268, %v271
      %v304 = vmul.f32 %v269, %v271
      %v306 = vperm.slane %v237, 0
      %v308 = vadd.f32 %v273, %v306
      %v309 = vadd.f32 %v274, %v306
      %v310 = vadd.f32 %v275, %v306
      %v311 = vadd.f32 %v276, %v306
      %v312 = vadd.f32 %v277, %v306
      %v313 = vadd.f32 %v278, %v306
      %v314 = vadd.f32 %v279, %v306
      %v315 = vadd.f32 %v280, %v306
      %v316 = vadd.f32 %v281, %v306
      %v317 = vadd.f32 %v282, %v306
      %v318 = vadd.f32 %v283, %v306
      %v319 = vadd.f32 %v284, %v306
      %v320 = vadd.f32 %v285, %v306
      %v321 = vadd.f32 %v286, %v306
      %v322 = vadd.f32 %v287, %v306
      %v323 = vadd.f32 %v288, %v306
      %v324 = vadd.f32 %v289, %v306
      %v325 = vadd.f32 %v290, %v306
      %v326 = vadd.f32 %v291, %v306
      %v327 = vadd.f32 %v292, %v306
      %v328 = vadd.f32 %v293, %v306
      %v329 = vadd.f32 %v294, %v306
      %v330 = vadd.f32 %v295, %v306
      %v331 = vadd.f32 %v296, %v306
      %v332 = vadd.f32 %v297, %v306
      %v333 = vadd.f32 %v298, %v306
      %v334 = vadd.f32 %v299, %v306
      %v335 = vadd.f32 %v300, %v306
      %v336 = vadd.f32 %v301, %v306
      %v337 = vadd.f32 %v302, %v306
      %v338 = vadd.f32 %v303, %v306
      %v339 = vadd.f32 %v304, %v306
      %v340 = vmax.f32 %v308, 0.0
      %v341 = vmax.f32 %v309, 0.0
      %v342 = vmax.f32 %v310, 0.0
      %v343 = vmax.f32 %v311, 0.0
      %v344 = vmax.f32 %v312, 0.0
      %v345 = vmax.f32 %v313, 0.0
      %v346 = vmax.f32 %v314, 0.0
      %v347 = vmax.f32 %v315, 0.0
      %v348 = vmax.f32 %v316, 0.0
      %v349 = vmax.f32 %v317, 0.0
      %v350 = vmax.f32 %v318, 0.0
      %v351 = vmax.f32 %v319, 0.0
      %v352 = vmax.f32 %v320, 0.0
      %v353 = vmax.f32 %v321, 0.0
      %v354 = vmax.f32 %v322, 0.0
      %v355 = vmax.f32 %v323, 0.0
      %v356 = vmax.f32 %v324, 0.0
      %v357 = vmax.f32 %v325, 0.0
      %v358 = vmax.f32 %v326, 0.0
      %v359 = vmax.f32 %v327, 0.0
      %v360 = vmax.f32 %v328, 0.0
      %v361 = vmax.f32 %v329, 0.0
      %v362 = vmax.f32 %v330, 0.0
      %v363 = vmax.f32 %v331, 0.0
      %v364 = vmax.f32 %v332, 0.0
      %v365 = vmax.f32 %v333, 0.0
      %v366 = vmax.f32 %v334, 0.0
      %v367 = vmax.f32 %v335, 0.0
      %v368 = vmax.f32 %v336, 0.0
      %v369 = vmax.f32 %v337, 0.0
      %v370 = vmax.f32 %v338, 0.0
      %v371 = vmax.f32 %v339, 0.0
      %vm372 = vcmask 64512
      %373 = vst.msk [vmem:[#allocation2] sm:$0xff] %vm372, 0.0
      %374 = vst.msk [vmem:[#allocation2 + $0x8] sm:$0xff] %vm372, 0.0
      %vm375 = vcmask 58368
      %376 = vst.msk [vmem:[#allocation2 + $0x10] sm:$0x3] %vm375, 0.0
      %s377 = scalar_lea.vmem [#allocation2], 408
      %378 = vst.msk [vmem:[%s377] sm:$0xff] %vm372, 0.0
      %379 = vst.msk [vmem:[%s377 + $0x8] sm:$0xff] %vm372, 0.0
      %380 = vst.msk [vmem:[%s377 + $0x10] sm:$0x3] %vm375, 0.0
      %vm381 = vcmask 57344
      %382 = vst.msk [vmem:[#allocation2] sm:$0x1] %vm381, 0.0
      %383 = vst.msk [vmem:[#allocation2 + $0x18] sm:$0x1] %vm381, 0.0
      %384 = vst.msk [vmem:[#allocation2 + $0x30] sm:$0x1] %vm381, 0.0
      %385 = vst.msk [vmem:[#allocation2 + $0x48] sm:$0x1] %vm381, 0.0
      %386 = vst.msk [vmem:[#allocation2 + $0x60] sm:$0x1] %vm381, 0.0
      %387 = vst.msk [vmem:[#allocation2 + $0x78] sm:$0x1] %vm381, 0.0
      %388 = vst.msk [vmem:[#allocation2 + $0x90] sm:$0x1] %vm381, 0.0
      %389 = vst.msk [vmem:[#allocation2 + $0xa8] sm:$0x1] %vm381, 0.0
      %390 = vst.msk [vmem:[#allocation2 + $0xc0] sm:$0x1] %vm381, 0.0
      %391 = vst.msk [vmem:[#allocation2 + $0xd8] sm:$0x1] %vm381, 0.0
      %392 = vst.msk [vmem:[#allocation2 + $0xf0] sm:$0x1] %vm381, 0.0
      %393 = vst.msk [vmem:[#allocation2 + $0x108] sm:$0x1] %vm381, 0.0
      %394 = vst.msk [vmem:[#allocation2 + $0x120] sm:$0x1] %vm381, 0.0
      %395 = vst.msk [vmem:[#allocation2 + $0x138] sm:$0x1] %vm381, 0.0
      %396 = vst.msk [vmem:[#allocation2 + $0x150] sm:$0x1] %vm381, 0.0
      %397 = vst.msk [vmem:[#allocation2 + $0x168] sm:$0x1] %vm381, 0.0
      %398 = vst.msk [vmem:[#allocation2 + $0x180] sm:$0x1] %vm381, 0.0
      %399 = vst.msk [vmem:[#allocation2 + $0x198] sm:$0x1] %vm381, 0.0
      %400 = vst.msk [vmem:[#allocation2 + $0x11] sm:$0x1] %vm381, 0.0
      %401 = vst.msk [vmem:[#allocation2 + $0x29] sm:$0x1] %vm381, 0.0
      %402 = vst.msk [vmem:[#allocation2 + $0x41] sm:$0x1] %vm381, 0.0
      %403 = vst.msk [vmem:[#allocation2 + $0x59] sm:$0x1] %vm381, 0.0
      %404 = vst.msk [vmem:[#allocation2 + $0x71] sm:$0x1] %vm381, 0.0
      %405 = vst.msk [vmem:[#allocation2 + $0x89] sm:$0x1] %vm381, 0.0
      %406 = vst.msk [vmem:[#allocation2 + $0xa1] sm:$0x1] %vm381, 0.0
      %407 = vst.msk [vmem:[#allocation2 + $0xb9] sm:$0x1] %vm381, 0.0
      %408 = vst.msk [vmem:[#allocation2 + $0xd1] sm:$0x1] %vm381, 0.0
      %409 = vst.msk [vmem:[#allocation2 + $0xe9] sm:$0x1] %vm381, 0.0
      %410 = vst.msk [vmem:[#allocation2 + $0x101] sm:$0x1] %vm381, 0.0
      %411 = vst.msk [vmem:[#allocation2 + $0x119] sm:$0x1] %vm381, 0.0
      %412 = vst.msk [vmem:[#allocation2 + $0x131] sm:$0x1] %vm381, 0.0
      %413 = vst.msk [vmem:[#allocation2 + $0x149] sm:$0x1] %vm381, 0.0
      %414 = vst.msk [vmem:[#allocation2 + $0x161] sm:$0x1] %vm381, 0.0
      %415 = vst.msk [vmem:[#allocation2 + $0x179] sm:$0x1] %vm381, 0.0
      %416 = vst.msk [vmem:[#allocation2 + $0x191] sm:$0x1] %vm381, 0.0
      %417 = vst.msk [vmem:[#allocation2 + $0x1a9] sm:$0x1] %vm381, 0.0
      %s418 = scalar_lea.vmem [#allocation2], 24
      %419 = vst.msk [vmem:[%s418 + $0x1] sm:$0xff] %vm372, %v340
      %420 = vst.msk [vmem:[%s418 + $0x9] sm:$0xff] %vm372, %v341
      %421 = vst.msk [vmem:[%s418 + $0x19] sm:$0xff] %vm372, %v342
      %422 = vst.msk [vmem:[%s418 + $0x21] sm:$0xff] %vm372, %v343
      %423 = vst.msk [vmem:[%s418 + $0x31] sm:$0xff] %vm372, %v344
      %424 = vst.msk [vmem:[%s418 + $0x39] sm:$0xff] %vm372, %v345
      %425 = vst.msk [vmem:[%s418 + $0x49] sm:$0xff] %vm372, %v346
      %426 = vst.msk [vmem:[%s418 + $0x51] sm:$0xff] %vm372, %v347
      %427 = vst.msk [vmem:[%s418 + $0x61] sm:$0xff] %vm372, %v348
      %428 = vst.msk [vmem:[%s418 + $0x69] sm:$0xff] %vm372, %v349
      %429 = vst.msk [vmem:[%s418 + $0x79] sm:$0xff] %vm372, %v350
      %430 = vst.msk [vmem:[%s418 + $0x81] sm:$0xff] %vm372, %v351
      %431 = vst.msk [vmem:[%s418 + $0x91] sm:$0xff] %vm372, %v352
      %432 = vst.msk [vmem:[%s418 + $0x99] sm:$0xff] %vm372, %v353
      %433 = vst.msk [vmem:[%s418 + $0xa9] sm:$0xff] %vm372, %v354
      %434 = vst.msk [vmem:[%s418 + $0xb1] sm:$0xff] %vm372, %v355
      %435 = vst.msk [vmem:[%s418 + $0xc1] sm:$0xff] %vm372, %v356
      %436 = vst.msk [vmem:[%s418 + $0xc9] sm:$0xff] %vm372, %v357
      %437 = vst.msk [vmem:[%s418 + $0xd9] sm:$0xff] %vm372, %v358
      %438 = vst.msk [vmem:[%s418 + $0xe1] sm:$0xff] %vm372, %v359
      %439 = vst.msk [vmem:[%s418 + $0xf1] sm:$0xff] %vm372, %v360
      %440 = vst.msk [vmem:[%s418 + $0xf9] sm:$0xff] %vm372, %v361
      %441 = vst.msk [vmem:[%s418 + $0x109] sm:$0xff] %vm372, %v362
      %442 = vst.msk [vmem:[%s418 + $0x111] sm:$0xff] %vm372, %v363
      %443 = vst.msk [vmem:[%s418 + $0x121] sm:$0xff] %vm372, %v364
      %444 = vst.msk [vmem:[%s418 + $0x129] sm:$0xff] %vm372, %v365
      %445 = vst.msk [vmem:[%s418 + $0x139] sm:$0xff] %vm372, %v366
      %446 = vst.msk [vmem:[%s418 + $0x141] sm:$0xff] %vm372, %v367
      %447 = vst.msk [vmem:[%s418 + $0x151] sm:$0xff] %vm372, %v368
      %448 = vst.msk [vmem:[%s418 + $0x159] sm:$0xff] %vm372, %v369
      %449 = vst.msk [vmem:[%s418 + $0x169] sm:$0xff] %vm372, %v370
      %450 = vst.msk [vmem:[%s418 + $0x171] sm:$0xff] %vm372, %v371
      %v451 = vld [vmem:[#allocation2] sm:$0xff]
      %v452 = vld [vmem:[#allocation2 + $0x8] sm:$0xff]
      %v453 = vld [vmem:[#allocation2 + $0x18] sm:$0xff]
      %v454 = vld [vmem:[#allocation2 + $0x20] sm:$0xff]
      %v455 = vld [vmem:[#allocation2 + $0x30] sm:$0xff]
      %v456 = vld [vmem:[#allocation2 + $0x38] sm:$0xff]
      %v457 = vld [vmem:[#allocation2 + $0x48] sm:$0xff]
      %v458 = vld [vmem:[#allocation2 + $0x50] sm:$0xff]
      %v459 = vld [vmem:[#allocation2 + $0x60] sm:$0xff]
      %v460 = vld [vmem:[#allocation2 + $0x68] sm:$0xff]
      %v461 = vld [vmem:[#allocation2 + $0x78] sm:$0xff]
      %v462 = vld [vmem:[#allocation2 + $0x80] sm:$0xff]
      %v463 = vld [vmem:[#allocation2 + $0x90] sm:$0xff]
      %v464 = vld [vmem:[#allocation2 + $0x98] sm:$0xff]
      %v465 = vld [vmem:[#allocation2 + $0xa8] sm:$0xff]
      %v466 = vld [vmem:[#allocation2 + $0xb0] sm:$0xff]
      %v467 = vld [vmem:[#allocation2 + $0xc0] sm:$0xff]
      %v468 = vld [vmem:[#allocation2 + $0xc8] sm:$0xff]
      %v469 = vld [vmem:[#allocation2 + $0xd8] sm:$0xff]
      %v470 = vld [vmem:[#allocation2 + $0xe0] sm:$0xff]
      %v471 = vld [vmem:[#allocation2 + $0xf0] sm:$0xff]
      %v472 = vld [vmem:[#allocation2 + $0xf8] sm:$0xff]
      %v473 = vld [vmem:[#allocation2 + $0x108] sm:$0xff]
      %v474 = vld [vmem:[#allocation2 + $0x110] sm:$0xff]
      %v475 = vld [vmem:[#allocation2 + $0x120] sm:$0xff]
      %v476 = vld [vmem:[#allocation2 + $0x128] sm:$0xff]
      %v477 = vld [vmem:[#allocation2 + $0x138] sm:$0xff]
      %v478 = vld [vmem:[#allocation2 + $0x140] sm:$0xff]
      %v479 = vld [vmem:[#allocation2 + $0x150] sm:$0xff]
      %v480 = vld [vmem:[#allocation2 + $0x158] sm:$0xff]
      %v481 = vld [vmem:[#allocation2 + $0x168] sm:$0xff]
      %v482 = vld [vmem:[#allocation2 + $0x170] sm:$0xff]
      %v483 = vld [vmem:[%s1] sm:$0xff]
      %v484 = vld [vmem:[#allocation2 + $0x1] sm:$0xff]
      %v485 = vld [vmem:[#allocation2 + $0x9] sm:$0xff]
      %v486 = vld [vmem:[#allocation2 + $0x19] sm:$0xff]
      %v487 = vld [vmem:[#allocation2 + $0x21] sm:$0xff]
      %v488 = vld [vmem:[#allocation2 + $0x31] sm:$0xff]
      %v489 = vld [vmem:[#allocation2 + $0x39] sm:$0xff]
      %v490 = vld [vmem:[#allocation2 + $0x49] sm:$0xff]
      %v491 = vld [vmem:[#allocation2 + $0x51] sm:$0xff]
      %v492 = vld [vmem:[#allocation2 + $0x61] sm:$0xff]
      %v493 = vld [vmem:[#allocation2 + $0x69] sm:$0xff]
      %v494 = vld [vmem:[#allocation2 + $0x79] sm:$0xff]
      %v495 = vld [vmem:[#allocation2 + $0x81] sm:$0xff]
      %v496 = vld [vmem:[#allocation2 + $0x91] sm:$0xff]
      %v497 = vld [vmem:[#allocation2 + $0x99] sm:$0xff]
      %v498 = vld [vmem:[#allocation2 + $0xa9] sm:$0xff]
      %v499 = vld [vmem:[#allocation2 + $0xb1] sm:$0xff]
      %v500 = vld [vmem:[#allocation2 + $0xc1] sm:$0xff]
      %v501 = vld [vmem:[#allocation2 + $0xc9] sm:$0xff]
      %v502 = vld [vmem:[#allocation2 + $0xd9] sm:$0xff]
      %v503 = vld [vmem:[#allocation2 + $0xe1] sm:$0xff]
      %v504 = vld [vmem:[#allocation2 + $0xf1] sm:$0xff]
      %v505 = vld [vmem:[#allocation2 + $0xf9] sm:$0xff]
      %v506 = vld [vmem:[#allocation2 + $0x109] sm:$0xff]
      %v507 = vld [vmem:[#allocation2 + $0x111] sm:$0xff]
      %v508 = vld [vmem:[#allocation2 + $0x121] sm:$0xff]
      %v509 = vld [vmem:[#allocation2 + $0x129] sm:$0xff]
      %v510 = vld [vmem:[#allocation2 + $0x139] sm:$0xff]
      %v511 = vld [vmem:[#allocation2 + $0x141] sm:$0xff]
      %v512 = vld [vmem:[#allocation2 + $0x151] sm:$0xff]
      %v513 = vld [vmem:[#allocation2 + $0x159] sm:$0xff]
      %v514 = vld [vmem:[#allocation2 + $0x169] sm:$0xff]
      %v515 = vld [vmem:[#allocation2 + $0x171] sm:$0xff]
      %s516 = scalar_lea.vmem %s1, 8
      %v517 = vld [vmem:[%s516] sm:$0xff]
      %v519 = vsel %vm372, %v484, 0
      %v522 = vsel %vm372, %v485, 0
      %v525 = vsel %vm372, %v486, 0
      %v528 = vsel %vm372, %v487, 0
      %v531 = vsel %vm372, %v488, 0
      %v534 = vsel %vm372, %v489, 0
      %v537 = vsel %vm372, %v490, 0
      %v540 = vsel %vm372, %v491, 0
      %v543 = vsel %vm372, %v492, 0
      %v546 = vsel %vm372, %v493, 0
      %v549 = vsel %vm372, %v494, 0
      %v552 = vsel %vm372, %v495, 0
      %v555 = vsel %vm372, %v496, 0
      %v558 = vsel %vm372, %v497, 0
      %v561 = vsel %vm372, %v498, 0
      %v564 = vsel %vm372, %v499, 0
      %v567 = vsel %vm372, %v500, 0
      %v570 = vsel %vm372, %v501, 0
      %v573 = vsel %vm372, %v502, 0
      %v576 = vsel %vm372, %v503, 0
      %v579 = vsel %vm372, %v504, 0
      %v582 = vsel %vm372, %v505, 0
      %v585 = vsel %vm372, %v506, 0
      %v588 = vsel %vm372, %v507, 0
      %v591 = vsel %vm372, %v508, 0
      %v594 = vsel %vm372, %v509, 0
      %v597 = vsel %vm372, %v510, 0
      %v600 = vsel %vm372, %v511, 0
      %v603 = vsel %vm372, %v512, 0
      %v606 = vsel %vm372, %v513, 0
      %v609 = vsel %vm372, %v514, 0
      %v612 = vsel %vm372, %v515, 0
      %614 = vmatpush.msra.mxu0 0.0
      %615 = vmatpush.msra.mxu0 0.0
      %616 = vmatpush.msra.mxu0 0.0
      %617 = vmatpush.msra.mxu0 0.0
      %618 = vmatpush.msra.mxu0 0.0
      %619 = vmatpush.msra.mxu0 0.0
      %620 = vmatpush.msra.mxu0 0.0
      %621 = vmatpush.msra.mxu0 0.0
      %622 = vmatpush.msra.mxu0 0.0
      %623 = vmatpush.msra.mxu0 0.0
      %624 = vmatpush.msra.mxu0 0.0
      %625 = vmatpush.msra.mxu0 0.0
      %626 = vmatpush.msra.mxu0 0.0
      %627 = vmatpush.msra.mxu0 0.0
      %628 = vmatpush.msra.mxu0 0.0
      %629 = vmatpush.msra.mxu0 %v517
      %630 = vmatmul.f32.gmra.mxu0 %v519
      %v631 = vpop.f32.mrf.mxu0
      %v632 = vadd.f32 0.0, %v631
      %633 = vmatmul.f32.gmra.mxu0 %v522
      %v634 = vpop.f32.mrf.mxu0
      %v635 = vadd.f32 0.0, %v634
      %636 = vmatmul.f32.gmra.mxu0 %v525
      %v637 = vpop.f32.mrf.mxu0
      %v638 = vadd.f32 0.0, %v637
      %639 = vmatmul.f32.gmra.mxu0 %v528
      %v640 = vpop.f32.mrf.mxu0
      %v641 = vadd.f32 0.0, %v640
      %642 = vmatmul.f32.gmra.mxu0 %v531
      %v643 = vpop.f32.mrf.mxu0
      %v644 = vadd.f32 0.0, %v643
      %645 = vmatmul.f32.gmra.mxu0 %v534
      %v646 = vpop.f32.mrf.mxu0
      %v647 = vadd.f32 0.0, %v646
      %648 = vmatmul.f32.gmra.mxu0 %v537
      %v649 = vpop.f32.mrf.mxu0
      %v650 = vadd.f32 0.0, %v649
      %651 = vmatmul.f32.gmra.mxu0 %v540
      %v652 = vpop.f32.mrf.mxu0
      %v653 = vadd.f32 0.0, %v652
      %654 = vmatmul.f32.gmra.mxu0 %v543
      %v655 = vpop.f32.mrf.mxu0
      %v656 = vadd.f32 0.0, %v655
      %657 = vmatmul.f32.gmra.mxu0 %v546
      %v658 = vpop.f32.mrf.mxu0
      %v659 = vadd.f32 0.0, %v658
      %660 = vmatmul.f32.gmra.mxu0 %v549
      %v661 = vpop.f32.mrf.mxu0
      %v662 = vadd.f32 0.0, %v661
      %663 = vmatmul.f32.gmra.mxu0 %v552
      %v664 = vpop.f32.mrf.mxu0
      %v665 = vadd.f32 0.0, %v664
      %666 = vmatmul.f32.gmra.mxu0 %v555
      %v667 = vpop.f32.mrf.mxu0
      %v668 = vadd.f32 0.0, %v667
      %669 = vmatmul.f32.gmra.mxu0 %v558
      %v670 = vpop.f32.mrf.mxu0
      %v671 = vadd.f32 0.0, %v670
      %672 = vmatmul.f32.gmra.mxu0 %v561
      %v673 = vpop.f32.mrf.mxu0
      %v674 = vadd.f32 0.0, %v673
      %675 = vmatmul.f32.gmra.mxu0 %v564
      %v676 = vpop.f32.mrf.mxu0
      %v677 = vadd.f32 0.0, %v676
      %678 = vmatmul.f32.gmra.mxu0 %v567
      %v679 = vpop.f32.mrf.mxu0
      %v680 = vadd.f32 0.0, %v679
      %681 = vmatmul.f32.gmra.mxu0 %v570
      %v682 = vpop.f32.mrf.mxu0
      %v683 = vadd.f32 0.0, %v682
      %684 = vmatmul.f32.gmra.mxu0 %v573
      %v685 = vpop.f32.mrf.mxu0
      %v686 = vadd.f32 0.0, %v685
      %687 = vmatmul.f32.gmra.mxu0 %v576
      %v688 = vpop.f32.mrf.mxu0
      %v689 = vadd.f32 0.0, %v688
      %690 = vmatmul.f32.gmra.mxu0 %v579
      %v691 = vpop.f32.mrf.mxu0
      %v692 = vadd.f32 0.0, %v691
      %693 = vmatmul.f32.gmra.mxu0 %v582
      %v694 = vpop.f32.mrf.mxu0
      %v695 = vadd.f32 0.0, %v694
      %696 = vmatmul.f32.gmra.mxu0 %v585
      %v697 = vpop.f32.mrf.mxu0
      %v698 = vadd.f32 0.0, %v697
      %699 = vmatmul.f32.gmra.mxu0 %v588
      %v700 = vpop.f32.mrf.mxu0
      %v701 = vadd.f32 0.0, %v700
      %702 = vmatmul.f32.gmra.mxu0 %v591
      %v703 = vpop.f32.mrf.mxu0
      %v704 = vadd.f32 0.0, %v703
      %705 = vmatmul.f32.gmra.mxu0 %v594
      %v706 = vpop.f32.mrf.mxu0
      %v707 = vadd.f32 0.0, %v706
      %708 = vmatmul.f32.gmra.mxu0 %v597
      %v709 = vpop.f32.mrf.mxu0
      %v710 = vadd.f32 0.0, %v709
      %711 = vmatmul.f32.gmra.mxu0 %v600
      %v712 = vpop.f32.mrf.mxu0
      %v713 = vadd.f32 0.0, %v712
      %714 = vmatmul.f32.gmra.mxu0 %v603
      %v715 = vpop.f32.mrf.mxu0
      %v716 = vadd.f32 0.0, %v715
      %717 = vmatmul.f32.gmra.mxu0 %v606
      %v718 = vpop.f32.mrf.mxu0
      %v719 = vadd.f32 0.0, %v718
      %720 = vmatmul.f32.gmra.mxu0 %v609
      %v721 = vpop.f32.mrf.mxu0
      %v722 = vadd.f32 0.0, %v721
      %723 = vmatmul.f32.gmra.mxu0 %v612
      %v724 = vpop.f32.mrf.mxu0
      %v725 = vadd.f32 0.0, %v724
      %726 = vdwg.mxu0
      %v728 = vsel %vm372, %v451, 0
      %v731 = vsel %vm372, %v452, 0
      %v734 = vsel %vm372, %v453, 0
      %v737 = vsel %vm372, %v454, 0
      %v740 = vsel %vm372, %v455, 0
      %v743 = vsel %vm372, %v456, 0
      %v746 = vsel %vm372, %v457, 0
      %v749 = vsel %vm372, %v458, 0
      %v752 = vsel %vm372, %v459, 0
      %v755 = vsel %vm372, %v460, 0
      %v758 = vsel %vm372, %v461, 0
      %v761 = vsel %vm372, %v462, 0
      %v764 = vsel %vm372, %v463, 0
      %v767 = vsel %vm372, %v464, 0
      %v770 = vsel %vm372, %v465, 0
      %v773 = vsel %vm372, %v466, 0
      %v776 = vsel %vm372, %v467, 0
      %v779 = vsel %vm372, %v468, 0
      %v782 = vsel %vm372, %v469, 0
      %v785 = vsel %vm372, %v470, 0
      %v788 = vsel %vm372, %v471, 0
      %v791 = vsel %vm372, %v472, 0
      %v794 = vsel %vm372, %v473, 0
      %v797 = vsel %vm372, %v474, 0
      %v800 = vsel %vm372, %v475, 0
      %v803 = vsel %vm372, %v476, 0
      %v806 = vsel %vm372, %v477, 0
      %v809 = vsel %vm372, %v478, 0
      %v812 = vsel %vm372, %v479, 0
      %v815 = vsel %vm372, %v480, 0
      %v818 = vsel %vm372, %v481, 0
      %v821 = vsel %vm372, %v482, 0
      %823 = vmatpush.msra.mxu0 0.0
      %824 = vmatpush.msra.mxu0 0.0
      %825 = vmatpush.msra.mxu0 0.0
      %826 = vmatpush.msra.mxu0 0.0
      %827 = vmatpush.msra.mxu0 0.0
      %828 = vmatpush.msra.mxu0 0.0
      %829 = vmatpush.msra.mxu0 0.0
      %830 = vmatpush.msra.mxu0 0.0
      %831 = vmatpush.msra.mxu0 0.0
      %832 = vmatpush.msra.mxu0 0.0
      %833 = vmatpush.msra.mxu0 0.0
      %834 = vmatpush.msra.mxu0 0.0
      %835 = vmatpush.msra.mxu0 0.0
      %836 = vmatpush.msra.mxu0 0.0
      %837 = vmatpush.msra.mxu0 0.0
      %838 = vmatpush.msra.mxu0 %v483
      %839 = vmatmul.f32.gmra.mxu0 %v728
      %v840 = vpop.f32.mrf.mxu0
      %v841 = vadd.f32 %v632, %v840
      %842 = vmatmul.f32.gmra.mxu0 %v731
      %v843 = vpop.f32.mrf.mxu0
      %v844 = vadd.f32 %v635, %v843
      %845 = vmatmul.f32.gmra.mxu0 %v734
      %v846 = vpop.f32.mrf.mxu0
      %v847 = vadd.f32 %v638, %v846
      %848 = vmatmul.f32.gmra.mxu0 %v737
      %v849 = vpop.f32.mrf.mxu0
      %v850 = vadd.f32 %v641, %v849
      %851 = vmatmul.f32.gmra.mxu0 %v740
      %v852 = vpop.f32.mrf.mxu0
      %v853 = vadd.f32 %v644, %v852
      %854 = vmatmul.f32.gmra.mxu0 %v743
      %v855 = vpop.f32.mrf.mxu0
      %v856 = vadd.f32 %v647, %v855
      %857 = vmatmul.f32.gmra.mxu0 %v746
      %v858 = vpop.f32.mrf.mxu0
      %v859 = vadd.f32 %v650, %v858
      %860 = vmatmul.f32.gmra.mxu0 %v749
      %v861 = vpop.f32.mrf.mxu0
      %v862 = vadd.f32 %v653, %v861
      %863 = vmatmul.f32.gmra.mxu0 %v752
      %v864 = vpop.f32.mrf.mxu0
      %v865 = vadd.f32 %v656, %v864
      %866 = vmatmul.f32.gmra.mxu0 %v755
      %v867 = vpop.f32.mrf.mxu0
      %v868 = vadd.f32 %v659, %v867
      %869 = vmatmul.f32.gmra.mxu0 %v758
      %v870 = vpop.f32.mrf.mxu0
      %v871 = vadd.f32 %v662, %v870
      %872 = vmatmul.f32.gmra.mxu0 %v761
      %v873 = vpop.f32.mrf.mxu0
      %v874 = vadd.f32 %v665, %v873
      %875 = vmatmul.f32.gmra.mxu0 %v764
      %v876 = vpop.f32.mrf.mxu0
      %v877 = vadd.f32 %v668, %v876
      %878 = vmatmul.f32.gmra.mxu0 %v767
      %v879 = vpop.f32.mrf.mxu0
      %v880 = vadd.f32 %v671, %v879
      %881 = vmatmul.f32.gmra.mxu0 %v770
      %v882 = vpop.f32.mrf.mxu0
      %v883 = vadd.f32 %v674, %v882
      %884 = vmatmul.f32.gmra.mxu0 %v773
      %v885 = vpop.f32.mrf.mxu0
      %v886 = vadd.f32 %v677, %v885
      %887 = vmatmul.f32.gmra.mxu0 %v776
      %v888 = vpop.f32.mrf.mxu0
      %v889 = vadd.f32 %v680, %v888
      %890 = vmatmul.f32.gmra.mxu0 %v779
      %v891 = vpop.f32.mrf.mxu0
      %v892 = vadd.f32 %v683, %v891
      %893 = vmatmul.f32.gmra.mxu0 %v782
      %v894 = vpop.f32.mrf.mxu0
      %v895 = vadd.f32 %v686, %v894
      %896 = vmatmul.f32.gmra.mxu0 %v785
      %v897 = vpop.f32.mrf.mxu0
      %v898 = vadd.f32 %v689, %v897
      %899 = vmatmul.f32.gmra.mxu0 %v788
      %v900 = vpop.f32.mrf.mxu0
      %v901 = vadd.f32 %v692, %v900
      %902 = vmatmul.f32.gmra.mxu0 %v791
      %v903 = vpop.f32.mrf.mxu0
      %v904 = vadd.f32 %v695, %v903
      %905 = vmatmul.f32.gmra.mxu0 %v794
      %v906 = vpop.f32.mrf.mxu0
      %v907 = vadd.f32 %v698, %v906
      %908 = vmatmul.f32.gmra.mxu0 %v797
      %v909 = vpop.f32.mrf.mxu0
      %v910 = vadd.f32 %v701, %v909
      %911 = vmatmul.f32.gmra.mxu0 %v800
      %v912 = vpop.f32.mrf.mxu0
      %v913 = vadd.f32 %v704, %v912
      %914 = vmatmul.f32.gmra.mxu0 %v803
      %v915 = vpop.f32.mrf.mxu0
      %v916 = vadd.f32 %v707, %v915
      %917 = vmatmul.f32.gmra.mxu0 %v806
      %v918 = vpop.f32.mrf.mxu0
      %v919 = vadd.f32 %v710, %v918
      %920 = vmatmul.f32.gmra.mxu0 %v809
      %v921 = vpop.f32.mrf.mxu0
      %v922 = vadd.f32 %v713, %v921
      %923 = vmatmul.f32.gmra.mxu0 %v812
      %v924 = vpop.f32.mrf.mxu0
      %v925 = vadd.f32 %v716, %v924
      %926 = vmatmul.f32.gmra.mxu0 %v815
      %v927 = vpop.f32.mrf.mxu0
      %v928 = vadd.f32 %v719, %v927
      %929 = vmatmul.f32.gmra.mxu0 %v818
      %v930 = vpop.f32.mrf.mxu0
      %v931 = vadd.f32 %v722, %v930
      %932 = vmatmul.f32.gmra.mxu0 %v821
      %v933 = vpop.f32.mrf.mxu0
      %v934 = vadd.f32 %v725, %v933
      %935 = vdwg.mxu0
      %v936 = vld [vmem:[#allocation2 + $0x2] sm:$0xff]
      %v937 = vld [vmem:[#allocation2 + $0xa] sm:$0xff]
      %v938 = vld [vmem:[#allocation2 + $0x1a] sm:$0xff]
      %v939 = vld [vmem:[#allocation2 + $0x22] sm:$0xff]
      %v940 = vld [vmem:[#allocation2 + $0x32] sm:$0xff]
      %v941 = vld [vmem:[#allocation2 + $0x3a] sm:$0xff]
      %v942 = vld [vmem:[#allocation2 + $0x4a] sm:$0xff]
      %v943 = vld [vmem:[#allocation2 + $0x52] sm:$0xff]
      %v944 = vld [vmem:[#allocation2 + $0x62] sm:$0xff]
      %v945 = vld [vmem:[#allocation2 + $0x6a] sm:$0xff]
      %v946 = vld [vmem:[#allocation2 + $0x7a] sm:$0xff]
      %v947 = vld [vmem:[#allocation2 + $0x82] sm:$0xff]
      %v948 = vld [vmem:[#allocation2 + $0x92] sm:$0xff]
      %v949 = vld [vmem:[#allocation2 + $0x9a] sm:$0xff]
      %v950 = vld [vmem:[#allocation2 + $0xaa] sm:$0xff]
      %v951 = vld [vmem:[#allocation2 + $0xb2] sm:$0xff]
      %v952 = vld [vmem:[#allocation2 + $0xc2] sm:$0xff]
      %v953 = vld [vmem:[#allocation2 + $0xca] sm:$0xff]
      %v954 = vld [vmem:[#allocation2 + $0xda] sm:$0xff]
      %v955 = vld [vmem:[#allocation2 + $0xe2] sm:$0xff]
      %v956 = vld [vmem:[#allocation2 + $0xf2] sm:$0xff]
      %v957 = vld [vmem:[#allocation2 + $0xfa] sm:$0xff]
      %v958 = vld [vmem:[#allocation2 + $0x10a] sm:$0xff]
      %v959 = vld [vmem:[#allocation2 + $0x112] sm:$0xff]
      %v960 = vld [vmem:[#allocation2 + $0x122] sm:$0xff]
      %v961 = vld [vmem:[#allocation2 + $0x12a] sm:$0xff]
      %v962 = vld [vmem:[#allocation2 + $0x13a] sm:$0xff]
      %v963 = vld [vmem:[#allocation2 + $0x142] sm:$0xff]
      %v964 = vld [vmem:[#allocation2 + $0x152] sm:$0xff]
      %v965 = vld [vmem:[#allocation2 + $0x15a] sm:$0xff]
      %v966 = vld [vmem:[#allocation2 + $0x16a] sm:$0xff]
      %v967 = vld [vmem:[#allocation2 + $0x172] sm:$0xff]
      %s968 = scalar_lea.vmem %s1, 16
      %v969 = vld [vmem:[%s968] sm:$0xff]
      %v971 = vsel %vm372, %v936, 0
      %v974 = vsel %vm372, %v937, 0
      %v977 = vsel %vm372, %v938, 0
      %v980 = vsel %vm372, %v939, 0
      %v983 = vsel %vm372, %v940, 0
      %v986 = vsel %vm372, %v941, 0
      %v989 = vsel %vm372, %v942, 0
      %v992 = vsel %vm372, %v943, 0
      %v995 = vsel %vm372, %v944, 0
      %v998 = vsel %vm372, %v945, 0
      %v1001 = vsel %vm372, %v946, 0
      %v1004 = vsel %vm372, %v947, 0
      %v1007 = vsel %vm372, %v948, 0
      %v1010 = vsel %vm372, %v949, 0
      %v1013 = vsel %vm372, %v950, 0
      %v1016 = vsel %vm372, %v951, 0
      %v1019 = vsel %vm372, %v952, 0
      %v1022 = vsel %vm372, %v953, 0
      %v1025 = vsel %vm372, %v954, 0
      %v1028 = vsel %vm372, %v955, 0
      %v1031 = vsel %vm372, %v956, 0
      %v1034 = vsel %vm372, %v957, 0
      %v1037 = vsel %vm372, %v958, 0
      %v1040 = vsel %vm372, %v959, 0
      %v1043 = vsel %vm372, %v960, 0
      %v1046 = vsel %vm372, %v961, 0
      %v1049 = vsel %vm372, %v962, 0
      %v1052 = vsel %vm372, %v963, 0
      %v1055 = vsel %vm372, %v964, 0
      %v1058 = vsel %vm372, %v965, 0
      %v1061 = vsel %vm372, %v966, 0
      %v1064 = vsel %vm372, %v967, 0
      %1066 = vmatpush.msra.mxu0 0.0
      %1067 = vmatpush.msra.mxu0 0.0
      %1068 = vmatpush.msra.mxu0 0.0
      %1069 = vmatpush.msra.mxu0 0.0
      %1070 = vmatpush.msra.mxu0 0.0
      %1071 = vmatpush.msra.mxu0 0.0
      %1072 = vmatpush.msra.mxu0 0.0
      %1073 = vmatpush.msra.mxu0 0.0
      %1074 = vmatpush.msra.mxu0 0.0
      %1075 = vmatpush.msra.mxu0 0.0
      %1076 = vmatpush.msra.mxu0 0.0
      %1077 = vmatpush.msra.mxu0 0.0
      %1078 = vmatpush.msra.mxu0 0.0
      %1079 = vmatpush.msra.mxu0 0.0
      %1080 = vmatpush.msra.mxu0 0.0
      %1081 = vmatpush.msra.mxu0 %v969
      %1082 = vmatmul.f32.gmra.mxu0 %v971
      %v1083 = vpop.f32.mrf.mxu0
      %v1084 = vadd.f32 0.0, %v1083
      %1085 = vmatmul.f32.gmra.mxu0 %v974
      %v1086 = vpop.f32.mrf.mxu0
      %v1087 = vadd.f32 0.0, %v1086
      %1088 = vmatmul.f32.gmra.mxu0 %v977
      %v1089 = vpop.f32.mrf.mxu0
      %v1090 = vadd.f32 0.0, %v1089
      %1091 = vmatmul.f32.gmra.mxu0 %v980
      %v1092 = vpop.f32.mrf.mxu0
      %v1093 = vadd.f32 0.0, %v1092
      %1094 = vmatmul.f32.gmra.mxu0 %v983
      %v1095 = vpop.f32.mrf.mxu0
      %v1096 = vadd.f32 0.0, %v1095
      %1097 = vmatmul.f32.gmra.mxu0 %v986
      %v1098 = vpop.f32.mrf.mxu0
      %v1099 = vadd.f32 0.0, %v1098
      %1100 = vmatmul.f32.gmra.mxu0 %v989
      %v1101 = vpop.f32.mrf.mxu0
      %v1102 = vadd.f32 0.0, %v1101
      %1103 = vmatmul.f32.gmra.mxu0 %v992
      %v1104 = vpop.f32.mrf.mxu0
      %v1105 = vadd.f32 0.0, %v1104
      %1106 = vmatmul.f32.gmra.mxu0 %v995
      %v1107 = vpop.f32.mrf.mxu0
      %v1108 = vadd.f32 0.0, %v1107
      %1109 = vmatmul.f32.gmra.mxu0 %v998
      %v1110 = vpop.f32.mrf.mxu0
      %v1111 = vadd.f32 0.0, %v1110
      %1112 = vmatmul.f32.gmra.mxu0 %v1001
      %v1113 = vpop.f32.mrf.mxu0
      %v1114 = vadd.f32 0.0, %v1113
      %1115 = vmatmul.f32.gmra.mxu0 %v1004
      %v1116 = vpop.f32.mrf.mxu0
      %v1117 = vadd.f32 0.0, %v1116
      %1118 = vmatmul.f32.gmra.mxu0 %v1007
      %v1119 = vpop.f32.mrf.mxu0
      %v1120 = vadd.f32 0.0, %v1119
      %1121 = vmatmul.f32.gmra.mxu0 %v1010
      %v1122 = vpop.f32.mrf.mxu0
      %v1123 = vadd.f32 0.0, %v1122
      %1124 = vmatmul.f32.gmra.mxu0 %v1013
      %v1125 = vpop.f32.mrf.mxu0
      %v1126 = vadd.f32 0.0, %v1125
      %1127 = vmatmul.f32.gmra.mxu0 %v1016
      %v1128 = vpop.f32.mrf.mxu0
      %v1129 = vadd.f32 0.0, %v1128
      %1130 = vmatmul.f32.gmra.mxu0 %v1019
      %v1131 = vpop.f32.mrf.mxu0
      %v1132 = vadd.f32 0.0, %v1131
      %1133 = vmatmul.f32.gmra.mxu0 %v1022
      %v1134 = vpop.f32.mrf.mxu0
      %v1135 = vadd.f32 0.0, %v1134
      %1136 = vmatmul.f32.gmra.mxu0 %v1025
      %v1137 = vpop.f32.mrf.mxu0
      %v1138 = vadd.f32 0.0, %v1137
      %1139 = vmatmul.f32.gmra.mxu0 %v1028
      %v1140 = vpop.f32.mrf.mxu0
      %v1141 = vadd.f32 0.0, %v1140
      %1142 = vmatmul.f32.gmra.mxu0 %v1031
      %v1143 = vpop.f32.mrf.mxu0
      %v1144 = vadd.f32 0.0, %v1143
      %1145 = vmatmul.f32.gmra.mxu0 %v1034
      %v1146 = vpop.f32.mrf.mxu0
      %v1147 = vadd.f32 0.0, %v1146
      %1148 = vmatmul.f32.gmra.mxu0 %v1037
      %v1149 = vpop.f32.mrf.mxu0
      %v1150 = vadd.f32 0.0, %v1149
      %1151 = vmatmul.f32.gmra.mxu0 %v1040
      %v1152 = vpop.f32.mrf.mxu0
      %v1153 = vadd.f32 0.0, %v1152
      %1154 = vmatmul.f32.gmra.mxu0 %v1043
      %v1155 = vpop.f32.mrf.mxu0
      %v1156 = vadd.f32 0.0, %v1155
      %1157 = vmatmul.f32.gmra.mxu0 %v1046
      %v1158 = vpop.f32.mrf.mxu0
      %v1159 = vadd.f32 0.0, %v1158
      %1160 = vmatmul.f32.gmra.mxu0 %v1049
      %v1161 = vpop.f32.mrf.mxu0
      %v1162 = vadd.f32 0.0, %v1161
      %1163 = vmatmul.f32.gmra.mxu0 %v1052
      %v1164 = vpop.f32.mrf.mxu0
      %v1165 = vadd.f32 0.0, %v1164
      %1166 = vmatmul.f32.gmra.mxu0 %v1055
      %v1167 = vpop.f32.mrf.mxu0
      %v1168 = vadd.f32 0.0, %v1167
      %1169 = vmatmul.f32.gmra.mxu0 %v1058
      %v1170 = vpop.f32.mrf.mxu0
      %v1171 = vadd.f32 0.0, %v1170
      %1172 = vmatmul.f32.gmra.mxu0 %v1061
      %v1173 = vpop.f32.mrf.mxu0
      %v1174 = vadd.f32 0.0, %v1173
      %1175 = vmatmul.f32.gmra.mxu0 %v1064
      %v1176 = vpop.f32.mrf.mxu0
      %v1177 = vadd.f32 0.0, %v1176
      %1178 = vdwg.mxu0
      %v1179 = vadd.f32 %v841, %v1084
      %v1180 = vadd.f32 %v844, %v1087
      %v1181 = vadd.f32 %v847, %v1090
      %v1182 = vadd.f32 %v850, %v1093
      %v1183 = vadd.f32 %v853, %v1096
      %v1184 = vadd.f32 %v856, %v1099
      %v1185 = vadd.f32 %v859, %v1102
      %v1186 = vadd.f32 %v862, %v1105
      %v1187 = vadd.f32 %v865, %v1108
      %v1188 = vadd.f32 %v868, %v1111
      %v1189 = vadd.f32 %v871, %v1114
      %v1190 = vadd.f32 %v874, %v1117
      %v1191 = vadd.f32 %v877, %v1120
      %v1192 = vadd.f32 %v880, %v1123
      %v1193 = vadd.f32 %v883, %v1126
      %v1194 = vadd.f32 %v886, %v1129
      %v1195 = vadd.f32 %v889, %v1132
      %v1196 = vadd.f32 %v892, %v1135
      %v1197 = vadd.f32 %v895, %v1138
      %v1198 = vadd.f32 %v898, %v1141
      %v1199 = vadd.f32 %v901, %v1144
      %v1200 = vadd.f32 %v904, %v1147
      %v1201 = vadd.f32 %v907, %v1150
      %v1202 = vadd.f32 %v910, %v1153
      %v1203 = vadd.f32 %v913, %v1156
      %v1204 = vadd.f32 %v916, %v1159
      %v1205 = vadd.f32 %v919, %v1162
      %v1206 = vadd.f32 %v922, %v1165
      %v1207 = vadd.f32 %v925, %v1168
      %v1208 = vadd.f32 %v928, %v1171
      %v1209 = vadd.f32 %v931, %v1174
      %v1210 = vadd.f32 %v934, %v1177
      %v1211 = vld [vmem:[%s418] sm:$0xff]
      %v1212 = vld [vmem:[%s418 + $0x8] sm:$0xff]
      %v1213 = vld [vmem:[%s418 + $0x18] sm:$0xff]
      %v1214 = vld [vmem:[%s418 + $0x20] sm:$0xff]
      %v1215 = vld [vmem:[%s418 + $0x30] sm:$0xff]
      %v1216 = vld [vmem:[%s418 + $0x38] sm:$0xff]
      %v1217 = vld [vmem:[%s418 + $0x48] sm:$0xff]
      %v1218 = vld [vmem:[%s418 + $0x50] sm:$0xff]
      %v1219 = vld [vmem:[%s418 + $0x60] sm:$0xff]
      %v1220 = vld [vmem:[%s418 + $0x68] sm:$0xff]
      %v1221 = vld [vmem:[%s418 + $0x78] sm:$0xff]
      %v1222 = vld [vmem:[%s418 + $0x80] sm:$0xff]
      %v1223 = vld [vmem:[%s418 + $0x90] sm:$0xff]
      %v1224 = vld [vmem:[%s418 + $0x98] sm:$0xff]
      %v1225 = vld [vmem:[%s418 + $0xa8] sm:$0xff]
      %v1226 = vld [vmem:[%s418 + $0xb0] sm:$0xff]
      %v1227 = vld [vmem:[%s418 + $0xc0] sm:$0xff]
      %v1228 = vld [vmem:[%s418 + $0xc8] sm:$0xff]
      %v1229 = vld [vmem:[%s418 + $0xd8] sm:$0xff]
      %v1230 = vld [vmem:[%s418 + $0xe0] sm:$0xff]
      %v1231 = vld [vmem:[%s418 + $0xf0] sm:$0xff]
      %v1232 = vld [vmem:[%s418 + $0xf8] sm:$0xff]
      %v1233 = vld [vmem:[%s418 + $0x108] sm:$0xff]
      %v1234 = vld [vmem:[%s418 + $0x110] sm:$0xff]
      %v1235 = vld [vmem:[%s418 + $0x120] sm:$0xff]
      %v1236 = vld [vmem:[%s418 + $0x128] sm:$0xff]
      %v1237 = vld [vmem:[%s418 + $0x138] sm:$0xff]
      %v1238 = vld [vmem:[%s418 + $0x140] sm:$0xff]
      %v1239 = vld [vmem:[%s418 + $0x150] sm:$0xff]
      %v1240 = vld [vmem:[%s418 + $0x158] sm:$0xff]
      %v1241 = vld [vmem:[%s418 + $0x168] sm:$0xff]
      %v1242 = vld [vmem:[%s418 + $0x170] sm:$0xff]
      %s1243 = scalar_lea.vmem %s1, 24
      %v1244 = vld [vmem:[%s1243] sm:$0xff]
      %v1246 = vsel %vm372, %v1211, 0
      %v1249 = vsel %vm372, %v1212, 0
      %v1252 = vsel %vm372, %v1213, 0
      %v1255 = vsel %vm372, %v1214, 0
      %v1258 = vsel %vm372, %v1215, 0
      %v1261 = vsel %vm372, %v1216, 0
      %v1264 = vsel %vm372, %v1217, 0
      %v1267 = vsel %vm372, %v1218, 0
      %v1270 = vsel %vm372, %v1219, 0
      %v1273 = vsel %vm372, %v1220, 0
      %v1276 = vsel %vm372, %v1221, 0
      %v1279 = vsel %vm372, %v1222, 0
      %v1282 = vsel %vm372, %v1223, 0
      %v1285 = vsel %vm372, %v1224, 0
      %v1288 = vsel %vm372, %v1225, 0
      %v1291 = vsel %vm372, %v1226, 0
      %v1294 = vsel %vm372, %v1227, 0
      %v1297 = vsel %vm372, %v1228, 0
      %v1300 = vsel %vm372, %v1229, 0
      %v1303 = vsel %vm372, %v1230, 0
      %v1306 = vsel %vm372, %v1231, 0
      %v1309 = vsel %vm372, %v1232, 0
      %v1312 = vsel %vm372, %v1233, 0
      %v1315 = vsel %vm372, %v1234, 0
      %v1318 = vsel %vm372, %v1235, 0
      %v1321 = vsel %vm372, %v1236, 0
      %v1324 = vsel %vm372, %v1237, 0
      %v1327 = vsel %vm372, %v1238, 0
      %v1330 = vsel %vm372, %v1239, 0
      %v1333 = vsel %vm372, %v1240, 0
      %v1336 = vsel %vm372, %v1241, 0
      %v1339 = vsel %vm372, %v1242, 0
      %1341 = vmatpush.msra.mxu0 0.0
      %1342 = vmatpush.msra.mxu0 0.0
      %1343 = vmatpush.msra.mxu0 0.0
      %1344 = vmatpush.msra.mxu0 0.0
      %1345 = vmatpush.msra.mxu0 0.0
      %1346 = vmatpush.msra.mxu0 0.0
      %1347 = vmatpush.msra.mxu0 0.0
      %1348 = vmatpush.msra.mxu0 0.0
      %1349 = vmatpush.msra.mxu0 0.0
      %1350 = vmatpush.msra.mxu0 0.0
      %1351 = vmatpush.msra.mxu0 0.0
      %1352 = vmatpush.msra.mxu0 0.0
      %1353 = vmatpush.msra.mxu0 0.0
      %1354 = vmatpush.msra.mxu0 0.0
      %1355 = vmatpush.msra.mxu0 0.0
      %1356 = vmatpush.msra.mxu0 %v1244
      %1357 = vmatmul.f32.gmra.mxu0 %v1246
      %v1358 = vpop.f32.mrf.mxu0
      %v1359 = vadd.f32 0.0, %v1358
      %1360 = vmatmul.f32.gmra.mxu0 %v1249
      %v1361 = vpop.f32.mrf.mxu0
      %v1362 = vadd.f32 0.0, %v1361
      %1363 = vmatmul.f32.gmra.mxu0 %v1252
      %v1364 = vpop.f32.mrf.mxu0
      %v1365 = vadd.f32 0.0, %v1364
      %1366 = vmatmul.f32.gmra.mxu0 %v1255
      %v1367 = vpop.f32.mrf.mxu0
      %v1368 = vadd.f32 0.0, %v1367
      %1369 = vmatmul.f32.gmra.mxu0 %v1258
      %v1370 = vpop.f32.mrf.mxu0
      %v1371 = vadd.f32 0.0, %v1370
      %1372 = vmatmul.f32.gmra.mxu0 %v1261
      %v1373 = vpop.f32.mrf.mxu0
      %v1374 = vadd.f32 0.0, %v1373
      %1375 = vmatmul.f32.gmra.mxu0 %v1264
      %v1376 = vpop.f32.mrf.mxu0
      %v1377 = vadd.f32 0.0, %v1376
      %1378 = vmatmul.f32.gmra.mxu0 %v1267
      %v1379 = vpop.f32.mrf.mxu0
      %v1380 = vadd.f32 0.0, %v1379
      %1381 = vmatmul.f32.gmra.mxu0 %v1270
      %v1382 = vpop.f32.mrf.mxu0
      %v1383 = vadd.f32 0.0, %v1382
      %1384 = vmatmul.f32.gmra.mxu0 %v1273
      %v1385 = vpop.f32.mrf.mxu0
      %v1386 = vadd.f32 0.0, %v1385
      %1387 = vmatmul.f32.gmra.mxu0 %v1276
      %v1388 = vpop.f32.mrf.mxu0
      %v1389 = vadd.f32 0.0, %v1388
      %1390 = vmatmul.f32.gmra.mxu0 %v1279
      %v1391 = vpop.f32.mrf.mxu0
      %v1392 = vadd.f32 0.0, %v1391
      %1393 = vmatmul.f32.gmra.mxu0 %v1282
      %v1394 = vpop.f32.mrf.mxu0
      %v1395 = vadd.f32 0.0, %v1394
      %1396 = vmatmul.f32.gmra.mxu0 %v1285
      %v1397 = vpop.f32.mrf.mxu0
      %v1398 = vadd.f32 0.0, %v1397
      %1399 = vmatmul.f32.gmra.mxu0 %v1288
      %v1400 = vpop.f32.mrf.mxu0
      %v1401 = vadd.f32 0.0, %v1400
      %1402 = vmatmul.f32.gmra.mxu0 %v1291
      %v1403 = vpop.f32.mrf.mxu0
      %v1404 = vadd.f32 0.0, %v1403
      %1405 = vmatmul.f32.gmra.mxu0 %v1294
      %v1406 = vpop.f32.mrf.mxu0
      %v1407 = vadd.f32 0.0, %v1406
      %1408 = vmatmul.f32.gmra.mxu0 %v1297
      %v1409 = vpop.f32.mrf.mxu0
      %v1410 = vadd.f32 0.0, %v1409
      %1411 = vmatmul.f32.gmra.mxu0 %v1300
      %v1412 = vpop.f32.mrf.mxu0
      %v1413 = vadd.f32 0.0, %v1412
      %1414 = vmatmul.f32.gmra.mxu0 %v1303
      %v1415 = vpop.f32.mrf.mxu0
      %v1416 = vadd.f32 0.0, %v1415
      %1417 = vmatmul.f32.gmra.mxu0 %v1306
      %v1418 = vpop.f32.mrf.mxu0
      %v1419 = vadd.f32 0.0, %v1418
      %1420 = vmatmul.f32.gmra.mxu0 %v1309
      %v1421 = vpop.f32.mrf.mxu0
      %v1422 = vadd.f32 0.0, %v1421
      %1423 = vmatmul.f32.gmra.mxu0 %v1312
      %v1424 = vpop.f32.mrf.mxu0
      %v1425 = vadd.f32 0.0, %v1424
      %1426 = vmatmul.f32.gmra.mxu0 %v1315
      %v1427 = vpop.f32.mrf.mxu0
      %v1428 = vadd.f32 0.0, %v1427
      %1429 = vmatmul.f32.gmra.mxu0 %v1318
      %v1430 = vpop.f32.mrf.mxu0
      %v1431 = vadd.f32 0.0, %v1430
      %1432 = vmatmul.f32.gmra.mxu0 %v1321
      %v1433 = vpop.f32.mrf.mxu0
      %v1434 = vadd.f32 0.0, %v1433
      %1435 = vmatmul.f32.gmra.mxu0 %v1324
      %v1436 = vpop.f32.mrf.mxu0
      %v1437 = vadd.f32 0.0, %v1436
      %1438 = vmatmul.f32.gmra.mxu0 %v1327
      %v1439 = vpop.f32.mrf.mxu0
      %v1440 = vadd.f32 0.0, %v1439
      %1441 = vmatmul.f32.gmra.mxu0 %v1330
      %v1442 = vpop.f32.mrf.mxu0
      %v1443 = vadd.f32 0.0, %v1442
      %1444 = vmatmul.f32.gmra.mxu0 %v1333
      %v1445 = vpop.f32.mrf.mxu0
      %v1446 = vadd.f32 0.0, %v1445
      %1447 = vmatmul.f32.gmra.mxu0 %v1336
      %v1448 = vpop.f32.mrf.mxu0
      %v1449 = vadd.f32 0.0, %v1448
      %1450 = vmatmul.f32.gmra.mxu0 %v1339
      %v1451 = vpop.f32.mrf.mxu0
      %v1452 = vadd.f32 0.0, %v1451
      %1453 = vdwg.mxu0
      %v1454 = vadd.f32 %v1179, %v1359
      %v1455 = vadd.f32 %v1180, %v1362
      %v1456 = vadd.f32 %v1181, %v1365
      %v1457 = vadd.f32 %v1182, %v1368
      %v1458 = vadd.f32 %v1183, %v1371
      %v1459 = vadd.f32 %v1184, %v1374
      %v1460 = vadd.f32 %v1185, %v1377
      %v1461 = vadd.f32 %v1186, %v1380
      %v1462 = vadd.f32 %v1187, %v1383
      %v1463 = vadd.f32 %v1188, %v1386
      %v1464 = vadd.f32 %v1189, %v1389
      %v1465 = vadd.f32 %v1190, %v1392
      %v1466 = vadd.f32 %v1191, %v1395
      %v1467 = vadd.f32 %v1192, %v1398
      %v1468 = vadd.f32 %v1193, %v1401
      %v1469 = vadd.f32 %v1194, %v1404
      %v1470 = vadd.f32 %v1195, %v1407
      %v1471 = vadd.f32 %v1196, %v1410
      %v1472 = vadd.f32 %v1197, %v1413
      %v1473 = vadd.f32 %v1198, %v1416
      %v1474 = vadd.f32 %v1199, %v1419
      %v1475 = vadd.f32 %v1200, %v1422
      %v1476 = vadd.f32 %v1201, %v1425
      %v1477 = vadd.f32 %v1202, %v1428
      %v1478 = vadd.f32 %v1203, %v1431
      %v1479 = vadd.f32 %v1204, %v1434
      %v1480 = vadd.f32 %v1205, %v1437
      %v1481 = vadd.f32 %v1206, %v1440
      %v1482 = vadd.f32 %v1207, %v1443
      %v1483 = vadd.f32 %v1208, %v1446
      %v1484 = vadd.f32 %v1209, %v1449
      %v1485 = vadd.f32 %v1210, %v1452
      %v1486 = vld [vmem:[%s418 + $0x1] sm:$0xff]
      %v1487 = vld [vmem:[%s418 + $0x9] sm:$0xff]
      %v1488 = vld [vmem:[%s418 + $0x19] sm:$0xff]
      %v1489 = vld [vmem:[%s418 + $0x21] sm:$0xff]
      %v1490 = vld [vmem:[%s418 + $0x31] sm:$0xff]
      %v1491 = vld [vmem:[%s418 + $0x39] sm:$0xff]
      %v1492 = vld [vmem:[%s418 + $0x49] sm:$0xff]
      %v1493 = vld [vmem:[%s418 + $0x51] sm:$0xff]
      %v1494 = vld [vmem:[%s418 + $0x61] sm:$0xff]
      %v1495 = vld [vmem:[%s418 + $0x69] sm:$0xff]
      %v1496 = vld [vmem:[%s418 + $0x79] sm:$0xff]
      %v1497 = vld [vmem:[%s418 + $0x81] sm:$0xff]
      %v1498 = vld [vmem:[%s418 + $0x91] sm:$0xff]
      %v1499 = vld [vmem:[%s418 + $0x99] sm:$0xff]
      %v1500 = vld [vmem:[%s418 + $0xa9] sm:$0xff]
      %v1501 = vld [vmem:[%s418 + $0xb1] sm:$0xff]
      %v1502 = vld [vmem:[%s418 + $0xc1] sm:$0xff]
      %v1503 = vld [vmem:[%s418 + $0xc9] sm:$0xff]
      %v1504 = vld [vmem:[%s418 + $0xd9] sm:$0xff]
      %v1505 = vld [vmem:[%s418 + $0xe1] sm:$0xff]
      %v1506 = vld [vmem:[%s418 + $0xf1] sm:$0xff]
      %v1507 = vld [vmem:[%s418 + $0xf9] sm:$0xff]
      %v1508 = vld [vmem:[%s418 + $0x109] sm:$0xff]
      %v1509 = vld [vmem:[%s418 + $0x111] sm:$0xff]
      %v1510 = vld [vmem:[%s418 + $0x121] sm:$0xff]
      %v1511 = vld [vmem:[%s418 + $0x129] sm:$0xff]
      %v1512 = vld [vmem:[%s418 + $0x139] sm:$0xff]
      %v1513 = vld [vmem:[%s418 + $0x141] sm:$0xff]
      %v1514 = vld [vmem:[%s418 + $0x151] sm:$0xff]
      %v1515 = vld [vmem:[%s418 + $0x159] sm:$0xff]
      %v1516 = vld [vmem:[%s418 + $0x169] sm:$0xff]
      %v1517 = vld [vmem:[%s418 + $0x171] sm:$0xff]
      %s1518 = scalar_lea.vmem %s1, 32
      %v1519 = vld [vmem:[%s1518] sm:$0xff]
      %v1521 = vsel %vm372, %v1486, 0
      %v1524 = vsel %vm372, %v1487, 0
      %v1527 = vsel %vm372, %v1488, 0
      %v1530 = vsel %vm372, %v1489, 0
      %v1533 = vsel %vm372, %v1490, 0
      %v1536 = vsel %vm372, %v1491, 0
      %v1539 = vsel %vm372, %v1492, 0
      %v1542 = vsel %vm372, %v1493, 0
      %v1545 = vsel %vm372, %v1494, 0
      %v1548 = vsel %vm372, %v1495, 0
      %v1551 = vsel %vm372, %v1496, 0
      %v1554 = vsel %vm372, %v1497, 0
      %v1557 = vsel %vm372, %v1498, 0
      %v1560 = vsel %vm372, %v1499, 0
      %v1563 = vsel %vm372, %v1500, 0
      %v1566 = vsel %vm372, %v1501, 0
      %v1569 = vsel %vm372, %v1502, 0
      %v1572 = vsel %vm372, %v1503, 0
      %v1575 = vsel %vm372, %v1504, 0
      %v1578 = vsel %vm372, %v1505, 0
      %v1581 = vsel %vm372, %v1506, 0
      %v1584 = vsel %vm372, %v1507, 0
      %v1587 = vsel %vm372, %v1508, 0
      %v1590 = vsel %vm372, %v1509, 0
      %v1593 = vsel %vm372, %v1510, 0
      %v1596 = vsel %vm372, %v1511, 0
      %v1599 = vsel %vm372, %v1512, 0
      %v1602 = vsel %vm372, %v1513, 0
      %v1605 = vsel %vm372, %v1514, 0
      %v1608 = vsel %vm372, %v1515, 0
      %v1611 = vsel %vm372, %v1516, 0
      %v1614 = vsel %vm372, %v1517, 0
      %1616 = vmatpush.msra.mxu0 0.0
      %1617 = vmatpush.msra.mxu0 0.0
      %1618 = vmatpush.msra.mxu0 0.0
      %1619 = vmatpush.msra.mxu0 0.0
      %1620 = vmatpush.msra.mxu0 0.0
      %1621 = vmatpush.msra.mxu0 0.0
      %1622 = vmatpush.msra.mxu0 0.0
      %1623 = vmatpush.msra.mxu0 0.0
      %1624 = vmatpush.msra.mxu0 0.0
      %1625 = vmatpush.msra.mxu0 0.0
      %1626 = vmatpush.msra.mxu0 0.0
      %1627 = vmatpush.msra.mxu0 0.0
      %1628 = vmatpush.msra.mxu0 0.0
      %1629 = vmatpush.msra.mxu0 0.0
      %1630 = vmatpush.msra.mxu0 0.0
      %1631 = vmatpush.msra.mxu0 %v1519
      %1632 = vmatmul.f32.gmra.mxu0 %v1521
      %v1633 = vpop.f32.mrf.mxu0
      %v1634 = vadd.f32 0.0, %v1633
      %1635 = vmatmul.f32.gmra.mxu0 %v1524
      %v1636 = vpop.f32.mrf.mxu0
      %v1637 = vadd.f32 0.0, %v1636
      %1638 = vmatmul.f32.gmra.mxu0 %v1527
      %v1639 = vpop.f32.mrf.mxu0
      %v1640 = vadd.f32 0.0, %v1639
      %1641 = vmatmul.f32.gmra.mxu0 %v1530
      %v1642 = vpop.f32.mrf.mxu0
      %v1643 = vadd.f32 0.0, %v1642
      %1644 = vmatmul.f32.gmra.mxu0 %v1533
      %v1645 = vpop.f32.mrf.mxu0
      %v1646 = vadd.f32 0.0, %v1645
      %1647 = vmatmul.f32.gmra.mxu0 %v1536
      %v1648 = vpop.f32.mrf.mxu0
      %v1649 = vadd.f32 0.0, %v1648
      %1650 = vmatmul.f32.gmra.mxu0 %v1539
      %v1651 = vpop.f32.mrf.mxu0
      %v1652 = vadd.f32 0.0, %v1651
      %1653 = vmatmul.f32.gmra.mxu0 %v1542
      %v1654 = vpop.f32.mrf.mxu0
      %v1655 = vadd.f32 0.0, %v1654
      %1656 = vmatmul.f32.gmra.mxu0 %v1545
      %v1657 = vpop.f32.mrf.mxu0
      %v1658 = vadd.f32 0.0, %v1657
      %1659 = vmatmul.f32.gmra.mxu0 %v1548
      %v1660 = vpop.f32.mrf.mxu0
      %v1661 = vadd.f32 0.0, %v1660
      %1662 = vmatmul.f32.gmra.mxu0 %v1551
      %v1663 = vpop.f32.mrf.mxu0
      %v1664 = vadd.f32 0.0, %v1663
      %1665 = vmatmul.f32.gmra.mxu0 %v1554
      %v1666 = vpop.f32.mrf.mxu0
      %v1667 = vadd.f32 0.0, %v1666
      %1668 = vmatmul.f32.gmra.mxu0 %v1557
      %v1669 = vpop.f32.mrf.mxu0
      %v1670 = vadd.f32 0.0, %v1669
      %1671 = vmatmul.f32.gmra.mxu0 %v1560
      %v1672 = vpop.f32.mrf.mxu0
      %v1673 = vadd.f32 0.0, %v1672
      %1674 = vmatmul.f32.gmra.mxu0 %v1563
      %v1675 = vpop.f32.mrf.mxu0
      %v1676 = vadd.f32 0.0, %v1675
      %1677 = vmatmul.f32.gmra.mxu0 %v1566
      %v1678 = vpop.f32.mrf.mxu0
      %v1679 = vadd.f32 0.0, %v1678
      %1680 = vmatmul.f32.gmra.mxu0 %v1569
      %v1681 = vpop.f32.mrf.mxu0
      %v1682 = vadd.f32 0.0, %v1681
      %1683 = vmatmul.f32.gmra.mxu0 %v1572
      %v1684 = vpop.f32.mrf.mxu0
      %v1685 = vadd.f32 0.0, %v1684
      %1686 = vmatmul.f32.gmra.mxu0 %v1575
      %v1687 = vpop.f32.mrf.mxu0
      %v1688 = vadd.f32 0.0, %v1687
      %1689 = vmatmul.f32.gmra.mxu0 %v1578
      %v1690 = vpop.f32.mrf.mxu0
      %v1691 = vadd.f32 0.0, %v1690
      %1692 = vmatmul.f32.gmra.mxu0 %v1581
      %v1693 = vpop.f32.mrf.mxu0
      %v1694 = vadd.f32 0.0, %v1693
      %1695 = vmatmul.f32.gmra.mxu0 %v1584
      %v1696 = vpop.f32.mrf.mxu0
      %v1697 = vadd.f32 0.0, %v1696
      %1698 = vmatmul.f32.gmra.mxu0 %v1587
      %v1699 = vpop.f32.mrf.mxu0
      %v1700 = vadd.f32 0.0, %v1699
      %1701 = vmatmul.f32.gmra.mxu0 %v1590
      %v1702 = vpop.f32.mrf.mxu0
      %v1703 = vadd.f32 0.0, %v1702
      %1704 = vmatmul.f32.gmra.mxu0 %v1593
      %v1705 = vpop.f32.mrf.mxu0
      %v1706 = vadd.f32 0.0, %v1705
      %1707 = vmatmul.f32.gmra.mxu0 %v1596
      %v1708 = vpop.f32.mrf.mxu0
      %v1709 = vadd.f32 0.0, %v1708
      %1710 = vmatmul.f32.gmra.mxu0 %v1599
      %v1711 = vpop.f32.mrf.mxu0
      %v1712 = vadd.f32 0.0, %v1711
      %1713 = vmatmul.f32.gmra.mxu0 %v1602
      %v1714 = vpop.f32.mrf.mxu0
      %v1715 = vadd.f32 0.0, %v1714
      %1716 = vmatmul.f32.gmra.mxu0 %v1605
      %v1717 = vpop.f32.mrf.mxu0
      %v1718 = vadd.f32 0.0, %v1717
      %1719 = vmatmul.f32.gmra.mxu0 %v1608
      %v1720 = vpop.f32.mrf.mxu0
      %v1721 = vadd.f32 0.0, %v1720
      %1722 = vmatmul.f32.gmra.mxu0 %v1611
      %v1723 = vpop.f32.mrf.mxu0
      %v1724 = vadd.f32 0.0, %v1723
      %1725 = vmatmul.f32.gmra.mxu0 %v1614
      %v1726 = vpop.f32.mrf.mxu0
      %v1727 = vadd.f32 0.0, %v1726
      %1728 = vdwg.mxu0
      %v1729 = vadd.f32 %v1454, %v1634
      %v1730 = vadd.f32 %v1455, %v1637
      %v1731 = vadd.f32 %v1456, %v1640
      %v1732 = vadd.f32 %v1457, %v1643
      %v1733 = vadd.f32 %v1458, %v1646
      %v1734 = vadd.f32 %v1459, %v1649
      %v1735 = vadd.f32 %v1460, %v1652
      %v1736 = vadd.f32 %v1461, %v1655
      %v1737 = vadd.f32 %v1462, %v1658
      %v1738 = vadd.f32 %v1463, %v1661
      %v1739 = vadd.f32 %v1464, %v1664
      %v1740 = vadd.f32 %v1465, %v1667
      %v1741 = vadd.f32 %v1466, %v1670
      %v1742 = vadd.f32 %v1467, %v1673
      %v1743 = vadd.f32 %v1468, %v1676
      %v1744 = vadd.f32 %v1469, %v1679
      %v1745 = vadd.f32 %v1470, %v1682
      %v1746 = vadd.f32 %v1471, %v1685
      %v1747 = vadd.f32 %v1472, %v1688
      %v1748 = vadd.f32 %v1473, %v1691
      %v1749 = vadd.f32 %v1474, %v1694
      %v1750 = vadd.f32 %v1475, %v1697
      %v1751 = vadd.f32 %v1476, %v1700
      %v1752 = vadd.f32 %v1477, %v1703
      %v1753 = vadd.f32 %v1478, %v1706
      %v1754 = vadd.f32 %v1479, %v1709
      %v1755 = vadd.f32 %v1480, %v1712
      %v1756 = vadd.f32 %v1481, %v1715
      %v1757 = vadd.f32 %v1482, %v1718
      %v1758 = vadd.f32 %v1483, %v1721
      %v1759 = vadd.f32 %v1484, %v1724
      %v1760 = vadd.f32 %v1485, %v1727
      %v1761 = vld [vmem:[%s418 + $0x2] sm:$0xff]
      %v1762 = vld [vmem:[%s418 + $0xa] sm:$0xff]
      %v1763 = vld [vmem:[%s418 + $0x1a] sm:$0xff]
      %v1764 = vld [vmem:[%s418 + $0x22] sm:$0xff]
      %v1765 = vld [vmem:[%s418 + $0x32] sm:$0xff]
      %v1766 = vld [vmem:[%s418 + $0x3a] sm:$0xff]
      %v1767 = vld [vmem:[%s418 + $0x4a] sm:$0xff]
      %v1768 = vld [vmem:[%s418 + $0x52] sm:$0xff]
      %v1769 = vld [vmem:[%s418 + $0x62] sm:$0xff]
      %v1770 = vld [vmem:[%s418 + $0x6a] sm:$0xff]
      %v1771 = vld [vmem:[%s418 + $0x7a] sm:$0xff]
      %v1772 = vld [vmem:[%s418 + $0x82] sm:$0xff]
      %v1773 = vld [vmem:[%s418 + $0x92] sm:$0xff]
      %v1774 = vld [vmem:[%s418 + $0x9a] sm:$0xff]
      %v1775 = vld [vmem:[%s418 + $0xaa] sm:$0xff]
      %v1776 = vld [vmem:[%s418 + $0xb2] sm:$0xff]
      %v1777 = vld [vmem:[%s418 + $0xc2] sm:$0xff]
      %v1778 = vld [vmem:[%s418 + $0xca] sm:$0xff]
      %v1779 = vld [vmem:[%s418 + $0xda] sm:$0xff]
      %v1780 = vld [vmem:[%s418 + $0xe2] sm:$0xff]
      %v1781 = vld [vmem:[%s418 + $0xf2] sm:$0xff]
      %v1782 = vld [vmem:[%s418 + $0xfa] sm:$0xff]
      %v1783 = vld [vmem:[%s418 + $0x10a] sm:$0xff]
      %v1784 = vld [vmem:[%s418 + $0x112] sm:$0xff]
      %v1785 = vld [vmem:[%s418 + $0x122] sm:$0xff]
      %v1786 = vld [vmem:[%s418 + $0x12a] sm:$0xff]
      %v1787 = vld [vmem:[%s418 + $0x13a] sm:$0xff]
      %v1788 = vld [vmem:[%s418 + $0x142] sm:$0xff]
      %v1789 = vld [vmem:[%s418 + $0x152] sm:$0xff]
      %v1790 = vld [vmem:[%s418 + $0x15a] sm:$0xff]
      %v1791 = vld [vmem:[%s418 + $0x16a] sm:$0xff]
      %v1792 = vld [vmem:[%s418 + $0x172] sm:$0xff]
      %s1793 = scalar_lea.vmem %s1, 40
      %v1794 = vld [vmem:[%s1793] sm:$0xff]
      %v1796 = vsel %vm372, %v1761, 0
      %v1799 = vsel %vm372, %v1762, 0
      %v1802 = vsel %vm372, %v1763, 0
      %v1805 = vsel %vm372, %v1764, 0
      %v1808 = vsel %vm372, %v1765, 0
      %v1811 = vsel %vm372, %v1766, 0
      %v1814 = vsel %vm372, %v1767, 0
      %v1817 = vsel %vm372, %v1768, 0
      %v1820 = vsel %vm372, %v1769, 0
      %v1823 = vsel %vm372, %v1770, 0
      %v1826 = vsel %vm372, %v1771, 0
      %v1829 = vsel %vm372, %v1772, 0
      %v1832 = vsel %vm372, %v1773, 0
      %v1835 = vsel %vm372, %v1774, 0
      %v1838 = vsel %vm372, %v1775, 0
      %v1841 = vsel %vm372, %v1776, 0
      %v1844 = vsel %vm372, %v1777, 0
      %v1847 = vsel %vm372, %v1778, 0
      %v1850 = vsel %vm372, %v1779, 0
      %v1853 = vsel %vm372, %v1780, 0
      %v1856 = vsel %vm372, %v1781, 0
      %v1859 = vsel %vm372, %v1782, 0
      %v1862 = vsel %vm372, %v1783, 0
      %v1865 = vsel %vm372, %v1784, 0
      %v1868 = vsel %vm372, %v1785, 0
      %v1871 = vsel %vm372, %v1786, 0
      %v1874 = vsel %vm372, %v1787, 0
      %v1877 = vsel %vm372, %v1788, 0
      %v1880 = vsel %vm372, %v1789, 0
      %v1883 = vsel %vm372, %v1790, 0
      %v1886 = vsel %vm372, %v1791, 0
      %v1889 = vsel %vm372, %v1792, 0
      %1891 = vmatpush.msra.mxu0 0.0
      %1892 = vmatpush.msra.mxu0 0.0
      %1893 = vmatpush.msra.mxu0 0.0
      %1894 = vmatpush.msra.mxu0 0.0
      %1895 = vmatpush.msra.mxu0 0.0
      %1896 = vmatpush.msra.mxu0 0.0
      %1897 = vmatpush.msra.mxu0 0.0
      %1898 = vmatpush.msra.mxu0 0.0
      %1899 = vmatpush.msra.mxu0 0.0
      %1900 = vmatpush.msra.mxu0 0.0
      %1901 = vmatpush.msra.mxu0 0.0
      %1902 = vmatpush.msra.mxu0 0.0
      %1903 = vmatpush.msra.mxu0 0.0
      %1904 = vmatpush.msra.mxu0 0.0
      %1905 = vmatpush.msra.mxu0 0.0
      %1906 = vmatpush.msra.mxu0 %v1794
      %1907 = vmatmul.f32.gmra.mxu0 %v1796
      %v1908 = vpop.f32.mrf.mxu0
      %v1909 = vadd.f32 0.0, %v1908
      %1910 = vmatmul.f32.gmra.mxu0 %v1799
      %v1911 = vpop.f32.mrf.mxu0
      %v1912 = vadd.f32 0.0, %v1911
      %1913 = vmatmul.f32.gmra.mxu0 %v1802
      %v1914 = vpop.f32.mrf.mxu0
      %v1915 = vadd.f32 0.0, %v1914
      %1916 = vmatmul.f32.gmra.mxu0 %v1805
      %v1917 = vpop.f32.mrf.mxu0
      %v1918 = vadd.f32 0.0, %v1917
      %1919 = vmatmul.f32.gmra.mxu0 %v1808
      %v1920 = vpop.f32.mrf.mxu0
      %v1921 = vadd.f32 0.0, %v1920
      %1922 = vmatmul.f32.gmra.mxu0 %v1811
      %v1923 = vpop.f32.mrf.mxu0
      %v1924 = vadd.f32 0.0, %v1923
      %1925 = vmatmul.f32.gmra.mxu0 %v1814
      %v1926 = vpop.f32.mrf.mxu0
      %v1927 = vadd.f32 0.0, %v1926
      %1928 = vmatmul.f32.gmra.mxu0 %v1817
      %v1929 = vpop.f32.mrf.mxu0
      %v1930 = vadd.f32 0.0, %v1929
      %1931 = vmatmul.f32.gmra.mxu0 %v1820
      %v1932 = vpop.f32.mrf.mxu0
      %v1933 = vadd.f32 0.0, %v1932
      %1934 = vmatmul.f32.gmra.mxu0 %v1823
      %v1935 = vpop.f32.mrf.mxu0
      %v1936 = vadd.f32 0.0, %v1935
      %1937 = vmatmul.f32.gmra.mxu0 %v1826
      %v1938 = vpop.f32.mrf.mxu0
      %v1939 = vadd.f32 0.0, %v1938
      %1940 = vmatmul.f32.gmra.mxu0 %v1829
      %v1941 = vpop.f32.mrf.mxu0
      %v1942 = vadd.f32 0.0, %v1941
      %1943 = vmatmul.f32.gmra.mxu0 %v1832
      %v1944 = vpop.f32.mrf.mxu0
      %v1945 = vadd.f32 0.0, %v1944
      %1946 = vmatmul.f32.gmra.mxu0 %v1835
      %v1947 = vpop.f32.mrf.mxu0
      %v1948 = vadd.f32 0.0, %v1947
      %1949 = vmatmul.f32.gmra.mxu0 %v1838
      %v1950 = vpop.f32.mrf.mxu0
      %v1951 = vadd.f32 0.0, %v1950
      %1952 = vmatmul.f32.gmra.mxu0 %v1841
      %v1953 = vpop.f32.mrf.mxu0
      %v1954 = vadd.f32 0.0, %v1953
      %1955 = vmatmul.f32.gmra.mxu0 %v1844
      %v1956 = vpop.f32.mrf.mxu0
      %v1957 = vadd.f32 0.0, %v1956
      %1958 = vmatmul.f32.gmra.mxu0 %v1847
      %v1959 = vpop.f32.mrf.mxu0
      %v1960 = vadd.f32 0.0, %v1959
      %1961 = vmatmul.f32.gmra.mxu0 %v1850
      %v1962 = vpop.f32.mrf.mxu0
      %v1963 = vadd.f32 0.0, %v1962
      %1964 = vmatmul.f32.gmra.mxu0 %v1853
      %v1965 = vpop.f32.mrf.mxu0
      %v1966 = vadd.f32 0.0, %v1965
      %1967 = vmatmul.f32.gmra.mxu0 %v1856
      %v1968 = vpop.f32.mrf.mxu0
      %v1969 = vadd.f32 0.0, %v1968
      %1970 = vmatmul.f32.gmra.mxu0 %v1859
      %v1971 = vpop.f32.mrf.mxu0
      %v1972 = vadd.f32 0.0, %v1971
      %1973 = vmatmul.f32.gmra.mxu0 %v1862
      %v1974 = vpop.f32.mrf.mxu0
      %v1975 = vadd.f32 0.0, %v1974
      %1976 = vmatmul.f32.gmra.mxu0 %v1865
      %v1977 = vpop.f32.mrf.mxu0
      %v1978 = vadd.f32 0.0, %v1977
      %1979 = vmatmul.f32.gmra.mxu0 %v1868
      %v1980 = vpop.f32.mrf.mxu0
      %v1981 = vadd.f32 0.0, %v1980
      %1982 = vmatmul.f32.gmra.mxu0 %v1871
      %v1983 = vpop.f32.mrf.mxu0
      %v1984 = vadd.f32 0.0, %v1983
      %1985 = vmatmul.f32.gmra.mxu0 %v1874
      %v1986 = vpop.f32.mrf.mxu0
      %v1987 = vadd.f32 0.0, %v1986
      %1988 = vmatmul.f32.gmra.mxu0 %v1877
      %v1989 = vpop.f32.mrf.mxu0
      %v1990 = vadd.f32 0.0, %v1989
      %1991 = vmatmul.f32.gmra.mxu0 %v1880
      %v1992 = vpop.f32.mrf.mxu0
      %v1993 = vadd.f32 0.0, %v1992
      %1994 = vmatmul.f32.gmra.mxu0 %v1883
      %v1995 = vpop.f32.mrf.mxu0
      %v1996 = vadd.f32 0.0, %v1995
      %1997 = vmatmul.f32.gmra.mxu0 %v1886
      %v1998 = vpop.f32.mrf.mxu0
      %v1999 = vadd.f32 0.0, %v1998
      %2000 = vmatmul.f32.gmra.mxu0 %v1889
      %v2001 = vpop.f32.mrf.mxu0
      %v2002 = vadd.f32 0.0, %v2001
      %2003 = vdwg.mxu0
      %v2004 = vadd.f32 %v1729, %v1909
      %v2005 = vadd.f32 %v1730, %v1912
      %v2006 = vadd.f32 %v1731, %v1915
      %v2007 = vadd.f32 %v1732, %v1918
      %v2008 = vadd.f32 %v1733, %v1921
      %v2009 = vadd.f32 %v1734, %v1924
      %v2010 = vadd.f32 %v1735, %v1927
      %v2011 = vadd.f32 %v1736, %v1930
      %v2012 = vadd.f32 %v1737, %v1933
      %v2013 = vadd.f32 %v1738, %v1936
      %v2014 = vadd.f32 %v1739, %v1939
      %v2015 = vadd.f32 %v1740, %v1942
      %v2016 = vadd.f32 %v1741, %v1945
      %v2017 = vadd.f32 %v1742, %v1948
      %v2018 = vadd.f32 %v1743, %v1951
      %v2019 = vadd.f32 %v1744, %v1954
      %v2020 = vadd.f32 %v1745, %v1957
      %v2021 = vadd.f32 %v1746, %v1960
      %v2022 = vadd.f32 %v1747, %v1963
      %v2023 = vadd.f32 %v1748, %v1966
      %v2024 = vadd.f32 %v1749, %v1969
      %v2025 = vadd.f32 %v1750, %v1972
      %v2026 = vadd.f32 %v1751, %v1975
      %v2027 = vadd.f32 %v1752, %v1978
      %v2028 = vadd.f32 %v1753, %v1981
      %v2029 = vadd.f32 %v1754, %v1984
      %v2030 = vadd.f32 %v1755, %v1987
      %v2031 = vadd.f32 %v1756, %v1990
      %v2032 = vadd.f32 %v1757, %v1993
      %v2033 = vadd.f32 %v1758, %v1996
      %v2034 = vadd.f32 %v1759, %v1999
      %v2035 = vadd.f32 %v1760, %v2002
      %s2036 = scalar_lea.vmem [#allocation2], 48
      %v2037 = vld [vmem:[%s2036] sm:$0xff]
      %v2038 = vld [vmem:[%s2036 + $0x8] sm:$0xff]
      %v2039 = vld [vmem:[%s2036 + $0x18] sm:$0xff]
      %v2040 = vld [vmem:[%s2036 + $0x20] sm:$0xff]
      %v2041 = vld [vmem:[%s2036 + $0x30] sm:$0xff]
      %v2042 = vld [vmem:[%s2036 + $0x38] sm:$0xff]
      %v2043 = vld [vmem:[%s2036 + $0x48] sm:$0xff]
      %v2044 = vld [vmem:[%s2036 + $0x50] sm:$0xff]
      %v2045 = vld [vmem:[%s2036 + $0x60] sm:$0xff]
      %v2046 = vld [vmem:[%s2036 + $0x68] sm:$0xff]
      %v2047 = vld [vmem:[%s2036 + $0x78] sm:$0xff]
      %v2048 = vld [vmem:[%s2036 + $0x80] sm:$0xff]
      %v2049 = vld [vmem:[%s2036 + $0x90] sm:$0xff]
      %v2050 = vld [vmem:[%s2036 + $0x98] sm:$0xff]
      %v2051 = vld [vmem:[%s2036 + $0xa8] sm:$0xff]
      %v2052 = vld [vmem:[%s2036 + $0xb0] sm:$0xff]
      %v2053 = vld [vmem:[%s2036 + $0xc0] sm:$0xff]
      %v2054 = vld [vmem:[%s2036 + $0xc8] sm:$0xff]
      %v2055 = vld [vmem:[%s2036 + $0xd8] sm:$0xff]
      %v2056 = vld [vmem:[%s2036 + $0xe0] sm:$0xff]
      %v2057 = vld [vmem:[%s2036 + $0xf0] sm:$0xff]
      %v2058 = vld [vmem:[%s2036 + $0xf8] sm:$0xff]
      %v2059 = vld [vmem:[%s2036 + $0x108] sm:$0xff]
      %v2060 = vld [vmem:[%s2036 + $0x110] sm:$0xff]
      %v2061 = vld [vmem:[%s2036 + $0x120] sm:$0xff]
      %v2062 = vld [vmem:[%s2036 + $0x128] sm:$0xff]
      %v2063 = vld [vmem:[%s2036 + $0x138] sm:$0xff]
      %v2064 = vld [vmem:[%s2036 + $0x140] sm:$0xff]
      %v2065 = vld [vmem:[%s2036 + $0x150] sm:$0xff]
      %v2066 = vld [vmem:[%s2036 + $0x158] sm:$0xff]
      %v2067 = vld [vmem:[%s2036 + $0x168] sm:$0xff]
      %v2068 = vld [vmem:[%s2036 + $0x170] sm:$0xff]
      %s2069 = scalar_lea.vmem %s1, 48
      %v2070 = vld [vmem:[%s2069] sm:$0xff]
      %v2072 = vsel %vm372, %v2037, 0
      %v2075 = vsel %vm372, %v2038, 0
      %v2078 = vsel %vm372, %v2039, 0
      %v2081 = vsel %vm372, %v2040, 0
      %v2084 = vsel %vm372, %v2041, 0
      %v2087 = vsel %vm372, %v2042, 0
      %v2090 = vsel %vm372, %v2043, 0
      %v2093 = vsel %vm372, %v2044, 0
      %v2096 = vsel %vm372, %v2045, 0
      %v2099 = vsel %vm372, %v2046, 0
      %v2102 = vsel %vm372, %v2047, 0
      %v2105 = vsel %vm372, %v2048, 0
      %v2108 = vsel %vm372, %v2049, 0
      %v2111 = vsel %vm372, %v2050, 0
      %v2114 = vsel %vm372, %v2051, 0
      %v2117 = vsel %vm372, %v2052, 0
      %v2120 = vsel %vm372, %v2053, 0
      %v2123 = vsel %vm372, %v2054, 0
      %v2126 = vsel %vm372, %v2055, 0
      %v2129 = vsel %vm372, %v2056, 0
      %v2132 = vsel %vm372, %v2057, 0
      %v2135 = vsel %vm372, %v2058, 0
      %v2138 = vsel %vm372, %v2059, 0
      %v2141 = vsel %vm372, %v2060, 0
      %v2144 = vsel %vm372, %v2061, 0
      %v2147 = vsel %vm372, %v2062, 0
      %v2150 = vsel %vm372, %v2063, 0
      %v2153 = vsel %vm372, %v2064, 0
      %v2156 = vsel %vm372, %v2065, 0
      %v2159 = vsel %vm372, %v2066, 0
      %v2162 = vsel %vm372, %v2067, 0
      %v2165 = vsel %vm372, %v2068, 0
      %2167 = vmatpush.msra.mxu0 0.0
      %2168 = vmatpush.msra.mxu0 0.0
      %2169 = vmatpush.msra.mxu0 0.0
      %2170 = vmatpush.msra.mxu0 0.0
      %2171 = vmatpush.msra.mxu0 0.0
      %2172 = vmatpush.msra.mxu0 0.0
      %2173 = vmatpush.msra.mxu0 0.0
      %2174 = vmatpush.msra.mxu0 0.0
      %2175 = vmatpush.msra.mxu0 0.0
      %2176 = vmatpush.msra.mxu0 0.0
      %2177 = vmatpush.msra.mxu0 0.0
      %2178 = vmatpush.msra.mxu0 0.0
      %2179 = vmatpush.msra.mxu0 0.0
      %2180 = vmatpush.msra.mxu0 0.0
      %2181 = vmatpush.msra.mxu0 0.0
      %2182 = vmatpush.msra.mxu0 %v2070
      %2183 = vmatmul.f32.gmra.mxu0 %v2072
      %v2184 = vpop.f32.mrf.mxu0
      %v2185 = vadd.f32 0.0, %v2184
      %2186 = vmatmul.f32.gmra.mxu0 %v2075
      %v2187 = vpop.f32.mrf.mxu0
      %v2188 = vadd.f32 0.0, %v2187
      %2189 = vmatmul.f32.gmra.mxu0 %v2078
      %v2190 = vpop.f32.mrf.mxu0
      %v2191 = vadd.f32 0.0, %v2190
      %2192 = vmatmul.f32.gmra.mxu0 %v2081
      %v2193 = vpop.f32.mrf.mxu0
      %v2194 = vadd.f32 0.0, %v2193
      %2195 = vmatmul.f32.gmra.mxu0 %v2084
      %v2196 = vpop.f32.mrf.mxu0
      %v2197 = vadd.f32 0.0, %v2196
      %2198 = vmatmul.f32.gmra.mxu0 %v2087
      %v2199 = vpop.f32.mrf.mxu0
      %v2200 = vadd.f32 0.0, %v2199
      %2201 = vmatmul.f32.gmra.mxu0 %v2090
      %v2202 = vpop.f32.mrf.mxu0
      %v2203 = vadd.f32 0.0, %v2202
      %2204 = vmatmul.f32.gmra.mxu0 %v2093
      %v2205 = vpop.f32.mrf.mxu0
      %v2206 = vadd.f32 0.0, %v2205
      %2207 = vmatmul.f32.gmra.mxu0 %v2096
      %v2208 = vpop.f32.mrf.mxu0
      %v2209 = vadd.f32 0.0, %v2208
      %2210 = vmatmul.f32.gmra.mxu0 %v2099
      %v2211 = vpop.f32.mrf.mxu0
      %v2212 = vadd.f32 0.0, %v2211
      %2213 = vmatmul.f32.gmra.mxu0 %v2102
      %v2214 = vpop.f32.mrf.mxu0
      %v2215 = vadd.f32 0.0, %v2214
      %2216 = vmatmul.f32.gmra.mxu0 %v2105
      %v2217 = vpop.f32.mrf.mxu0
      %v2218 = vadd.f32 0.0, %v2217
      %2219 = vmatmul.f32.gmra.mxu0 %v2108
      %v2220 = vpop.f32.mrf.mxu0
      %v2221 = vadd.f32 0.0, %v2220
      %2222 = vmatmul.f32.gmra.mxu0 %v2111
      %v2223 = vpop.f32.mrf.mxu0
      %v2224 = vadd.f32 0.0, %v2223
      %2225 = vmatmul.f32.gmra.mxu0 %v2114
      %v2226 = vpop.f32.mrf.mxu0
      %v2227 = vadd.f32 0.0, %v2226
      %2228 = vmatmul.f32.gmra.mxu0 %v2117
      %v2229 = vpop.f32.mrf.mxu0
      %v2230 = vadd.f32 0.0, %v2229
      %2231 = vmatmul.f32.gmra.mxu0 %v2120
      %v2232 = vpop.f32.mrf.mxu0
      %v2233 = vadd.f32 0.0, %v2232
      %2234 = vmatmul.f32.gmra.mxu0 %v2123
      %v2235 = vpop.f32.mrf.mxu0
      %v2236 = vadd.f32 0.0, %v2235
      %2237 = vmatmul.f32.gmra.mxu0 %v2126
      %v2238 = vpop.f32.mrf.mxu0
      %v2239 = vadd.f32 0.0, %v2238
      %2240 = vmatmul.f32.gmra.mxu0 %v2129
      %v2241 = vpop.f32.mrf.mxu0
      %v2242 = vadd.f32 0.0, %v2241
      %2243 = vmatmul.f32.gmra.mxu0 %v2132
      %v2244 = vpop.f32.mrf.mxu0
      %v2245 = vadd.f32 0.0, %v2244
      %2246 = vmatmul.f32.gmra.mxu0 %v2135
      %v2247 = vpop.f32.mrf.mxu0
      %v2248 = vadd.f32 0.0, %v2247
      %2249 = vmatmul.f32.gmra.mxu0 %v2138
      %v2250 = vpop.f32.mrf.mxu0
      %v2251 = vadd.f32 0.0, %v2250
      %2252 = vmatmul.f32.gmra.mxu0 %v2141
      %v2253 = vpop.f32.mrf.mxu0
      %v2254 = vadd.f32 0.0, %v2253
      %2255 = vmatmul.f32.gmra.mxu0 %v2144
      %v2256 = vpop.f32.mrf.mxu0
      %v2257 = vadd.f32 0.0, %v2256
      %2258 = vmatmul.f32.gmra.mxu0 %v2147
      %v2259 = vpop.f32.mrf.mxu0
      %v2260 = vadd.f32 0.0, %v2259
      %2261 = vmatmul.f32.gmra.mxu0 %v2150
      %v2262 = vpop.f32.mrf.mxu0
      %v2263 = vadd.f32 0.0, %v2262
      %2264 = vmatmul.f32.gmra.mxu0 %v2153
      %v2265 = vpop.f32.mrf.mxu0
      %v2266 = vadd.f32 0.0, %v2265
      %2267 = vmatmul.f32.gmra.mxu0 %v2156
      %v2268 = vpop.f32.mrf.mxu0
      %v2269 = vadd.f32 0.0, %v2268
      %2270 = vmatmul.f32.gmra.mxu0 %v2159
      %v2271 = vpop.f32.mrf.mxu0
      %v2272 = vadd.f32 0.0, %v2271
      %2273 = vmatmul.f32.gmra.mxu0 %v2162
      %v2274 = vpop.f32.mrf.mxu0
      %v2275 = vadd.f32 0.0, %v2274
      %2276 = vmatmul.f32.gmra.mxu0 %v2165
      %v2277 = vpop.f32.mrf.mxu0
      %v2278 = vadd.f32 0.0, %v2277
      %2279 = vdwg.mxu0
      %v2280 = vadd.f32 %v2004, %v2185
      %v2281 = vadd.f32 %v2005, %v2188
      %v2282 = vadd.f32 %v2006, %v2191
      %v2283 = vadd.f32 %v2007, %v2194
      %v2284 = vadd.f32 %v2008, %v2197
      %v2285 = vadd.f32 %v2009, %v2200
      %v2286 = vadd.f32 %v2010, %v2203
      %v2287 = vadd.f32 %v2011, %v2206
      %v2288 = vadd.f32 %v2012, %v2209
      %v2289 = vadd.f32 %v2013, %v2212
      %v2290 = vadd.f32 %v2014, %v2215
      %v2291 = vadd.f32 %v2015, %v2218
      %v2292 = vadd.f32 %v2016, %v2221
      %v2293 = vadd.f32 %v2017, %v2224
      %v2294 = vadd.f32 %v2018, %v2227
      %v2295 = vadd.f32 %v2019, %v2230
      %v2296 = vadd.f32 %v2020, %v2233
      %v2297 = vadd.f32 %v2021, %v2236
      %v2298 = vadd.f32 %v2022, %v2239
      %v2299 = vadd.f32 %v2023, %v2242
      %v2300 = vadd.f32 %v2024, %v2245
      %v2301 = vadd.f32 %v2025, %v2248
      %v2302 = vadd.f32 %v2026, %v2251
      %v2303 = vadd.f32 %v2027, %v2254
      %v2304 = vadd.f32 %v2028, %v2257
      %v2305 = vadd.f32 %v2029, %v2260
      %v2306 = vadd.f32 %v2030, %v2263
      %v2307 = vadd.f32 %v2031, %v2266
      %v2308 = vadd.f32 %v2032, %v2269
      %v2309 = vadd.f32 %v2033, %v2272
      %v2310 = vadd.f32 %v2034, %v2275
      %v2311 = vadd.f32 %v2035, %v2278
      %v2312 = vld [vmem:[%s2036 + $0x1] sm:$0xff]
      %v2313 = vld [vmem:[%s2036 + $0x9] sm:$0xff]
      %v2314 = vld [vmem:[%s2036 + $0x19] sm:$0xff]
      %v2315 = vld [vmem:[%s2036 + $0x21] sm:$0xff]
      %v2316 = vld [vmem:[%s2036 + $0x31] sm:$0xff]
      %v2317 = vld [vmem:[%s2036 + $0x39] sm:$0xff]
      %v2318 = vld [vmem:[%s2036 + $0x49] sm:$0xff]
      %v2319 = vld [vmem:[%s2036 + $0x51] sm:$0xff]
      %v2320 = vld [vmem:[%s2036 + $0x61] sm:$0xff]
      %v2321 = vld [vmem:[%s2036 + $0x69] sm:$0xff]
      %v2322 = vld [vmem:[%s2036 + $0x79] sm:$0xff]
      %v2323 = vld [vmem:[%s2036 + $0x81] sm:$0xff]
      %v2324 = vld [vmem:[%s2036 + $0x91] sm:$0xff]
      %v2325 = vld [vmem:[%s2036 + $0x99] sm:$0xff]
      %v2326 = vld [vmem:[%s2036 + $0xa9] sm:$0xff]
      %v2327 = vld [vmem:[%s2036 + $0xb1] sm:$0xff]
      %v2328 = vld [vmem:[%s2036 + $0xc1] sm:$0xff]
      %v2329 = vld [vmem:[%s2036 + $0xc9] sm:$0xff]
      %v2330 = vld [vmem:[%s2036 + $0xd9] sm:$0xff]
      %v2331 = vld [vmem:[%s2036 + $0xe1] sm:$0xff]
      %v2332 = vld [vmem:[%s2036 + $0xf1] sm:$0xff]
      %v2333 = vld [vmem:[%s2036 + $0xf9] sm:$0xff]
      %v2334 = vld [vmem:[%s2036 + $0x109] sm:$0xff]
      %v2335 = vld [vmem:[%s2036 + $0x111] sm:$0xff]
      %v2336 = vld [vmem:[%s2036 + $0x121] sm:$0xff]
      %v2337 = vld [vmem:[%s2036 + $0x129] sm:$0xff]
      %v2338 = vld [vmem:[%s2036 + $0x139] sm:$0xff]
      %v2339 = vld [vmem:[%s2036 + $0x141] sm:$0xff]
      %v2340 = vld [vmem:[%s2036 + $0x151] sm:$0xff]
      %v2341 = vld [vmem:[%s2036 + $0x159] sm:$0xff]
      %v2342 = vld [vmem:[%s2036 + $0x169] sm:$0xff]
      %v2343 = vld [vmem:[%s2036 + $0x171] sm:$0xff]
      %s2344 = scalar_lea.vmem %s1, 56
      %v2345 = vld [vmem:[%s2344] sm:$0xff]
      %v2347 = vsel %vm372, %v2312, 0
      %v2350 = vsel %vm372, %v2313, 0
      %v2353 = vsel %vm372, %v2314, 0
      %v2356 = vsel %vm372, %v2315, 0
      %v2359 = vsel %vm372, %v2316, 0
      %v2362 = vsel %vm372, %v2317, 0
      %v2365 = vsel %vm372, %v2318, 0
      %v2368 = vsel %vm372, %v2319, 0
      %v2371 = vsel %vm372, %v2320, 0
      %v2374 = vsel %vm372, %v2321, 0
      %v2377 = vsel %vm372, %v2322, 0
      %v2380 = vsel %vm372, %v2323, 0
      %v2383 = vsel %vm372, %v2324, 0
      %v2386 = vsel %vm372, %v2325, 0
      %v2389 = vsel %vm372, %v2326, 0
      %v2392 = vsel %vm372, %v2327, 0
      %v2395 = vsel %vm372, %v2328, 0
      %v2398 = vsel %vm372, %v2329, 0
      %v2401 = vsel %vm372, %v2330, 0
      %v2404 = vsel %vm372, %v2331, 0
      %v2407 = vsel %vm372, %v2332, 0
      %v2410 = vsel %vm372, %v2333, 0
      %v2413 = vsel %vm372, %v2334, 0
      %v2416 = vsel %vm372, %v2335, 0
      %v2419 = vsel %vm372, %v2336, 0
      %v2422 = vsel %vm372, %v2337, 0
      %v2425 = vsel %vm372, %v2338, 0
      %v2428 = vsel %vm372, %v2339, 0
      %v2431 = vsel %vm372, %v2340, 0
      %v2434 = vsel %vm372, %v2341, 0
      %v2437 = vsel %vm372, %v2342, 0
      %v2440 = vsel %vm372, %v2343, 0
      %2442 = vmatpush.msra.mxu0 0.0
      %2443 = vmatpush.msra.mxu0 0.0
      %2444 = vmatpush.msra.mxu0 0.0
      %2445 = vmatpush.msra.mxu0 0.0
      %2446 = vmatpush.msra.mxu0 0.0
      %2447 = vmatpush.msra.mxu0 0.0
      %2448 = vmatpush.msra.mxu0 0.0
      %2449 = vmatpush.msra.mxu0 0.0
      %2450 = vmatpush.msra.mxu0 0.0
      %2451 = vmatpush.msra.mxu0 0.0
      %2452 = vmatpush.msra.mxu0 0.0
      %2453 = vmatpush.msra.mxu0 0.0
      %2454 = vmatpush.msra.mxu0 0.0
      %2455 = vmatpush.msra.mxu0 0.0
      %2456 = vmatpush.msra.mxu0 0.0
      %2457 = vmatpush.msra.mxu0 %v2345
      %2458 = vmatmul.f32.gmra.mxu0 %v2347
      %v2459 = vpop.f32.mrf.mxu0
      %v2460 = vadd.f32 0.0, %v2459
      %2461 = vmatmul.f32.gmra.mxu0 %v2350
      %v2462 = vpop.f32.mrf.mxu0
      %v2463 = vadd.f32 0.0, %v2462
      %2464 = vmatmul.f32.gmra.mxu0 %v2353
      %v2465 = vpop.f32.mrf.mxu0
      %v2466 = vadd.f32 0.0, %v2465
      %2467 = vmatmul.f32.gmra.mxu0 %v2356
      %v2468 = vpop.f32.mrf.mxu0
      %v2469 = vadd.f32 0.0, %v2468
      %2470 = vmatmul.f32.gmra.mxu0 %v2359
      %v2471 = vpop.f32.mrf.mxu0
      %v2472 = vadd.f32 0.0, %v2471
      %2473 = vmatmul.f32.gmra.mxu0 %v2362
      %v2474 = vpop.f32.mrf.mxu0
      %v2475 = vadd.f32 0.0, %v2474
      %2476 = vmatmul.f32.gmra.mxu0 %v2365
      %v2477 = vpop.f32.mrf.mxu0
      %v2478 = vadd.f32 0.0, %v2477
      %2479 = vmatmul.f32.gmra.mxu0 %v2368
      %v2480 = vpop.f32.mrf.mxu0
      %v2481 = vadd.f32 0.0, %v2480
      %2482 = vmatmul.f32.gmra.mxu0 %v2371
      %v2483 = vpop.f32.mrf.mxu0
      %v2484 = vadd.f32 0.0, %v2483
      %2485 = vmatmul.f32.gmra.mxu0 %v2374
      %v2486 = vpop.f32.mrf.mxu0
      %v2487 = vadd.f32 0.0, %v2486
      %2488 = vmatmul.f32.gmra.mxu0 %v2377
      %v2489 = vpop.f32.mrf.mxu0
      %v2490 = vadd.f32 0.0, %v2489
      %2491 = vmatmul.f32.gmra.mxu0 %v2380
      %v2492 = vpop.f32.mrf.mxu0
      %v2493 = vadd.f32 0.0, %v2492
      %2494 = vmatmul.f32.gmra.mxu0 %v2383
      %v2495 = vpop.f32.mrf.mxu0
      %v2496 = vadd.f32 0.0, %v2495
      %2497 = vmatmul.f32.gmra.mxu0 %v2386
      %v2498 = vpop.f32.mrf.mxu0
      %v2499 = vadd.f32 0.0, %v2498
      %2500 = vmatmul.f32.gmra.mxu0 %v2389
      %v2501 = vpop.f32.mrf.mxu0
      %v2502 = vadd.f32 0.0, %v2501
      %2503 = vmatmul.f32.gmra.mxu0 %v2392
      %v2504 = vpop.f32.mrf.mxu0
      %v2505 = vadd.f32 0.0, %v2504
      %2506 = vmatmul.f32.gmra.mxu0 %v2395
      %v2507 = vpop.f32.mrf.mxu0
      %v2508 = vadd.f32 0.0, %v2507
      %2509 = vmatmul.f32.gmra.mxu0 %v2398
      %v2510 = vpop.f32.mrf.mxu0
      %v2511 = vadd.f32 0.0, %v2510
      %2512 = vmatmul.f32.gmra.mxu0 %v2401
      %v2513 = vpop.f32.mrf.mxu0
      %v2514 = vadd.f32 0.0, %v2513
      %2515 = vmatmul.f32.gmra.mxu0 %v2404
      %v2516 = vpop.f32.mrf.mxu0
      %v2517 = vadd.f32 0.0, %v2516
      %2518 = vmatmul.f32.gmra.mxu0 %v2407
      %v2519 = vpop.f32.mrf.mxu0
      %v2520 = vadd.f32 0.0, %v2519
      %2521 = vmatmul.f32.gmra.mxu0 %v2410
      %v2522 = vpop.f32.mrf.mxu0
      %v2523 = vadd.f32 0.0, %v2522
      %2524 = vmatmul.f32.gmra.mxu0 %v2413
      %v2525 = vpop.f32.mrf.mxu0
      %v2526 = vadd.f32 0.0, %v2525
      %2527 = vmatmul.f32.gmra.mxu0 %v2416
      %v2528 = vpop.f32.mrf.mxu0
      %v2529 = vadd.f32 0.0, %v2528
      %2530 = vmatmul.f32.gmra.mxu0 %v2419
      %v2531 = vpop.f32.mrf.mxu0
      %v2532 = vadd.f32 0.0, %v2531
      %2533 = vmatmul.f32.gmra.mxu0 %v2422
      %v2534 = vpop.f32.mrf.mxu0
      %v2535 = vadd.f32 0.0, %v2534
      %2536 = vmatmul.f32.gmra.mxu0 %v2425
      %v2537 = vpop.f32.mrf.mxu0
      %v2538 = vadd.f32 0.0, %v2537
      %2539 = vmatmul.f32.gmra.mxu0 %v2428
      %v2540 = vpop.f32.mrf.mxu0
      %v2541 = vadd.f32 0.0, %v2540
      %2542 = vmatmul.f32.gmra.mxu0 %v2431
      %v2543 = vpop.f32.mrf.mxu0
      %v2544 = vadd.f32 0.0, %v2543
      %2545 = vmatmul.f32.gmra.mxu0 %v2434
      %v2546 = vpop.f32.mrf.mxu0
      %v2547 = vadd.f32 0.0, %v2546
      %2548 = vmatmul.f32.gmra.mxu0 %v2437
      %v2549 = vpop.f32.mrf.mxu0
      %v2550 = vadd.f32 0.0, %v2549
      %2551 = vmatmul.f32.gmra.mxu0 %v2440
      %v2552 = vpop.f32.mrf.mxu0
      %v2553 = vadd.f32 0.0, %v2552
      %2554 = vdwg.mxu0
      %v2555 = vadd.f32 %v2280, %v2460
      %v2556 = vadd.f32 %v2281, %v2463
      %v2557 = vadd.f32 %v2282, %v2466
      %v2558 = vadd.f32 %v2283, %v2469
      %v2559 = vadd.f32 %v2284, %v2472
      %v2560 = vadd.f32 %v2285, %v2475
      %v2561 = vadd.f32 %v2286, %v2478
      %v2562 = vadd.f32 %v2287, %v2481
      %v2563 = vadd.f32 %v2288, %v2484
      %v2564 = vadd.f32 %v2289, %v2487
      %v2565 = vadd.f32 %v2290, %v2490
      %v2566 = vadd.f32 %v2291, %v2493
      %v2567 = vadd.f32 %v2292, %v2496
      %v2568 = vadd.f32 %v2293, %v2499
      %v2569 = vadd.f32 %v2294, %v2502
      %v2570 = vadd.f32 %v2295, %v2505
      %v2571 = vadd.f32 %v2296, %v2508
      %v2572 = vadd.f32 %v2297, %v2511
      %v2573 = vadd.f32 %v2298, %v2514
      %v2574 = vadd.f32 %v2299, %v2517
      %v2575 = vadd.f32 %v2300, %v2520
      %v2576 = vadd.f32 %v2301, %v2523
      %v2577 = vadd.f32 %v2302, %v2526
      %v2578 = vadd.f32 %v2303, %v2529
      %v2579 = vadd.f32 %v2304, %v2532
      %v2580 = vadd.f32 %v2305, %v2535
      %v2581 = vadd.f32 %v2306, %v2538
      %v2582 = vadd.f32 %v2307, %v2541
      %v2583 = vadd.f32 %v2308, %v2544
      %v2584 = vadd.f32 %v2309, %v2547
      %v2585 = vadd.f32 %v2310, %v2550
      %v2586 = vadd.f32 %v2311, %v2553
      %v2587 = vld [vmem:[%s2036 + $0x2] sm:$0xff]
      %v2588 = vld [vmem:[%s2036 + $0xa] sm:$0xff]
      %v2589 = vld [vmem:[%s2036 + $0x1a] sm:$0xff]
      %v2590 = vld [vmem:[%s2036 + $0x22] sm:$0xff]
      %v2591 = vld [vmem:[%s2036 + $0x32] sm:$0xff]
      %v2592 = vld [vmem:[%s2036 + $0x3a] sm:$0xff]
      %v2593 = vld [vmem:[%s2036 + $0x4a] sm:$0xff]
      %v2594 = vld [vmem:[%s2036 + $0x52] sm:$0xff]
      %v2595 = vld [vmem:[%s2036 + $0x62] sm:$0xff]
      %v2596 = vld [vmem:[%s2036 + $0x6a] sm:$0xff]
      %v2597 = vld [vmem:[%s2036 + $0x7a] sm:$0xff]
      %v2598 = vld [vmem:[%s2036 + $0x82] sm:$0xff]
      %v2599 = vld [vmem:[%s2036 + $0x92] sm:$0xff]
      %v2600 = vld [vmem:[%s2036 + $0x9a] sm:$0xff]
      %v2601 = vld [vmem:[%s2036 + $0xaa] sm:$0xff]
      %v2602 = vld [vmem:[%s2036 + $0xb2] sm:$0xff]
      %v2603 = vld [vmem:[%s2036 + $0xc2] sm:$0xff]
      %v2604 = vld [vmem:[%s2036 + $0xca] sm:$0xff]
      %v2605 = vld [vmem:[%s2036 + $0xda] sm:$0xff]
      %v2606 = vld [vmem:[%s2036 + $0xe2] sm:$0xff]
      %v2607 = vld [vmem:[%s2036 + $0xf2] sm:$0xff]
      %v2608 = vld [vmem:[%s2036 + $0xfa] sm:$0xff]
      %v2609 = vld [vmem:[%s2036 + $0x10a] sm:$0xff]
      %v2610 = vld [vmem:[%s2036 + $0x112] sm:$0xff]
      %v2611 = vld [vmem:[%s2036 + $0x122] sm:$0xff]
      %v2612 = vld [vmem:[%s2036 + $0x12a] sm:$0xff]
      %v2613 = vld [vmem:[%s2036 + $0x13a] sm:$0xff]
      %v2614 = vld [vmem:[%s2036 + $0x142] sm:$0xff]
      %v2615 = vld [vmem:[%s2036 + $0x152] sm:$0xff]
      %v2616 = vld [vmem:[%s2036 + $0x15a] sm:$0xff]
      %v2617 = vld [vmem:[%s2036 + $0x16a] sm:$0xff]
      %v2618 = vld [vmem:[%s2036 + $0x172] sm:$0xff]
      %s2619 = scalar_lea.vmem %s1, 64
      %v2620 = vld [vmem:[%s2619] sm:$0xff]
      %v2622 = vsel %vm372, %v2587, 0
      %v2625 = vsel %vm372, %v2588, 0
      %v2628 = vsel %vm372, %v2589, 0
      %v2631 = vsel %vm372, %v2590, 0
      %v2634 = vsel %vm372, %v2591, 0
      %v2637 = vsel %vm372, %v2592, 0
      %v2640 = vsel %vm372, %v2593, 0
      %v2643 = vsel %vm372, %v2594, 0
      %v2646 = vsel %vm372, %v2595, 0
      %v2649 = vsel %vm372, %v2596, 0
      %v2652 = vsel %vm372, %v2597, 0
      %v2655 = vsel %vm372, %v2598, 0
      %v2658 = vsel %vm372, %v2599, 0
      %v2661 = vsel %vm372, %v2600, 0
      %v2664 = vsel %vm372, %v2601, 0
      %v2667 = vsel %vm372, %v2602, 0
      %v2670 = vsel %vm372, %v2603, 0
      %v2673 = vsel %vm372, %v2604, 0
      %v2676 = vsel %vm372, %v2605, 0
      %v2679 = vsel %vm372, %v2606, 0
      %v2682 = vsel %vm372, %v2607, 0
      %v2685 = vsel %vm372, %v2608, 0
      %v2688 = vsel %vm372, %v2609, 0
      %v2691 = vsel %vm372, %v2610, 0
      %v2694 = vsel %vm372, %v2611, 0
      %v2697 = vsel %vm372, %v2612, 0
      %v2700 = vsel %vm372, %v2613, 0
      %v2703 = vsel %vm372, %v2614, 0
      %v2706 = vsel %vm372, %v2615, 0
      %v2709 = vsel %vm372, %v2616, 0
      %v2712 = vsel %vm372, %v2617, 0
      %v2715 = vsel %vm372, %v2618, 0
      %2717 = vmatpush.msra.mxu0 0.0
      %2718 = vmatpush.msra.mxu0 0.0
      %2719 = vmatpush.msra.mxu0 0.0
      %2720 = vmatpush.msra.mxu0 0.0
      %2721 = vmatpush.msra.mxu0 0.0
      %2722 = vmatpush.msra.mxu0 0.0
      %2723 = vmatpush.msra.mxu0 0.0
      %2724 = vmatpush.msra.mxu0 0.0
      %2725 = vmatpush.msra.mxu0 0.0
      %2726 = vmatpush.msra.mxu0 0.0
      %2727 = vmatpush.msra.mxu0 0.0
      %2728 = vmatpush.msra.mxu0 0.0
      %2729 = vmatpush.msra.mxu0 0.0
      %2730 = vmatpush.msra.mxu0 0.0
      %2731 = vmatpush.msra.mxu0 0.0
      %2732 = vmatpush.msra.mxu0 %v2620
      %2733 = vmatmul.f32.gmra.mxu0 %v2622
      %v2734 = vpop.f32.mrf.mxu0
      %v2735 = vadd.f32 0.0, %v2734
      %2736 = vmatmul.f32.gmra.mxu0 %v2625
      %v2737 = vpop.f32.mrf.mxu0
      %v2738 = vadd.f32 0.0, %v2737
      %2739 = vmatmul.f32.gmra.mxu0 %v2628
      %v2740 = vpop.f32.mrf.mxu0
      %v2741 = vadd.f32 0.0, %v2740
      %2742 = vmatmul.f32.gmra.mxu0 %v2631
      %v2743 = vpop.f32.mrf.mxu0
      %v2744 = vadd.f32 0.0, %v2743
      %2745 = vmatmul.f32.gmra.mxu0 %v2634
      %v2746 = vpop.f32.mrf.mxu0
      %v2747 = vadd.f32 0.0, %v2746
      %2748 = vmatmul.f32.gmra.mxu0 %v2637
      %v2749 = vpop.f32.mrf.mxu0
      %v2750 = vadd.f32 0.0, %v2749
      %2751 = vmatmul.f32.gmra.mxu0 %v2640
      %v2752 = vpop.f32.mrf.mxu0
      %v2753 = vadd.f32 0.0, %v2752
      %2754 = vmatmul.f32.gmra.mxu0 %v2643
      %v2755 = vpop.f32.mrf.mxu0
      %v2756 = vadd.f32 0.0, %v2755
      %2757 = vmatmul.f32.gmra.mxu0 %v2646
      %v2758 = vpop.f32.mrf.mxu0
      %v2759 = vadd.f32 0.0, %v2758
      %2760 = vmatmul.f32.gmra.mxu0 %v2649
      %v2761 = vpop.f32.mrf.mxu0
      %v2762 = vadd.f32 0.0, %v2761
      %2763 = vmatmul.f32.gmra.mxu0 %v2652
      %v2764 = vpop.f32.mrf.mxu0
      %v2765 = vadd.f32 0.0, %v2764
      %2766 = vmatmul.f32.gmra.mxu0 %v2655
      %v2767 = vpop.f32.mrf.mxu0
      %v2768 = vadd.f32 0.0, %v2767
      %2769 = vmatmul.f32.gmra.mxu0 %v2658
      %v2770 = vpop.f32.mrf.mxu0
      %v2771 = vadd.f32 0.0, %v2770
      %2772 = vmatmul.f32.gmra.mxu0 %v2661
      %v2773 = vpop.f32.mrf.mxu0
      %v2774 = vadd.f32 0.0, %v2773
      %2775 = vmatmul.f32.gmra.mxu0 %v2664
      %v2776 = vpop.f32.mrf.mxu0
      %v2777 = vadd.f32 0.0, %v2776
      %2778 = vmatmul.f32.gmra.mxu0 %v2667
      %v2779 = vpop.f32.mrf.mxu0
      %v2780 = vadd.f32 0.0, %v2779
      %2781 = vmatmul.f32.gmra.mxu0 %v2670
      %v2782 = vpop.f32.mrf.mxu0
      %v2783 = vadd.f32 0.0, %v2782
      %2784 = vmatmul.f32.gmra.mxu0 %v2673
      %v2785 = vpop.f32.mrf.mxu0
      %v2786 = vadd.f32 0.0, %v2785
      %2787 = vmatmul.f32.gmra.mxu0 %v2676
      %v2788 = vpop.f32.mrf.mxu0
      %v2789 = vadd.f32 0.0, %v2788
      %2790 = vmatmul.f32.gmra.mxu0 %v2679
      %v2791 = vpop.f32.mrf.mxu0
      %v2792 = vadd.f32 0.0, %v2791
      %2793 = vmatmul.f32.gmra.mxu0 %v2682
      %v2794 = vpop.f32.mrf.mxu0
      %v2795 = vadd.f32 0.0, %v2794
      %2796 = vmatmul.f32.gmra.mxu0 %v2685
      %v2797 = vpop.f32.mrf.mxu0
      %v2798 = vadd.f32 0.0, %v2797
      %2799 = vmatmul.f32.gmra.mxu0 %v2688
      %v2800 = vpop.f32.mrf.mxu0
      %v2801 = vadd.f32 0.0, %v2800
      %2802 = vmatmul.f32.gmra.mxu0 %v2691
      %v2803 = vpop.f32.mrf.mxu0
      %v2804 = vadd.f32 0.0, %v2803
      %2805 = vmatmul.f32.gmra.mxu0 %v2694
      %v2806 = vpop.f32.mrf.mxu0
      %v2807 = vadd.f32 0.0, %v2806
      %2808 = vmatmul.f32.gmra.mxu0 %v2697
      %v2809 = vpop.f32.mrf.mxu0
      %v2810 = vadd.f32 0.0, %v2809
      %2811 = vmatmul.f32.gmra.mxu0 %v2700
      %v2812 = vpop.f32.mrf.mxu0
      %v2813 = vadd.f32 0.0, %v2812
      %2814 = vmatmul.f32.gmra.mxu0 %v2703
      %v2815 = vpop.f32.mrf.mxu0
      %v2816 = vadd.f32 0.0, %v2815
      %2817 = vmatmul.f32.gmra.mxu0 %v2706
      %v2818 = vpop.f32.mrf.mxu0
      %v2819 = vadd.f32 0.0, %v2818
      %2820 = vmatmul.f32.gmra.mxu0 %v2709
      %v2821 = vpop.f32.mrf.mxu0
      %v2822 = vadd.f32 0.0, %v2821
      %2823 = vmatmul.f32.gmra.mxu0 %v2712
      %v2824 = vpop.f32.mrf.mxu0
      %v2825 = vadd.f32 0.0, %v2824
      %2826 = vmatmul.f32.gmra.mxu0 %v2715
      %v2827 = vpop.f32.mrf.mxu0
      %v2828 = vadd.f32 0.0, %v2827
      %2829 = vdwg.mxu0
      %v2830 = vadd.f32 %v2555, %v2735
      %v2831 = vadd.f32 %v2556, %v2738
      %v2832 = vadd.f32 %v2557, %v2741
      %v2833 = vadd.f32 %v2558, %v2744
      %v2834 = vadd.f32 %v2559, %v2747
      %v2835 = vadd.f32 %v2560, %v2750
      %v2836 = vadd.f32 %v2561, %v2753
      %v2837 = vadd.f32 %v2562, %v2756
      %v2838 = vadd.f32 %v2563, %v2759
      %v2839 = vadd.f32 %v2564, %v2762
      %v2840 = vadd.f32 %v2565, %v2765
      %v2841 = vadd.f32 %v2566, %v2768
      %v2842 = vadd.f32 %v2567, %v2771
      %v2843 = vadd.f32 %v2568, %v2774
      %v2844 = vadd.f32 %v2569, %v2777
      %v2845 = vadd.f32 %v2570, %v2780
      %v2846 = vadd.f32 %v2571, %v2783
      %v2847 = vadd.f32 %v2572, %v2786
      %v2848 = vadd.f32 %v2573, %v2789
      %v2849 = vadd.f32 %v2574, %v2792
      %v2850 = vadd.f32 %v2575, %v2795
      %v2851 = vadd.f32 %v2576, %v2798
      %v2852 = vadd.f32 %v2577, %v2801
      %v2853 = vadd.f32 %v2578, %v2804
      %v2854 = vadd.f32 %v2579, %v2807
      %v2855 = vadd.f32 %v2580, %v2810
      %v2856 = vadd.f32 %v2581, %v2813
      %v2857 = vadd.f32 %v2582, %v2816
      %v2858 = vadd.f32 %v2583, %v2819
      %v2859 = vadd.f32 %v2584, %v2822
      %v2860 = vadd.f32 %v2585, %v2825
      %v2861 = vadd.f32 %v2586, %v2828
      %v2862 = vsel %vm372, %v2830, 0.0
      %v2863 = vsel %vm372, %v2831, 0.0
      %v2864 = vadd.f32 %v2862, %v2863
      %v2865 = vsel %vm372, %v2832, 0.0
      %v2866 = vadd.f32 %v2864, %v2865
      %v2867 = vsel %vm372, %v2833, 0.0
      %v2868 = vadd.f32 %v2866, %v2867
      %v2869 = vsel %vm372, %v2834, 0.0
      %v2870 = vadd.f32 %v2868, %v2869
      %v2871 = vsel %vm372, %v2835, 0.0
      %v2872 = vadd.f32 %v2870, %v2871
      %v2873 = vsel %vm372, %v2836, 0.0
      %v2874 = vadd.f32 %v2872, %v2873
      %v2875 = vsel %vm372, %v2837, 0.0
      %v2876 = vadd.f32 %v2874, %v2875
      %v2877 = vsel %vm372, %v2838, 0.0
      %v2878 = vadd.f32 %v2876, %v2877
      %v2879 = vsel %vm372, %v2839, 0.0
      %v2880 = vadd.f32 %v2878, %v2879
      %v2881 = vsel %vm372, %v2840, 0.0
      %v2882 = vadd.f32 %v2880, %v2881
      %v2883 = vsel %vm372, %v2841, 0.0
      %v2884 = vadd.f32 %v2882, %v2883
      %v2885 = vsel %vm372, %v2842, 0.0
      %v2886 = vadd.f32 %v2884, %v2885
      %v2887 = vsel %vm372, %v2843, 0.0
      %v2888 = vadd.f32 %v2886, %v2887
      %v2889 = vsel %vm372, %v2844, 0.0
      %v2890 = vadd.f32 %v2888, %v2889
      %v2891 = vsel %vm372, %v2845, 0.0
      %v2892 = vadd.f32 %v2890, %v2891
      %v2893 = vsel %vm372, %v2846, 0.0
      %v2894 = vadd.f32 %v2892, %v2893
      %v2895 = vsel %vm372, %v2847, 0.0
      %v2896 = vadd.f32 %v2894, %v2895
      %v2897 = vsel %vm372, %v2848, 0.0
      %v2898 = vadd.f32 %v2896, %v2897
      %v2899 = vsel %vm372, %v2849, 0.0
      %v2900 = vadd.f32 %v2898, %v2899
      %v2901 = vsel %vm372, %v2850, 0.0
      %v2902 = vadd.f32 %v2900, %v2901
      %v2903 = vsel %vm372, %v2851, 0.0
      %v2904 = vadd.f32 %v2902, %v2903
      %v2905 = vsel %vm372, %v2852, 0.0
      %v2906 = vadd.f32 %v2904, %v2905
      %v2907 = vsel %vm372, %v2853, 0.0
      %v2908 = vadd.f32 %v2906, %v2907
      %v2909 = vsel %vm372, %v2854, 0.0
      %v2910 = vadd.f32 %v2908, %v2909
      %v2911 = vsel %vm372, %v2855, 0.0
      %v2912 = vadd.f32 %v2910, %v2911
      %v2913 = vsel %vm372, %v2856, 0.0
      %v2914 = vadd.f32 %v2912, %v2913
      %v2915 = vsel %vm372, %v2857, 0.0
      %v2916 = vadd.f32 %v2914, %v2915
      %v2917 = vsel %vm372, %v2858, 0.0
      %v2918 = vadd.f32 %v2916, %v2917
      %v2919 = vsel %vm372, %v2859, 0.0
      %v2920 = vadd.f32 %v2918, %v2919
      %v2921 = vsel %vm372, %v2860, 0.0
      %v2922 = vadd.f32 %v2920, %v2921
      %v2923 = vsel %vm372, %v2861, 0.0
      %v2924 = vadd.f32 %v2922, %v2923
      %v2925 = vrot.slane %v2924, 4
      %v2926 = vadd.f32 %v2924, %v2925
      %v2927 = vrot.slane %v2926, 2
      %v2928 = vadd.f32 %v2926, %v2927
      %v2929 = vrot.slane %v2928, 1
      %v2930 = vadd.f32 %v2928, %v2929
      %v2931 = vmul.f32 %v2930, 0.00390625
      %v2932 = vsub.f32 %v2830, %v2931
      %v2933 = vsub.f32 %v2831, %v2931
      %v2934 = vsub.f32 %v2832, %v2931
      %v2935 = vsub.f32 %v2833, %v2931
      %v2936 = vsub.f32 %v2834, %v2931
      %v2937 = vsub.f32 %v2835, %v2931
      %v2938 = vsub.f32 %v2836, %v2931
      %v2939 = vsub.f32 %v2837, %v2931
      %v2940 = vsub.f32 %v2838, %v2931
      %v2941 = vsub.f32 %v2839, %v2931
      %v2942 = vsub.f32 %v2840, %v2931
      %v2943 = vsub.f32 %v2841, %v2931
      %v2944 = vsub.f32 %v2842, %v2931
      %v2945 = vsub.f32 %v2843, %v2931
      %v2946 = vsub.f32 %v2844, %v2931
      %v2947 = vsub.f32 %v2845, %v2931
      %v2948 = vsub.f32 %v2846, %v2931
      %v2949 = vsub.f32 %v2847, %v2931
      %v2950 = vsub.f32 %v2848, %v2931
      %v2951 = vsub.f32 %v2849, %v2931
      %v2952 = vsub.f32 %v2850, %v2931
      %v2953 = vsub.f32 %v2851, %v2931
      %v2954 = vsub.f32 %v2852, %v2931
      %v2955 = vsub.f32 %v2853, %v2931
      %v2956 = vsub.f32 %v2854, %v2931
      %v2957 = vsub.f32 %v2855, %v2931
      %v2958 = vsub.f32 %v2856, %v2931
      %v2959 = vsub.f32 %v2857, %v2931
      %v2960 = vsub.f32 %v2858, %v2931
      %v2961 = vsub.f32 %v2859, %v2931
      %v2962 = vsub.f32 %v2860, %v2931
      %v2963 = vsub.f32 %v2861, %v2931
      %2964 = vst.msk [vmem:[%s235] sm:$0x1] %vm381, %v2930
      %v2965 = vmul.f32 %v2932, %v2932
      %v2966 = vmul.f32 %v2933, %v2933
      %v2967 = vmul.f32 %v2934, %v2934
      %v2968 = vmul.f32 %v2935, %v2935
      %v2969 = vmul.f32 %v2936, %v2936
      %v2970 = vmul.f32 %v2937, %v2937
      %v2971 = vmul.f32 %v2938, %v2938
      %v2972 = vmul.f32 %v2939, %v2939
      %v2973 = vmul.f32 %v2940, %v2940
      %v2974 = vmul.f32 %v2941, %v2941
      %v2975 = vmul.f32 %v2942, %v2942
      %v2976 = vmul.f32 %v2943, %v2943
      %v2977 = vmul.f32 %v2944, %v2944
      %v2978 = vmul.f32 %v2945, %v2945
      %v2979 = vmul.f32 %v2946, %v2946
      %v2980 = vmul.f32 %v2947, %v2947
      %v2981 = vmul.f32 %v2948, %v2948
      %v2982 = vmul.f32 %v2949, %v2949
      %v2983 = vmul.f32 %v2950, %v2950
      %v2984 = vmul.f32 %v2951, %v2951
      %v2985 = vmul.f32 %v2952, %v2952
      %v2986 = vmul.f32 %v2953, %v2953
      %v2987 = vmul.f32 %v2954, %v2954
      %v2988 = vmul.f32 %v2955, %v2955
      %v2989 = vmul.f32 %v2956, %v2956
      %v2990 = vmul.f32 %v2957, %v2957
      %v2991 = vmul.f32 %v2958, %v2958
      %v2992 = vmul.f32 %v2959, %v2959
      %v2993 = vmul.f32 %v2960, %v2960
      %v2994 = vmul.f32 %v2961, %v2961
      %v2995 = vmul.f32 %v2962, %v2962
      %v2996 = vmul.f32 %v2963, %v2963
      %v2997 = vsel %vm372, %v2965, 0.0
      %v2998 = vsel %vm372, %v2966, 0.0
      %v2999 = vadd.f32 %v2997, %v2998
      %v3000 = vsel %vm372, %v2967, 0.0
      %v3001 = vadd.f32 %v2999, %v3000
      %v3002 = vsel %vm372, %v2968, 0.0
      %v3003 = vadd.f32 %v3001, %v3002
      %v3004 = vsel %vm372, %v2969, 0.0
      %v3005 = vadd.f32 %v3003, %v3004
      %v3006 = vsel %vm372, %v2970, 0.0
      %v3007 = vadd.f32 %v3005, %v3006
      %v3008 = vsel %vm372, %v2971, 0.0
      %v3009 = vadd.f32 %v3007, %v3008
      %v3010 = vsel %vm372, %v2972, 0.0
      %v3011 = vadd.f32 %v3009, %v3010
      %v3012 = vsel %vm372, %v2973, 0.0
      %v3013 = vadd.f32 %v3011, %v3012
      %v3014 = vsel %vm372, %v2974, 0.0
      %v3015 = vadd.f32 %v3013, %v3014
      %v3016 = vsel %vm372, %v2975, 0.0
      %v3017 = vadd.f32 %v3015, %v3016
      %v3018 = vsel %vm372, %v2976, 0.0
      %v3019 = vadd.f32 %v3017, %v3018
      %v3020 = vsel %vm372, %v2977, 0.0
      %v3021 = vadd.f32 %v3019, %v3020
      %v3022 = vsel %vm372, %v2978, 0.0
      %v3023 = vadd.f32 %v3021, %v3022
      %v3024 = vsel %vm372, %v2979, 0.0
      %v3025 = vadd.f32 %v3023, %v3024
      %v3026 = vsel %vm372, %v2980, 0.0
      %v3027 = vadd.f32 %v3025, %v3026
      %v3028 = vsel %vm372, %v2981, 0.0
      %v3029 = vadd.f32 %v3027, %v3028
      %v3030 = vsel %vm372, %v2982, 0.0
      %v3031 = vadd.f32 %v3029, %v3030
      %v3032 = vsel %vm372, %v2983, 0.0
      %v3033 = vadd.f32 %v3031, %v3032
      %v3034 = vsel %vm372, %v2984, 0.0
      %v3035 = vadd.f32 %v3033, %v3034
      %v3036 = vsel %vm372, %v2985, 0.0
      %v3037 = vadd.f32 %v3035, %v3036
      %v3038 = vsel %vm372, %v2986, 0.0
      %v3039 = vadd.f32 %v3037, %v3038
      %v3040 = vsel %vm372, %v2987, 0.0
      %v3041 = vadd.f32 %v3039, %v3040
      %v3042 = vsel %vm372, %v2988, 0.0
      %v3043 = vadd.f32 %v3041, %v3042
      %v3044 = vsel %vm372, %v2989, 0.0
      %v3045 = vadd.f32 %v3043, %v3044
      %v3046 = vsel %vm372, %v2990, 0.0
      %v3047 = vadd.f32 %v3045, %v3046
      %v3048 = vsel %vm372, %v2991, 0.0
      %v3049 = vadd.f32 %v3047, %v3048
      %v3050 = vsel %vm372, %v2992, 0.0
      %v3051 = vadd.f32 %v3049, %v3050
      %v3052 = vsel %vm372, %v2993, 0.0
      %v3053 = vadd.f32 %v3051, %v3052
      %v3054 = vsel %vm372, %v2994, 0.0
      %v3055 = vadd.f32 %v3053, %v3054
      %v3056 = vsel %vm372, %v2995, 0.0
      %v3057 = vadd.f32 %v3055, %v3056
      %v3058 = vsel %vm372, %v2996, 0.0
      %v3059 = vadd.f32 %v3057, %v3058
      %v3060 = vrot.slane %v3059, 4
      %v3061 = vadd.f32 %v3059, %v3060
      %v3062 = vrot.slane %v3061, 2
      %v3063 = vadd.f32 %v3061, %v3062
      %v3064 = vrot.slane %v3063, 1
      %v3065 = vadd.f32 %v3063, %v3064
      %3066 = vst.msk [vmem:[%s235 + $0x1] sm:$0x1] %vm381, %v3065
      %3067 = vst.msk [vmem:[%s231] sm:$0xff] %vm372, %v2830
      %3068 = vst.msk [vmem:[%s231 + $0x8] sm:$0xff] %vm372, %v2831
      %3069 = vst.msk [vmem:[%s231 + $0x10] sm:$0xff] %vm372, %v2832
      %3070 = vst.msk [vmem:[%s231 + $0x18] sm:$0xff] %vm372, %v2833
      %3071 = vst.msk [vmem:[%s231 + $0x20] sm:$0xff] %vm372, %v2834
      %3072 = vst.msk [vmem:[%s231 + $0x28] sm:$0xff] %vm372, %v2835
      %3073 = vst.msk [vmem:[%s231 + $0x30] sm:$0xff] %vm372, %v2836
      %3074 = vst.msk [vmem:[%s231 + $0x38] sm:$0xff] %vm372, %v2837
      %3075 = vst.msk [vmem:[%s231 + $0x40] sm:$0xff] %vm372, %v2838
      %3076 = vst.msk [vmem:[%s231 + $0x48] sm:$0xff] %vm372, %v2839
      %3077 = vst.msk [vmem:[%s231 + $0x50] sm:$0xff] %vm372, %v2840
      %3078 = vst.msk [vmem:[%s231 + $0x58] sm:$0xff] %vm372, %v2841
      %3079 = vst.msk [vmem:[%s231 + $0x60] sm:$0xff] %vm372, %v2842
      %3080 = vst.msk [vmem:[%s231 + $0x68] sm:$0xff] %vm372, %v2843
      %3081 = vst.msk [vmem:[%s231 + $0x70] sm:$0xff] %vm372, %v2844
      %3082 = vst.msk [vmem:[%s231 + $0x78] sm:$0xff] %vm372, %v2845
      %3083 = vst.msk [vmem:[%s231 + $0x80] sm:$0xff] %vm372, %v2846
      %3084 = vst.msk [vmem:[%s231 + $0x88] sm:$0xff] %vm372, %v2847
      %3085 = vst.msk [vmem:[%s231 + $0x90] sm:$0xff] %vm372, %v2848
      %3086 = vst.msk [vmem:[%s231 + $0x98] sm:$0xff] %vm372, %v2849
      %3087 = vst.msk [vmem:[%s231 + $0xa0] sm:$0xff] %vm372, %v2850
      %3088 = vst.msk [vmem:[%s231 + $0xa8] sm:$0xff] %vm372, %v2851
      %3089 = vst.msk [vmem:[%s231 + $0xb0] sm:$0xff] %vm372, %v2852
      %3090 = vst.msk [vmem:[%s231 + $0xb8] sm:$0xff] %vm372, %v2853
      %3091 = vst.msk [vmem:[%s231 + $0xc0] sm:$0xff] %vm372, %v2854
      %3092 = vst.msk [vmem:[%s231 + $0xc8] sm:$0xff] %vm372, %v2855
      %3093 = vst.msk [vmem:[%s231 + $0xd0] sm:$0xff] %vm372, %v2856
      %3094 = vst.msk [vmem:[%s231 + $0xd8] sm:$0xff] %vm372, %v2857
      %3095 = vst.msk [vmem:[%s231 + $0xe0] sm:$0xff] %vm372, %v2858
      %3096 = vst.msk [vmem:[%s231 + $0xe8] sm:$0xff] %vm372, %v2859
      %3097 = vst.msk [vmem:[%s231 + $0xf0] sm:$0xff] %vm372, %v2860
      %3098 = vst.msk [vmem:[%s231 + $0xf8] sm:$0xff] %vm372, %v2861
      %p3099 = scmp.lt.s32.totalorder %s17, 1
      %s3100 = scalar_select %p3099, %s17, 1
      %s3101 = smul.addr %s3100, 32
      %s3102 = smul.addr %s3101, 8
      %s3103 = scalar_lea.vmem %s4, %s3102
      %p3104 = scmp.lt.s32.totalorder %s17, 1
      %s3105 = scalar_select %p3104, %s17, 1
      %s3106 = smul.addr %s3105, 2
      %s3107 = scalar_lea.vmem %s5, %s3106
      // Predicated region
      $region37: #{basic_block_forward.4} parent=35 // pred_check
        %p3108 = pneg %p124
      $region38: #{basic_block_forward.4} parent=35 // pred_check_branch
        %3110 = sbr.rel (%p3108) target = $region40
      $region39: #{basic_block_forward.4} parent=35 // pred_region
        _
      $region40: #{basic_block_forward.4} parent=35 // pred_fallthru
        _
      // Predicated region
      $region41: #{basic_block_forward.4} parent=35 // pred_check
        %p3111 = pneg %p150
      $region42: #{basic_block_forward.4} parent=35 // pred_check_branch
        %3113 = sbr.rel (%p3111) target = $region44
      $region43: #{basic_block_forward.4} parent=35 // pred_region
        _
      $region44: #{basic_block_forward.4} parent=35 // pred_fallthru
        _
    $region36: #{basic_block_forward.4} parent=5 // pred_fallthru
      _
    %p3114 = scmp.le.s32.totalorder 2, %s12
    // Predicated region
    $region45: #{basic_block_forward.4} parent=5 // pred_check
      %p3115 = pneg %p3114
    $region46: #{basic_block_forward.4} parent=5 // pred_check_branch
      %3117 = sbr.rel (%p3115) target = $region48
    $region47: #{basic_block_forward.4} parent=5 // pred_region
      %s3118 = ssub.s32 %s12, 2
      // Predicated region
      $region49: #{basic_block_forward.4} parent=47 // pred_check
        %p3119 = pneg %p130
      $region50: #{basic_block_forward.4} parent=47 // pred_check_branch
        %3121 = sbr.rel (%p3119) target = $region52
      $region51: #{basic_block_forward.4} parent=47 // pred_region
        %p3122 = scmp.lt.s32.totalorder %s18, 1
        %s3123 = scalar_select %p3122, %s18, 1
        %s3124 = smul.addr %s3123, 32
        %s3125 = smul.addr %s3124, 8
        %s3126 = scalar_lea.vmem %s4, %s3125
      $region52: #{basic_block_forward.4} parent=47 // pred_fallthru
        _
      // Predicated region
      $region53: #{basic_block_forward.4} parent=47 // pred_check
        %p3127 = pneg %p156
      $region54: #{basic_block_forward.4} parent=47 // pred_check_branch
        %3129 = sbr.rel (%p3127) target = $region56
      $region55: #{basic_block_forward.4} parent=47 // pred_region
        %p3130 = scmp.lt.s32.totalorder %s18, 1
        %s3131 = scalar_select %p3130, %s18, 1
        %s3132 = smul.addr %s3131, 2
        %s3133 = scalar_lea.vmem %s5, %s3132
      $region56: #{basic_block_forward.4} parent=47 // pred_fallthru
        _
    $region48: #{basic_block_forward.4} parent=5 // pred_fallthru
      _
  $region6: #{basic_block_forward.4} parent=0 // loop_footer
    %s16 = sadd.s32 1, %s12
  $region7: #{basic_block_forward.4} parent=0 // loop_footer_branch
    %11 = sbr.rel target = $region3
  $region8: #{basic_block_forward.4} parent=0 // loop_exit
    _

// kernel: basic_block_forward.3
$region0: #{basic_block_forward.3}
  #allocation0 [shape = 'u32[]', space=smem, size = 0x4, offset = 0x4, fixed_abs, tag = 'smem constant byte address 0x4 - core index']
  #allocation1 [shape = 'u32[72,128]{1,0:T(1,128)}', space=vmem, size = 0x9000, scoped, tag = 'internal scratch']
  #allocation2 [shape = 'f32[1,18,18,8]{3,2,1,0:T(8,128)}', space=vmem, size = 0x36000, scoped, tag = 'scratch operand']
  %s0 = inlined_call_operand.vmem [shape: f32[2,16,16,8], index: 0, kind: input, shape index: {}]
  %s1 = inlined_call_operand.vmem [shape: f32[9,8,8], index: 1, kind: input, shape index: {}]
  %s2 = inlined_call_operand.vmem [shape: f32[2,16,16,8], index: 2, kind: output, shape index: {0}]
  %s3 = inlined_call_operand.vmem [shape: f32[2,2,8], index: 3, kind: output, shape index: {1}]
  %4 = xla_tuple %s2, %s3
  %s5 = sld [smem:[#allocation0]]
  $region49: #{basic_block_forward.3} parent=0
    _
  %s7 = ssub.s32 1, %s5
  %s8 = scalar_select 0, %s7, %s5
  loop: start=0, step=1, limit=4
  $region2: #{basic_block_forward.3} parent=0 // loop_pre_header
    _
  $region3: #{basic_block_forward.3} parent=0 // loop_header
    %s10 = sphi 0, %s14
    %p11 = scmp.ge.s32.totalorder %s10, 4
    %s20 = sphi 0, %s22
    %s23 = sphi 0, %s20
    %s24 = sphi 0, %s23
    %s40 = sphi 0, %s24
    %s44 = sphi 0, %s44
    %s46 = sphi 0, %s44
    %s47 = sphi 0, %s46
    %s61 = sphi 0, %s47
    %s67 = sphi 0, %s69
    %s70 = sphi 0, %s67
    %s71 = sphi 0, %s70
    %s87 = sphi 0, %s71
    %s93 = sphi 0, %s95
    %s96 = sphi 0, %s93
    %s97 = sphi 0, %s96
    %s113 = sphi 0, %s97
  $region4: #{basic_block_forward.3} parent=0 // loop_header_branch
    %13 = sbr.rel (%p11) target = $region8
  $region5: #{basic_block_forward.3} parent=0 // loop_body
    %s15 = ssub.s32 %s10, 1
    %s16 = ssub.s32 %s10, 2
    %s17 = sadd.s32 %s10, 1
    %s18 = ssub.s32 %s10, %s17
    %p19 = scmp.eq.s32.totalorder %s18, 0
    %s21 = sadd.s32 %s20, 1
    %s22 = scalar_select %p19, %s20, %s21
    %p25 = pneg %p19
    %p26 = scmp.eq.s32.totalorder %s10, 1
    %p27 = por %p25, %p26
    %p28 = scmp.ne.s32.totalorder %s20, %s23
    %p29 = scmp.eq.s32.totalorder %s10, 0
    %p30 = por %p28, %p29
    %p31 = scmp.ne.s32.totalorder %s20, %s23
    %p32 = scmp.eq.s32.totalorder %s15, 1
    %p33 = por %p31, %p32
    %p34 = scmp.ne.s32.totalorder %s23, %s24
    %p35 = scmp.eq.s32.totalorder %s15, 0
    %p36 = por %p34, %p35
    %p37 = scmp.ne.s32.totalorder %s23, %s24
    %p38 = scmp.eq.s32.totalorder %s16, 1
    %p39 = por %p37, %p38
    %p41 = scmp.ne.s32.totalorder %s24, %s40
    %p42 = scmp.eq.s32.totalorder %s16, 0
    %p43 = por %p41, %p42
    %s45 = sadd.s32 %s44, 1
    %p48 = scmp.eq.s32.totalorder %s10, 1
    %p49 = scmp.ne.s32.totalorder %s44, %s46
    %p50 = scmp.eq.s32.totalorder %s10, 0
    %p51 = por %p49, %p50
    %p52 = scmp.ne.s32.totalorder %s44, %s46
    %p53 = scmp.eq.s32.totalorder %s15, 1
    %p54 = por %p52, %p53
    %p55 = scmp.ne.s32.totalorder %s46, %s47
    %p56 = scmp.eq.s32.totalorder %s15, 0
    %p57 = por %p55, %p56
    %p58 = scmp.ne.s32.totalorder %s46, %s47
    %p59 = scmp.eq.s32.totalorder %s16, 1
    %p60 = por %p58, %p59
    %p62 = scmp.ne.s32.totalorder %s47, %s61
    %p63 = scmp.eq.s32.totalorder %s16, 0
    %p64 = por %p62, %p63
    %s65 = ssub.s32 %s10, %s17
    %p66 = scmp.eq.s32.totalorder %s65, 0
    %s68 = sadd.s32 %s67, 1
    %s69 = scalar_select %p66, %s67, %s68
    %p72 = pneg %p66
    %p73 = scmp.eq.s32.totalorder %s10, 1
    %p74 = por %p72, %p73
    %p75 = scmp.ne.s32.totalorder %s67, %s70
    %p76 = scmp.eq.s32.totalorder %s10, 0
    %p77 = por %p75, %p76
    %p78 = scmp.ne.s32.totalorder %s67, %s70
    %p79 = scmp.eq.s32.totalorder %s15, 1
    %p80 = por %p78, %p79
    %p81 = scmp.ne.s32.totalorder %s70, %s71
    %p82 = scmp.eq.s32.totalorder %s15, 0
    %p83 = por %p81, %p82
    %p84 = scmp.ne.s32.totalorder %s70, %s71
    %p85 = scmp.eq.s32.totalorder %s16, 1
    %p86 = por %p84, %p85
    %p88 = scmp.ne.s32.totalorder %s71, %s87
    %p89 = scmp.eq.s32.totalorder %s16, 0
    %p90 = por %p88, %p89
    %s91 = ssub.s32 %s10, %s17
    %p92 = scmp.eq.s32.totalorder %s91, 0
    %s94 = sadd.s32 %s93, 1
    %s95 = scalar_select %p92, %s93, %s94
    %p98 = pneg %p92
    %p99 = scmp.eq.s32.totalorder %s10, 1
    %p100 = por %p98, %p99
    %p101 = scmp.ne.s32.totalorder %s93, %s96
    %p102 = scmp.eq.s32.totalorder %s10, 0
    %p103 = por %p101, %p102
    %p104 = scmp.ne.s32.totalorder %s93, %s96
    %p105 = scmp.eq.s32.totalorder %s15, 1
    %p106 = por %p104, %p105
    %p107 = scmp.ne.s32.totalorder %s96, %s97
    %p108 = scmp.eq.s32.totalorder %s15, 0
    %p109 = por %p107, %p108
    %p110 = scmp.ne.s32.totalorder %s96, %s97
    %p111 = scmp.eq.s32.totalorder %s16, 1
    %p112 = por %p110, %p111
    %p114 = scmp.ne.s32.totalorder %s97, %s113
    %p115 = scmp.eq.s32.totalorder %s16, 0
    %p116 = por %p114, %p115
    %p117 = scmp.le.s32.totalorder 1, %s10
    %p118 = scmp.lt.s32.totalorder %s10, 3
    %p119 = pnand %p117, %p118
    %p120 = pneg %p119
    // Predicated region
    $region9: #{basic_block_forward.3} parent=5 // pred_check
      _
    $region10: #{basic_block_forward.3} parent=5 // pred_check_branch
      %122 = sbr.rel (%p119) target = $region12
    $region11: #{basic_block_forward.3} parent=5 // pred_region
      %s123 = ssub.s32 %s10, 1
      // Predicated region
      $region13: #{basic_block_forward.3} parent=11 // pred_check
        %p124 = pneg %p57
      $region14: #{basic_block_forward.3} parent=11 // pred_check_branch
        %126 = sbr.rel (%p124) target = $region16
      $region15: #{basic_block_forward.3} parent=11 // pred_region
        _
      $region16: #{basic_block_forward.3} parent=11 // pred_fallthru
        _
    $region12: #{basic_block_forward.3} parent=5 // pred_fallthru
      _
    %p127 = scmp.lt.s32.totalorder %s10, 2
    // Predicated region
    $region17: #{basic_block_forward.3} parent=5 // pred_check
      %p128 = pneg %p127
    $region18: #{basic_block_forward.3} parent=5 // pred_check_branch
      %130 = sbr.rel (%p128) target = $region20
    $region19: #{basic_block_forward.3} parent=5 // pred_region
      // Predicated region
      $region21: #{basic_block_forward.3} parent=19 // pred_check
        %p131 = pneg %p30
      $region22: #{basic_block_forward.3} parent=19 // pred_check_branch
        %133 = sbr.rel (%p131) target = $region24
      $region23: #{basic_block_forward.3} parent=19 // pred_region
        %p134 = scmp.lt.s32.totalorder %s10, 1
        %s135 = scalar_select %p134, %s10, 1
        %s136 = smul.addr %s135, 32
        %s137 = smul.addr %s136, 8
        %s138 = scalar_lea.vmem %s0, %s137
      $region24: #{basic_block_forward.3} parent=19 // pred_fallthru
        _
    $region20: #{basic_block_forward.3} parent=5 // pred_fallthru
      _
    %p139 = scmp.le.s32.totalorder 1, %s10
    %p140 = scmp.lt.s32.totalorder %s10, 3
    %p141 = pnand %p139, %p140
    %p142 = pneg %p141
    // Predicated region
    $region25: #{basic_block_forward.3} parent=5 // pred_check
      _
    $region26: #{basic_block_forward.3} parent=5 // pred_check_branch
      %144 = sbr.rel (%p141) target = $region28
    $region27: #{basic_block_forward.3} parent=5 // pred_region
      %s145 = ssub.s32 %s10, 1
      %p146 = scmp.lt.s32.totalorder %s15, 1
      %s147 = scalar_select %p146, %s15, 1
      %s148 = smul.addr %s147, 32
      %s149 = smul.addr %s148, 8
      %s150 = scalar_lea.vmem %s0, %s149
      %p151 = pneg %p36
      %p152 = pneg %p33
      %p153 = pneg %p57
      %p154 = pneg %p54
      %p155 = pneg %p83
      %p156 = pneg %p80
      %p157 = scmp.lt.s32.totalorder %s15, 1
      %s158 = scalar_select %p157, %s15, 1
      %s159 = smul.addr %s158, 32
      %s160 = smul.addr %s159, 8
      %s161 = scalar_lea.vmem %s2, %s160
      %p162 = pneg %p109
      %p163 = pneg %p106
      %p164 = scmp.lt.s32.totalorder %s15, 1
      %s165 = scalar_select %p164, %s15, 1
      %s166 = smul.addr %s165, 2
      %s167 = scalar_lea.vmem %s3, %s166
      %p168 = scmp.lt.s32.totalorder %s15, 1
      %s169 = scalar_select %p168, %s15, 1
      %s170 = smul.addr %s169, 32
      %s171 = smul.addr %s170, 8
      %s172 = scalar_lea.vmem %s0, %s171
      %p173 = scmp.lt.s32.totalorder %s15, 1
      %s174 = scalar_select %p173, %s15, 1
      %s175 = smul.addr %s174, 32
      %s176 = smul.addr %s175, 8
      %s177 = scalar_lea.vmem %s2, %s176
      %p178 = scmp.lt.s32.totalorder %s15, 1
      %s179 = scalar_select %p178, %s15, 1
      %s180 = smul.addr %s179, 2
      %s181 = scalar_lea.vmem %s3, %s180
      %vm182 = vcmask 64512
      %183 = vst.msk [vmem:[#allocation2] sm:$0xff] %vm182, 0.0
      %184 = vst.msk [vmem:[#allocation2 + $0x8] sm:$0xff] %vm182, 0.0
      %vm185 = vcmask 58368
      %186 = vst.msk [vmem:[#allocation2 + $0x10] sm:$0x3] %vm185, 0.0
      %s187 = scalar_lea.vmem [#allocation2], 408
      %188 = vst.msk [vmem:[%s187] sm:$0xff] %vm182, 0.0
      %189 = vst.msk [vmem:[%s187 + $0x8] sm:$0xff] %vm182, 0.0
      %190 = vst.msk [vmem:[%s187 + $0x10] sm:$0x3] %vm185, 0.0
      %vm191 = vcmask 57344
      %192 = vst.msk [vmem:[#allocation2] sm:$0x1] %vm191, 0.0
      %193 = vst.msk [vmem:[#allocation2 + $0x18] sm:$0x1] %vm191, 0.0
      %194 = vst.msk [vmem:[#allocation2 + $0x30] sm:$0x1] %vm191, 0.0
      %195 = vst.msk [vmem:[#allocation2 + $0x48] sm:$0x1] %vm191, 0.0
      %196 = vst.msk [vmem:[#allocation2 + $0x60] sm:$0x1] %vm191, 0.0
      %197 = vst.msk [vmem:[#allocation2 + $0x78] sm:$0x1] %vm191, 0.0
      %198 = vst.msk [vmem:[#allocation2 + $0x90] sm:$0x1] %vm191, 0.0
      %199 = vst.msk [vmem:[#allocation2 + $0xa8] sm:$0x1] %vm191, 0.0
      %200 = vst.msk [vmem:[#allocation2 + $0xc0] sm:$0x1] %vm191, 0.0
      %201 = vst.msk [vmem:[#allocation2 + $0xd8] sm:$0x1] %vm191, 0.0
      %202 = vst.msk [vmem:[#allocation2 + $0xf0] sm:$0x1] %vm191, 0.0
      %203 = vst.msk [vmem:[#allocation2 + $0x108] sm:$0x1] %vm191, 0.0
      %204 = vst.msk [vmem:[#allocation2 + $0x120] sm:$0x1] %vm191, 0.0
      %205 = vst.msk [vmem:[#allocation2 + $0x138] sm:$0x1] %vm191, 0.0
      %206 = vst.msk [vmem:[#allocation2 + $0x150] sm:$0x1] %vm191, 0.0
      %207 = vst.msk [vmem:[#allocation2 + $0x168] sm:$0x1] %vm191, 0.0
      %208 = vst.msk [vmem:[#allocation2 + $0x180] sm:$0x1] %vm191, 0.0
      %209 = vst.msk [vmem:[#allocation2 + $0x198] sm:$0x1] %vm191, 0.0
      %210 = vst.msk [vmem:[#allocation2 + $0x11] sm:$0x1] %vm191, 0.0
      %211 = vst.msk [vmem:[#allocation2 + $0x29] sm:$0x1] %vm191, 0.0
      %212 = vst.msk [vmem:[#allocation2 + $0x41] sm:$0x1] %vm191, 0.0
      %213 = vst.msk [vmem:[#allocation2 + $0x59] sm:$0x1] %vm191, 0.0
      %214 = vst.msk [vmem:[#allocation2 + $0x71] sm:$0x1] %vm191, 0.0
      %215 = vst.msk [vmem:[#allocation2 + $0x89] sm:$0x1] %vm191, 0.0
      %216 = vst.msk [vmem:[#allocation2 + $0xa1] sm:$0x1] %vm191, 0.0
      %217 = vst.msk [vmem:[#allocation2 + $0xb9] sm:$0x1] %vm191, 0.0
      %218 = vst.msk [vmem:[#allocation2 + $0xd1] sm:$0x1] %vm191, 0.0
      %219 = vst.msk [vmem:[#allocation2 + $0xe9] sm:$0x1] %vm191, 0.0
      %220 = vst.msk [vmem:[#allocation2 + $0x101] sm:$0x1] %vm191, 0.0
      %221 = vst.msk [vmem:[#allocation2 + $0x119] sm:$0x1] %vm191, 0.0
      %222 = vst.msk [vmem:[#allocation2 + $0x131] sm:$0x1] %vm191, 0.0
      %223 = vst.msk [vmem:[#allocation2 + $0x149] sm:$0x1] %vm191, 0.0
      %224 = vst.msk [vmem:[#allocation2 + $0x161] sm:$0x1] %vm191, 0.0
      %225 = vst.msk [vmem:[#allocation2 + $0x179] sm:$0x1] %vm191, 0.0
      %226 = vst.msk [vmem:[#allocation2 + $0x191] sm:$0x1] %vm191, 0.0
      %227 = vst.msk [vmem:[#allocation2 + $0x1a9] sm:$0x1] %vm191, 0.0
      %v228 = vld [vmem:[%s172] sm:$0xff]
      %v229 = vld [vmem:[%s172 + $0x8] sm:$0xff]
      %v230 = vld [vmem:[%s172 + $0x10] sm:$0xff]
      %v231 = vld [vmem:[%s172 + $0x18] sm:$0xff]
      %v232 = vld [vmem:[%s172 + $0x20] sm:$0xff]
      %v233 = vld [vmem:[%s172 + $0x28] sm:$0xff]
      %v234 = vld [vmem:[%s172 + $0x30] sm:$0xff]
      %v235 = vld [vmem:[%s172 + $0x38] sm:$0xff]
      %v236 = vld [vmem:[%s172 + $0x40] sm:$0xff]
      %v237 = vld [vmem:[%s172 + $0x48] sm:$0xff]
      %v238 = vld [vmem:[%s172 + $0x50] sm:$0xff]
      %v239 = vld [vmem:[%s172 + $0x58] sm:$0xff]
      %v240 = vld [vmem:[%s172 + $0x60] sm:$0xff]
      %v241 = vld [vmem:[%s172 + $0x68] sm:$0xff]
      %v242 = vld [vmem:[%s172 + $0x70] sm:$0xff]
      %v243 = vld [vmem:[%s172 + $0x78] sm:$0xff]
      %v244 = vld [vmem:[%s172 + $0x80] sm:$0xff]
      %v245 = vld [vmem:[%s172 + $0x88] sm:$0xff]
      %v246 = vld [vmem:[%s172 + $0x90] sm:$0xff]
      %v247 = vld [vmem:[%s172 + $0x98] sm:$0xff]
      %v248 = vld [vmem:[%s172 + $0xa0] sm:$0xff]
      %v249 = vld [vmem:[%s172 + $0xa8] sm:$0xff]
      %v250 = vld [vmem:[%s172 + $0xb0] sm:$0xff]
      %v251 = vld [vmem:[%s172 + $0xb8] sm:$0xff]
      %v252 = vld [vmem:[%s172 + $0xc0] sm:$0xff]
      %v253 = vld [vmem:[%s172 + $0xc8] sm:$0xff]
      %v254 = vld [vmem:[%s172 + $0xd0] sm:$0xff]
      %v255 = vld [vmem:[%s172 + $0xd8] sm:$0xff]
      %v256 = vld [vmem:[%s172 + $0xe0] sm:$0xff]
      %v257 = vld [vmem:[%s172 + $0xe8] sm:$0xff]
      %v258 = vld [vmem:[%s172 + $0xf0] sm:$0xff]
      %v259 = vld [vmem:[%s172 + $0xf8] sm:$0xff]
      %s260 = scalar_lea.vmem [#allocation2], 24
      %261 = vst.msk [vmem:[%s260 + $0x1] sm:$0xff] %vm182, %v228
      %262 = vst.msk [vmem:[%s260 + $0x9] sm:$0xff] %vm182, %v229
      %263 = vst.msk [vmem:[%s260 + $0x19] sm:$0xff] %vm182, %v230
      %264 = vst.msk [vmem:[%s260 + $0x21] sm:$0xff] %vm182, %v231
      %265 = vst.msk [vmem:[%s260 + $0x31] sm:$0xff] %vm182, %v232
      %266 = vst.msk [vmem:[%s260 + $0x39] sm:$0xff] %vm182, %v233
      %267 = vst.msk [vmem:[%s260 + $0x49] sm:$0xff] %vm182, %v234
      %268 = vst.msk [vmem:[%s260 + $0x51] sm:$0xff] %vm182, %v235
      %269 = vst.msk [vmem:[%s260 + $0x61] sm:$0xff] %vm182, %v236
      %270 = vst.msk [vmem:[%s260 + $0x69] sm:$0xff] %vm182, %v237
      %271 = vst.msk [vmem:[%s260 + $0x79] sm:$0xff] %vm182, %v238
      %272 = vst.msk [vmem:[%s260 + $0x81] sm:$0xff] %vm182, %v239
      %273 = vst.msk [vmem:[%s260 + $0x91] sm:$0xff] %vm182, %v240
      %274 = vst.msk [vmem:[%s260 + $0x99] sm:$0xff] %vm182, %v241
      %275 = vst.msk [vmem:[%s260 + $0xa9] sm:$0xff] %vm182, %v242
      %276 = vst.msk [vmem:[%s260 + $0xb1] sm:$0xff] %vm182, %v243
      %277 = vst.msk [vmem:[%s260 + $0xc1] sm:$0xff] %vm182, %v244
      %278 = vst.msk [vmem:[%s260 + $0xc9] sm:$0xff] %vm182, %v245
      %279 = vst.msk [vmem:[%s260 + $0xd9] sm:$0xff] %vm182, %v246
      %280 = vst.msk [vmem:[%s260 + $0xe1] sm:$0xff] %vm182, %v247
      %281 = vst.msk [vmem:[%s260 + $0xf1] sm:$0xff] %vm182, %v248
      %282 = vst.msk [vmem:[%s260 + $0xf9] sm:$0xff] %vm182, %v249
      %283 = vst.msk [vmem:[%s260 + $0x109] sm:$0xff] %vm182, %v250
      %284 = vst.msk [vmem:[%s260 + $0x111] sm:$0xff] %vm182, %v251
      %285 = vst.msk [vmem:[%s260 + $0x121] sm:$0xff] %vm182, %v252
      %286 = vst.msk [vmem:[%s260 + $0x129] sm:$0xff] %vm182, %v253
      %287 = vst.msk [vmem:[%s260 + $0x139] sm:$0xff] %vm182, %v254
      %288 = vst.msk [vmem:[%s260 + $0x141] sm:$0xff] %vm182, %v255
      %289 = vst.msk [vmem:[%s260 + $0x151] sm:$0xff] %vm182, %v256
      %290 = vst.msk [vmem:[%s260 + $0x159] sm:$0xff] %vm182, %v257
      %291 = vst.msk [vmem:[%s260 + $0x169] sm:$0xff] %vm182, %v258
      %292 = vst.msk [vmem:[%s260 + $0x171] sm:$0xff] %vm182, %v259
      %v293 = vld [vmem:[#allocation2] sm:$0xff]
      %v294 = vld [vmem:[#allocation2 + $0x8] sm:$0xff]
      %v295 = vld [vmem:[#allocation2 + $0x18] sm:$0xff]
      %v296 = vld [vmem:[#allocation2 + $0x20] sm:$0xff]
      %v297 = vld [vmem:[#allocation2 + $0x30] sm:$0xff]
      %v298 = vld [vmem:[#allocation2 + $0x38] sm:$0xff]
      %v299 = vld [vmem:[#allocation2 + $0x48] sm:$0xff]
      %v300 = vld [vmem:[#allocation2 + $0x50] sm:$0xff]
      %v301 = vld [vmem:[#allocation2 + $0x60] sm:$0xff]
      %v302 = vld [vmem:[#allocation2 + $0x68] sm:$0xff]
      %v303 = vld [vmem:[#allocation2 + $0x78] sm:$0xff]
      %v304 = vld [vmem:[#allocation2 + $0x80] sm:$0xff]
      %v305 = vld [vmem:[#allocation2 + $0x90] sm:$0xff]
      %v306 = vld [vmem:[#allocation2 + $0x98] sm:$0xff]
      %v307 = vld [vmem:[#allocation2 + $0xa8] sm:$0xff]
      %v308 = vld [vmem:[#allocation2 + $0xb0] sm:$0xff]
      %v309 = vld [vmem:[#allocation2 + $0xc0] sm:$0xff]
      %v310 = vld [vmem:[#allocation2 + $0xc8] sm:$0xff]
      %v311 = vld [vmem:[#allocation2 + $0xd8] sm:$0xff]
      %v312 = vld [vmem:[#allocation2 + $0xe0] sm:$0xff]
      %v313 = vld [vmem:[#allocation2 + $0xf0] sm:$0xff]
      %v314 = vld [vmem:[#allocation2 + $0xf8] sm:$0xff]
      %v315 = vld [vmem:[#allocation2 + $0x108] sm:$0xff]
      %v316 = vld [vmem:[#allocation2 + $0x110] sm:$0xff]
      %v317 = vld [vmem:[#allocation2 + $0x120] sm:$0xff]
      %v318 = vld [vmem:[#allocation2 + $0x128] sm:$0xff]
      %v319 = vld [vmem:[#allocation2 + $0x138] sm:$0xff]
      %v320 = vld [vmem:[#allocation2 + $0x140] sm:$0xff]
      %v321 = vld [vmem:[#allocation2 + $0x150] sm:$0xff]
      %v322 = vld [vmem:[#allocation2 + $0x158] sm:$0xff]
      %v323 = vld [vmem:[#allocation2 + $0x168] sm:$0xff]
      %v324 = vld [vmem:[#allocation2 + $0x170] sm:$0xff]
      %v325 = vld [vmem:[%s1] sm:$0xff]
      %v326 = vld [vmem:[#allocation2 + $0x1] sm:$0xff]
      %v327 = vld [vmem:[#allocation2 + $0x9] sm:$0xff]
      %v328 = vld [vmem:[#allocation2 + $0x19] sm:$0xff]
      %v329 = vld [vmem:[#allocation2 + $0x21] sm:$0xff]
      %v330 = vld [vmem:[#allocation2 + $0x31] sm:$0xff]
      %v331 = vld [vmem:[#allocation2 + $0x39] sm:$0xff]
      %v332 = vld [vmem:[#allocation2 + $0x49] sm:$0xff]
      %v333 = vld [vmem:[#allocation2 + $0x51] sm:$0xff]
      %v334 = vld [vmem:[#allocation2 + $0x61] sm:$0xff]
      %v335 = vld [vmem:[#allocation2 + $0x69] sm:$0xff]
      %v336 = vld [vmem:[#allocation2 + $0x79] sm:$0xff]
      %v337 = vld [vmem:[#allocation2 + $0x81] sm:$0xff]
      %v338 = vld [vmem:[#allocation2 + $0x91] sm:$0xff]
      %v339 = vld [vmem:[#allocation2 + $0x99] sm:$0xff]
      %v340 = vld [vmem:[#allocation2 + $0xa9] sm:$0xff]
      %v341 = vld [vmem:[#allocation2 + $0xb1] sm:$0xff]
      %v342 = vld [vmem:[#allocation2 + $0xc1] sm:$0xff]
      %v343 = vld [vmem:[#allocation2 + $0xc9] sm:$0xff]
      %v344 = vld [vmem:[#allocation2 + $0xd9] sm:$0xff]
      %v345 = vld [vmem:[#allocation2 + $0xe1] sm:$0xff]
      %v346 = vld [vmem:[#allocation2 + $0xf1] sm:$0xff]
      %v347 = vld [vmem:[#allocation2 + $0xf9] sm:$0xff]
      %v348 = vld [vmem:[#allocation2 + $0x109] sm:$0xff]
      %v349 = vld [vmem:[#allocation2 + $0x111] sm:$0xff]
      %v350 = vld [vmem:[#allocation2 + $0x121] sm:$0xff]
      %v351 = vld [vmem:[#allocation2 + $0x129] sm:$0xff]
      %v352 = vld [vmem:[#allocation2 + $0x139] sm:$0xff]
      %v353 = vld [vmem:[#allocation2 + $0x141] sm:$0xff]
      %v354 = vld [vmem:[#allocation2 + $0x151] sm:$0xff]
      %v355 = vld [vmem:[#allocation2 + $0x159] sm:$0xff]
      %v356 = vld [vmem:[#allocation2 + $0x169] sm:$0xff]
      %v357 = vld [vmem:[#allocation2 + $0x171] sm:$0xff]
      %s358 = scalar_lea.vmem %s1, 8
      %v359 = vld [vmem:[%s358] sm:$0xff]
      %v361 = vsel %vm182, %v326, 0
      %v364 = vsel %vm182, %v327, 0
      %v367 = vsel %vm182, %v328, 0
      %v370 = vsel %vm182, %v329, 0
      %v373 = vsel %vm182, %v330, 0
      %v376 = vsel %vm182, %v331, 0
      %v379 = vsel %vm182, %v332, 0
      %v382 = vsel %vm182, %v333, 0
      %v385 = vsel %vm182, %v334, 0
      %v388 = vsel %vm182, %v335, 0
      %v391 = vsel %vm182, %v336, 0
      %v394 = vsel %vm182, %v337, 0
      %v397 = vsel %vm182, %v338, 0
      %v400 = vsel %vm182, %v339, 0
      %v403 = vsel %vm182, %v340, 0
      %v406 = vsel %vm182, %v341, 0
      %v409 = vsel %vm182, %v342, 0
      %v412 = vsel %vm182, %v343, 0
      %v415 = vsel %vm182, %v344, 0
      %v418 = vsel %vm182, %v345, 0
      %v421 = vsel %vm182, %v346, 0
      %v424 = vsel %vm182, %v347, 0
      %v427 = vsel %vm182, %v348, 0
      %v430 = vsel %vm182, %v349, 0
      %v433 = vsel %vm182, %v350, 0
      %v436 = vsel %vm182, %v351, 0
      %v439 = vsel %vm182, %v352, 0
      %v442 = vsel %vm182, %v353, 0
      %v445 = vsel %vm182, %v354, 0
      %v448 = vsel %vm182, %v355, 0
      %v451 = vsel %vm182, %v356, 0
      %v454 = vsel %vm182, %v357, 0
      %456 = vmatpush.msra.mxu0 0.0
      %457 = vmatpush.msra.mxu0 0.0
      %458 = vmatpush.msra.mxu0 0.0
      %459 = vmatpush.msra.mxu0 0.0
      %460 = vmatpush.msra.mxu0 0.0
      %461 = vmatpush.msra.mxu0 0.0
      %462 = vmatpush.msra.mxu0 0.0
      %463 = vmatpush.msra.mxu0 0.0
      %464 = vmatpush.msra.mxu0 0.0
      %465 = vmatpush.msra.mxu0 0.0
      %466 = vmatpush.msra.mxu0 0.0
      %467 = vmatpush.msra.mxu0 0.0
      %468 = vmatpush.msra.mxu0 0.0
      %469 = vmatpush.msra.mxu0 0.0
      %470 = vmatpush.msra.mxu0 0.0
      %471 = vmatpush.msra.mxu0 %v359
      %472 = vmatmul.f32.gmra.mxu0 %v361
      %v473 = vpop.f32.mrf.mxu0
      %v474 = vadd.f32 0.0, %v473
      %475 = vmatmul.f32.gmra.mxu0 %v364
      %v476 = vpop.f32.mrf.mxu0
      %v477 = vadd.f32 0.0, %v476
      %478 = vmatmul.f32.gmra.mxu0 %v367
      %v479 = vpop.f32.mrf.mxu0
      %v480 = vadd.f32 0.0, %v479
      %481 = vmatmul.f32.gmra.mxu0 %v370
      %v482 = vpop.f32.mrf.mxu0
      %v483 = vadd.f32 0.0, %v482
      %484 = vmatmul.f32.gmra.mxu0 %v373
      %v485 = vpop.f32.mrf.mxu0
      %v486 = vadd.f32 0.0, %v485
      %487 = vmatmul.f32.gmra.mxu0 %v376
      %v488 = vpop.f32.mrf.mxu0
      %v489 = vadd.f32 0.0, %v488
      %490 = vmatmul.f32.gmra.mxu0 %v379
      %v491 = vpop.f32.mrf.mxu0
      %v492 = vadd.f32 0.0, %v491
      %493 = vmatmul.f32.gmra.mxu0 %v382
      %v494 = vpop.f32.mrf.mxu0
      %v495 = vadd.f32 0.0, %v494
      %496 = vmatmul.f32.gmra.mxu0 %v385
      %v497 = vpop.f32.mrf.mxu0
      %v498 = vadd.f32 0.0, %v497
      %499 = vmatmul.f32.gmra.mxu0 %v388
      %v500 = vpop.f32.mrf.mxu0
      %v501 = vadd.f32 0.0, %v500
      %502 = vmatmul.f32.gmra.mxu0 %v391
      %v503 = vpop.f32.mrf.mxu0
      %v504 = vadd.f32 0.0, %v503
      %505 = vmatmul.f32.gmra.mxu0 %v394
      %v506 = vpop.f32.mrf.mxu0
      %v507 = vadd.f32 0.0, %v506
      %508 = vmatmul.f32.gmra.mxu0 %v397
      %v509 = vpop.f32.mrf.mxu0
      %v510 = vadd.f32 0.0, %v509
      %511 = vmatmul.f32.gmra.mxu0 %v400
      %v512 = vpop.f32.mrf.mxu0
      %v513 = vadd.f32 0.0, %v512
      %514 = vmatmul.f32.gmra.mxu0 %v403
      %v515 = vpop.f32.mrf.mxu0
      %v516 = vadd.f32 0.0, %v515
      %517 = vmatmul.f32.gmra.mxu0 %v406
      %v518 = vpop.f32.mrf.mxu0
      %v519 = vadd.f32 0.0, %v518
      %520 = vmatmul.f32.gmra.mxu0 %v409
      %v521 = vpop.f32.mrf.mxu0
      %v522 = vadd.f32 0.0, %v521
      %523 = vmatmul.f32.gmra.mxu0 %v412
      %v524 = vpop.f32.mrf.mxu0
      %v525 = vadd.f32 0.0, %v524
      %526 = vmatmul.f32.gmra.mxu0 %v415
      %v527 = vpop.f32.mrf.mxu0
      %v528 = vadd.f32 0.0, %v527
      %529 = vmatmul.f32.gmra.mxu0 %v418
      %v530 = vpop.f32.mrf.mxu0
      %v531 = vadd.f32 0.0, %v530
      %532 = vmatmul.f32.gmra.mxu0 %v421
      %v533 = vpop.f32.mrf.mxu0
      %v534 = vadd.f32 0.0, %v533
      %535 = vmatmul.f32.gmra.mxu0 %v424
      %v536 = vpop.f32.mrf.mxu0
      %v537 = vadd.f32 0.0, %v536
      %538 = vmatmul.f32.gmra.mxu0 %v427
      %v539 = vpop.f32.mrf.mxu0
      %v540 = vadd.f32 0.0, %v539
      %541 = vmatmul.f32.gmra.mxu0 %v430
      %v542 = vpop.f32.mrf.mxu0
      %v543 = vadd.f32 0.0, %v542
      %544 = vmatmul.f32.gmra.mxu0 %v433
      %v545 = vpop.f32.mrf.mxu0
      %v546 = vadd.f32 0.0, %v545
      %547 = vmatmul.f32.gmra.mxu0 %v436
      %v548 = vpop.f32.mrf.mxu0
      %v549 = vadd.f32 0.0, %v548
      %550 = vmatmul.f32.gmra.mxu0 %v439
      %v551 = vpop.f32.mrf.mxu0
      %v552 = vadd.f32 0.0, %v551
      %553 = vmatmul.f32.gmra.mxu0 %v442
      %v554 = vpop.f32.mrf.mxu0
      %v555 = vadd.f32 0.0, %v554
      %556 = vmatmul.f32.gmra.mxu0 %v445
      %v557 = vpop.f32.mrf.mxu0
      %v558 = vadd.f32 0.0, %v557
      %559 = vmatmul.f32.gmra.mxu0 %v448
      %v560 = vpop.f32.mrf.mxu0
      %v561 = vadd.f32 0.0, %v560
      %562 = vmatmul.f32.gmra.mxu0 %v451
      %v563 = vpop.f32.mrf.mxu0
      %v564 = vadd.f32 0.0, %v563
      %565 = vmatmul.f32.gmra.mxu0 %v454
      %v566 = vpop.f32.mrf.mxu0
      %v567 = vadd.f32 0.0, %v566
      %568 = vdwg.mxu0
      %v570 = vsel %vm182, %v293, 0
      %v573 = vsel %vm182, %v294, 0
      %v576 = vsel %vm182, %v295, 0
      %v579 = vsel %vm182, %v296, 0
      %v582 = vsel %vm182, %v297, 0
      %v585 = vsel %vm182, %v298, 0
      %v588 = vsel %vm182, %v299, 0
      %v591 = vsel %vm182, %v300, 0
      %v594 = vsel %vm182, %v301, 0
      %v597 = vsel %vm182, %v302, 0
      %v600 = vsel %vm182, %v303, 0
      %v603 = vsel %vm182, %v304, 0
      %v606 = vsel %vm182, %v305, 0
      %v609 = vsel %vm182, %v306, 0
      %v612 = vsel %vm182, %v307, 0
      %v615 = vsel %vm182, %v308, 0
      %v618 = vsel %vm182, %v309, 0
      %v621 = vsel %vm182, %v310, 0
      %v624 = vsel %vm182, %v311, 0
      %v627 = vsel %vm182, %v312, 0
      %v630 = vsel %vm182, %v313, 0
      %v633 = vsel %vm182, %v314, 0
      %v636 = vsel %vm182, %v315, 0
      %v639 = vsel %vm182, %v316, 0
      %v642 = vsel %vm182, %v317, 0
      %v645 = vsel %vm182, %v318, 0
      %v648 = vsel %vm182, %v319, 0
      %v651 = vsel %vm182, %v320, 0
      %v654 = vsel %vm182, %v321, 0
      %v657 = vsel %vm182, %v322, 0
      %v660 = vsel %vm182, %v323, 0
      %v663 = vsel %vm182, %v324, 0
      %665 = vmatpush.msra.mxu0 0.0
      %666 = vmatpush.msra.mxu0 0.0
      %667 = vmatpush.msra.mxu0 0.0
      %668 = vmatpush.msra.mxu0 0.0
      %669 = vmatpush.msra.mxu0 0.0
      %670 = vmatpush.msra.mxu0 0.0
      %671 = vmatpush.msra.mxu0 0.0
      %672 = vmatpush.msra.mxu0 0.0
      %673 = vmatpush.msra.mxu0 0.0
      %674 = vmatpush.msra.mxu0 0.0
      %675 = vmatpush.msra.mxu0 0.0
      %676 = vmatpush.msra.mxu0 0.0
      %677 = vmatpush.msra.mxu0 0.0
      %678 = vmatpush.msra.mxu0 0.0
      %679 = vmatpush.msra.mxu0 0.0
      %680 = vmatpush.msra.mxu0 %v325
      %681 = vmatmul.f32.gmra.mxu0 %v570
      %v682 = vpop.f32.mrf.mxu0
      %v683 = vadd.f32 %v474, %v682
      %684 = vmatmul.f32.gmra.mxu0 %v573
      %v685 = vpop.f32.mrf.mxu0
      %v686 = vadd.f32 %v477, %v685
      %687 = vmatmul.f32.gmra.mxu0 %v576
      %v688 = vpop.f32.mrf.mxu0
      %v689 = vadd.f32 %v480, %v688
      %690 = vmatmul.f32.gmra.mxu0 %v579
      %v691 = vpop.f32.mrf.mxu0
      %v692 = vadd.f32 %v483, %v691
      %693 = vmatmul.f32.gmra.mxu0 %v582
      %v694 = vpop.f32.mrf.mxu0
      %v695 = vadd.f32 %v486, %v694
      %696 = vmatmul.f32.gmra.mxu0 %v585
      %v697 = vpop.f32.mrf.mxu0
      %v698 = vadd.f32 %v489, %v697
      %699 = vmatmul.f32.gmra.mxu0 %v588
      %v700 = vpop.f32.mrf.mxu0
      %v701 = vadd.f32 %v492, %v700
      %702 = vmatmul.f32.gmra.mxu0 %v591
      %v703 = vpop.f32.mrf.mxu0
      %v704 = vadd.f32 %v495, %v703
      %705 = vmatmul.f32.gmra.mxu0 %v594
      %v706 = vpop.f32.mrf.mxu0
      %v707 = vadd.f32 %v498, %v706
      %708 = vmatmul.f32.gmra.mxu0 %v597
      %v709 = vpop.f32.mrf.mxu0
      %v710 = vadd.f32 %v501, %v709
      %711 = vmatmul.f32.gmra.mxu0 %v600
      %v712 = vpop.f32.mrf.mxu0
      %v713 = vadd.f32 %v504, %v712
      %714 = vmatmul.f32.gmra.mxu0 %v603
      %v715 = vpop.f32.mrf.mxu0
      %v716 = vadd.f32 %v507, %v715
      %717 = vmatmul.f32.gmra.mxu0 %v606
      %v718 = vpop.f32.mrf.mxu0
      %v719 = vadd.f32 %v510, %v718
      %720 = vmatmul.f32.gmra.mxu0 %v609
      %v721 = vpop.f32.mrf.mxu0
      %v722 = vadd.f32 %v513, %v721
      %723 = vmatmul.f32.gmra.mxu0 %v612
      %v724 = vpop.f32.mrf.mxu0
      %v725 = vadd.f32 %v516, %v724
      %726 = vmatmul.f32.gmra.mxu0 %v615
      %v727 = vpop.f32.mrf.mxu0
      %v728 = vadd.f32 %v519, %v727
      %729 = vmatmul.f32.gmra.mxu0 %v618
      %v730 = vpop.f32.mrf.mxu0
      %v731 = vadd.f32 %v522, %v730
      %732 = vmatmul.f32.gmra.mxu0 %v621
      %v733 = vpop.f32.mrf.mxu0
      %v734 = vadd.f32 %v525, %v733
      %735 = vmatmul.f32.gmra.mxu0 %v624
      %v736 = vpop.f32.mrf.mxu0
      %v737 = vadd.f32 %v528, %v736
      %738 = vmatmul.f32.gmra.mxu0 %v627
      %v739 = vpop.f32.mrf.mxu0
      %v740 = vadd.f32 %v531, %v739
      %741 = vmatmul.f32.gmra.mxu0 %v630
      %v742 = vpop.f32.mrf.mxu0
      %v743 = vadd.f32 %v534, %v742
      %744 = vmatmul.f32.gmra.mxu0 %v633
      %v745 = vpop.f32.mrf.mxu0
      %v746 = vadd.f32 %v537, %v745
      %747 = vmatmul.f32.gmra.mxu0 %v636
      %v748 = vpop.f32.mrf.mxu0
      %v749 = vadd.f32 %v540, %v748
      %750 = vmatmul.f32.gmra.mxu0 %v639
      %v751 = vpop.f32.mrf.mxu0
      %v752 = vadd.f32 %v543, %v751
      %753 = vmatmul.f32.gmra.mxu0 %v642
      %v754 = vpop.f32.mrf.mxu0
      %v755 = vadd.f32 %v546, %v754
      %756 = vmatmul.f32.gmra.mxu0 %v645
      %v757 = vpop.f32.mrf.mxu0
      %v758 = vadd.f32 %v549, %v757
      %759 = vmatmul.f32.gmra.mxu0 %v648
      %v760 = vpop.f32.mrf.mxu0
      %v761 = vadd.f32 %v552, %v760
      %762 = vmatmul.f32.gmra.mxu0 %v651
      %v763 = vpop.f32.mrf.mxu0
      %v764 = vadd.f32 %v555, %v763
      %765 = vmatmul.f32.gmra.mxu0 %v654
      %v766 = vpop.f32.mrf.mxu0
      %v767 = vadd.f32 %v558, %v766
      %768 = vmatmul.f32.gmra.mxu0 %v657
      %v769 = vpop.f32.mrf.mxu0
      %v770 = vadd.f32 %v561, %v769
      %771 = vmatmul.f32.gmra.mxu0 %v660
      %v772 = vpop.f32.mrf.mxu0
      %v773 = vadd.f32 %v564, %v772
      %774 = vmatmul.f32.gmra.mxu0 %v663
      %v775 = vpop.f32.mrf.mxu0
      %v776 = vadd.f32 %v567, %v775
      %777 = vdwg.mxu0
      %v778 = vld [vmem:[#allocation2 + $0x2] sm:$0xff]
      %v779 = vld [vmem:[#allocation2 + $0xa] sm:$0xff]
      %v780 = vld [vmem:[#allocation2 + $0x1a] sm:$0xff]
      %v781 = vld [vmem:[#allocation2 + $0x22] sm:$0xff]
      %v782 = vld [vmem:[#allocation2 + $0x32] sm:$0xff]
      %v783 = vld [vmem:[#allocation2 + $0x3a] sm:$0xff]
      %v784 = vld [vmem:[#allocation2 + $0x4a] sm:$0xff]
      %v785 = vld [vmem:[#allocation2 + $0x52] sm:$0xff]
      %v786 = vld [vmem:[#allocation2 + $0x62] sm:$0xff]
      %v787 = vld [vmem:[#allocation2 + $0x6a] sm:$0xff]
      %v788 = vld [vmem:[#allocation2 + $0x7a] sm:$0xff]
      %v789 = vld [vmem:[#allocation2 + $0x82] sm:$0xff]
      %v790 = vld [vmem:[#allocation2 + $0x92] sm:$0xff]
      %v791 = vld [vmem:[#allocation2 + $0x9a] sm:$0xff]
      %v792 = vld [vmem:[#allocation2 + $0xaa] sm:$0xff]
      %v793 = vld [vmem:[#allocation2 + $0xb2] sm:$0xff]
      %v794 = vld [vmem:[#allocation2 + $0xc2] sm:$0xff]
      %v795 = vld [vmem:[#allocation2 + $0xca] sm:$0xff]
      %v796 = vld [vmem:[#allocation2 + $0xda] sm:$0xff]
      %v797 = vld [vmem:[#allocation2 + $0xe2] sm:$0xff]
      %v798 = vld [vmem:[#allocation2 + $0xf2] sm:$0xff]
      %v799 = vld [vmem:[#allocation2 + $0xfa] sm:$0xff]
      %v800 = vld [vmem:[#allocation2 + $0x10a] sm:$0xff]
      %v801 = vld [vmem:[#allocation2 + $0x112] sm:$0xff]
      %v802 = vld [vmem:[#allocation2 + $0x122] sm:$0xff]
      %v803 = vld [vmem:[#allocation2 + $0x12a] sm:$0xff]
      %v804 = vld [vmem:[#allocation2 + $0x13a] sm:$0xff]
      %v805 = vld [vmem:[#allocation2 + $0x142] sm:$0xff]
      %v806 = vld [vmem:[#allocation2 + $0x152] sm:$0xff]
      %v807 = vld [vmem:[#allocation2 + $0x15a] sm:$0xff]
      %v808 = vld [vmem:[#allocation2 + $0x16a] sm:$0xff]
      %v809 = vld [vmem:[#allocation2 + $0x172] sm:$0xff]
      %s810 = scalar_lea.vmem %s1, 16
      %v811 = vld [vmem:[%s810] sm:$0xff]
      %v813 = vsel %vm182, %v778, 0
      %v816 = vsel %vm182, %v779, 0
      %v819 = vsel %vm182, %v780, 0
      %v822 = vsel %vm182, %v781, 0
      %v825 = vsel %vm182, %v782, 0
      %v828 = vsel %vm182, %v783, 0
      %v831 = vsel %vm182, %v784, 0
      %v834 = vsel %vm182, %v785, 0
      %v837 = vsel %vm182, %v786, 0
      %v840 = vsel %vm182, %v787, 0
      %v843 = vsel %vm182, %v788, 0
      %v846 = vsel %vm182, %v789, 0
      %v849 = vsel %vm182, %v790, 0
      %v852 = vsel %vm182, %v791, 0
      %v855 = vsel %vm182, %v792, 0
      %v858 = vsel %vm182, %v793, 0
      %v861 = vsel %vm182, %v794, 0
      %v864 = vsel %vm182, %v795, 0
      %v867 = vsel %vm182, %v796, 0
      %v870 = vsel %vm182, %v797, 0
      %v873 = vsel %vm182, %v798, 0
      %v876 = vsel %vm182, %v799, 0
      %v879 = vsel %vm182, %v800, 0
      %v882 = vsel %vm182, %v801, 0
      %v885 = vsel %vm182, %v802, 0
      %v888 = vsel %vm182, %v803, 0
      %v891 = vsel %vm182, %v804, 0
      %v894 = vsel %vm182, %v805, 0
      %v897 = vsel %vm182, %v806, 0
      %v900 = vsel %vm182, %v807, 0
      %v903 = vsel %vm182, %v808, 0
      %v906 = vsel %vm182, %v809, 0
      %908 = vmatpush.msra.mxu0 0.0
      %909 = vmatpush.msra.mxu0 0.0
      %910 = vmatpush.msra.mxu0 0.0
      %911 = vmatpush.msra.mxu0 0.0
      %912 = vmatpush.msra.mxu0 0.0
      %913 = vmatpush.msra.mxu0 0.0
      %914 = vmatpush.msra.mxu0 0.0
      %915 = vmatpush.msra.mxu0 0.0
      %916 = vmatpush.msra.mxu0 0.0
      %917 = vmatpush.msra.mxu0 0.0
      %918 = vmatpush.msra.mxu0 0.0
      %919 = vmatpush.msra.mxu0 0.0
      %920 = vmatpush.msra.mxu0 0.0
      %921 = vmatpush.msra.mxu0 0.0
      %922 = vmatpush.msra.mxu0 0.0
      %923 = vmatpush.msra.mxu0 %v811
      %924 = vmatmul.f32.gmra.mxu0 %v813
      %v925 = vpop.f32.mrf.mxu0
      %v926 = vadd.f32 0.0, %v925
      %927 = vmatmul.f32.gmra.mxu0 %v816
      %v928 = vpop.f32.mrf.mxu0
      %v929 = vadd.f32 0.0, %v928
      %930 = vmatmul.f32.gmra.mxu0 %v819
      %v931 = vpop.f32.mrf.mxu0
      %v932 = vadd.f32 0.0, %v931
      %933 = vmatmul.f32.gmra.mxu0 %v822
      %v934 = vpop.f32.mrf.mxu0
      %v935 = vadd.f32 0.0, %v934
      %936 = vmatmul.f32.gmra.mxu0 %v825
      %v937 = vpop.f32.mrf.mxu0
      %v938 = vadd.f32 0.0, %v937
      %939 = vmatmul.f32.gmra.mxu0 %v828
      %v940 = vpop.f32.mrf.mxu0
      %v941 = vadd.f32 0.0, %v940
      %942 = vmatmul.f32.gmra.mxu0 %v831
      %v943 = vpop.f32.mrf.mxu0
      %v944 = vadd.f32 0.0, %v943
      %945 = vmatmul.f32.gmra.mxu0 %v834
      %v946 = vpop.f32.mrf.mxu0
      %v947 = vadd.f32 0.0, %v946
      %948 = vmatmul.f32.gmra.mxu0 %v837
      %v949 = vpop.f32.mrf.mxu0
      %v950 = vadd.f32 0.0, %v949
      %951 = vmatmul.f32.gmra.mxu0 %v840
      %v952 = vpop.f32.mrf.mxu0
      %v953 = vadd.f32 0.0, %v952
      %954 = vmatmul.f32.gmra.mxu0 %v843
      %v955 = vpop.f32.mrf.mxu0
      %v956 = vadd.f32 0.0, %v955
      %957 = vmatmul.f32.gmra.mxu0 %v846
      %v958 = vpop.f32.mrf.mxu0
      %v959 = vadd.f32 0.0, %v958
      %960 = vmatmul.f32.gmra.mxu0 %v849
      %v961 = vpop.f32.mrf.mxu0
      %v962 = vadd.f32 0.0, %v961
      %963 = vmatmul.f32.gmra.mxu0 %v852
      %v964 = vpop.f32.mrf.mxu0
      %v965 = vadd.f32 0.0, %v964
      %966 = vmatmul.f32.gmra.mxu0 %v855
      %v967 = vpop.f32.mrf.mxu0
      %v968 = vadd.f32 0.0, %v967
      %969 = vmatmul.f32.gmra.mxu0 %v858
      %v970 = vpop.f32.mrf.mxu0
      %v971 = vadd.f32 0.0, %v970
      %972 = vmatmul.f32.gmra.mxu0 %v861
      %v973 = vpop.f32.mrf.mxu0
      %v974 = vadd.f32 0.0, %v973
      %975 = vmatmul.f32.gmra.mxu0 %v864
      %v976 = vpop.f32.mrf.mxu0
      %v977 = vadd.f32 0.0, %v976
      %978 = vmatmul.f32.gmra.mxu0 %v867
      %v979 = vpop.f32.mrf.mxu0
      %v980 = vadd.f32 0.0, %v979
      %981 = vmatmul.f32.gmra.mxu0 %v870
      %v982 = vpop.f32.mrf.mxu0
      %v983 = vadd.f32 0.0, %v982
      %984 = vmatmul.f32.gmra.mxu0 %v873
      %v985 = vpop.f32.mrf.mxu0
      %v986 = vadd.f32 0.0, %v985
      %987 = vmatmul.f32.gmra.mxu0 %v876
      %v988 = vpop.f32.mrf.mxu0
      %v989 = vadd.f32 0.0, %v988
      %990 = vmatmul.f32.gmra.mxu0 %v879
      %v991 = vpop.f32.mrf.mxu0
      %v992 = vadd.f32 0.0, %v991
      %993 = vmatmul.f32.gmra.mxu0 %v882
      %v994 = vpop.f32.mrf.mxu0
      %v995 = vadd.f32 0.0, %v994
      %996 = vmatmul.f32.gmra.mxu0 %v885
      %v997 = vpop.f32.mrf.mxu0
      %v998 = vadd.f32 0.0, %v997
      %999 = vmatmul.f32.gmra.mxu0 %v888
      %v1000 = vpop.f32.mrf.mxu0
      %v1001 = vadd.f32 0.0, %v1000
      %1002 = vmatmul.f32.gmra.mxu0 %v891
      %v1003 = vpop.f32.mrf.mxu0
      %v1004 = vadd.f32 0.0, %v1003
      %1005 = vmatmul.f32.gmra.mxu0 %v894
      %v1006 = vpop.f32.mrf.mxu0
      %v1007 = vadd.f32 0.0, %v1006
      %1008 = vmatmul.f32.gmra.mxu0 %v897
      %v1009 = vpop.f32.mrf.mxu0
      %v1010 = vadd.f32 0.0, %v1009
      %1011 = vmatmul.f32.gmra.mxu0 %v900
      %v1012 = vpop.f32.mrf.mxu0
      %v1013 = vadd.f32 0.0, %v1012
      %1014 = vmatmul.f32.gmra.mxu0 %v903
      %v1015 = vpop.f32.mrf.mxu0
      %v1016 = vadd.f32 0.0, %v1015
      %1017 = vmatmul.f32.gmra.mxu0 %v906
      %v1018 = vpop.f32.mrf.mxu0
      %v1019 = vadd.f32 0.0, %v1018
      %1020 = vdwg.mxu0
      %v1021 = vadd.f32 %v683, %v926
      %v1022 = vadd.f32 %v686, %v929
      %v1023 = vadd.f32 %v689, %v932
      %v1024 = vadd.f32 %v692, %v935
      %v1025 = vadd.f32 %v695, %v938
      %v1026 = vadd.f32 %v698, %v941
      %v1027 = vadd.f32 %v701, %v944
      %v1028 = vadd.f32 %v704, %v947
      %v1029 = vadd.f32 %v707, %v950
      %v1030 = vadd.f32 %v710, %v953
      %v1031 = vadd.f32 %v713, %v956
      %v1032 = vadd.f32 %v716, %v959
      %v1033 = vadd.f32 %v719, %v962
      %v1034 = vadd.f32 %v722, %v965
      %v1035 = vadd.f32 %v725, %v968
      %v1036 = vadd.f32 %v728, %v971
      %v1037 = vadd.f32 %v731, %v974
      %v1038 = vadd.f32 %v734, %v977
      %v1039 = vadd.f32 %v737, %v980
      %v1040 = vadd.f32 %v740, %v983
      %v1041 = vadd.f32 %v743, %v986
      %v1042 = vadd.f32 %v746, %v989
      %v1043 = vadd.f32 %v749, %v992
      %v1044 = vadd.f32 %v752, %v995
      %v1045 = vadd.f32 %v755, %v998
      %v1046 = vadd.f32 %v758, %v1001
      %v1047 = vadd.f32 %v761, %v1004
      %v1048 = vadd.f32 %v764, %v1007
      %v1049 = vadd.f32 %v767, %v1010
      %v1050 = vadd.f32 %v770, %v1013
      %v1051 = vadd.f32 %v773, %v1016
      %v1052 = vadd.f32 %v776, %v1019
      %v1053 = vld [vmem:[%s260] sm:$0xff]
      %v1054 = vld [vmem:[%s260 + $0x8] sm:$0xff]
      %v1055 = vld [vmem:[%s260 + $0x18] sm:$0xff]
      %v1056 = vld [vmem:[%s260 + $0x20] sm:$0xff]
      %v1057 = vld [vmem:[%s260 + $0x30] sm:$0xff]
      %v1058 = vld [vmem:[%s260 + $0x38] sm:$0xff]
      %v1059 = vld [vmem:[%s260 + $0x48] sm:$0xff]
      %v1060 = vld [vmem:[%s260 + $0x50] sm:$0xff]
      %v1061 = vld [vmem:[%s260 + $0x60] sm:$0xff]
      %v1062 = vld [vmem:[%s260 + $0x68] sm:$0xff]
      %v1063 = vld [vmem:[%s260 + $0x78] sm:$0xff]
      %v1064 = vld [vmem:[%s260 + $0x80] sm:$0xff]
      %v1065 = vld [vmem:[%s260 + $0x90] sm:$0xff]
      %v1066 = vld [vmem:[%s260 + $0x98] sm:$0xff]
      %v1067 = vld [vmem:[%s260 + $0xa8] sm:$0xff]
      %v1068 = vld [vmem:[%s260 + $0xb0] sm:$0xff]
      %v1069 = vld [vmem:[%s260 + $0xc0] sm:$0xff]
      %v1070 = vld [vmem:[%s260 + $0xc8] sm:$0xff]
      %v1071 = vld [vmem:[%s260 + $0xd8] sm:$0xff]
      %v1072 = vld [vmem:[%s260 + $0xe0] sm:$0xff]
      %v1073 = vld [vmem:[%s260 + $0xf0] sm:$0xff]
      %v1074 = vld [vmem:[%s260 + $0xf8] sm:$0xff]
      %v1075 = vld [vmem:[%s260 + $0x108] sm:$0xff]
      %v1076 = vld [vmem:[%s260 + $0x110] sm:$0xff]
      %v1077 = vld [vmem:[%s260 + $0x120] sm:$0xff]
      %v1078 = vld [vmem:[%s260 + $0x128] sm:$0xff]
      %v1079 = vld [vmem:[%s260 + $0x138] sm:$0xff]
      %v1080 = vld [vmem:[%s260 + $0x140] sm:$0xff]
      %v1081 = vld [vmem:[%s260 + $0x150] sm:$0xff]
      %v1082 = vld [vmem:[%s260 + $0x158] sm:$0xff]
      %v1083 = vld [vmem:[%s260 + $0x168] sm:$0xff]
      %v1084 = vld [vmem:[%s260 + $0x170] sm:$0xff]
      %s1085 = scalar_lea.vmem %s1, 24
      %v1086 = vld [vmem:[%s1085] sm:$0xff]
      %v1088 = vsel %vm182, %v1053, 0
      %v1091 = vsel %vm182, %v1054, 0
      %v1094 = vsel %vm182, %v1055, 0
      %v1097 = vsel %vm182, %v1056, 0
      %v1100 = vsel %vm182, %v1057, 0
      %v1103 = vsel %vm182, %v1058, 0
      %v1106 = vsel %vm182, %v1059, 0
      %v1109 = vsel %vm182, %v1060, 0
      %v1112 = vsel %vm182, %v1061, 0
      %v1115 = vsel %vm182, %v1062, 0
      %v1118 = vsel %vm182, %v1063, 0
      %v1121 = vsel %vm182, %v1064, 0
      %v1124 = vsel %vm182, %v1065, 0
      %v1127 = vsel %vm182, %v1066, 0
      %v1130 = vsel %vm182, %v1067, 0
      %v1133 = vsel %vm182, %v1068, 0
      %v1136 = vsel %vm182, %v1069, 0
      %v1139 = vsel %vm182, %v1070, 0
      %v1142 = vsel %vm182, %v1071, 0
      %v1145 = vsel %vm182, %v1072, 0
      %v1148 = vsel %vm182, %v1073, 0
      %v1151 = vsel %vm182, %v1074, 0
      %v1154 = vsel %vm182, %v1075, 0
      %v1157 = vsel %vm182, %v1076, 0
      %v1160 = vsel %vm182, %v1077, 0
      %v1163 = vsel %vm182, %v1078, 0
      %v1166 = vsel %vm182, %v1079, 0
      %v1169 = vsel %vm182, %v1080, 0
      %v1172 = vsel %vm182, %v1081, 0
      %v1175 = vsel %vm182, %v1082, 0
      %v1178 = vsel %vm182, %v1083, 0
      %v1181 = vsel %vm182, %v1084, 0
      %1183 = vmatpush.msra.mxu0 0.0
      %1184 = vmatpush.msra.mxu0 0.0
      %1185 = vmatpush.msra.mxu0 0.0
      %1186 = vmatpush.msra.mxu0 0.0
      %1187 = vmatpush.msra.mxu0 0.0
      %1188 = vmatpush.msra.mxu0 0.0
      %1189 = vmatpush.msra.mxu0 0.0
      %1190 = vmatpush.msra.mxu0 0.0
      %1191 = vmatpush.msra.mxu0 0.0
      %1192 = vmatpush.msra.mxu0 0.0
      %1193 = vmatpush.msra.mxu0 0.0
      %1194 = vmatpush.msra.mxu0 0.0
      %1195 = vmatpush.msra.mxu0 0.0
      %1196 = vmatpush.msra.mxu0 0.0
      %1197 = vmatpush.msra.mxu0 0.0
      %1198 = vmatpush.msra.mxu0 %v1086
      %1199 = vmatmul.f32.gmra.mxu0 %v1088
      %v1200 = vpop.f32.mrf.mxu0
      %v1201 = vadd.f32 0.0, %v1200
      %1202 = vmatmul.f32.gmra.mxu0 %v1091
      %v1203 = vpop.f32.mrf.mxu0
      %v1204 = vadd.f32 0.0, %v1203
      %1205 = vmatmul.f32.gmra.mxu0 %v1094
      %v1206 = vpop.f32.mrf.mxu0
      %v1207 = vadd.f32 0.0, %v1206
      %1208 = vmatmul.f32.gmra.mxu0 %v1097
      %v1209 = vpop.f32.mrf.mxu0
      %v1210 = vadd.f32 0.0, %v1209
      %1211 = vmatmul.f32.gmra.mxu0 %v1100
      %v1212 = vpop.f32.mrf.mxu0
      %v1213 = vadd.f32 0.0, %v1212
      %1214 = vmatmul.f32.gmra.mxu0 %v1103
      %v1215 = vpop.f32.mrf.mxu0
      %v1216 = vadd.f32 0.0, %v1215
      %1217 = vmatmul.f32.gmra.mxu0 %v1106
      %v1218 = vpop.f32.mrf.mxu0
      %v1219 = vadd.f32 0.0, %v1218
      %1220 = vmatmul.f32.gmra.mxu0 %v1109
      %v1221 = vpop.f32.mrf.mxu0
      %v1222 = vadd.f32 0.0, %v1221
      %1223 = vmatmul.f32.gmra.mxu0 %v1112
      %v1224 = vpop.f32.mrf.mxu0
      %v1225 = vadd.f32 0.0, %v1224
      %1226 = vmatmul.f32.gmra.mxu0 %v1115
      %v1227 = vpop.f32.mrf.mxu0
      %v1228 = vadd.f32 0.0, %v1227
      %1229 = vmatmul.f32.gmra.mxu0 %v1118
      %v1230 = vpop.f32.mrf.mxu0
      %v1231 = vadd.f32 0.0, %v1230
      %1232 = vmatmul.f32.gmra.mxu0 %v1121
      %v1233 = vpop.f32.mrf.mxu0
      %v1234 = vadd.f32 0.0, %v1233
      %1235 = vmatmul.f32.gmra.mxu0 %v1124
      %v1236 = vpop.f32.mrf.mxu0
      %v1237 = vadd.f32 0.0, %v1236
      %1238 = vmatmul.f32.gmra.mxu0 %v1127
      %v1239 = vpop.f32.mrf.mxu0
      %v1240 = vadd.f32 0.0, %v1239
      %1241 = vmatmul.f32.gmra.mxu0 %v1130
      %v1242 = vpop.f32.mrf.mxu0
      %v1243 = vadd.f32 0.0, %v1242
      %1244 = vmatmul.f32.gmra.mxu0 %v1133
      %v1245 = vpop.f32.mrf.mxu0
      %v1246 = vadd.f32 0.0, %v1245
      %1247 = vmatmul.f32.gmra.mxu0 %v1136
      %v1248 = vpop.f32.mrf.mxu0
      %v1249 = vadd.f32 0.0, %v1248
      %1250 = vmatmul.f32.gmra.mxu0 %v1139
      %v1251 = vpop.f32.mrf.mxu0
      %v1252 = vadd.f32 0.0, %v1251
      %1253 = vmatmul.f32.gmra.mxu0 %v1142
      %v1254 = vpop.f32.mrf.mxu0
      %v1255 = vadd.f32 0.0, %v1254
      %1256 = vmatmul.f32.gmra.mxu0 %v1145
      %v1257 = vpop.f32.mrf.mxu0
      %v1258 = vadd.f32 0.0, %v1257
      %1259 = vmatmul.f32.gmra.mxu0 %v1148
      %v1260 = vpop.f32.mrf.mxu0
      %v1261 = vadd.f32 0.0, %v1260
      %1262 = vmatmul.f32.gmra.mxu0 %v1151
      %v1263 = vpop.f32.mrf.mxu0
      %v1264 = vadd.f32 0.0, %v1263
      %1265 = vmatmul.f32.gmra.mxu0 %v1154
      %v1266 = vpop.f32.mrf.mxu0
      %v1267 = vadd.f32 0.0, %v1266
      %1268 = vmatmul.f32.gmra.mxu0 %v1157
      %v1269 = vpop.f32.mrf.mxu0
      %v1270 = vadd.f32 0.0, %v1269
      %1271 = vmatmul.f32.gmra.mxu0 %v1160
      %v1272 = vpop.f32.mrf.mxu0
      %v1273 = vadd.f32 0.0, %v1272
      %1274 = vmatmul.f32.gmra.mxu0 %v1163
      %v1275 = vpop.f32.mrf.mxu0
      %v1276 = vadd.f32 0.0, %v1275
      %1277 = vmatmul.f32.gmra.mxu0 %v1166
      %v1278 = vpop.f32.mrf.mxu0
      %v1279 = vadd.f32 0.0, %v1278
      %1280 = vmatmul.f32.gmra.mxu0 %v1169
      %v1281 = vpop.f32.mrf.mxu0
      %v1282 = vadd.f32 0.0, %v1281
      %1283 = vmatmul.f32.gmra.mxu0 %v1172
      %v1284 = vpop.f32.mrf.mxu0
      %v1285 = vadd.f32 0.0, %v1284
      %1286 = vmatmul.f32.gmra.mxu0 %v1175
      %v1287 = vpop.f32.mrf.mxu0
      %v1288 = vadd.f32 0.0, %v1287
      %1289 = vmatmul.f32.gmra.mxu0 %v1178
      %v1290 = vpop.f32.mrf.mxu0
      %v1291 = vadd.f32 0.0, %v1290
      %1292 = vmatmul.f32.gmra.mxu0 %v1181
      %v1293 = vpop.f32.mrf.mxu0
      %v1294 = vadd.f32 0.0, %v1293
      %1295 = vdwg.mxu0
      %v1296 = vadd.f32 %v1021, %v1201
      %v1297 = vadd.f32 %v1022, %v1204
      %v1298 = vadd.f32 %v1023, %v1207
      %v1299 = vadd.f32 %v1024, %v1210
      %v1300 = vadd.f32 %v1025, %v1213
      %v1301 = vadd.f32 %v1026, %v1216
      %v1302 = vadd.f32 %v1027, %v1219
      %v1303 = vadd.f32 %v1028, %v1222
      %v1304 = vadd.f32 %v1029, %v1225
      %v1305 = vadd.f32 %v1030, %v1228
      %v1306 = vadd.f32 %v1031, %v1231
      %v1307 = vadd.f32 %v1032, %v1234
      %v1308 = vadd.f32 %v1033, %v1237
      %v1309 = vadd.f32 %v1034, %v1240
      %v1310 = vadd.f32 %v1035, %v1243
      %v1311 = vadd.f32 %v1036, %v1246
      %v1312 = vadd.f32 %v1037, %v1249
      %v1313 = vadd.f32 %v1038, %v1252
      %v1314 = vadd.f32 %v1039, %v1255
      %v1315 = vadd.f32 %v1040, %v1258
      %v1316 = vadd.f32 %v1041, %v1261
      %v1317 = vadd.f32 %v1042, %v1264
      %v1318 = vadd.f32 %v1043, %v1267
      %v1319 = vadd.f32 %v1044, %v1270
      %v1320 = vadd.f32 %v1045, %v1273
      %v1321 = vadd.f32 %v1046, %v1276
      %v1322 = vadd.f32 %v1047, %v1279
      %v1323 = vadd.f32 %v1048, %v1282
      %v1324 = vadd.f32 %v1049, %v1285
      %v1325 = vadd.f32 %v1050, %v1288
      %v1326 = vadd.f32 %v1051, %v1291
      %v1327 = vadd.f32 %v1052, %v1294
      %v1328 = vld [vmem:[%s260 + $0x1] sm:$0xff]
      %v1329 = vld [vmem:[%s260 + $0x9] sm:$0xff]
      %v1330 = vld [vmem:[%s260 + $0x19] sm:$0xff]
      %v1331 = vld [vmem:[%s260 + $0x21] sm:$0xff]
      %v1332 = vld [vmem:[%s260 + $0x31] sm:$0xff]
      %v1333 = vld [vmem:[%s260 + $0x39] sm:$0xff]
      %v1334 = vld [vmem:[%s260 + $0x49] sm:$0xff]
      %v1335 = vld [vmem:[%s260 + $0x51] sm:$0xff]
      %v1336 = vld [vmem:[%s260 + $0x61] sm:$0xff]
      %v1337 = vld [vmem:[%s260 + $0x69] sm:$0xff]
      %v1338 = vld [vmem:[%s260 + $0x79] sm:$0xff]
      %v1339 = vld [vmem:[%s260 + $0x81] sm:$0xff]
      %v1340 = vld [vmem:[%s260 + $0x91] sm:$0xff]
      %v1341 = vld [vmem:[%s260 + $0x99] sm:$0xff]
      %v1342 = vld [vmem:[%s260 + $0xa9] sm:$0xff]
      %v1343 = vld [vmem:[%s260 + $0xb1] sm:$0xff]
      %v1344 = vld [vmem:[%s260 + $0xc1] sm:$0xff]
      %v1345 = vld [vmem:[%s260 + $0xc9] sm:$0xff]
      %v1346 = vld [vmem:[%s260 + $0xd9] sm:$0xff]
      %v1347 = vld [vmem:[%s260 + $0xe1] sm:$0xff]
      %v1348 = vld [vmem:[%s260 + $0xf1] sm:$0xff]
      %v1349 = vld [vmem:[%s260 + $0xf9] sm:$0xff]
      %v1350 = vld [vmem:[%s260 + $0x109] sm:$0xff]
      %v1351 = vld [vmem:[%s260 + $0x111] sm:$0xff]
      %v1352 = vld [vmem:[%s260 + $0x121] sm:$0xff]
      %v1353 = vld [vmem:[%s260 + $0x129] sm:$0xff]
      %v1354 = vld [vmem:[%s260 + $0x139] sm:$0xff]
      %v1355 = vld [vmem:[%s260 + $0x141] sm:$0xff]
      %v1356 = vld [vmem:[%s260 + $0x151] sm:$0xff]
      %v1357 = vld [vmem:[%s260 + $0x159] sm:$0xff]
      %v1358 = vld [vmem:[%s260 + $0x169] sm:$0xff]
      %v1359 = vld [vmem:[%s260 + $0x171] sm:$0xff]
      %s1360 = scalar_lea.vmem %s1, 32
      %v1361 = vld [vmem:[%s1360] sm:$0xff]
      %v1363 = vsel %vm182, %v1328, 0
      %v1366 = vsel %vm182, %v1329, 0
      %v1369 = vsel %vm182, %v1330, 0
      %v1372 = vsel %vm182, %v1331, 0
      %v1375 = vsel %vm182, %v1332, 0
      %v1378 = vsel %vm182, %v1333, 0
      %v1381 = vsel %vm182, %v1334, 0
      %v1384 = vsel %vm182, %v1335, 0
      %v1387 = vsel %vm182, %v1336, 0
      %v1390 = vsel %vm182, %v1337, 0
      %v1393 = vsel %vm182, %v1338, 0
      %v1396 = vsel %vm182, %v1339, 0
      %v1399 = vsel %vm182, %v1340, 0
      %v1402 = vsel %vm182, %v1341, 0
      %v1405 = vsel %vm182, %v1342, 0
      %v1408 = vsel %vm182, %v1343, 0
      %v1411 = vsel %vm182, %v1344, 0
      %v1414 = vsel %vm182, %v1345, 0
      %v1417 = vsel %vm182, %v1346, 0
      %v1420 = vsel %vm182, %v1347, 0
      %v1423 = vsel %vm182, %v1348, 0
      %v1426 = vsel %vm182, %v1349, 0
      %v1429 = vsel %vm182, %v1350, 0
      %v1432 = vsel %vm182, %v1351, 0
      %v1435 = vsel %vm182, %v1352, 0
      %v1438 = vsel %vm182, %v1353, 0
      %v1441 = vsel %vm182, %v1354, 0
      %v1444 = vsel %vm182, %v1355, 0
      %v1447 = vsel %vm182, %v1356, 0
      %v1450 = vsel %vm182, %v1357, 0
      %v1453 = vsel %vm182, %v1358, 0
      %v1456 = vsel %vm182, %v1359, 0
      %1458 = vmatpush.msra.mxu0 0.0
      %1459 = vmatpush.msra.mxu0 0.0
      %1460 = vmatpush.msra.mxu0 0.0
      %1461 = vmatpush.msra.mxu0 0.0
      %1462 = vmatpush.msra.mxu0 0.0
      %1463 = vmatpush.msra.mxu0 0.0
      %1464 = vmatpush.msra.mxu0 0.0
      %1465 = vmatpush.msra.mxu0 0.0
      %1466 = vmatpush.msra.mxu0 0.0
      %1467 = vmatpush.msra.mxu0 0.0
      %1468 = vmatpush.msra.mxu0 0.0
      %1469 = vmatpush.msra.mxu0 0.0
      %1470 = vmatpush.msra.mxu0 0.0
      %1471 = vmatpush.msra.mxu0 0.0
      %1472 = vmatpush.msra.mxu0 0.0
      %1473 = vmatpush.msra.mxu0 %v1361
      %1474 = vmatmul.f32.gmra.mxu0 %v1363
      %v1475 = vpop.f32.mrf.mxu0
      %v1476 = vadd.f32 0.0, %v1475
      %1477 = vmatmul.f32.gmra.mxu0 %v1366
      %v1478 = vpop.f32.mrf.mxu0
      %v1479 = vadd.f32 0.0, %v1478
      %1480 = vmatmul.f32.gmra.mxu0 %v1369
      %v1481 = vpop.f32.mrf.mxu0
      %v1482 = vadd.f32 0.0, %v1481
      %1483 = vmatmul.f32.gmra.mxu0 %v1372
      %v1484 = vpop.f32.mrf.mxu0
      %v1485 = vadd.f32 0.0, %v1484
      %1486 = vmatmul.f32.gmra.mxu0 %v1375
      %v1487 = vpop.f32.mrf.mxu0
      %v1488 = vadd.f32 0.0, %v1487
      %1489 = vmatmul.f32.gmra.mxu0 %v1378
      %v1490 = vpop.f32.mrf.mxu0
      %v1491 = vadd.f32 0.0, %v1490
      %1492 = vmatmul.f32.gmra.mxu0 %v1381
      %v1493 = vpop.f32.mrf.mxu0
      %v1494 = vadd.f32 0.0, %v1493
      %1495 = vmatmul.f32.gmra.mxu0 %v1384
      %v1496 = vpop.f32.mrf.mxu0
      %v1497 = vadd.f32 0.0, %v1496
      %1498 = vmatmul.f32.gmra.mxu0 %v1387
      %v1499 = vpop.f32.mrf.mxu0
      %v1500 = vadd.f32 0.0, %v1499
      %1501 = vmatmul.f32.gmra.mxu0 %v1390
      %v1502 = vpop.f32.mrf.mxu0
      %v1503 = vadd.f32 0.0, %v1502
      %1504 = vmatmul.f32.gmra.mxu0 %v1393
      %v1505 = vpop.f32.mrf.mxu0
      %v1506 = vadd.f32 0.0, %v1505
      %1507 = vmatmul.f32.gmra.mxu0 %v1396
      %v1508 = vpop.f32.mrf.mxu0
      %v1509 = vadd.f32 0.0, %v1508
      %1510 = vmatmul.f32.gmra.mxu0 %v1399
      %v1511 = vpop.f32.mrf.mxu0
      %v1512 = vadd.f32 0.0, %v1511
      %1513 = vmatmul.f32.gmra.mxu0 %v1402
      %v1514 = vpop.f32.mrf.mxu0
      %v1515 = vadd.f32 0.0, %v1514
      %1516 = vmatmul.f32.gmra.mxu0 %v1405
      %v1517 = vpop.f32.mrf.mxu0
      %v1518 = vadd.f32 0.0, %v1517
      %1519 = vmatmul.f32.gmra.mxu0 %v1408
      %v1520 = vpop.f32.mrf.mxu0
      %v1521 = vadd.f32 0.0, %v1520
      %1522 = vmatmul.f32.gmra.mxu0 %v1411
      %v1523 = vpop.f32.mrf.mxu0
      %v1524 = vadd.f32 0.0, %v1523
      %1525 = vmatmul.f32.gmra.mxu0 %v1414
      %v1526 = vpop.f32.mrf.mxu0
      %v1527 = vadd.f32 0.0, %v1526
      %1528 = vmatmul.f32.gmra.mxu0 %v1417
      %v1529 = vpop.f32.mrf.mxu0
      %v1530 = vadd.f32 0.0, %v1529
      %1531 = vmatmul.f32.gmra.mxu0 %v1420
      %v1532 = vpop.f32.mrf.mxu0
      %v1533 = vadd.f32 0.0, %v1532
      %1534 = vmatmul.f32.gmra.mxu0 %v1423
      %v1535 = vpop.f32.mrf.mxu0
      %v1536 = vadd.f32 0.0, %v1535
      %1537 = vmatmul.f32.gmra.mxu0 %v1426
      %v1538 = vpop.f32.mrf.mxu0
      %v1539 = vadd.f32 0.0, %v1538
      %1540 = vmatmul.f32.gmra.mxu0 %v1429
      %v1541 = vpop.f32.mrf.mxu0
      %v1542 = vadd.f32 0.0, %v1541
      %1543 = vmatmul.f32.gmra.mxu0 %v1432
      %v1544 = vpop.f32.mrf.mxu0
      %v1545 = vadd.f32 0.0, %v1544
      %1546 = vmatmul.f32.gmra.mxu0 %v1435
      %v1547 = vpop.f32.mrf.mxu0
      %v1548 = vadd.f32 0.0, %v1547
      %1549 = vmatmul.f32.gmra.mxu0 %v1438
      %v1550 = vpop.f32.mrf.mxu0
      %v1551 = vadd.f32 0.0, %v1550
      %1552 = vmatmul.f32.gmra.mxu0 %v1441
      %v1553 = vpop.f32.mrf.mxu0
      %v1554 = vadd.f32 0.0, %v1553
      %1555 = vmatmul.f32.gmra.mxu0 %v1444
      %v1556 = vpop.f32.mrf.mxu0
      %v1557 = vadd.f32 0.0, %v1556
      %1558 = vmatmul.f32.gmra.mxu0 %v1447
      %v1559 = vpop.f32.mrf.mxu0
      %v1560 = vadd.f32 0.0, %v1559
      %1561 = vmatmul.f32.gmra.mxu0 %v1450
      %v1562 = vpop.f32.mrf.mxu0
      %v1563 = vadd.f32 0.0, %v1562
      %1564 = vmatmul.f32.gmra.mxu0 %v1453
      %v1565 = vpop.f32.mrf.mxu0
      %v1566 = vadd.f32 0.0, %v1565
      %1567 = vmatmul.f32.gmra.mxu0 %v1456
      %v1568 = vpop.f32.mrf.mxu0
      %v1569 = vadd.f32 0.0, %v1568
      %1570 = vdwg.mxu0
      %v1571 = vadd.f32 %v1296, %v1476
      %v1572 = vadd.f32 %v1297, %v1479
      %v1573 = vadd.f32 %v1298, %v1482
      %v1574 = vadd.f32 %v1299, %v1485
      %v1575 = vadd.f32 %v1300, %v1488
      %v1576 = vadd.f32 %v1301, %v1491
      %v1577 = vadd.f32 %v1302, %v1494
      %v1578 = vadd.f32 %v1303, %v1497
      %v1579 = vadd.f32 %v1304, %v1500
      %v1580 = vadd.f32 %v1305, %v1503
      %v1581 = vadd.f32 %v1306, %v1506
      %v1582 = vadd.f32 %v1307, %v1509
      %v1583 = vadd.f32 %v1308, %v1512
      %v1584 = vadd.f32 %v1309, %v1515
      %v1585 = vadd.f32 %v1310, %v1518
      %v1586 = vadd.f32 %v1311, %v1521
      %v1587 = vadd.f32 %v1312, %v1524
      %v1588 = vadd.f32 %v1313, %v1527
      %v1589 = vadd.f32 %v1314, %v1530
      %v1590 = vadd.f32 %v1315, %v1533
      %v1591 = vadd.f32 %v1316, %v1536
      %v1592 = vadd.f32 %v1317, %v1539
      %v1593 = vadd.f32 %v1318, %v1542
      %v1594 = vadd.f32 %v1319, %v1545
      %v1595 = vadd.f32 %v1320, %v1548
      %v1596 = vadd.f32 %v1321, %v1551
      %v1597 = vadd.f32 %v1322, %v1554
      %v1598 = vadd.f32 %v1323, %v1557
      %v1599 = vadd.f32 %v1324, %v1560
      %v1600 = vadd.f32 %v1325, %v1563
      %v1601 = vadd.f32 %v1326, %v1566
      %v1602 = vadd.f32 %v1327, %v1569
      %v1603 = vld [vmem:[%s260 + $0x2] sm:$0xff]
      %v1604 = vld [vmem:[%s260 + $0xa] sm:$0xff]
      %v1605 = vld [vmem:[%s260 + $0x1a] sm:$0xff]
      %v1606 = vld [vmem:[%s260 + $0x22] sm:$0xff]
      %v1607 = vld [vmem:[%s260 + $0x32] sm:$0xff]
      %v1608 = vld [vmem:[%s260 + $0x3a] sm:$0xff]
      %v1609 = vld [vmem:[%s260 + $0x4a] sm:$0xff]
      %v1610 = vld [vmem:[%s260 + $0x52] sm:$0xff]
      %v1611 = vld [vmem:[%s260 + $0x62] sm:$0xff]
      %v1612 = vld [vmem:[%s260 + $0x6a] sm:$0xff]
      %v1613 = vld [vmem:[%s260 + $0x7a] sm:$0xff]
      %v1614 = vld [vmem:[%s260 + $0x82] sm:$0xff]
      %v1615 = vld [vmem:[%s260 + $0x92] sm:$0xff]
      %v1616 = vld [vmem:[%s260 + $0x9a] sm:$0xff]
      %v1617 = vld [vmem:[%s260 + $0xaa] sm:$0xff]
      %v1618 = vld [vmem:[%s260 + $0xb2] sm:$0xff]
      %v1619 = vld [vmem:[%s260 + $0xc2] sm:$0xff]
      %v1620 = vld [vmem:[%s260 + $0xca] sm:$0xff]
      %v1621 = vld [vmem:[%s260 + $0xda] sm:$0xff]
      %v1622 = vld [vmem:[%s260 + $0xe2] sm:$0xff]
      %v1623 = vld [vmem:[%s260 + $0xf2] sm:$0xff]
      %v1624 = vld [vmem:[%s260 + $0xfa] sm:$0xff]
      %v1625 = vld [vmem:[%s260 + $0x10a] sm:$0xff]
      %v1626 = vld [vmem:[%s260 + $0x112] sm:$0xff]
      %v1627 = vld [vmem:[%s260 + $0x122] sm:$0xff]
      %v1628 = vld [vmem:[%s260 + $0x12a] sm:$0xff]
      %v1629 = vld [vmem:[%s260 + $0x13a] sm:$0xff]
      %v1630 = vld [vmem:[%s260 + $0x142] sm:$0xff]
      %v1631 = vld [vmem:[%s260 + $0x152] sm:$0xff]
      %v1632 = vld [vmem:[%s260 + $0x15a] sm:$0xff]
      %v1633 = vld [vmem:[%s260 + $0x16a] sm:$0xff]
      %v1634 = vld [vmem:[%s260 + $0x172] sm:$0xff]
      %s1635 = scalar_lea.vmem %s1, 40
      %v1636 = vld [vmem:[%s1635] sm:$0xff]
      %v1638 = vsel %vm182, %v1603, 0
      %v1641 = vsel %vm182, %v1604, 0
      %v1644 = vsel %vm182, %v1605, 0
      %v1647 = vsel %vm182, %v1606, 0
      %v1650 = vsel %vm182, %v1607, 0
      %v1653 = vsel %vm182, %v1608, 0
      %v1656 = vsel %vm182, %v1609, 0
      %v1659 = vsel %vm182, %v1610, 0
      %v1662 = vsel %vm182, %v1611, 0
      %v1665 = vsel %vm182, %v1612, 0
      %v1668 = vsel %vm182, %v1613, 0
      %v1671 = vsel %vm182, %v1614, 0
      %v1674 = vsel %vm182, %v1615, 0
      %v1677 = vsel %vm182, %v1616, 0
      %v1680 = vsel %vm182, %v1617, 0
      %v1683 = vsel %vm182, %v1618, 0
      %v1686 = vsel %vm182, %v1619, 0
      %v1689 = vsel %vm182, %v1620, 0
      %v1692 = vsel %vm182, %v1621, 0
      %v1695 = vsel %vm182, %v1622, 0
      %v1698 = vsel %vm182, %v1623, 0
      %v1701 = vsel %vm182, %v1624, 0
      %v1704 = vsel %vm182, %v1625, 0
      %v1707 = vsel %vm182, %v1626, 0
      %v1710 = vsel %vm182, %v1627, 0
      %v1713 = vsel %vm182, %v1628, 0
      %v1716 = vsel %vm182, %v1629, 0
      %v1719 = vsel %vm182, %v1630, 0
      %v1722 = vsel %vm182, %v1631, 0
      %v1725 = vsel %vm182, %v1632, 0
      %v1728 = vsel %vm182, %v1633, 0
      %v1731 = vsel %vm182, %v1634, 0
      %1733 = vmatpush.msra.mxu0 0.0
      %1734 = vmatpush.msra.mxu0 0.0
      %1735 = vmatpush.msra.mxu0 0.0
      %1736 = vmatpush.msra.mxu0 0.0
      %1737 = vmatpush.msra.mxu0 0.0
      %1738 = vmatpush.msra.mxu0 0.0
      %1739 = vmatpush.msra.mxu0 0.0
      %1740 = vmatpush.msra.mxu0 0.0
      %1741 = vmatpush.msra.mxu0 0.0
      %1742 = vmatpush.msra.mxu0 0.0
      %1743 = vmatpush.msra.mxu0 0.0
      %1744 = vmatpush.msra.mxu0 0.0
      %1745 = vmatpush.msra.mxu0 0.0
      %1746 = vmatpush.msra.mxu0 0.0
      %1747 = vmatpush.msra.mxu0 0.0
      %1748 = vmatpush.msra.mxu0 %v1636
      %1749 = vmatmul.f32.gmra.mxu0 %v1638
      %v1750 = vpop.f32.mrf.mxu0
      %v1751 = vadd.f32 0.0, %v1750
      %1752 = vmatmul.f32.gmra.mxu0 %v1641
      %v1753 = vpop.f32.mrf.mxu0
      %v1754 = vadd.f32 0.0, %v1753
      %1755 = vmatmul.f32.gmra.mxu0 %v1644
      %v1756 = vpop.f32.mrf.mxu0
      %v1757 = vadd.f32 0.0, %v1756
      %1758 = vmatmul.f32.gmra.mxu0 %v1647
      %v1759 = vpop.f32.mrf.mxu0
      %v1760 = vadd.f32 0.0, %v1759
      %1761 = vmatmul.f32.gmra.mxu0 %v1650
      %v1762 = vpop.f32.mrf.mxu0
      %v1763 = vadd.f32 0.0, %v1762
      %1764 = vmatmul.f32.gmra.mxu0 %v1653
      %v1765 = vpop.f32.mrf.mxu0
      %v1766 = vadd.f32 0.0, %v1765
      %1767 = vmatmul.f32.gmra.mxu0 %v1656
      %v1768 = vpop.f32.mrf.mxu0
      %v1769 = vadd.f32 0.0, %v1768
      %1770 = vmatmul.f32.gmra.mxu0 %v1659
      %v1771 = vpop.f32.mrf.mxu0
      %v1772 = vadd.f32 0.0, %v1771
      %1773 = vmatmul.f32.gmra.mxu0 %v1662
      %v1774 = vpop.f32.mrf.mxu0
      %v1775 = vadd.f32 0.0, %v1774
      %1776 = vmatmul.f32.gmra.mxu0 %v1665
      %v1777 = vpop.f32.mrf.mxu0
      %v1778 = vadd.f32 0.0, %v1777
      %1779 = vmatmul.f32.gmra.mxu0 %v1668
      %v1780 = vpop.f32.mrf.mxu0
      %v1781 = vadd.f32 0.0, %v1780
      %1782 = vmatmul.f32.gmra.mxu0 %v1671
      %v1783 = vpop.f32.mrf.mxu0
      %v1784 = vadd.f32 0.0, %v1783
      %1785 = vmatmul.f32.gmra.mxu0 %v1674
      %v1786 = vpop.f32.mrf.mxu0
      %v1787 = vadd.f32 0.0, %v1786
      %1788 = vmatmul.f32.gmra.mxu0 %v1677
      %v1789 = vpop.f32.mrf.mxu0
      %v1790 = vadd.f32 0.0, %v1789
      %1791 = vmatmul.f32.gmra.mxu0 %v1680
      %v1792 = vpop.f32.mrf.mxu0
      %v1793 = vadd.f32 0.0, %v1792
      %1794 = vmatmul.f32.gmra.mxu0 %v1683
      %v1795 = vpop.f32.mrf.mxu0
      %v1796 = vadd.f32 0.0, %v1795
      %1797 = vmatmul.f32.gmra.mxu0 %v1686
      %v1798 = vpop.f32.mrf.mxu0
      %v1799 = vadd.f32 0.0, %v1798
      %1800 = vmatmul.f32.gmra.mxu0 %v1689
      %v1801 = vpop.f32.mrf.mxu0
      %v1802 = vadd.f32 0.0, %v1801
      %1803 = vmatmul.f32.gmra.mxu0 %v1692
      %v1804 = vpop.f32.mrf.mxu0
      %v1805 = vadd.f32 0.0, %v1804
      %1806 = vmatmul.f32.gmra.mxu0 %v1695
      %v1807 = vpop.f32.mrf.mxu0
      %v1808 = vadd.f32 0.0, %v1807
      %1809 = vmatmul.f32.gmra.mxu0 %v1698
      %v1810 = vpop.f32.mrf.mxu0
      %v1811 = vadd.f32 0.0, %v1810
      %1812 = vmatmul.f32.gmra.mxu0 %v1701
      %v1813 = vpop.f32.mrf.mxu0
      %v1814 = vadd.f32 0.0, %v1813
      %1815 = vmatmul.f32.gmra.mxu0 %v1704
      %v1816 = vpop.f32.mrf.mxu0
      %v1817 = vadd.f32 0.0, %v1816
      %1818 = vmatmul.f32.gmra.mxu0 %v1707
      %v1819 = vpop.f32.mrf.mxu0
      %v1820 = vadd.f32 0.0, %v1819
      %1821 = vmatmul.f32.gmra.mxu0 %v1710
      %v1822 = vpop.f32.mrf.mxu0
      %v1823 = vadd.f32 0.0, %v1822
      %1824 = vmatmul.f32.gmra.mxu0 %v1713
      %v1825 = vpop.f32.mrf.mxu0
      %v1826 = vadd.f32 0.0, %v1825
      %1827 = vmatmul.f32.gmra.mxu0 %v1716
      %v1828 = vpop.f32.mrf.mxu0
      %v1829 = vadd.f32 0.0, %v1828
      %1830 = vmatmul.f32.gmra.mxu0 %v1719
      %v1831 = vpop.f32.mrf.mxu0
      %v1832 = vadd.f32 0.0, %v1831
      %1833 = vmatmul.f32.gmra.mxu0 %v1722
      %v1834 = vpop.f32.mrf.mxu0
      %v1835 = vadd.f32 0.0, %v1834
      %1836 = vmatmul.f32.gmra.mxu0 %v1725
      %v1837 = vpop.f32.mrf.mxu0
      %v1838 = vadd.f32 0.0, %v1837
      %1839 = vmatmul.f32.gmra.mxu0 %v1728
      %v1840 = vpop.f32.mrf.mxu0
      %v1841 = vadd.f32 0.0, %v1840
      %1842 = vmatmul.f32.gmra.mxu0 %v1731
      %v1843 = vpop.f32.mrf.mxu0
      %v1844 = vadd.f32 0.0, %v1843
      %1845 = vdwg.mxu0
      %v1846 = vadd.f32 %v1571, %v1751
      %v1847 = vadd.f32 %v1572, %v1754
      %v1848 = vadd.f32 %v1573, %v1757
      %v1849 = vadd.f32 %v1574, %v1760
      %v1850 = vadd.f32 %v1575, %v1763
      %v1851 = vadd.f32 %v1576, %v1766
      %v1852 = vadd.f32 %v1577, %v1769
      %v1853 = vadd.f32 %v1578, %v1772
      %v1854 = vadd.f32 %v1579, %v1775
      %v1855 = vadd.f32 %v1580, %v1778
      %v1856 = vadd.f32 %v1581, %v1781
      %v1857 = vadd.f32 %v1582, %v1784
      %v1858 = vadd.f32 %v1583, %v1787
      %v1859 = vadd.f32 %v1584, %v1790
      %v1860 = vadd.f32 %v1585, %v1793
      %v1861 = vadd.f32 %v1586, %v1796
      %v1862 = vadd.f32 %v1587, %v1799
      %v1863 = vadd.f32 %v1588, %v1802
      %v1864 = vadd.f32 %v1589, %v1805
      %v1865 = vadd.f32 %v1590, %v1808
      %v1866 = vadd.f32 %v1591, %v1811
      %v1867 = vadd.f32 %v1592, %v1814
      %v1868 = vadd.f32 %v1593, %v1817
      %v1869 = vadd.f32 %v1594, %v1820
      %v1870 = vadd.f32 %v1595, %v1823
      %v1871 = vadd.f32 %v1596, %v1826
      %v1872 = vadd.f32 %v1597, %v1829
      %v1873 = vadd.f32 %v1598, %v1832
      %v1874 = vadd.f32 %v1599, %v1835
      %v1875 = vadd.f32 %v1600, %v1838
      %v1876 = vadd.f32 %v1601, %v1841
      %v1877 = vadd.f32 %v1602, %v1844
      %s1878 = scalar_lea.vmem [#allocation2], 48
      %v1879 = vld [vmem:[%s1878] sm:$0xff]
      %v1880 = vld [vmem:[%s1878 + $0x8] sm:$0xff]
      %v1881 = vld [vmem:[%s1878 + $0x18] sm:$0xff]
      %v1882 = vld [vmem:[%s1878 + $0x20] sm:$0xff]
      %v1883 = vld [vmem:[%s1878 + $0x30] sm:$0xff]
      %v1884 = vld [vmem:[%s1878 + $0x38] sm:$0xff]
      %v1885 = vld [vmem:[%s1878 + $0x48] sm:$0xff]
      %v1886 = vld [vmem:[%s1878 + $0x50] sm:$0xff]
      %v1887 = vld [vmem:[%s1878 + $0x60] sm:$0xff]
      %v1888 = vld [vmem:[%s1878 + $0x68] sm:$0xff]
      %v1889 = vld [vmem:[%s1878 + $0x78] sm:$0xff]
      %v1890 = vld [vmem:[%s1878 + $0x80] sm:$0xff]
      %v1891 = vld [vmem:[%s1878 + $0x90] sm:$0xff]
      %v1892 = vld [vmem:[%s1878 + $0x98] sm:$0xff]
      %v1893 = vld [vmem:[%s1878 + $0xa8] sm:$0xff]
      %v1894 = vld [vmem:[%s1878 + $0xb0] sm:$0xff]
      %v1895 = vld [vmem:[%s1878 + $0xc0] sm:$0xff]
      %v1896 = vld [vmem:[%s1878 + $0xc8] sm:$0xff]
      %v1897 = vld [vmem:[%s1878 + $0xd8] sm:$0xff]
      %v1898 = vld [vmem:[%s1878 + $0xe0] sm:$0xff]
      %v1899 = vld [vmem:[%s1878 + $0xf0] sm:$0xff]
      %v1900 = vld [vmem:[%s1878 + $0xf8] sm:$0xff]
      %v1901 = vld [vmem:[%s1878 + $0x108] sm:$0xff]
      %v1902 = vld [vmem:[%s1878 + $0x110] sm:$0xff]
      %v1903 = vld [vmem:[%s1878 + $0x120] sm:$0xff]
      %v1904 = vld [vmem:[%s1878 + $0x128] sm:$0xff]
      %v1905 = vld [vmem:[%s1878 + $0x138] sm:$0xff]
      %v1906 = vld [vmem:[%s1878 + $0x140] sm:$0xff]
      %v1907 = vld [vmem:[%s1878 + $0x150] sm:$0xff]
      %v1908 = vld [vmem:[%s1878 + $0x158] sm:$0xff]
      %v1909 = vld [vmem:[%s1878 + $0x168] sm:$0xff]
      %v1910 = vld [vmem:[%s1878 + $0x170] sm:$0xff]
      %s1911 = scalar_lea.vmem %s1, 48
      %v1912 = vld [vmem:[%s1911] sm:$0xff]
      %v1914 = vsel %vm182, %v1879, 0
      %v1917 = vsel %vm182, %v1880, 0
      %v1920 = vsel %vm182, %v1881, 0
      %v1923 = vsel %vm182, %v1882, 0
      %v1926 = vsel %vm182, %v1883, 0
      %v1929 = vsel %vm182, %v1884, 0
      %v1932 = vsel %vm182, %v1885, 0
      %v1935 = vsel %vm182, %v1886, 0
      %v1938 = vsel %vm182, %v1887, 0
      %v1941 = vsel %vm182, %v1888, 0
      %v1944 = vsel %vm182, %v1889, 0
      %v1947 = vsel %vm182, %v1890, 0
      %v1950 = vsel %vm182, %v1891, 0
      %v1953 = vsel %vm182, %v1892, 0
      %v1956 = vsel %vm182, %v1893, 0
      %v1959 = vsel %vm182, %v1894, 0
      %v1962 = vsel %vm182, %v1895, 0
      %v1965 = vsel %vm182, %v1896, 0
      %v1968 = vsel %vm182, %v1897, 0
      %v1971 = vsel %vm182, %v1898, 0
      %v1974 = vsel %vm182, %v1899, 0
      %v1977 = vsel %vm182, %v1900, 0
      %v1980 = vsel %vm182, %v1901, 0
      %v1983 = vsel %vm182, %v1902, 0
      %v1986 = vsel %vm182, %v1903, 0
      %v1989 = vsel %vm182, %v1904, 0
      %v1992 = vsel %vm182, %v1905, 0
      %v1995 = vsel %vm182, %v1906, 0
      %v1998 = vsel %vm182, %v1907, 0
      %v2001 = vsel %vm182, %v1908, 0
      %v2004 = vsel %vm182, %v1909, 0
      %v2007 = vsel %vm182, %v1910, 0
      %2009 = vmatpush.msra.mxu0 0.0
      %2010 = vmatpush.msra.mxu0 0.0
      %2011 = vmatpush.msra.mxu0 0.0
      %2012 = vmatpush.msra.mxu0 0.0
      %2013 = vmatpush.msra.mxu0 0.0
      %2014 = vmatpush.msra.mxu0 0.0
      %2015 = vmatpush.msra.mxu0 0.0
      %2016 = vmatpush.msra.mxu0 0.0
      %2017 = vmatpush.msra.mxu0 0.0
      %2018 = vmatpush.msra.mxu0 0.0
      %2019 = vmatpush.msra.mxu0 0.0
      %2020 = vmatpush.msra.mxu0 0.0
      %2021 = vmatpush.msra.mxu0 0.0
      %2022 = vmatpush.msra.mxu0 0.0
      %2023 = vmatpush.msra.mxu0 0.0
      %2024 = vmatpush.msra.mxu0 %v1912
      %2025 = vmatmul.f32.gmra.mxu0 %v1914
      %v2026 = vpop.f32.mrf.mxu0
      %v2027 = vadd.f32 0.0, %v2026
      %2028 = vmatmul.f32.gmra.mxu0 %v1917
      %v2029 = vpop.f32.mrf.mxu0
      %v2030 = vadd.f32 0.0, %v2029
      %2031 = vmatmul.f32.gmra.mxu0 %v1920
      %v2032 = vpop.f32.mrf.mxu0
      %v2033 = vadd.f32 0.0, %v2032
      %2034 = vmatmul.f32.gmra.mxu0 %v1923
      %v2035 = vpop.f32.mrf.mxu0
      %v2036 = vadd.f32 0.0, %v2035
      %2037 = vmatmul.f32.gmra.mxu0 %v1926
      %v2038 = vpop.f32.mrf.mxu0
      %v2039 = vadd.f32 0.0, %v2038
      %2040 = vmatmul.f32.gmra.mxu0 %v1929
      %v2041 = vpop.f32.mrf.mxu0
      %v2042 = vadd.f32 0.0, %v2041
      %2043 = vmatmul.f32.gmra.mxu0 %v1932
      %v2044 = vpop.f32.mrf.mxu0
      %v2045 = vadd.f32 0.0, %v2044
      %2046 = vmatmul.f32.gmra.mxu0 %v1935
      %v2047 = vpop.f32.mrf.mxu0
      %v2048 = vadd.f32 0.0, %v2047
      %2049 = vmatmul.f32.gmra.mxu0 %v1938
      %v2050 = vpop.f32.mrf.mxu0
      %v2051 = vadd.f32 0.0, %v2050
      %2052 = vmatmul.f32.gmra.mxu0 %v1941
      %v2053 = vpop.f32.mrf.mxu0
      %v2054 = vadd.f32 0.0, %v2053
      %2055 = vmatmul.f32.gmra.mxu0 %v1944
      %v2056 = vpop.f32.mrf.mxu0
      %v2057 = vadd.f32 0.0, %v2056
      %2058 = vmatmul.f32.gmra.mxu0 %v1947
      %v2059 = vpop.f32.mrf.mxu0
      %v2060 = vadd.f32 0.0, %v2059
      %2061 = vmatmul.f32.gmra.mxu0 %v1950
      %v2062 = vpop.f32.mrf.mxu0
      %v2063 = vadd.f32 0.0, %v2062
      %2064 = vmatmul.f32.gmra.mxu0 %v1953
      %v2065 = vpop.f32.mrf.mxu0
      %v2066 = vadd.f32 0.0, %v2065
      %2067 = vmatmul.f32.gmra.mxu0 %v1956
      %v2068 = vpop.f32.mrf.mxu0
      %v2069 = vadd.f32 0.0, %v2068
      %2070 = vmatmul.f32.gmra.mxu0 %v1959
      %v2071 = vpop.f32.mrf.mxu0
      %v2072 = vadd.f32 0.0, %v2071
      %2073 = vmatmul.f32.gmra.mxu0 %v1962
      %v2074 = vpop.f32.mrf.mxu0
      %v2075 = vadd.f32 0.0, %v2074
      %2076 = vmatmul.f32.gmra.mxu0 %v1965
      %v2077 = vpop.f32.mrf.mxu0
      %v2078 = vadd.f32 0.0, %v2077
      %2079 = vmatmul.f32.gmra.mxu0 %v1968
      %v2080 = vpop.f32.mrf.mxu0
      %v2081 = vadd.f32 0.0, %v2080
      %2082 = vmatmul.f32.gmra.mxu0 %v1971
      %v2083 = vpop.f32.mrf.mxu0
      %v2084 = vadd.f32 0.0, %v2083
      %2085 = vmatmul.f32.gmra.mxu0 %v1974
      %v2086 = vpop.f32.mrf.mxu0
      %v2087 = vadd.f32 0.0, %v2086
      %2088 = vmatmul.f32.gmra.mxu0 %v1977
      %v2089 = vpop.f32.mrf.mxu0
      %v2090 = vadd.f32 0.0, %v2089
      %2091 = vmatmul.f32.gmra.mxu0 %v1980
      %v2092 = vpop.f32.mrf.mxu0
      %v2093 = vadd.f32 0.0, %v2092
      %2094 = vmatmul.f32.gmra.mxu0 %v1983
      %v2095 = vpop.f32.mrf.mxu0
      %v2096 = vadd.f32 0.0, %v2095
      %2097 = vmatmul.f32.gmra.mxu0 %v1986
      %v2098 = vpop.f32.mrf.mxu0
      %v2099 = vadd.f32 0.0, %v2098
      %2100 = vmatmul.f32.gmra.mxu0 %v1989
      %v2101 = vpop.f32.mrf.mxu0
      %v2102 = vadd.f32 0.0, %v2101
      %2103 = vmatmul.f32.gmra.mxu0 %v1992
      %v2104 = vpop.f32.mrf.mxu0
      %v2105 = vadd.f32 0.0, %v2104
      %2106 = vmatmul.f32.gmra.mxu0 %v1995
      %v2107 = vpop.f32.mrf.mxu0
      %v2108 = vadd.f32 0.0, %v2107
      %2109 = vmatmul.f32.gmra.mxu0 %v1998
      %v2110 = vpop.f32.mrf.mxu0
      %v2111 = vadd.f32 0.0, %v2110
      %2112 = vmatmul.f32.gmra.mxu0 %v2001
      %v2113 = vpop.f32.mrf.mxu0
      %v2114 = vadd.f32 0.0, %v2113
      %2115 = vmatmul.f32.gmra.mxu0 %v2004
      %v2116 = vpop.f32.mrf.mxu0
      %v2117 = vadd.f32 0.0, %v2116
      %2118 = vmatmul.f32.gmra.mxu0 %v2007
      %v2119 = vpop.f32.mrf.mxu0
      %v2120 = vadd.f32 0.0, %v2119
      %2121 = vdwg.mxu0
      %v2122 = vadd.f32 %v1846, %v2027
      %v2123 = vadd.f32 %v1847, %v2030
      %v2124 = vadd.f32 %v1848, %v2033
      %v2125 = vadd.f32 %v1849, %v2036
      %v2126 = vadd.f32 %v1850, %v2039
      %v2127 = vadd.f32 %v1851, %v2042
      %v2128 = vadd.f32 %v1852, %v2045
      %v2129 = vadd.f32 %v1853, %v2048
      %v2130 = vadd.f32 %v1854, %v2051
      %v2131 = vadd.f32 %v1855, %v2054
      %v2132 = vadd.f32 %v1856, %v2057
      %v2133 = vadd.f32 %v1857, %v2060
      %v2134 = vadd.f32 %v1858, %v2063
      %v2135 = vadd.f32 %v1859, %v2066
      %v2136 = vadd.f32 %v1860, %v2069
      %v2137 = vadd.f32 %v1861, %v2072
      %v2138 = vadd.f32 %v1862, %v2075
      %v2139 = vadd.f32 %v1863, %v2078
      %v2140 = vadd.f32 %v1864, %v2081
      %v2141 = vadd.f32 %v1865, %v2084
      %v2142 = vadd.f32 %v1866, %v2087
      %v2143 = vadd.f32 %v1867, %v2090
      %v2144 = vadd.f32 %v1868, %v2093
      %v2145 = vadd.f32 %v1869, %v2096
      %v2146 = vadd.f32 %v1870, %v2099
      %v2147 = vadd.f32 %v1871, %v2102
      %v2148 = vadd.f32 %v1872, %v2105
      %v2149 = vadd.f32 %v1873, %v2108
      %v2150 = vadd.f32 %v1874, %v2111
      %v2151 = vadd.f32 %v1875, %v2114
      %v2152 = vadd.f32 %v1876, %v2117
      %v2153 = vadd.f32 %v1877, %v2120
      %v2154 = vld [vmem:[%s1878 + $0x1] sm:$0xff]
      %v2155 = vld [vmem:[%s1878 + $0x9] sm:$0xff]
      %v2156 = vld [vmem:[%s1878 + $0x19] sm:$0xff]
      %v2157 = vld [vmem:[%s1878 + $0x21] sm:$0xff]
      %v2158 = vld [vmem:[%s1878 + $0x31] sm:$0xff]
      %v2159 = vld [vmem:[%s1878 + $0x39] sm:$0xff]
      %v2160 = vld [vmem:[%s1878 + $0x49] sm:$0xff]
      %v2161 = vld [vmem:[%s1878 + $0x51] sm:$0xff]
      %v2162 = vld [vmem:[%s1878 + $0x61] sm:$0xff]
      %v2163 = vld [vmem:[%s1878 + $0x69] sm:$0xff]
      %v2164 = vld [vmem:[%s1878 + $0x79] sm:$0xff]
      %v2165 = vld [vmem:[%s1878 + $0x81] sm:$0xff]
      %v2166 = vld [vmem:[%s1878 + $0x91] sm:$0xff]
      %v2167 = vld [vmem:[%s1878 + $0x99] sm:$0xff]
      %v2168 = vld [vmem:[%s1878 + $0xa9] sm:$0xff]
      %v2169 = vld [vmem:[%s1878 + $0xb1] sm:$0xff]
      %v2170 = vld [vmem:[%s1878 + $0xc1] sm:$0xff]
      %v2171 = vld [vmem:[%s1878 + $0xc9] sm:$0xff]
      %v2172 = vld [vmem:[%s1878 + $0xd9] sm:$0xff]
      %v2173 = vld [vmem:[%s1878 + $0xe1] sm:$0xff]
      %v2174 = vld [vmem:[%s1878 + $0xf1] sm:$0xff]
      %v2175 = vld [vmem:[%s1878 + $0xf9] sm:$0xff]
      %v2176 = vld [vmem:[%s1878 + $0x109] sm:$0xff]
      %v2177 = vld [vmem:[%s1878 + $0x111] sm:$0xff]
      %v2178 = vld [vmem:[%s1878 + $0x121] sm:$0xff]
      %v2179 = vld [vmem:[%s1878 + $0x129] sm:$0xff]
      %v2180 = vld [vmem:[%s1878 + $0x139] sm:$0xff]
      %v2181 = vld [vmem:[%s1878 + $0x141] sm:$0xff]
      %v2182 = vld [vmem:[%s1878 + $0x151] sm:$0xff]
      %v2183 = vld [vmem:[%s1878 + $0x159] sm:$0xff]
      %v2184 = vld [vmem:[%s1878 + $0x169] sm:$0xff]
      %v2185 = vld [vmem:[%s1878 + $0x171] sm:$0xff]
      %s2186 = scalar_lea.vmem %s1, 56
      %v2187 = vld [vmem:[%s2186] sm:$0xff]
      %v2189 = vsel %vm182, %v2154, 0
      %v2192 = vsel %vm182, %v2155, 0
      %v2195 = vsel %vm182, %v2156, 0
      %v2198 = vsel %vm182, %v2157, 0
      %v2201 = vsel %vm182, %v2158, 0
      %v2204 = vsel %vm182, %v2159, 0
      %v2207 = vsel %vm182, %v2160, 0
      %v2210 = vsel %vm182, %v2161, 0
      %v2213 = vsel %vm182, %v2162, 0
      %v2216 = vsel %vm182, %v2163, 0
      %v2219 = vsel %vm182, %v2164, 0
      %v2222 = vsel %vm182, %v2165, 0
      %v2225 = vsel %vm182, %v2166, 0
      %v2228 = vsel %vm182, %v2167, 0
      %v2231 = vsel %vm182, %v2168, 0
      %v2234 = vsel %vm182, %v2169, 0
      %v2237 = vsel %vm182, %v2170, 0
      %v2240 = vsel %vm182, %v2171, 0
      %v2243 = vsel %vm182, %v2172, 0
      %v2246 = vsel %vm182, %v2173, 0
      %v2249 = vsel %vm182, %v2174, 0
      %v2252 = vsel %vm182, %v2175, 0
      %v2255 = vsel %vm182, %v2176, 0
      %v2258 = vsel %vm182, %v2177, 0
      %v2261 = vsel %vm182, %v2178, 0
      %v2264 = vsel %vm182, %v2179, 0
      %v2267 = vsel %vm182, %v2180, 0
      %v2270 = vsel %vm182, %v2181, 0
      %v2273 = vsel %vm182, %v2182, 0
      %v2276 = vsel %vm182, %v2183, 0
      %v2279 = vsel %vm182, %v2184, 0
      %v2282 = vsel %vm182, %v2185, 0
      %2284 = vmatpush.msra.mxu0 0.0
      %2285 = vmatpush.msra.mxu0 0.0
      %2286 = vmatpush.msra.mxu0 0.0
      %2287 = vmatpush.msra.mxu0 0.0
      %2288 = vmatpush.msra.mxu0 0.0
      %2289 = vmatpush.msra.mxu0 0.0
      %2290 = vmatpush.msra.mxu0 0.0
      %2291 = vmatpush.msra.mxu0 0.0
      %2292 = vmatpush.msra.mxu0 0.0
      %2293 = vmatpush.msra.mxu0 0.0
      %2294 = vmatpush.msra.mxu0 0.0
      %2295 = vmatpush.msra.mxu0 0.0
      %2296 = vmatpush.msra.mxu0 0.0
      %2297 = vmatpush.msra.mxu0 0.0
      %2298 = vmatpush.msra.mxu0 0.0
      %2299 = vmatpush.msra.mxu0 %v2187
      %2300 = vmatmul.f32.gmra.mxu0 %v2189
      %v2301 = vpop.f32.mrf.mxu0
      %v2302 = vadd.f32 0.0, %v2301
      %2303 = vmatmul.f32.gmra.mxu0 %v2192
      %v2304 = vpop.f32.mrf.mxu0
      %v2305 = vadd.f32 0.0, %v2304
      %2306 = vmatmul.f32.gmra.mxu0 %v2195
      %v2307 = vpop.f32.mrf.mxu0
      %v2308 = vadd.f32 0.0, %v2307
      %2309 = vmatmul.f32.gmra.mxu0 %v2198
      %v2310 = vpop.f32.mrf.mxu0
      %v2311 = vadd.f32 0.0, %v2310
      %2312 = vmatmul.f32.gmra.mxu0 %v2201
      %v2313 = vpop.f32.mrf.mxu0
      %v2314 = vadd.f32 0.0, %v2313
      %2315 = vmatmul.f32.gmra.mxu0 %v2204
      %v2316 = vpop.f32.mrf.mxu0
      %v2317 = vadd.f32 0.0, %v2316
      %2318 = vmatmul.f32.gmra.mxu0 %v2207
      %v2319 = vpop.f32.mrf.mxu0
      %v2320 = vadd.f32 0.0, %v2319
      %2321 = vmatmul.f32.gmra.mxu0 %v2210
      %v2322 = vpop.f32.mrf.mxu0
      %v2323 = vadd.f32 0.0, %v2322
      %2324 = vmatmul.f32.gmra.mxu0 %v2213
      %v2325 = vpop.f32.mrf.mxu0
      %v2326 = vadd.f32 0.0, %v2325
      %2327 = vmatmul.f32.gmra.mxu0 %v2216
      %v2328 = vpop.f32.mrf.mxu0
      %v2329 = vadd.f32 0.0, %v2328
      %2330 = vmatmul.f32.gmra.mxu0 %v2219
      %v2331 = vpop.f32.mrf.mxu0
      %v2332 = vadd.f32 0.0, %v2331
      %2333 = vmatmul.f32.gmra.mxu0 %v2222
      %v2334 = vpop.f32.mrf.mxu0
      %v2335 = vadd.f32 0.0, %v2334
      %2336 = vmatmul.f32.gmra.mxu0 %v2225
      %v2337 = vpop.f32.mrf.mxu0
      %v2338 = vadd.f32 0.0, %v2337
      %2339 = vmatmul.f32.gmra.mxu0 %v2228
      %v2340 = vpop.f32.mrf.mxu0
      %v2341 = vadd.f32 0.0, %v2340
      %2342 = vmatmul.f32.gmra.mxu0 %v2231
      %v2343 = vpop.f32.mrf.mxu0
      %v2344 = vadd.f32 0.0, %v2343
      %2345 = vmatmul.f32.gmra.mxu0 %v2234
      %v2346 = vpop.f32.mrf.mxu0
      %v2347 = vadd.f32 0.0, %v2346
      %2348 = vmatmul.f32.gmra.mxu0 %v2237
      %v2349 = vpop.f32.mrf.mxu0
      %v2350 = vadd.f32 0.0, %v2349
      %2351 = vmatmul.f32.gmra.mxu0 %v2240
      %v2352 = vpop.f32.mrf.mxu0
      %v2353 = vadd.f32 0.0, %v2352
      %2354 = vmatmul.f32.gmra.mxu0 %v2243
      %v2355 = vpop.f32.mrf.mxu0
      %v2356 = vadd.f32 0.0, %v2355
      %2357 = vmatmul.f32.gmra.mxu0 %v2246
      %v2358 = vpop.f32.mrf.mxu0
      %v2359 = vadd.f32 0.0, %v2358
      %2360 = vmatmul.f32.gmra.mxu0 %v2249
      %v2361 = vpop.f32.mrf.mxu0
      %v2362 = vadd.f32 0.0, %v2361
      %2363 = vmatmul.f32.gmra.mxu0 %v2252
      %v2364 = vpop.f32.mrf.mxu0
      %v2365 = vadd.f32 0.0, %v2364
      %2366 = vmatmul.f32.gmra.mxu0 %v2255
      %v2367 = vpop.f32.mrf.mxu0
      %v2368 = vadd.f32 0.0, %v2367
      %2369 = vmatmul.f32.gmra.mxu0 %v2258
      %v2370 = vpop.f32.mrf.mxu0
      %v2371 = vadd.f32 0.0, %v2370
      %2372 = vmatmul.f32.gmra.mxu0 %v2261
      %v2373 = vpop.f32.mrf.mxu0
      %v2374 = vadd.f32 0.0, %v2373
      %2375 = vmatmul.f32.gmra.mxu0 %v2264
      %v2376 = vpop.f32.mrf.mxu0
      %v2377 = vadd.f32 0.0, %v2376
      %2378 = vmatmul.f32.gmra.mxu0 %v2267
      %v2379 = vpop.f32.mrf.mxu0
      %v2380 = vadd.f32 0.0, %v2379
      %2381 = vmatmul.f32.gmra.mxu0 %v2270
      %v2382 = vpop.f32.mrf.mxu0
      %v2383 = vadd.f32 0.0, %v2382
      %2384 = vmatmul.f32.gmra.mxu0 %v2273
      %v2385 = vpop.f32.mrf.mxu0
      %v2386 = vadd.f32 0.0, %v2385
      %2387 = vmatmul.f32.gmra.mxu0 %v2276
      %v2388 = vpop.f32.mrf.mxu0
      %v2389 = vadd.f32 0.0, %v2388
      %2390 = vmatmul.f32.gmra.mxu0 %v2279
      %v2391 = vpop.f32.mrf.mxu0
      %v2392 = vadd.f32 0.0, %v2391
      %2393 = vmatmul.f32.gmra.mxu0 %v2282
      %v2394 = vpop.f32.mrf.mxu0
      %v2395 = vadd.f32 0.0, %v2394
      %2396 = vdwg.mxu0
      %v2397 = vadd.f32 %v2122, %v2302
      %v2398 = vadd.f32 %v2123, %v2305
      %v2399 = vadd.f32 %v2124, %v2308
      %v2400 = vadd.f32 %v2125, %v2311
      %v2401 = vadd.f32 %v2126, %v2314
      %v2402 = vadd.f32 %v2127, %v2317
      %v2403 = vadd.f32 %v2128, %v2320
      %v2404 = vadd.f32 %v2129, %v2323
      %v2405 = vadd.f32 %v2130, %v2326
      %v2406 = vadd.f32 %v2131, %v2329
      %v2407 = vadd.f32 %v2132, %v2332
      %v2408 = vadd.f32 %v2133, %v2335
      %v2409 = vadd.f32 %v2134, %v2338
      %v2410 = vadd.f32 %v2135, %v2341
      %v2411 = vadd.f32 %v2136, %v2344
      %v2412 = vadd.f32 %v2137, %v2347
      %v2413 = vadd.f32 %v2138, %v2350
      %v2414 = vadd.f32 %v2139, %v2353
      %v2415 = vadd.f32 %v2140, %v2356
      %v2416 = vadd.f32 %v2141, %v2359
      %v2417 = vadd.f32 %v2142, %v2362
      %v2418 = vadd.f32 %v2143, %v2365
      %v2419 = vadd.f32 %v2144, %v2368
      %v2420 = vadd.f32 %v2145, %v2371
      %v2421 = vadd.f32 %v2146, %v2374
      %v2422 = vadd.f32 %v2147, %v2377
      %v2423 = vadd.f32 %v2148, %v2380
      %v2424 = vadd.f32 %v2149, %v2383
      %v2425 = vadd.f32 %v2150, %v2386
      %v2426 = vadd.f32 %v2151, %v2389
      %v2427 = vadd.f32 %v2152, %v2392
      %v2428 = vadd.f32 %v2153, %v2395
      %v2429 = vld [vmem:[%s1878 + $0x2] sm:$0xff]
      %v2430 = vld [vmem:[%s1878 + $0xa] sm:$0xff]
      %v2431 = vld [vmem:[%s1878 + $0x1a] sm:$0xff]
      %v2432 = vld [vmem:[%s1878 + $0x22] sm:$0xff]
      %v2433 = vld [vmem:[%s1878 + $0x32] sm:$0xff]
      %v2434 = vld [vmem:[%s1878 + $0x3a] sm:$0xff]
      %v2435 = vld [vmem:[%s1878 + $0x4a] sm:$0xff]
      %v2436 = vld [vmem:[%s1878 + $0x52] sm:$0xff]
      %v2437 = vld [vmem:[%s1878 + $0x62] sm:$0xff]
      %v2438 = vld [vmem:[%s1878 + $0x6a] sm:$0xff]
      %v2439 = vld [vmem:[%s1878 + $0x7a] sm:$0xff]
      %v2440 = vld [vmem:[%s1878 + $0x82] sm:$0xff]
      %v2441 = vld [vmem:[%s1878 + $0x92] sm:$0xff]
      %v2442 = vld [vmem:[%s1878 + $0x9a] sm:$0xff]
      %v2443 = vld [vmem:[%s1878 + $0xaa] sm:$0xff]
      %v2444 = vld [vmem:[%s1878 + $0xb2] sm:$0xff]
      %v2445 = vld [vmem:[%s1878 + $0xc2] sm:$0xff]
      %v2446 = vld [vmem:[%s1878 + $0xca] sm:$0xff]
      %v2447 = vld [vmem:[%s1878 + $0xda] sm:$0xff]
      %v2448 = vld [vmem:[%s1878 + $0xe2] sm:$0xff]
      %v2449 = vld [vmem:[%s1878 + $0xf2] sm:$0xff]
      %v2450 = vld [vmem:[%s1878 + $0xfa] sm:$0xff]
      %v2451 = vld [vmem:[%s1878 + $0x10a] sm:$0xff]
      %v2452 = vld [vmem:[%s1878 + $0x112] sm:$0xff]
      %v2453 = vld [vmem:[%s1878 + $0x122] sm:$0xff]
      %v2454 = vld [vmem:[%s1878 + $0x12a] sm:$0xff]
      %v2455 = vld [vmem:[%s1878 + $0x13a] sm:$0xff]
      %v2456 = vld [vmem:[%s1878 + $0x142] sm:$0xff]
      %v2457 = vld [vmem:[%s1878 + $0x152] sm:$0xff]
      %v2458 = vld [vmem:[%s1878 + $0x15a] sm:$0xff]
      %v2459 = vld [vmem:[%s1878 + $0x16a] sm:$0xff]
      %v2460 = vld [vmem:[%s1878 + $0x172] sm:$0xff]
      %s2461 = scalar_lea.vmem %s1, 64
      %v2462 = vld [vmem:[%s2461] sm:$0xff]
      %v2464 = vsel %vm182, %v2429, 0
      %v2467 = vsel %vm182, %v2430, 0
      %v2470 = vsel %vm182, %v2431, 0
      %v2473 = vsel %vm182, %v2432, 0
      %v2476 = vsel %vm182, %v2433, 0
      %v2479 = vsel %vm182, %v2434, 0
      %v2482 = vsel %vm182, %v2435, 0
      %v2485 = vsel %vm182, %v2436, 0
      %v2488 = vsel %vm182, %v2437, 0
      %v2491 = vsel %vm182, %v2438, 0
      %v2494 = vsel %vm182, %v2439, 0
      %v2497 = vsel %vm182, %v2440, 0
      %v2500 = vsel %vm182, %v2441, 0
      %v2503 = vsel %vm182, %v2442, 0
      %v2506 = vsel %vm182, %v2443, 0
      %v2509 = vsel %vm182, %v2444, 0
      %v2512 = vsel %vm182, %v2445, 0
      %v2515 = vsel %vm182, %v2446, 0
      %v2518 = vsel %vm182, %v2447, 0
      %v2521 = vsel %vm182, %v2448, 0
      %v2524 = vsel %vm182, %v2449, 0
      %v2527 = vsel %vm182, %v2450, 0
      %v2530 = vsel %vm182, %v2451, 0
      %v2533 = vsel %vm182, %v2452, 0
      %v2536 = vsel %vm182, %v2453, 0
      %v2539 = vsel %vm182, %v2454, 0
      %v2542 = vsel %vm182, %v2455, 0
      %v2545 = vsel %vm182, %v2456, 0
      %v2548 = vsel %vm182, %v2457, 0
      %v2551 = vsel %vm182, %v2458, 0
      %v2554 = vsel %vm182, %v2459, 0
      %v2557 = vsel %vm182, %v2460, 0
      %2559 = vmatpush.msra.mxu0 0.0
      %2560 = vmatpush.msra.mxu0 0.0
      %2561 = vmatpush.msra.mxu0 0.0
      %2562 = vmatpush.msra.mxu0 0.0
      %2563 = vmatpush.msra.mxu0 0.0
      %2564 = vmatpush.msra.mxu0 0.0
      %2565 = vmatpush.msra.mxu0 0.0
      %2566 = vmatpush.msra.mxu0 0.0
      %2567 = vmatpush.msra.mxu0 0.0
      %2568 = vmatpush.msra.mxu0 0.0
      %2569 = vmatpush.msra.mxu0 0.0
      %2570 = vmatpush.msra.mxu0 0.0
      %2571 = vmatpush.msra.mxu0 0.0
      %2572 = vmatpush.msra.mxu0 0.0
      %2573 = vmatpush.msra.mxu0 0.0
      %2574 = vmatpush.msra.mxu0 %v2462
      %2575 = vmatmul.f32.gmra.mxu0 %v2464
      %v2576 = vpop.f32.mrf.mxu0
      %v2577 = vadd.f32 0.0, %v2576
      %2578 = vmatmul.f32.gmra.mxu0 %v2467
      %v2579 = vpop.f32.mrf.mxu0
      %v2580 = vadd.f32 0.0, %v2579
      %2581 = vmatmul.f32.gmra.mxu0 %v2470
      %v2582 = vpop.f32.mrf.mxu0
      %v2583 = vadd.f32 0.0, %v2582
      %2584 = vmatmul.f32.gmra.mxu0 %v2473
      %v2585 = vpop.f32.mrf.mxu0
      %v2586 = vadd.f32 0.0, %v2585
      %2587 = vmatmul.f32.gmra.mxu0 %v2476
      %v2588 = vpop.f32.mrf.mxu0
      %v2589 = vadd.f32 0.0, %v2588
      %2590 = vmatmul.f32.gmra.mxu0 %v2479
      %v2591 = vpop.f32.mrf.mxu0
      %v2592 = vadd.f32 0.0, %v2591
      %2593 = vmatmul.f32.gmra.mxu0 %v2482
      %v2594 = vpop.f32.mrf.mxu0
      %v2595 = vadd.f32 0.0, %v2594
      %2596 = vmatmul.f32.gmra.mxu0 %v2485
      %v2597 = vpop.f32.mrf.mxu0
      %v2598 = vadd.f32 0.0, %v2597
      %2599 = vmatmul.f32.gmra.mxu0 %v2488
      %v2600 = vpop.f32.mrf.mxu0
      %v2601 = vadd.f32 0.0, %v2600
      %2602 = vmatmul.f32.gmra.mxu0 %v2491
      %v2603 = vpop.f32.mrf.mxu0
      %v2604 = vadd.f32 0.0, %v2603
      %2605 = vmatmul.f32.gmra.mxu0 %v2494
      %v2606 = vpop.f32.mrf.mxu0
      %v2607 = vadd.f32 0.0, %v2606
      %2608 = vmatmul.f32.gmra.mxu0 %v2497
      %v2609 = vpop.f32.mrf.mxu0
      %v2610 = vadd.f32 0.0, %v2609
      %2611 = vmatmul.f32.gmra.mxu0 %v2500
      %v2612 = vpop.f32.mrf.mxu0
      %v2613 = vadd.f32 0.0, %v2612
      %2614 = vmatmul.f32.gmra.mxu0 %v2503
      %v2615 = vpop.f32.mrf.mxu0
      %v2616 = vadd.f32 0.0, %v2615
      %2617 = vmatmul.f32.gmra.mxu0 %v2506
      %v2618 = vpop.f32.mrf.mxu0
      %v2619 = vadd.f32 0.0, %v2618
      %2620 = vmatmul.f32.gmra.mxu0 %v2509
      %v2621 = vpop.f32.mrf.mxu0
      %v2622 = vadd.f32 0.0, %v2621
      %2623 = vmatmul.f32.gmra.mxu0 %v2512
      %v2624 = vpop.f32.mrf.mxu0
      %v2625 = vadd.f32 0.0, %v2624
      %2626 = vmatmul.f32.gmra.mxu0 %v2515
      %v2627 = vpop.f32.mrf.mxu0
      %v2628 = vadd.f32 0.0, %v2627
      %2629 = vmatmul.f32.gmra.mxu0 %v2518
      %v2630 = vpop.f32.mrf.mxu0
      %v2631 = vadd.f32 0.0, %v2630
      %2632 = vmatmul.f32.gmra.mxu0 %v2521
      %v2633 = vpop.f32.mrf.mxu0
      %v2634 = vadd.f32 0.0, %v2633
      %2635 = vmatmul.f32.gmra.mxu0 %v2524
      %v2636 = vpop.f32.mrf.mxu0
      %v2637 = vadd.f32 0.0, %v2636
      %2638 = vmatmul.f32.gmra.mxu0 %v2527
      %v2639 = vpop.f32.mrf.mxu0
      %v2640 = vadd.f32 0.0, %v2639
      %2641 = vmatmul.f32.gmra.mxu0 %v2530
      %v2642 = vpop.f32.mrf.mxu0
      %v2643 = vadd.f32 0.0, %v2642
      %2644 = vmatmul.f32.gmra.mxu0 %v2533
      %v2645 = vpop.f32.mrf.mxu0
      %v2646 = vadd.f32 0.0, %v2645
      %2647 = vmatmul.f32.gmra.mxu0 %v2536
      %v2648 = vpop.f32.mrf.mxu0
      %v2649 = vadd.f32 0.0, %v2648
      %2650 = vmatmul.f32.gmra.mxu0 %v2539
      %v2651 = vpop.f32.mrf.mxu0
      %v2652 = vadd.f32 0.0, %v2651
      %2653 = vmatmul.f32.gmra.mxu0 %v2542
      %v2654 = vpop.f32.mrf.mxu0
      %v2655 = vadd.f32 0.0, %v2654
      %2656 = vmatmul.f32.gmra.mxu0 %v2545
      %v2657 = vpop.f32.mrf.mxu0
      %v2658 = vadd.f32 0.0, %v2657
      %2659 = vmatmul.f32.gmra.mxu0 %v2548
      %v2660 = vpop.f32.mrf.mxu0
      %v2661 = vadd.f32 0.0, %v2660
      %2662 = vmatmul.f32.gmra.mxu0 %v2551
      %v2663 = vpop.f32.mrf.mxu0
      %v2664 = vadd.f32 0.0, %v2663
      %2665 = vmatmul.f32.gmra.mxu0 %v2554
      %v2666 = vpop.f32.mrf.mxu0
      %v2667 = vadd.f32 0.0, %v2666
      %2668 = vmatmul.f32.gmra.mxu0 %v2557
      %v2669 = vpop.f32.mrf.mxu0
      %v2670 = vadd.f32 0.0, %v2669
      %2671 = vdwg.mxu0
      %v2672 = vadd.f32 %v2397, %v2577
      %v2673 = vadd.f32 %v2398, %v2580
      %v2674 = vadd.f32 %v2399, %v2583
      %v2675 = vadd.f32 %v2400, %v2586
      %v2676 = vadd.f32 %v2401, %v2589
      %v2677 = vadd.f32 %v2402, %v2592
      %v2678 = vadd.f32 %v2403, %v2595
      %v2679 = vadd.f32 %v2404, %v2598
      %v2680 = vadd.f32 %v2405, %v2601
      %v2681 = vadd.f32 %v2406, %v2604
      %v2682 = vadd.f32 %v2407, %v2607
      %v2683 = vadd.f32 %v2408, %v2610
      %v2684 = vadd.f32 %v2409, %v2613
      %v2685 = vadd.f32 %v2410, %v2616
      %v2686 = vadd.f32 %v2411, %v2619
      %v2687 = vadd.f32 %v2412, %v2622
      %v2688 = vadd.f32 %v2413, %v2625
      %v2689 = vadd.f32 %v2414, %v2628
      %v2690 = vadd.f32 %v2415, %v2631
      %v2691 = vadd.f32 %v2416, %v2634
      %v2692 = vadd.f32 %v2417, %v2637
      %v2693 = vadd.f32 %v2418, %v2640
      %v2694 = vadd.f32 %v2419, %v2643
      %v2695 = vadd.f32 %v2420, %v2646
      %v2696 = vadd.f32 %v2421, %v2649
      %v2697 = vadd.f32 %v2422, %v2652
      %v2698 = vadd.f32 %v2423, %v2655
      %v2699 = vadd.f32 %v2424, %v2658
      %v2700 = vadd.f32 %v2425, %v2661
      %v2701 = vadd.f32 %v2426, %v2664
      %v2702 = vadd.f32 %v2427, %v2667
      %v2703 = vadd.f32 %v2428, %v2670
      %v2704 = vsel %vm182, %v2672, 0.0
      %v2705 = vsel %vm182, %v2673, 0.0
      %v2706 = vadd.f32 %v2704, %v2705
      %v2707 = vsel %vm182, %v2674, 0.0
      %v2708 = vadd.f32 %v2706, %v2707
      %v2709 = vsel %vm182, %v2675, 0.0
      %v2710 = vadd.f32 %v2708, %v2709
      %v2711 = vsel %vm182, %v2676, 0.0
      %v2712 = vadd.f32 %v2710, %v2711
      %v2713 = vsel %vm182, %v2677, 0.0
      %v2714 = vadd.f32 %v2712, %v2713
      %v2715 = vsel %vm182, %v2678, 0.0
      %v2716 = vadd.f32 %v2714, %v2715
      %v2717 = vsel %vm182, %v2679, 0.0
      %v2718 = vadd.f32 %v2716, %v2717
      %v2719 = vsel %vm182, %v2680, 0.0
      %v2720 = vadd.f32 %v2718, %v2719
      %v2721 = vsel %vm182, %v2681, 0.0
      %v2722 = vadd.f32 %v2720, %v2721
      %v2723 = vsel %vm182, %v2682, 0.0
      %v2724 = vadd.f32 %v2722, %v2723
      %v2725 = vsel %vm182, %v2683, 0.0
      %v2726 = vadd.f32 %v2724, %v2725
      %v2727 = vsel %vm182, %v2684, 0.0
      %v2728 = vadd.f32 %v2726, %v2727
      %v2729 = vsel %vm182, %v2685, 0.0
      %v2730 = vadd.f32 %v2728, %v2729
      %v2731 = vsel %vm182, %v2686, 0.0
      %v2732 = vadd.f32 %v2730, %v2731
      %v2733 = vsel %vm182, %v2687, 0.0
      %v2734 = vadd.f32 %v2732, %v2733
      %v2735 = vsel %vm182, %v2688, 0.0
      %v2736 = vadd.f32 %v2734, %v2735
      %v2737 = vsel %vm182, %v2689, 0.0
      %v2738 = vadd.f32 %v2736, %v2737
      %v2739 = vsel %vm182, %v2690, 0.0
      %v2740 = vadd.f32 %v2738, %v2739
      %v2741 = vsel %vm182, %v2691, 0.0
      %v2742 = vadd.f32 %v2740, %v2741
      %v2743 = vsel %vm182, %v2692, 0.0
      %v2744 = vadd.f32 %v2742, %v2743
      %v2745 = vsel %vm182, %v2693, 0.0
      %v2746 = vadd.f32 %v2744, %v2745
      %v2747 = vsel %vm182, %v2694, 0.0
      %v2748 = vadd.f32 %v2746, %v2747
      %v2749 = vsel %vm182, %v2695, 0.0
      %v2750 = vadd.f32 %v2748, %v2749
      %v2751 = vsel %vm182, %v2696, 0.0
      %v2752 = vadd.f32 %v2750, %v2751
      %v2753 = vsel %vm182, %v2697, 0.0
      %v2754 = vadd.f32 %v2752, %v2753
      %v2755 = vsel %vm182, %v2698, 0.0
      %v2756 = vadd.f32 %v2754, %v2755
      %v2757 = vsel %vm182, %v2699, 0.0
      %v2758 = vadd.f32 %v2756, %v2757
      %v2759 = vsel %vm182, %v2700, 0.0
      %v2760 = vadd.f32 %v2758, %v2759
      %v2761 = vsel %vm182, %v2701, 0.0
      %v2762 = vadd.f32 %v2760, %v2761
      %v2763 = vsel %vm182, %v2702, 0.0
      %v2764 = vadd.f32 %v2762, %v2763
      %v2765 = vsel %vm182, %v2703, 0.0
      %v2766 = vadd.f32 %v2764, %v2765
      %v2767 = vrot.slane %v2766, 4
      %v2768 = vadd.f32 %v2766, %v2767
      %v2769 = vrot.slane %v2768, 2
      %v2770 = vadd.f32 %v2768, %v2769
      %v2771 = vrot.slane %v2770, 1
      %v2772 = vadd.f32 %v2770, %v2771
      %v2773 = vmul.f32 %v2772, 0.00390625
      %v2774 = vsub.f32 %v2672, %v2773
      %v2775 = vsub.f32 %v2673, %v2773
      %v2776 = vsub.f32 %v2674, %v2773
      %v2777 = vsub.f32 %v2675, %v2773
      %v2778 = vsub.f32 %v2676, %v2773
      %v2779 = vsub.f32 %v2677, %v2773
      %v2780 = vsub.f32 %v2678, %v2773
      %v2781 = vsub.f32 %v2679, %v2773
      %v2782 = vsub.f32 %v2680, %v2773
      %v2783 = vsub.f32 %v2681, %v2773
      %v2784 = vsub.f32 %v2682, %v2773
      %v2785 = vsub.f32 %v2683, %v2773
      %v2786 = vsub.f32 %v2684, %v2773
      %v2787 = vsub.f32 %v2685, %v2773
      %v2788 = vsub.f32 %v2686, %v2773
      %v2789 = vsub.f32 %v2687, %v2773
      %v2790 = vsub.f32 %v2688, %v2773
      %v2791 = vsub.f32 %v2689, %v2773
      %v2792 = vsub.f32 %v2690, %v2773
      %v2793 = vsub.f32 %v2691, %v2773
      %v2794 = vsub.f32 %v2692, %v2773
      %v2795 = vsub.f32 %v2693, %v2773
      %v2796 = vsub.f32 %v2694, %v2773
      %v2797 = vsub.f32 %v2695, %v2773
      %v2798 = vsub.f32 %v2696, %v2773
      %v2799 = vsub.f32 %v2697, %v2773
      %v2800 = vsub.f32 %v2698, %v2773
      %v2801 = vsub.f32 %v2699, %v2773
      %v2802 = vsub.f32 %v2700, %v2773
      %v2803 = vsub.f32 %v2701, %v2773
      %v2804 = vsub.f32 %v2702, %v2773
      %v2805 = vsub.f32 %v2703, %v2773
      %2806 = vst.msk [vmem:[%s181] sm:$0x1] %vm191, %v2772
      %v2807 = vmul.f32 %v2774, %v2774
      %v2808 = vmul.f32 %v2775, %v2775
      %v2809 = vmul.f32 %v2776, %v2776
      %v2810 = vmul.f32 %v2777, %v2777
      %v2811 = vmul.f32 %v2778, %v2778
      %v2812 = vmul.f32 %v2779, %v2779
      %v2813 = vmul.f32 %v2780, %v2780
      %v2814 = vmul.f32 %v2781, %v2781
      %v2815 = vmul.f32 %v2782, %v2782
      %v2816 = vmul.f32 %v2783, %v2783
      %v2817 = vmul.f32 %v2784, %v2784
      %v2818 = vmul.f32 %v2785, %v2785
      %v2819 = vmul.f32 %v2786, %v2786
      %v2820 = vmul.f32 %v2787, %v2787
      %v2821 = vmul.f32 %v2788, %v2788
      %v2822 = vmul.f32 %v2789, %v2789
      %v2823 = vmul.f32 %v2790, %v2790
      %v2824 = vmul.f32 %v2791, %v2791
      %v2825 = vmul.f32 %v2792, %v2792
      %v2826 = vmul.f32 %v2793, %v2793
      %v2827 = vmul.f32 %v2794, %v2794
      %v2828 = vmul.f32 %v2795, %v2795
      %v2829 = vmul.f32 %v2796, %v2796
      %v2830 = vmul.f32 %v2797, %v2797
      %v2831 = vmul.f32 %v2798, %v2798
      %v2832 = vmul.f32 %v2799, %v2799
      %v2833 = vmul.f32 %v2800, %v2800
      %v2834 = vmul.f32 %v2801, %v2801
      %v2835 = vmul.f32 %v2802, %v2802
      %v2836 = vmul.f32 %v2803, %v2803
      %v2837 = vmul.f32 %v2804, %v2804
      %v2838 = vmul.f32 %v2805, %v2805
      %v2839 = vsel %vm182, %v2807, 0.0
      %v2840 = vsel %vm182, %v2808, 0.0
      %v2841 = vadd.f32 %v2839, %v2840
      %v2842 = vsel %vm182, %v2809, 0.0
      %v2843 = vadd.f32 %v2841, %v2842
      %v2844 = vsel %vm182, %v2810, 0.0
      %v2845 = vadd.f32 %v2843, %v2844
      %v2846 = vsel %vm182, %v2811, 0.0
      %v2847 = vadd.f32 %v2845, %v2846
      %v2848 = vsel %vm182, %v2812, 0.0
      %v2849 = vadd.f32 %v2847, %v2848
      %v2850 = vsel %vm182, %v2813, 0.0
      %v2851 = vadd.f32 %v2849, %v2850
      %v2852 = vsel %vm182, %v2814, 0.0
      %v2853 = vadd.f32 %v2851, %v2852
      %v2854 = vsel %vm182, %v2815, 0.0
      %v2855 = vadd.f32 %v2853, %v2854
      %v2856 = vsel %vm182, %v2816, 0.0
      %v2857 = vadd.f32 %v2855, %v2856
      %v2858 = vsel %vm182, %v2817, 0.0
      %v2859 = vadd.f32 %v2857, %v2858
      %v2860 = vsel %vm182, %v2818, 0.0
      %v2861 = vadd.f32 %v2859, %v2860
      %v2862 = vsel %vm182, %v2819, 0.0
      %v2863 = vadd.f32 %v2861, %v2862
      %v2864 = vsel %vm182, %v2820, 0.0
      %v2865 = vadd.f32 %v2863, %v2864
      %v2866 = vsel %vm182, %v2821, 0.0
      %v2867 = vadd.f32 %v2865, %v2866
      %v2868 = vsel %vm182, %v2822, 0.0
      %v2869 = vadd.f32 %v2867, %v2868
      %v2870 = vsel %vm182, %v2823, 0.0
      %v2871 = vadd.f32 %v2869, %v2870
      %v2872 = vsel %vm182, %v2824, 0.0
      %v2873 = vadd.f32 %v2871, %v2872
      %v2874 = vsel %vm182, %v2825, 0.0
      %v2875 = vadd.f32 %v2873, %v2874
      %v2876 = vsel %vm182, %v2826, 0.0
      %v2877 = vadd.f32 %v2875, %v2876
      %v2878 = vsel %vm182, %v2827, 0.0
      %v2879 = vadd.f32 %v2877, %v2878
      %v2880 = vsel %vm182, %v2828, 0.0
      %v2881 = vadd.f32 %v2879, %v2880
      %v2882 = vsel %vm182, %v2829, 0.0
      %v2883 = vadd.f32 %v2881, %v2882
      %v2884 = vsel %vm182, %v2830, 0.0
      %v2885 = vadd.f32 %v2883, %v2884
      %v2886 = vsel %vm182, %v2831, 0.0
      %v2887 = vadd.f32 %v2885, %v2886
      %v2888 = vsel %vm182, %v2832, 0.0
      %v2889 = vadd.f32 %v2887, %v2888
      %v2890 = vsel %vm182, %v2833, 0.0
      %v2891 = vadd.f32 %v2889, %v2890
      %v2892 = vsel %vm182, %v2834, 0.0
      %v2893 = vadd.f32 %v2891, %v2892
      %v2894 = vsel %vm182, %v2835, 0.0
      %v2895 = vadd.f32 %v2893, %v2894
      %v2896 = vsel %vm182, %v2836, 0.0
      %v2897 = vadd.f32 %v2895, %v2896
      %v2898 = vsel %vm182, %v2837, 0.0
      %v2899 = vadd.f32 %v2897, %v2898
      %v2900 = vsel %vm182, %v2838, 0.0
      %v2901 = vadd.f32 %v2899, %v2900
      %v2902 = vrot.slane %v2901, 4
      %v2903 = vadd.f32 %v2901, %v2902
      %v2904 = vrot.slane %v2903, 2
      %v2905 = vadd.f32 %v2903, %v2904
      %v2906 = vrot.slane %v2905, 1
      %v2907 = vadd.f32 %v2905, %v2906
      %2908 = vst.msk [vmem:[%s181 + $0x1] sm:$0x1] %vm191, %v2907
      %2909 = vst.msk [vmem:[%s177] sm:$0xff] %vm182, %v2672
      %2910 = vst.msk [vmem:[%s177 + $0x8] sm:$0xff] %vm182, %v2673
      %2911 = vst.msk [vmem:[%s177 + $0x10] sm:$0xff] %vm182, %v2674
      %2912 = vst.msk [vmem:[%s177 + $0x18] sm:$0xff] %vm182, %v2675
      %2913 = vst.msk [vmem:[%s177 + $0x20] sm:$0xff] %vm182, %v2676
      %2914 = vst.msk [vmem:[%s177 + $0x28] sm:$0xff] %vm182, %v2677
      %2915 = vst.msk [vmem:[%s177 + $0x30] sm:$0xff] %vm182, %v2678
      %2916 = vst.msk [vmem:[%s177 + $0x38] sm:$0xff] %vm182, %v2679
      %2917 = vst.msk [vmem:[%s177 + $0x40] sm:$0xff] %vm182, %v2680
      %2918 = vst.msk [vmem:[%s177 + $0x48] sm:$0xff] %vm182, %v2681
      %2919 = vst.msk [vmem:[%s177 + $0x50] sm:$0xff] %vm182, %v2682
      %2920 = vst.msk [vmem:[%s177 + $0x58] sm:$0xff] %vm182, %v2683
      %2921 = vst.msk [vmem:[%s177 + $0x60] sm:$0xff] %vm182, %v2684
      %2922 = vst.msk [vmem:[%s177 + $0x68] sm:$0xff] %vm182, %v2685
      %2923 = vst.msk [vmem:[%s177 + $0x70] sm:$0xff] %vm182, %v2686
      %2924 = vst.msk [vmem:[%s177 + $0x78] sm:$0xff] %vm182, %v2687
      %2925 = vst.msk [vmem:[%s177 + $0x80] sm:$0xff] %vm182, %v2688
      %2926 = vst.msk [vmem:[%s177 + $0x88] sm:$0xff] %vm182, %v2689
      %2927 = vst.msk [vmem:[%s177 + $0x90] sm:$0xff] %vm182, %v2690
      %2928 = vst.msk [vmem:[%s177 + $0x98] sm:$0xff] %vm182, %v2691
      %2929 = vst.msk [vmem:[%s177 + $0xa0] sm:$0xff] %vm182, %v2692
      %2930 = vst.msk [vmem:[%s177 + $0xa8] sm:$0xff] %vm182, %v2693
      %2931 = vst.msk [vmem:[%s177 + $0xb0] sm:$0xff] %vm182, %v2694
      %2932 = vst.msk [vmem:[%s177 + $0xb8] sm:$0xff] %vm182, %v2695
      %2933 = vst.msk [vmem:[%s177 + $0xc0] sm:$0xff] %vm182, %v2696
      %2934 = vst.msk [vmem:[%s177 + $0xc8] sm:$0xff] %vm182, %v2697
      %2935 = vst.msk [vmem:[%s177 + $0xd0] sm:$0xff] %vm182, %v2698
      %2936 = vst.msk [vmem:[%s177 + $0xd8] sm:$0xff] %vm182, %v2699
      %2937 = vst.msk [vmem:[%s177 + $0xe0] sm:$0xff] %vm182, %v2700
      %2938 = vst.msk [vmem:[%s177 + $0xe8] sm:$0xff] %vm182, %v2701
      %2939 = vst.msk [vmem:[%s177 + $0xf0] sm:$0xff] %vm182, %v2702
      %2940 = vst.msk [vmem:[%s177 + $0xf8] sm:$0xff] %vm182, %v2703
      %p2941 = scmp.lt.s32.totalorder %s15, 1
      %s2942 = scalar_select %p2941, %s15, 1
      %s2943 = smul.addr %s2942, 32
      %s2944 = smul.addr %s2943, 8
      %s2945 = scalar_lea.vmem %s2, %s2944
      %p2946 = scmp.lt.s32.totalorder %s15, 1
      %s2947 = scalar_select %p2946, %s15, 1
      %s2948 = smul.addr %s2947, 2
      %s2949 = scalar_lea.vmem %s3, %s2948
      // Predicated region
      $region29: #{basic_block_forward.3} parent=27 // pred_check
        %p2950 = pneg %p80
      $region30: #{basic_block_forward.3} parent=27 // pred_check_branch
        %2952 = sbr.rel (%p2950) target = $region32
      $region31: #{basic_block_forward.3} parent=27 // pred_region
        _
      $region32: #{basic_block_forward.3} parent=27 // pred_fallthru
        _
      // Predicated region
      $region33: #{basic_block_forward.3} parent=27 // pred_check
        %p2953 = pneg %p106
      $region34: #{basic_block_forward.3} parent=27 // pred_check_branch
        %2955 = sbr.rel (%p2953) target = $region36
      $region35: #{basic_block_forward.3} parent=27 // pred_region
        _
      $region36: #{basic_block_forward.3} parent=27 // pred_fallthru
        _
    $region28: #{basic_block_forward.3} parent=5 // pred_fallthru
      _
    %p2956 = scmp.le.s32.totalorder 2, %s10
    // Predicated region
    $region37: #{basic_block_forward.3} parent=5 // pred_check
      %p2957 = pneg %p2956
    $region38: #{basic_block_forward.3} parent=5 // pred_check_branch
      %2959 = sbr.rel (%p2957) target = $region40
    $region39: #{basic_block_forward.3} parent=5 // pred_region
      %s2960 = ssub.s32 %s10, 2
      // Predicated region
      $region41: #{basic_block_forward.3} parent=39 // pred_check
        %p2961 = pneg %p86
      $region42: #{basic_block_forward.3} parent=39 // pred_check_branch
        %2963 = sbr.rel (%p2961) target = $region44
      $region43: #{basic_block_forward.3} parent=39 // pred_region
        %p2964 = scmp.lt.s32.totalorder %s16, 1
        %s2965 = scalar_select %p2964, %s16, 1
        %s2966 = smul.addr %s2965, 32
        %s2967 = smul.addr %s2966, 8
        %s2968 = scalar_lea.vmem %s2, %s2967
      $region44: #{basic_block_forward.3} parent=39 // pred_fallthru
        _
      // Predicated region
      $region45: #{basic_block_forward.3} parent=39 // pred_check
        %p2969 = pneg %p112
      $region46: #{basic_block_forward.3} parent=39 // pred_check_branch
        %2971 = sbr.rel (%p2969) target = $region48
      $region47: #{basic_block_forward.3} parent=39 // pred_region
        %p2972 = scmp.lt.s32.totalorder %s16, 1
        %s2973 = scalar_select %p2972, %s16, 1
        %s2974 = smul.addr %s2973, 2
        %s2975 = scalar_lea.vmem %s3, %s2974
      $region48: #{basic_block_forward.3} parent=39 // pred_fallthru
        _
    $region40: #{basic_block_forward.3} parent=5 // pred_fallthru
      _
  $region6: #{basic_block_forward.3} parent=0 // loop_footer
    %s14 = sadd.s32 1, %s10
  $region7: #{basic_block_forward.3} parent=0 // loop_footer_branch
    %9 = sbr.rel target = $region3
  $region8: #{basic_block_forward.3} parent=0 // loop_exit
    _

</llo_original>
